<compile_context>
chip_gen: v6e
topology: v6e:2x2x1
jax: 0.10.0
libtpu: 0.0.40
codegen_flags: <defaults>
</compile_context>

<pallas_src>
import functools

import jax
import jax.numpy as jnp
from jax import lax
from jax.experimental import pallas as pl
from jax.experimental.pallas import tpu as pltpu

EPS = 1e-5
COMPUTE_DTYPE = jnp.bfloat16      # MXU operand / intermediate activation dtype


def _channel_tile(C):
    # Lane-dense output-channel tiles (multiple of 128); 256 keeps the bf16
    # weight block comfortably inside v7x's scoped VMEM even at Cin=512.
    # Sub-128 channel counts fall back to the full dim (masked stores).
    for t in (256, 128):
        if C % t == 0:
            return t
    return C


# ---------------------------------------------------------------------------
# K1 / K1': [optional fused BN+ReLU on the input stream] + 3x3 conv (stride 1)
#           + per-sample BatchNorm partial statistics.
# ---------------------------------------------------------------------------
def _conv3x3_kernel(*refs, H, W, Cin, fuse_bn_relu):
    if fuse_bn_relu:
        (x_ref, w_ref, scale_ref, shift_ref, y_ref, stats_ref,
         xp_scr, patch_scr) = refs
    else:
        x_ref, w_ref, y_ref, stats_ref, xp_scr, patch_scr = refs
        scale_ref = shift_ref = None

    cdt = xp_scr.dtype                 # bf16 compute dtype for the MXU
    ct = w_ref.shape[1]                # output-channel tile

    # ---- input tile, with the previous layer's BN + ReLU fused in ----------
    x = x_ref[0]                       # (H, W, Cin)
    if fuse_bn_relu:
        x = x.astype(jnp.float32)
        x = jnp.maximum(x * scale_ref[...] + shift_ref[...], 0.0)

    # ---- zero-padded tile built in VMEM (no HBM pad round trip) ------------
    # Only the 1-pixel halo needs zeroing (done every step -> megacore safe);
    # the interior is overwritten right after.
    zrow = jnp.zeros((1, W + 2, Cin), cdt)
    zcol = jnp.zeros((H + 2, 1, Cin), cdt)
    xp_scr[0:1, :, :] = zrow
    xp_scr[H + 1:H + 2, :, :] = zrow
    xp_scr[:, 0:1, :] = zcol
    xp_scr[:, W + 1:W + 2, :] = zcol
    xp_scr[1:H + 1, 1:W + 1, :] = x.astype(cdt)

    # ---- im2col: one big-K matmul instead of 9 K=Cin matmuls ---------------
    for k in range(9):                 # statically unrolled tap gather
        kh, kw = divmod(k, 3)
        patch_scr[:, :, k * Cin:(k + 1) * Cin] = xp_scr[kh:kh + H, kw:kw + W, :]

    acc = jnp.dot(patch_scr[...].reshape(H * W, 9 * Cin), w_ref[...],
                  preferred_element_type=jnp.float32)        # (H*W, Ct) f32

    y_ref[0] = acc.reshape(H, W, ct).astype(y_ref.dtype)

    # ---- per-sample BN partials (kept in f32) -------------------------------
    s = jnp.sum(acc, axis=0, keepdims=True)                  # (1, Ct)
    sq = jnp.sum(acc * acc, axis=0, keepdims=True)           # (1, Ct)
    stats_ref[...] = jnp.concatenate([s, sq], axis=0).reshape(1, 2, ct)


def conv3x3_with_stats(x, w9, scale=None, shift=None, *,
                       out_dtype=COMPUTE_DTYPE, compute_dtype=COMPUTE_DTYPE):
    """x: (N, H, W, Cin) NHWC; w9: (9*Cin, Cout) tap-major weights.
    If scale/shift (1, Cin) are given, relu(x*scale + shift) (= the previous
    BatchNorm + ReLU) is fused onto the input stream.  Returns the conv output
    (N, H, W, Cout) and per-sample f32 stats (N, 2, Cout) = [sum, sumsq]."""
    N, H, W, Cin = x.shape
    Cout = w9.shape[1]
    Ct = _channel_tile(Cout)
    fuse = scale is not None

    kernel = functools.partial(_conv3x3_kernel, H=H, W=W, Cin=Cin,
                               fuse_bn_relu=fuse)

    # Grid order: keep the larger of {input block, weight block} at a constant
    # block index across consecutive steps so Pallas skips its re-DMA.
    x_bytes = H * W * Cin * x.dtype.itemsize
    w_bytes = 9 * Cin * Ct * jnp.dtype(compute_dtype).itemsize
    if w_bytes > x_bytes:
        grid = (Cout // Ct, N)
        gx = lambda c, n: (n, 0, 0, 0)
        gw = lambda c, n: (0, c)
        gv = lambda c, n: (0, 0)
        gy = lambda c, n: (n, 0, 0, c)
        gs = lambda c, n: (n, 0, c)
    else:
        grid = (N, Cout // Ct)
        gx = lambda n, c: (n, 0, 0, 0)
        gw = lambda n, c: (0, c)
        gv = lambda n, c: (0, 0)
        gy = lambda n, c: (n, 0, 0, c)
        gs = lambda n, c: (n, 0, c)

    in_specs = [
        pl.BlockSpec((1, H, W, Cin), gx),
        pl.BlockSpec((9 * Cin, Ct), gw),
    ]
    args = [x, w9.astype(compute_dtype)]
    if fuse:
        in_specs += [pl.BlockSpec((1, Cin), gv), pl.BlockSpec((1, Cin), gv)]
        args += [scale.astype(jnp.float32), shift.astype(jnp.float32)]

    y, stats = pl.pallas_call(
        kernel,
        grid=grid,
        in_specs=in_specs,
        out_specs=[
            pl.BlockSpec((1, H, W, Ct), gy),
            pl.BlockSpec((1, 2, Ct), gs),
        ],
        out_shape=[
            jax.ShapeDtypeStruct((N, H, W, Cout), out_dtype),
            jax.ShapeDtypeStruct((N, 2, Cout), jnp.float32),
        ],
        scratch_shapes=[
            pltpu.VMEM((H + 2, W + 2, Cin), compute_dtype),   # padded tile
            pltpu.VMEM((H, W, 9 * Cin), compute_dtype),       # im2col patch
        ],
        compiler_params=pltpu.CompilerParams(
            dimension_semantics=("parallel", "parallel"),
        ),
    )(*args)
    return y, stats


# ---------------------------------------------------------------------------
# K2: BN2-apply + residual add + Identity(+0.0) + ReLU (pure streaming kernel)
# ---------------------------------------------------------------------------
def _bn_residual_relu_kernel(y_ref, scale_ref, shift_ref, res_ref, o_ref):
    y = y_ref[0].astype(jnp.float32)                 # (H, W, Ct)
    out = y * scale_ref[...] + shift_ref[...]        # BN2 apply
    out = out + res_ref[0].astype(jnp.float32)       # residual add
    out = out + 0.0                                  # Identity shortcut
    o_ref[0] = jnp.maximum(out, 0.0).astype(o_ref.dtype)


def bn_residual_relu(y, scale, shift, residual, out_dtype):
    N, H, W, C = y.shape
    Ct = _channel_tile(C)
    data_spec = pl.BlockSpec((1, H, W, Ct), lambda n, c: (n, 0, 0, c))
    vec_spec = pl.BlockSpec((1, Ct), lambda n, c: (0, c))
    return pl.pallas_call(
        _bn_residual_relu_kernel,
        grid=(N, C // Ct),
        in_specs=[data_spec, vec_spec, vec_spec,
                  pl.BlockSpec((1, H, W, Ct), lambda n, c: (n, 0, 0, c))],
        out_specs=data_spec,
        out_shape=jax.ShapeDtypeStruct((N, H, W, C), out_dtype),
        compiler_params=pltpu.CompilerParams(
            dimension_semantics=("parallel", "parallel"),
        ),
    )(y, scale.astype(jnp.float32), shift.astype(jnp.float32), residual)


# ---------------------------------------------------------------------------
# BatchNorm scale/shift from the streamed partials (tiny (C,) math, done ONCE
# in the wrapper instead of per grid step).
# ---------------------------------------------------------------------------
def _bn_scale_shift(stats, gamma, beta, count):
    tot = jnp.sum(stats, axis=0)                            # (2, C) f32
    mean = tot[0] / count
    var = jnp.maximum(tot[1] / count - mean * mean, 0.0)    # biased var, clamp
    inv_std = lax.rsqrt(var + EPS)
    scale = gamma.astype(jnp.float32) * inv_std
    shift = beta.astype(jnp.float32) - mean * scale
    return scale.reshape(1, -1), shift.reshape(1, -1)


def prepare_conv_weight(w_oihw, compute_dtype=COMPUTE_DTYPE):
    # OIHW (Cout, Cin, 3, 3) -> tap-major (9*Cin, Cout) bf16 (do once at init).
    cout, cin = w_oihw.shape[0], w_oihw.shape[1]
    w_hwio = jnp.transpose(w_oihw, (2, 3, 1, 0))            # (3, 3, Cin, Cout)
    return w_hwio.reshape(9 * cin, cout).astype(compute_dtype)


# ---------------------------------------------------------------------------
# Full block forward
# ---------------------------------------------------------------------------
def basic_block_forward_nhwc(x_nhwc, w1_9, gamma1, beta1, w2_9, gamma2, beta2):
    N, H, W, _ = x_nhwc.shape
    count = float(N * H * W)

    # conv1 (+ BN1 partial stats); intermediate activation stored bf16
    y1, stats1 = conv3x3_with_stats(x_nhwc, w1_9)
    scale1, shift1 = _bn_scale_shift(stats1, gamma1, beta1, count)

    # conv2 with BN1-apply + ReLU fused onto its input stream (+ BN2 stats)
    y2, stats2 = conv3x3_with_stats(y1, w2_9, scale=scale1, shift=shift1)
    scale2, shift2 = _bn_scale_shift(stats2, gamma2, beta2, count)

    # BN2-apply + residual + Identity(+0.0) + ReLU
    return bn_residual_relu(y2, scale2, shift2, x_nhwc, out_dtype=x_nhwc.dtype)


def basic_block_forward(x, w1, gamma1, beta1, w2, gamma2, beta2):
    """PyTorch-layout entry: x NCHW, conv weights OIHW (Cout, Cin, 3, 3)."""
    # TODO(synk): stride>1 / downsample (1x1 conv) branch not implemented
    # (the constructed module uses stride=1, downsample=None).
    # TODO(synk): in a full network keep activations NHWC across blocks and
    # prepare weights once at init; the transposes here exist only to match
    # the PyTorch NCHW module boundary.
    x_nhwc = jnp.transpose(x, (0, 2, 3, 1))
    w1_9 = prepare_conv_weight(w1)
    w2_9 = prepare_conv_weight(w2)
    out = basic_block_forward_nhwc(x_nhwc, w1_9, gamma1, beta1,
                                   w2_9, gamma2, beta2)
    return jnp.transpose(out, (0, 3, 1, 2))


# ---------------------------------------------------------------------------
# Pure-JAX f32 reference (PyTorch training-mode BatchNorm semantics)
# ---------------------------------------------------------------------------
def _reference_forward(x, w1, gamma1, beta1, w2, gamma2, beta2):
    def conv(x_, w_):
        return lax.conv_general_dilated(
            x_, w_, window_strides=(1, 1), padding=((1, 1), (1, 1)),
            dimension_numbers=("NCHW", "OIHW", "NCHW"),
            precision=lax.Precision.HIGHEST)

    def bn(y, g, b):
        mean = jnp.mean(y, axis=(0, 2, 3), keepdims=True)
        var = jnp.mean((y - mean) ** 2, axis=(0, 2, 3), keepdims=True)
        yhat = (y - mean) * lax.rsqrt(var + EPS)
        return yhat * g.reshape(1, -1, 1, 1) + b.reshape(1, -1, 1, 1)

    out = jax.nn.relu(bn(conv(x, w1), gamma1, beta1))
    out = bn(conv(out, w2), gamma2, beta2)
    out = out + x
    out = out + 0.0
    return jax.nn.relu(out)


if __name__ == "__main__":
    key = jax.random.PRNGKey(0)
    kx, kw1, kw2, kg1, kb1, kg2, kb2 = jax.random.split(key, 7)

    # Small shapes implied by the module: batch=2, inplanes=planes=4, spatial=16.
    N, C, H, W = 2, 4, 16, 16
    x = jax.random.normal(kx, (N, C, H, W), dtype=jnp.float32)
    w1 = 0.1 * jax.random.normal(kw1, (C, C, 3, 3), dtype=jnp.float32)
    w2 = 0.1 * jax.random.normal(kw2, (C, C, 3, 3), dtype=jnp.float32)
    gamma1 = 1.0 + 0.1 * jax.random.normal(kg1, (C,), dtype=jnp.float32)
    beta1 = 0.1 * jax.random.normal(kb1, (C,), dtype=jnp.float32)
    gamma2 = 1.0 + 0.1 * jax.random.normal(kg2, (C,), dtype=jnp.float32)
    beta2 = 0.1 * jax.random.normal(kb2, (C,), dtype=jnp.float32)

    fwd = jax.jit(basic_block_forward)
    out = jax.block_until_ready(fwd(x, w1, gamma1, beta1, w2, gamma2, beta2))

    ref = _reference_forward(x, w1, gamma1, beta1, w2, gamma2, beta2)
    assert out.shape == ref.shape, (out.shape, ref.shape)
    # bf16 MXU operands + bf16 intermediate activations (per the perf review)
    # vs the f32 reference -> loose tolerance; stats are accumulated in f32.
    err = float(jnp.max(jnp.abs(out - ref)))
    assert err < 1e-1, f"mismatch vs reference: max abs err = {err}"

    print("KERNEL_OK")
</pallas_src>

<mosaic_0001>
module attributes {stable_mosaic.version = 11 : i64} {
  func.func @_conv3x3_kernel(%arg0: i32, %arg1: i32, %arg2: memref<1x16x16x4xf32, #tpu.memory_space<vmem>>, %arg3: memref<36x4xbf16, #tpu.memory_space<vmem>>, %arg4: memref<1x16x16x4xbf16, #tpu.memory_space<vmem>>, %arg5: memref<1x2x4xf32, #tpu.memory_space<vmem>>, %arg6: memref<18x18x4xbf16, #tpu.memory_space<vmem>>, %arg7: memref<16x16x36xbf16, #tpu.memory_space<vmem>>) attributes {dimension_semantics = [#tpu.dimension_semantics<parallel>, #tpu.dimension_semantics<parallel>], iteration_bounds = array<i64: 2, 1>, scalar_prefetch = 0 : i64, scratch_operands = 2 : i64, tpu.core_type = #tpu.core_type<tc>, window_params = [{transform_indices = @transform_0, window_bounds = array<i64: 1, 16, 16, 4>}, {transform_indices = @transform_1, window_bounds = array<i64: 36, 4>}, {transform_indices = @transform_2, window_bounds = array<i64: 1, 16, 16, 4>}, {transform_indices = @transform_3, window_bounds = array<i64: 1, 2, 4>}]} {
    %c0 = arith.constant 0 : index
    %c0_0 = arith.constant 0 : index
    %c0_1 = arith.constant 0 : index
    %c0_2 = arith.constant 0 : index
    %0 = vector.load %arg2[%c0, %c0_0, %c0_1, %c0_2] : memref<1x16x16x4xf32, #tpu.memory_space<vmem>>, vector<1x16x16x4xf32>
    %1 = vector.shape_cast %0 : vector<1x16x16x4xf32> to vector<16x16x4xf32>
    %cst = arith.constant 0.000000e+00 : bf16
    %2 = vector.broadcast %cst : bf16 to vector<1x18x4xbf16>
    %cst_3 = arith.constant 0.000000e+00 : bf16
    %3 = vector.broadcast %cst_3 : bf16 to vector<18x1x4xbf16>
    %c0_4 = arith.constant 0 : index
    %c0_5 = arith.constant 0 : index
    %c0_6 = arith.constant 0 : index
    %4 = vector.load %arg6[%c0_4, %c0_5, %c0_6] : memref<18x18x4xbf16, #tpu.memory_space<vmem>>, vector<1x18x4xbf16>
    tpu.vector_store %arg6[%c0_4, %c0_5, %c0_6], %2 {strides = array<i32>} : memref<18x18x4xbf16, #tpu.memory_space<vmem>>, vector<1x18x4xbf16>,
    %c17 = arith.constant 17 : index
    %c0_7 = arith.constant 0 : index
    %c0_8 = arith.constant 0 : index
    %5 = vector.load %arg6[%c17, %c0_7, %c0_8] : memref<18x18x4xbf16, #tpu.memory_space<vmem>>, vector<1x18x4xbf16>
    tpu.vector_store %arg6[%c17, %c0_7, %c0_8], %2 {strides = array<i32>} : memref<18x18x4xbf16, #tpu.memory_space<vmem>>, vector<1x18x4xbf16>,
    %c0_9 = arith.constant 0 : index
    %c0_10 = arith.constant 0 : index
    %c0_11 = arith.constant 0 : index
    %6 = vector.load %arg6[%c0_9, %c0_10, %c0_11] : memref<18x18x4xbf16, #tpu.memory_space<vmem>>, vector<18x1x4xbf16>
    tpu.vector_store %arg6[%c0_9, %c0_10, %c0_11], %3 {strides = array<i32>} : memref<18x18x4xbf16, #tpu.memory_space<vmem>>, vector<18x1x4xbf16>,
    %c0_12 = arith.constant 0 : index
    %c17_13 = arith.constant 17 : index
    %c0_14 = arith.constant 0 : index
    %7 = vector.load %arg6[%c0_12, %c17_13, %c0_14] : memref<18x18x4xbf16, #tpu.memory_space<vmem>>, vector<18x1x4xbf16>
    tpu.vector_store %arg6[%c0_12, %c17_13, %c0_14], %3 {strides = array<i32>} : memref<18x18x4xbf16, #tpu.memory_space<vmem>>, vector<18x1x4xbf16>,
    %8 = arith.truncf %1 : vector<16x16x4xf32> to vector<16x16x4xbf16>
    %c1 = arith.constant 1 : index
    %c1_15 = arith.constant 1 : index
    %c0_16 = arith.constant 0 : index
    %9 = vector.load %arg6[%c1, %c1_15, %c0_16] : memref<18x18x4xbf16, #tpu.memory_space<vmem>>, vector<16x16x4xbf16>
    tpu.vector_store %arg6[%c1, %c1_15, %c0_16], %8 {strides = array<i32>} : memref<18x18x4xbf16, #tpu.memory_space<vmem>>, vector<16x16x4xbf16>,
    %c0_17 = arith.constant 0 : index
    %c0_18 = arith.constant 0 : index
    %c0_19 = arith.constant 0 : index
    %10 = vector.load %arg6[%c0_17, %c0_18, %c0_19] : memref<18x18x4xbf16, #tpu.memory_space<vmem>>, vector<16x16x4xbf16>
    %c0_20 = arith.constant 0 : index
    %c0_21 = arith.constant 0 : index
    %c0_22 = arith.constant 0 : index
    %11 = vector.load %arg7[%c0_20, %c0_21, %c0_22] : memref<16x16x36xbf16, #tpu.memory_space<vmem>>, vector<16x16x4xbf16>
    tpu.vector_store %arg7[%c0_20, %c0_21, %c0_22], %10 {strides = array<i32>} : memref<16x16x36xbf16, #tpu.memory_space<vmem>>, vector<16x16x4xbf16>,
    %c0_23 = arith.constant 0 : index
    %c1_24 = arith.constant 1 : index
    %c0_25 = arith.constant 0 : index
    %12 = vector.load %arg6[%c0_23, %c1_24, %c0_25] : memref<18x18x4xbf16, #tpu.memory_space<vmem>>, vector<16x16x4xbf16>
    %c0_26 = arith.constant 0 : index
    %c0_27 = arith.constant 0 : index
    %c4 = arith.constant 4 : index
    %13 = vector.load %arg7[%c0_26, %c0_27, %c4] : memref<16x16x36xbf16, #tpu.memory_space<vmem>>, vector<16x16x4xbf16>
    tpu.vector_store %arg7[%c0_26, %c0_27, %c4], %12 {strides = array<i32>} : memref<16x16x36xbf16, #tpu.memory_space<vmem>>, vector<16x16x4xbf16>,
    %c0_28 = arith.constant 0 : index
    %c2 = arith.constant 2 : index
    %c0_29 = arith.constant 0 : index
    %14 = vector.load %arg6[%c0_28, %c2, %c0_29] : memref<18x18x4xbf16, #tpu.memory_space<vmem>>, vector<16x16x4xbf16>
    %c0_30 = arith.constant 0 : index
    %c0_31 = arith.constant 0 : index
    %c8 = arith.constant 8 : index
    %15 = vector.load %arg7[%c0_30, %c0_31, %c8] : memref<16x16x36xbf16, #tpu.memory_space<vmem>>, vector<16x16x4xbf16>
    tpu.vector_store %arg7[%c0_30, %c0_31, %c8], %14 {strides = array<i32>} : memref<16x16x36xbf16, #tpu.memory_space<vmem>>, vector<16x16x4xbf16>,
    %c1_32 = arith.constant 1 : index
    %c0_33 = arith.constant 0 : index
    %c0_34 = arith.constant 0 : index
    %16 = vector.load %arg6[%c1_32, %c0_33, %c0_34] : memref<18x18x4xbf16, #tpu.memory_space<vmem>>, vector<16x16x4xbf16>
    %c0_35 = arith.constant 0 : index
    %c0_36 = arith.constant 0 : index
    %c12 = arith.constant 12 : index
    %17 = vector.load %arg7[%c0_35, %c0_36, %c12] : memref<16x16x36xbf16, #tpu.memory_space<vmem>>, vector<16x16x4xbf16>
    tpu.vector_store %arg7[%c0_35, %c0_36, %c12], %16 {strides = array<i32>} : memref<16x16x36xbf16, #tpu.memory_space<vmem>>, vector<16x16x4xbf16>,
    %c1_37 = arith.constant 1 : index
    %c1_38 = arith.constant 1 : index
    %c0_39 = arith.constant 0 : index
    %18 = vector.load %arg6[%c1_37, %c1_38, %c0_39] : memref<18x18x4xbf16, #tpu.memory_space<vmem>>, vector<16x16x4xbf16>
    %c0_40 = arith.constant 0 : index
    %c0_41 = arith.constant 0 : index
    %c16 = arith.constant 16 : index
    %19 = vector.load %arg7[%c0_40, %c0_41, %c16] : memref<16x16x36xbf16, #tpu.memory_space<vmem>>, vector<16x16x4xbf16>
    tpu.vector_store %arg7[%c0_40, %c0_41, %c16], %18 {strides = array<i32>} : memref<16x16x36xbf16, #tpu.memory_space<vmem>>, vector<16x16x4xbf16>,
    %c1_42 = arith.constant 1 : index
    %c2_43 = arith.constant 2 : index
    %c0_44 = arith.constant 0 : index
    %20 = vector.load %arg6[%c1_42, %c2_43, %c0_44] : memref<18x18x4xbf16, #tpu.memory_space<vmem>>, vector<16x16x4xbf16>
    %c0_45 = arith.constant 0 : index
    %c0_46 = arith.constant 0 : index
    %c20 = arith.constant 20 : index
    %21 = vector.load %arg7[%c0_45, %c0_46, %c20] : memref<16x16x36xbf16, #tpu.memory_space<vmem>>, vector<16x16x4xbf16>
    tpu.vector_store %arg7[%c0_45, %c0_46, %c20], %20 {strides = array<i32>} : memref<16x16x36xbf16, #tpu.memory_space<vmem>>, vector<16x16x4xbf16>,
    %c2_47 = arith.constant 2 : index
    %c0_48 = arith.constant 0 : index
    %c0_49 = arith.constant 0 : index
    %22 = vector.load %arg6[%c2_47, %c0_48, %c0_49] : memref<18x18x4xbf16, #tpu.memory_space<vmem>>, vector<16x16x4xbf16>
    %c0_50 = arith.constant 0 : index
    %c0_51 = arith.constant 0 : index
    %c24 = arith.constant 24 : index
    %23 = vector.load %arg7[%c0_50, %c0_51, %c24] : memref<16x16x36xbf16, #tpu.memory_space<vmem>>, vector<16x16x4xbf16>
    tpu.vector_store %arg7[%c0_50, %c0_51, %c24], %22 {strides = array<i32>} : memref<16x16x36xbf16, #tpu.memory_space<vmem>>, vector<16x16x4xbf16>,
    %c2_52 = arith.constant 2 : index
    %c1_53 = arith.constant 1 : index
    %c0_54 = arith.constant 0 : index
    %24 = vector.load %arg6[%c2_52, %c1_53, %c0_54] : memref<18x18x4xbf16, #tpu.memory_space<vmem>>, vector<16x16x4xbf16>
    %c0_55 = arith.constant 0 : index
    %c0_56 = arith.constant 0 : index
    %c28 = arith.constant 28 : index
    %25 = vector.load %arg7[%c0_55, %c0_56, %c28] : memref<16x16x36xbf16, #tpu.memory_space<vmem>>, vector<16x16x4xbf16>
    tpu.vector_store %arg7[%c0_55, %c0_56, %c28], %24 {strides = array<i32>} : memref<16x16x36xbf16, #tpu.memory_space<vmem>>, vector<16x16x4xbf16>,
    %c2_57 = arith.constant 2 : index
    %c2_58 = arith.constant 2 : index
    %c0_59 = arith.constant 0 : index
    %26 = vector.load %arg6[%c2_57, %c2_58, %c0_59] : memref<18x18x4xbf16, #tpu.memory_space<vmem>>, vector<16x16x4xbf16>
    %c0_60 = arith.constant 0 : index
    %c0_61 = arith.constant 0 : index
    %c32 = arith.constant 32 : index
    %27 = vector.load %arg7[%c0_60, %c0_61, %c32] : memref<16x16x36xbf16, #tpu.memory_space<vmem>>, vector<16x16x4xbf16>
    tpu.vector_store %arg7[%c0_60, %c0_61, %c32], %26 {strides = array<i32>} : memref<16x16x36xbf16, #tpu.memory_space<vmem>>, vector<16x16x4xbf16>,
    %c0_62 = arith.constant 0 : index
    %c0_63 = arith.constant 0 : index
    %c0_64 = arith.constant 0 : index
    %28 = vector.load %arg7[%c0_62, %c0_63, %c0_64] : memref<16x16x36xbf16, #tpu.memory_space<vmem>>, vector<16x16x36xbf16>
    %29 = vector.shape_cast %28 : vector<16x16x36xbf16> to vector<256x36xbf16>
    %c0_65 = arith.constant 0 : index
    %c0_66 = arith.constant 0 : index
    %30 = vector.load %arg3[%c0_65, %c0_66] : memref<36x4xbf16, #tpu.memory_space<vmem>>, vector<36x4xbf16>
    %cst_67 = arith.constant dense<0.000000e+00> : vector<256x4xf32>
    %31 = tpu.matmul %29, %30, %cst_67 {dimension_numbers = #tpu.dot_dimension_numbers<[1], [0], [0], [1], [0, 0, 1, 1], [], []>} : vector<256x36xbf16>, vector<36x4xbf16>, vector<256x4xf32> -> vector<256x4xf32>
    %32 = vector.shape_cast %31 : vector<256x4xf32> to vector<16x16x4xf32>
    %33 = arith.truncf %32 : vector<16x16x4xf32> to vector<16x16x4xbf16>
    %c0_68 = arith.constant 0 : index
    %c0_69 = arith.constant 0 : index
    %c0_70 = arith.constant 0 : index
    %c0_71 = arith.constant 0 : index
    %34 = vector.load %arg4[%c0_68, %c0_69, %c0_70, %c0_71] : memref<1x16x16x4xbf16, #tpu.memory_space<vmem>>, vector<1x16x16x4xbf16>
    %35 = vector.shape_cast %34 : vector<1x16x16x4xbf16> to vector<16x16x4xbf16>
    %36 = vector.shape_cast %33 : vector<16x16x4xbf16> to vector<1x16x16x4xbf16>
    tpu.vector_store %arg4[%c0_68, %c0_69, %c0_70, %c0_71], %36 {strides = array<i32>} : memref<1x16x16x4xbf16, #tpu.memory_space<vmem>>, vector<1x16x16x4xbf16>,
    %cst_72 = arith.constant dense<0.000000e+00> : vector<4xf32>
    %37 = vector.multi_reduction <add>, %31, %cst_72 [0] : vector<256x4xf32> to vector<4xf32>
    %38 = vector.shape_cast %37 : vector<4xf32> to vector<1x4xf32>
    %39 = arith.mulf %31, %31 : vector<256x4xf32>
    %cst_73 = arith.constant dense<0.000000e+00> : vector<4xf32>
    %40 = vector.multi_reduction <add>, %39, %cst_73 [0] : vector<256x4xf32> to vector<4xf32>
    %41 = vector.shape_cast %40 : vector<4xf32> to vector<1x4xf32>
    %42 = tpu.concatenate %38, %41 in 0 : vector<1x4xf32>, vector<1x4xf32> -> vector<2x4xf32>
    %43 = vector.shape_cast %42 : vector<2x4xf32> to vector<1x2x4xf32>
    %c0_74 = arith.constant 0 : index
    %c0_75 = arith.constant 0 : index
    %c0_76 = arith.constant 0 : index
    %44 = vector.load %arg5[%c0_74, %c0_75, %c0_76] : memref<1x2x4xf32, #tpu.memory_space<vmem>>, vector<1x2x4xf32>
    tpu.vector_store %arg5[%c0_74, %c0_75, %c0_76], %43 {strides = array<i32>} : memref<1x2x4xf32, #tpu.memory_space<vmem>>, vector<1x2x4xf32>,
    return
  }
  func.func @transform_0(%arg0: i32, %arg1: i32) -> (i32, i32, i32, i32) {
    %c0_i32 = arith.constant 0 : i32
    %c0_i32_0 = arith.constant 0 : i32
    %c0_i32_1 = arith.constant 0 : i32
    %c0_i32_2 = arith.constant 0 : i32
    return %arg0, %c0_i32, %c0_i32_0, %c0_i32_1 : i32, i32, i32, i32
  }
  func.func @transform_1(%arg0: i32, %arg1: i32) -> (i32, i32) {
    %c0_i32 = arith.constant 0 : i32
    %c0_i32_0 = arith.constant 0 : i32
    return %c0_i32, %arg1 : i32, i32
  }
  func.func @transform_2(%arg0: i32, %arg1: i32) -> (i32, i32, i32, i32) {
    %c0_i32 = arith.constant 0 : i32
    %c0_i32_0 = arith.constant 0 : i32
    %c0_i32_1 = arith.constant 0 : i32
    return %arg0, %c0_i32, %c0_i32_0, %arg1 : i32, i32, i32, i32
  }
  func.func @transform_3(%arg0: i32, %arg1: i32) -> (i32, i32, i32) {
    %c0_i32 = arith.constant 0 : i32
    %c0_i32_0 = arith.constant 0 : i32
    return %arg0, %c0_i32, %arg1 : i32, i32, i32
  }
}

module attributes {stable_mosaic.version = 11 : i64} {
  func.func @_bn_residual_relu_kernel(%arg0: i32, %arg1: i32, %arg2: memref<1x16x16x4xbf16, #tpu.memory_space<vmem>>, %arg3: memref<1x4xf32, #tpu.memory_space<vmem>>, %arg4: memref<1x4xf32, #tpu.memory_space<vmem>>, %arg5: memref<1x16x16x4xf32, #tpu.memory_space<vmem>>, %arg6: memref<1x16x16x4xf32, #tpu.memory_space<vmem>>) attributes {dimension_semantics = [#tpu.dimension_semantics<parallel>, #tpu.dimension_semantics<parallel>], iteration_bounds = array<i64: 2, 1>, scalar_prefetch = 0 : i64, scratch_operands = 0 : i64, tpu.core_type = #tpu.core_type<tc>, window_params = [{transform_indices = @transform_0, window_bounds = array<i64: 1, 16, 16, 4>}, {transform_indices = @transform_1, window_bounds = array<i64: 1, 4>}, {transform_indices = @transform_2, window_bounds = array<i64: 1, 4>}, {transform_indices = @transform_3, window_bounds = array<i64: 1, 16, 16, 4>}, {transform_indices = @transform_4, window_bounds = array<i64: 1, 16, 16, 4>}]} {
    %c0 = arith.constant 0 : index
    %c0_0 = arith.constant 0 : index
    %c0_1 = arith.constant 0 : index
    %c0_2 = arith.constant 0 : index
    %0 = vector.load %arg2[%c0, %c0_0, %c0_1, %c0_2] : memref<1x16x16x4xbf16, #tpu.memory_space<vmem>>, vector<1x16x16x4xbf16>
    %1 = vector.shape_cast %0 : vector<1x16x16x4xbf16> to vector<16x16x4xbf16>
    %2 = arith.extf %1 : vector<16x16x4xbf16> to vector<16x16x4xf32>
    %c0_3 = arith.constant 0 : index
    %c0_4 = arith.constant 0 : index
    %3 = vector.load %arg3[%c0_3, %c0_4] : memref<1x4xf32, #tpu.memory_space<vmem>>, vector<1x4xf32>
    %4 = vector.shape_cast %3 : vector<1x4xf32> to vector<1x1x4xf32>
    %5 = vector.broadcast %4 : vector<1x1x4xf32> to vector<16x16x4xf32>
    %6 = arith.mulf %2, %5 : vector<16x16x4xf32>
    %c0_5 = arith.constant 0 : index
    %c0_6 = arith.constant 0 : index
    %7 = vector.load %arg4[%c0_5, %c0_6] : memref<1x4xf32, #tpu.memory_space<vmem>>, vector<1x4xf32>
    %8 = vector.shape_cast %7 : vector<1x4xf32> to vector<1x1x4xf32>
    %9 = vector.broadcast %8 : vector<1x1x4xf32> to vector<16x16x4xf32>
    %10 = arith.addf %6, %9 : vector<16x16x4xf32>
    %c0_7 = arith.constant 0 : index
    %c0_8 = arith.constant 0 : index
    %c0_9 = arith.constant 0 : index
    %c0_10 = arith.constant 0 : index
    %11 = vector.load %arg5[%c0_7, %c0_8, %c0_9, %c0_10] : memref<1x16x16x4xf32, #tpu.memory_space<vmem>>, vector<1x16x16x4xf32>
    %12 = vector.shape_cast %11 : vector<1x16x16x4xf32> to vector<16x16x4xf32>
    %13 = arith.addf %10, %12 : vector<16x16x4xf32>
    %cst = arith.constant 0.000000e+00 : f32
    %14 = vector.broadcast %cst : f32 to vector<16x16x4xf32>
    %15 = arith.addf %13, %14 : vector<16x16x4xf32>
    %cst_11 = arith.constant 0.000000e+00 : f32
    %16 = vector.broadcast %cst_11 : f32 to vector<16x16x4xf32>
    %17 = arith.maximumf %15, %16 : vector<16x16x4xf32>
    %c0_12 = arith.constant 0 : index
    %c0_13 = arith.constant 0 : index
    %c0_14 = arith.constant 0 : index
    %c0_15 = arith.constant 0 : index
    %18 = vector.load %arg6[%c0_12, %c0_13, %c0_14, %c0_15] : memref<1x16x16x4xf32, #tpu.memory_space<vmem>>, vector<1x16x16x4xf32>
    %19 = vector.shape_cast %18 : vector<1x16x16x4xf32> to vector<16x16x4xf32>
    %20 = vector.shape_cast %17 : vector<16x16x4xf32> to vector<1x16x16x4xf32>
    tpu.vector_store %arg6[%c0_12, %c0_13, %c0_14, %c0_15], %20 {strides = array<i32>} : memref<1x16x16x4xf32, #tpu.memory_space<vmem>>, vector<1x16x16x4xf32>,
    return
  }
  func.func @transform_0(%arg0: i32, %arg1: i32) -> (i32, i32, i32, i32) {
    %c0_i32 = arith.constant 0 : i32
    %c0_i32_0 = arith.constant 0 : i32
    %c0_i32_1 = arith.constant 0 : i32
    return %arg0, %c0_i32, %c0_i32_0, %arg1 : i32, i32, i32, i32
  }
  func.func @transform_1(%arg0: i32, %arg1: i32) -> (i32, i32) {
    %c0_i32 = arith.constant 0 : i32
    %c0_i32_0 = arith.constant 0 : i32
    return %c0_i32, %arg1 : i32, i32
  }
  func.func @transform_2(%arg0: i32, %arg1: i32) -> (i32, i32) {
    %c0_i32 = arith.constant 0 : i32
    %c0_i32_0 = arith.constant 0 : i32
    return %c0_i32, %arg1 : i32, i32
  }
  func.func @transform_3(%arg0: i32, %arg1: i32) -> (i32, i32, i32, i32) {
    %c0_i32 = arith.constant 0 : i32
    %c0_i32_0 = arith.constant 0 : i32
    %c0_i32_1 = arith.constant 0 : i32
    return %arg0, %c0_i32, %c0_i32_0, %arg1 : i32, i32, i32, i32
  }
  func.func @transform_4(%arg0: i32, %arg1: i32) -> (i32, i32, i32, i32) {
    %c0_i32 = arith.constant 0 : i32
    %c0_i32_0 = arith.constant 0 : i32
    %c0_i32_1 = arith.constant 0 : i32
    return %arg0, %c0_i32, %c0_i32_0, %arg1 : i32, i32, i32, i32
  }
}

module attributes {stable_mosaic.version = 11 : i64} {
  func.func @_conv3x3_kernel(%arg0: i32, %arg1: i32, %arg2: memref<1x16x16x4xbf16, #tpu.memory_space<vmem>>, %arg3: memref<36x4xbf16, #tpu.memory_space<vmem>>, %arg4: memref<1x4xf32, #tpu.memory_space<vmem>>, %arg5: memref<1x4xf32, #tpu.memory_space<vmem>>, %arg6: memref<1x16x16x4xbf16, #tpu.memory_space<vmem>>, %arg7: memref<1x2x4xf32, #tpu.memory_space<vmem>>, %arg8: memref<18x18x4xbf16, #tpu.memory_space<vmem>>, %arg9: memref<16x16x36xbf16, #tpu.memory_space<vmem>>) attributes {dimension_semantics = [#tpu.dimension_semantics<parallel>, #tpu.dimension_semantics<parallel>], iteration_bounds = array<i64: 2, 1>, scalar_prefetch = 0 : i64, scratch_operands = 2 : i64, tpu.core_type = #tpu.core_type<tc>, window_params = [{transform_indices = @transform_0, window_bounds = array<i64: 1, 16, 16, 4>}, {transform_indices = @transform_1, window_bounds = array<i64: 36, 4>}, {pipeline_mode = #tpu.pipeline_mode<synchronous>, transform_indices = @transform_2, window_bounds = array<i64: 1, 4>}, {pipeline_mode = #tpu.pipeline_mode<synchronous>, transform_indices = @transform_3, window_bounds = array<i64: 1, 4>}, {transform_indices = @transform_4, window_bounds = array<i64: 1, 16, 16, 4>}, {transform_indices = @transform_5, window_bounds = array<i64: 1, 2, 4>}]} {
    %c0 = arith.constant 0 : index
    %c0_0 = arith.constant 0 : index
    %c0_1 = arith.constant 0 : index
    %c0_2 = arith.constant 0 : index
    %0 = vector.load %arg2[%c0, %c0_0, %c0_1, %c0_2] : memref<1x16x16x4xbf16, #tpu.memory_space<vmem>>, vector<1x16x16x4xbf16>
    %1 = vector.shape_cast %0 : vector<1x16x16x4xbf16> to vector<16x16x4xbf16>
    %2 = arith.extf %1 : vector<16x16x4xbf16> to vector<16x16x4xf32>
    %c0_3 = arith.constant 0 : index
    %c0_4 = arith.constant 0 : index
    %3 = vector.load %arg4[%c0_3, %c0_4] : memref<1x4xf32, #tpu.memory_space<vmem>>, vector<1x4xf32>
    %4 = vector.shape_cast %3 : vector<1x4xf32> to vector<1x1x4xf32>
    %5 = vector.broadcast %4 : vector<1x1x4xf32> to vector<16x16x4xf32>
    %6 = arith.mulf %2, %5 : vector<16x16x4xf32>
    %c0_5 = arith.constant 0 : index
    %c0_6 = arith.constant 0 : index
    %7 = vector.load %arg5[%c0_5, %c0_6] : memref<1x4xf32, #tpu.memory_space<vmem>>, vector<1x4xf32>
    %8 = vector.shape_cast %7 : vector<1x4xf32> to vector<1x1x4xf32>
    %9 = vector.broadcast %8 : vector<1x1x4xf32> to vector<16x16x4xf32>
    %10 = arith.addf %6, %9 : vector<16x16x4xf32>
    %cst = arith.constant 0.000000e+00 : f32
    %11 = vector.broadcast %cst : f32 to vector<16x16x4xf32>
    %12 = arith.maximumf %10, %11 : vector<16x16x4xf32>
    %cst_7 = arith.constant 0.000000e+00 : bf16
    %13 = vector.broadcast %cst_7 : bf16 to vector<1x18x4xbf16>
    %cst_8 = arith.constant 0.000000e+00 : bf16
    %14 = vector.broadcast %cst_8 : bf16 to vector<18x1x4xbf16>
    %c0_9 = arith.constant 0 : index
    %c0_10 = arith.constant 0 : index
    %c0_11 = arith.constant 0 : index
    %15 = vector.load %arg8[%c0_9, %c0_10, %c0_11] : memref<18x18x4xbf16, #tpu.memory_space<vmem>>, vector<1x18x4xbf16>
    tpu.vector_store %arg8[%c0_9, %c0_10, %c0_11], %13 {strides = array<i32>} : memref<18x18x4xbf16, #tpu.memory_space<vmem>>, vector<1x18x4xbf16>,
    %c17 = arith.constant 17 : index
    %c0_12 = arith.constant 0 : index
    %c0_13 = arith.constant 0 : index
    %16 = vector.load %arg8[%c17, %c0_12, %c0_13] : memref<18x18x4xbf16, #tpu.memory_space<vmem>>, vector<1x18x4xbf16>
    tpu.vector_store %arg8[%c17, %c0_12, %c0_13], %13 {strides = array<i32>} : memref<18x18x4xbf16, #tpu.memory_space<vmem>>, vector<1x18x4xbf16>,
    %c0_14 = arith.constant 0 : index
    %c0_15 = arith.constant 0 : index
    %c0_16 = arith.constant 0 : index
    %17 = vector.load %arg8[%c0_14, %c0_15, %c0_16] : memref<18x18x4xbf16, #tpu.memory_space<vmem>>, vector<18x1x4xbf16>
    tpu.vector_store %arg8[%c0_14, %c0_15, %c0_16], %14 {strides = array<i32>} : memref<18x18x4xbf16, #tpu.memory_space<vmem>>, vector<18x1x4xbf16>,
    %c0_17 = arith.constant 0 : index
    %c17_18 = arith.constant 17 : index
    %c0_19 = arith.constant 0 : index
    %18 = vector.load %arg8[%c0_17, %c17_18, %c0_19] : memref<18x18x4xbf16, #tpu.memory_space<vmem>>, vector<18x1x4xbf16>
    tpu.vector_store %arg8[%c0_17, %c17_18, %c0_19], %14 {strides = array<i32>} : memref<18x18x4xbf16, #tpu.memory_space<vmem>>, vector<18x1x4xbf16>,
    %19 = arith.truncf %12 : vector<16x16x4xf32> to vector<16x16x4xbf16>
    %c1 = arith.constant 1 : index
    %c1_20 = arith.constant 1 : index
    %c0_21 = arith.constant 0 : index
    %20 = vector.load %arg8[%c1, %c1_20, %c0_21] : memref<18x18x4xbf16, #tpu.memory_space<vmem>>, vector<16x16x4xbf16>
    tpu.vector_store %arg8[%c1, %c1_20, %c0_21], %19 {strides = array<i32>} : memref<18x18x4xbf16, #tpu.memory_space<vmem>>, vector<16x16x4xbf16>,
    %c0_22 = arith.constant 0 : index
    %c0_23 = arith.constant 0 : index
    %c0_24 = arith.constant 0 : index
    %21 = vector.load %arg8[%c0_22, %c0_23, %c0_24] : memref<18x18x4xbf16, #tpu.memory_space<vmem>>, vector<16x16x4xbf16>
    %c0_25 = arith.constant 0 : index
    %c0_26 = arith.constant 0 : index
    %c0_27 = arith.constant 0 : index
    %22 = vector.load %arg9[%c0_25, %c0_26, %c0_27] : memref<16x16x36xbf16, #tpu.memory_space<vmem>>, vector<16x16x4xbf16>
    tpu.vector_store %arg9[%c0_25, %c0_26, %c0_27], %21 {strides = array<i32>} : memref<16x16x36xbf16, #tpu.memory_space<vmem>>, vector<16x16x4xbf16>,
    %c0_28 = arith.constant 0 : index
    %c1_29 = arith.constant 1 : index
    %c0_30 = arith.constant 0 : index
    %23 = vector.load %arg8[%c0_28, %c1_29, %c0_30] : memref<18x18x4xbf16, #tpu.memory_space<vmem>>, vector<16x16x4xbf16>
    %c0_31 = arith.constant 0 : index
    %c0_32 = arith.constant 0 : index
    %c4 = arith.constant 4 : index
    %24 = vector.load %arg9[%c0_31, %c0_32, %c4] : memref<16x16x36xbf16, #tpu.memory_space<vmem>>, vector<16x16x4xbf16>
    tpu.vector_store %arg9[%c0_31, %c0_32, %c4], %23 {strides = array<i32>} : memref<16x16x36xbf16, #tpu.memory_space<vmem>>, vector<16x16x4xbf16>,
    %c0_33 = arith.constant 0 : index
    %c2 = arith.constant 2 : index
    %c0_34 = arith.constant 0 : index
    %25 = vector.load %arg8[%c0_33, %c2, %c0_34] : memref<18x18x4xbf16, #tpu.memory_space<vmem>>, vector<16x16x4xbf16>
    %c0_35 = arith.constant 0 : index
    %c0_36 = arith.constant 0 : index
    %c8 = arith.constant 8 : index
    %26 = vector.load %arg9[%c0_35, %c0_36, %c8] : memref<16x16x36xbf16, #tpu.memory_space<vmem>>, vector<16x16x4xbf16>
    tpu.vector_store %arg9[%c0_35, %c0_36, %c8], %25 {strides = array<i32>} : memref<16x16x36xbf16, #tpu.memory_space<vmem>>, vector<16x16x4xbf16>,
    %c1_37 = arith.constant 1 : index
    %c0_38 = arith.constant 0 : index
    %c0_39 = arith.constant 0 : index
    %27 = vector.load %arg8[%c1_37, %c0_38, %c0_39] : memref<18x18x4xbf16, #tpu.memory_space<vmem>>, vector<16x16x4xbf16>
    %c0_40 = arith.constant 0 : index
    %c0_41 = arith.constant 0 : index
    %c12 = arith.constant 12 : index
    %28 = vector.load %arg9[%c0_40, %c0_41, %c12] : memref<16x16x36xbf16, #tpu.memory_space<vmem>>, vector<16x16x4xbf16>
    tpu.vector_store %arg9[%c0_40, %c0_41, %c12], %27 {strides = array<i32>} : memref<16x16x36xbf16, #tpu.memory_space<vmem>>, vector<16x16x4xbf16>,
    %c1_42 = arith.constant 1 : index
    %c1_43 = arith.constant 1 : index
    %c0_44 = arith.constant 0 : index
    %29 = vector.load %arg8[%c1_42, %c1_43, %c0_44] : memref<18x18x4xbf16, #tpu.memory_space<vmem>>, vector<16x16x4xbf16>
    %c0_45 = arith.constant 0 : index
    %c0_46 = arith.constant 0 : index
    %c16 = arith.constant 16 : index
    %30 = vector.load %arg9[%c0_45, %c0_46, %c16] : memref<16x16x36xbf16, #tpu.memory_space<vmem>>, vector<16x16x4xbf16>
    tpu.vector_store %arg9[%c0_45, %c0_46, %c16], %29 {strides = array<i32>} : memref<16x16x36xbf16, #tpu.memory_space<vmem>>, vector<16x16x4xbf16>,
    %c1_47 = arith.constant 1 : index
    %c2_48 = arith.constant 2 : index
    %c0_49 = arith.constant 0 : index
    %31 = vector.load %arg8[%c1_47, %c2_48, %c0_49] : memref<18x18x4xbf16, #tpu.memory_space<vmem>>, vector<16x16x4xbf16>
    %c0_50 = arith.constant 0 : index
    %c0_51 = arith.constant 0 : index
    %c20 = arith.constant 20 : index
    %32 = vector.load %arg9[%c0_50, %c0_51, %c20] : memref<16x16x36xbf16, #tpu.memory_space<vmem>>, vector<16x16x4xbf16>
    tpu.vector_store %arg9[%c0_50, %c0_51, %c20], %31 {strides = array<i32>} : memref<16x16x36xbf16, #tpu.memory_space<vmem>>, vector<16x16x4xbf16>,
    %c2_52 = arith.constant 2 : index
    %c0_53 = arith.constant 0 : index
    %c0_54 = arith.constant 0 : index
    %33 = vector.load %arg8[%c2_52, %c0_53, %c0_54] : memref<18x18x4xbf16, #tpu.memory_space<vmem>>, vector<16x16x4xbf16>
    %c0_55 = arith.constant 0 : index
    %c0_56 = arith.constant 0 : index
    %c24 = arith.constant 24 : index
    %34 = vector.load %arg9[%c0_55, %c0_56, %c24] : memref<16x16x36xbf16, #tpu.memory_space<vmem>>, vector<16x16x4xbf16>
    tpu.vector_store %arg9[%c0_55, %c0_56, %c24], %33 {strides = array<i32>} : memref<16x16x36xbf16, #tpu.memory_space<vmem>>, vector<16x16x4xbf16>,
    %c2_57 = arith.constant 2 : index
    %c1_58 = arith.constant 1 : index
    %c0_59 = arith.constant 0 : index
    %35 = vector.load %arg8[%c2_57, %c1_58, %c0_59] : memref<18x18x4xbf16, #tpu.memory_space<vmem>>, vector<16x16x4xbf16>
    %c0_60 = arith.constant 0 : index
    %c0_61 = arith.constant 0 : index
    %c28 = arith.constant 28 : index
    %36 = vector.load %arg9[%c0_60, %c0_61, %c28] : memref<16x16x36xbf16, #tpu.memory_space<vmem>>, vector<16x16x4xbf16>
    tpu.vector_store %arg9[%c0_60, %c0_61, %c28], %35 {strides = array<i32>} : memref<16x16x36xbf16, #tpu.memory_space<vmem>>, vector<16x16x4xbf16>,
    %c2_62 = arith.constant 2 : index
    %c2_63 = arith.constant 2 : index
    %c0_64 = arith.constant 0 : index
    %37 = vector.load %arg8[%c2_62, %c2_63, %c0_64] : memref<18x18x4xbf16, #tpu.memory_space<vmem>>, vector<16x16x4xbf16>
    %c0_65 = arith.constant 0 : index
    %c0_66 = arith.constant 0 : index
    %c32 = arith.constant 32 : index
    %38 = vector.load %arg9[%c0_65, %c0_66, %c32] : memref<16x16x36xbf16, #tpu.memory_space<vmem>>, vector<16x16x4xbf16>
    tpu.vector_store %arg9[%c0_65, %c0_66, %c32], %37 {strides = array<i32>} : memref<16x16x36xbf16, #tpu.memory_space<vmem>>, vector<16x16x4xbf16>,
    %c0_67 = arith.constant 0 : index
    %c0_68 = arith.constant 0 : index
    %c0_69 = arith.constant 0 : index
    %39 = vector.load %arg9[%c0_67, %c0_68, %c0_69] : memref<16x16x36xbf16, #tpu.memory_space<vmem>>, vector<16x16x36xbf16>
    %40 = vector.shape_cast %39 : vector<16x16x36xbf16> to vector<256x36xbf16>
    %c0_70 = arith.constant 0 : index
    %c0_71 = arith.constant 0 : index
    %41 = vector.load %arg3[%c0_70, %c0_71] : memref<36x4xbf16, #tpu.memory_space<vmem>>, vector<36x4xbf16>
    %cst_72 = arith.constant dense<0.000000e+00> : vector<256x4xf32>
    %42 = tpu.matmul %40, %41, %cst_72 {dimension_numbers = #tpu.dot_dimension_numbers<[1], [0], [0], [1], [0, 0, 1, 1], [], []>} : vector<256x36xbf16>, vector<36x4xbf16>, vector<256x4xf32> -> vector<256x4xf32>
    %43 = vector.shape_cast %42 : vector<256x4xf32> to vector<16x16x4xf32>
    %44 = arith.truncf %43 : vector<16x16x4xf32> to vector<16x16x4xbf16>
    %c0_73 = arith.constant 0 : index
    %c0_74 = arith.constant 0 : index
    %c0_75 = arith.constant 0 : index
    %c0_76 = arith.constant 0 : index
    %45 = vector.load %arg6[%c0_73, %c0_74, %c0_75, %c0_76] : memref<1x16x16x4xbf16, #tpu.memory_space<vmem>>, vector<1x16x16x4xbf16>
    %46 = vector.shape_cast %45 : vector<1x16x16x4xbf16> to vector<16x16x4xbf16>
    %47 = vector.shape_cast %44 : vector<16x16x4xbf16> to vector<1x16x16x4xbf16>
    tpu.vector_store %arg6[%c0_73, %c0_74, %c0_75, %c0_76], %47 {strides = array<i32>} : memref<1x16x16x4xbf16, #tpu.memory_space<vmem>>, vector<1x16x16x4xbf16>,
    %cst_77 = arith.constant dense<0.000000e+00> : vector<4xf32>
    %48 = vector.multi_reduction <add>, %42, %cst_77 [0] : vector<256x4xf32> to vector<4xf32>
    %49 = vector.shape_cast %48 : vector<4xf32> to vector<1x4xf32>
    %50 = arith.mulf %42, %42 : vector<256x4xf32>
    %cst_78 = arith.constant dense<0.000000e+00> : vector<4xf32>
    %51 = vector.multi_reduction <add>, %50, %cst_78 [0] : vector<256x4xf32> to vector<4xf32>
    %52 = vector.shape_cast %51 : vector<4xf32> to vector<1x4xf32>
    %53 = tpu.concatenate %49, %52 in 0 : vector<1x4xf32>, vector<1x4xf32> -> vector<2x4xf32>
    %54 = vector.shape_cast %53 : vector<2x4xf32> to vector<1x2x4xf32>
    %c0_79 = arith.constant 0 : index
    %c0_80 = arith.constant 0 : index
    %c0_81 = arith.constant 0 : index
    %55 = vector.load %arg7[%c0_79, %c0_80, %c0_81] : memref<1x2x4xf32, #tpu.memory_space<vmem>>, vector<1x2x4xf32>
    tpu.vector_store %arg7[%c0_79, %c0_80, %c0_81], %54 {strides = array<i32>} : memref<1x2x4xf32, #tpu.memory_space<vmem>>, vector<1x2x4xf32>,
    return
  }
  func.func @transform_0(%arg0: i32, %arg1: i32) -> (i32, i32, i32, i32) {
    %c0_i32 = arith.constant 0 : i32
    %c0_i32_0 = arith.constant 0 : i32
    %c0_i32_1 = arith.constant 0 : i32
    %c0_i32_2 = arith.constant 0 : i32
    return %arg0, %c0_i32, %c0_i32_0, %c0_i32_1 : i32, i32, i32, i32
  }
  func.func @transform_1(%arg0: i32, %arg1: i32) -> (i32, i32) {
    %c0_i32 = arith.constant 0 : i32
    %c0_i32_0 = arith.constant 0 : i32
    return %c0_i32, %arg1 : i32, i32
  }
  func.func @transform_2(%arg0: i32, %arg1: i32) -> (i32, i32) {
    %c0_i32 = arith.constant 0 : i32
    %c0_i32_0 = arith.constant 0 : i32
    %c0_i32_1 = arith.constant 0 : i32
    return %c0_i32, %c0_i32_0 : i32, i32
  }
  func.func @transform_3(%arg0: i32, %arg1: i32) -> (i32, i32) {
    %c0_i32 = arith.constant 0 : i32
    %c0_i32_0 = arith.constant 0 : i32
    %c0_i32_1 = arith.constant 0 : i32
    return %c0_i32, %c0_i32_0 : i32, i32
  }
  func.func @transform_4(%arg0: i32, %arg1: i32) -> (i32, i32, i32, i32) {
    %c0_i32 = arith.constant 0 : i32
    %c0_i32_0 = arith.constant 0 : i32
    %c0_i32_1 = arith.constant 0 : i32
    return %arg0, %c0_i32, %c0_i32_0, %arg1 : i32, i32, i32, i32
  }
  func.func @transform_5(%arg0: i32, %arg1: i32) -> (i32, i32, i32) {
    %c0_i32 = arith.constant 0 : i32
    %c0_i32_0 = arith.constant 0 : i32
    return %arg0, %c0_i32, %arg1 : i32, i32, i32
  }
}

</mosaic_0001>

<llo_original>
// kernel: basic_block_forward.5
$region0: #{basic_block_forward.5}
  #allocation0 [shape = 'u32[]', space=smem, size = 0x4, offset = 0x4, fixed_abs, tag = 'smem constant byte address 0x4 - core index']
  #allocation1 [shape = 'u32[144,128]{1,0:T(1,128)}', space=vmem, size = 0x12000, scoped, tag = 'internal scratch']
  %s0 = inlined_call_operand.vmem [shape: bf16[2,16,16,4], index: 0, kind: input, shape index: {}]
  %s1 = inlined_call_operand.vmem [shape: f32[1,4], index: 1, kind: input, shape index: {}]
  %s2 = inlined_call_operand.vmem [shape: f32[1,4], index: 2, kind: input, shape index: {}]
  %s3 = inlined_call_operand.vmem [shape: f32[2,16,16,4], index: 3, kind: input, shape index: {}]
  %s4 = inlined_call_operand.vmem [shape: f32[2,16,16,4], index: 4, kind: output, shape index: {}]
  %s5 = sld [smem:[#allocation0]]
  $region49: #{basic_block_forward.5} parent=0
    _
  %s7 = ssub.s32 1, %s5
  %s8 = scalar_select 0, %s7, %s5
  loop: start=0, step=1, limit=4
  $region2: #{basic_block_forward.5} parent=0 // loop_pre_header
    _
  $region3: #{basic_block_forward.5} parent=0 // loop_header
    %s10 = sphi 0, %s14
    %p11 = scmp.ge.s32.totalorder %s10, 4
    %s17 = sphi 0, %s29
    %s18 = sphi 0, %s25
    %s19 = sphi 0, %s17
    %s20 = sphi 0, %s18
    %s21 = sphi 0, %s19
    %s22 = sphi 0, %s20
    %s34 = sphi 0, %s36
    %s37 = sphi 0, %s34
    %s38 = sphi 0, %s37
    %s54 = sphi 0, %s38
    %s60 = sphi 0, %s62
    %s63 = sphi 0, %s60
    %s64 = sphi 0, %s63
    %s80 = sphi 0, %s64
    %s86 = sphi 0, %s88
    %s89 = sphi 0, %s86
    %s90 = sphi 0, %s89
    %s106 = sphi 0, %s90
    %s114 = sphi 0, %s116
    %s117 = sphi 0, %s114
    %s118 = sphi 0, %s117
    %s134 = sphi 0, %s118
    %s142 = sphi 0, %s144
    %s145 = sphi 0, %s142
    %s146 = sphi 0, %s145
    %s162 = sphi 0, %s146
  $region4: #{basic_block_forward.5} parent=0 // loop_header_branch
    %13 = sbr.rel (%p11) target = $region8
  $region5: #{basic_block_forward.5} parent=0 // loop_body
    %s15 = ssub.s32 %s10, 1
    %s16 = ssub.s32 %s10, 2
    %s23 = sadd.s32 1, %s18
    %p24 = scmp.ge.s32.totalorder %s23, 1
    %s25 = scalar_select %p24, 0, %s23
    %s26 = sadd.s32 1, %s17
    %s27 = scalar_select %p24, %s26, %s17
    %p28 = scmp.ge.s32.totalorder %s27, 2
    %s29 = scalar_select %p28, 0, %s27
    %s30 = ssub.s32 %s17, %s29
    %s31 = ssub.s32 %s18, %s25
    %s32 = sor.u32 %s30, %s31
    %p33 = scmp.eq.s32.totalorder %s32, 0
    %s35 = sadd.s32 %s34, 1
    %s36 = scalar_select %p33, %s34, %s35
    %p39 = pneg %p33
    %p40 = scmp.eq.s32.totalorder %s10, 1
    %p41 = por %p39, %p40
    %p42 = scmp.ne.s32.totalorder %s34, %s37
    %p43 = scmp.eq.s32.totalorder %s10, 0
    %p44 = por %p42, %p43
    %p45 = scmp.ne.s32.totalorder %s34, %s37
    %p46 = scmp.eq.s32.totalorder %s15, 1
    %p47 = por %p45, %p46
    %p48 = scmp.ne.s32.totalorder %s37, %s38
    %p49 = scmp.eq.s32.totalorder %s15, 0
    %p50 = por %p48, %p49
    %p51 = scmp.ne.s32.totalorder %s37, %s38
    %p52 = scmp.eq.s32.totalorder %s16, 1
    %p53 = por %p51, %p52
    %p55 = scmp.ne.s32.totalorder %s38, %s54
    %p56 = scmp.eq.s32.totalorder %s16, 0
    %p57 = por %p55, %p56
    %s58 = ssub.s32 %s18, %s25
    %p59 = scmp.eq.s32.totalorder %s58, 0
    %s61 = sadd.s32 %s60, 1
    %s62 = scalar_select %p59, %s60, %s61
    %p65 = pneg %p59
    %p66 = scmp.eq.s32.totalorder %s10, 1
    %p67 = por %p65, %p66
    %p68 = scmp.ne.s32.totalorder %s60, %s63
    %p69 = scmp.eq.s32.totalorder %s10, 0
    %p70 = por %p68, %p69
    %p71 = scmp.ne.s32.totalorder %s60, %s63
    %p72 = scmp.eq.s32.totalorder %s15, 1
    %p73 = por %p71, %p72
    %p74 = scmp.ne.s32.totalorder %s63, %s64
    %p75 = scmp.eq.s32.totalorder %s15, 0
    %p76 = por %p74, %p75
    %p77 = scmp.ne.s32.totalorder %s63, %s64
    %p78 = scmp.eq.s32.totalorder %s16, 1
    %p79 = por %p77, %p78
    %p81 = scmp.ne.s32.totalorder %s64, %s80
    %p82 = scmp.eq.s32.totalorder %s16, 0
    %p83 = por %p81, %p82
    %s84 = ssub.s32 %s18, %s25
    %p85 = scmp.eq.s32.totalorder %s84, 0
    %s87 = sadd.s32 %s86, 1
    %s88 = scalar_select %p85, %s86, %s87
    %p91 = pneg %p85
    %p92 = scmp.eq.s32.totalorder %s10, 1
    %p93 = por %p91, %p92
    %p94 = scmp.ne.s32.totalorder %s86, %s89
    %p95 = scmp.eq.s32.totalorder %s10, 0
    %p96 = por %p94, %p95
    %p97 = scmp.ne.s32.totalorder %s86, %s89
    %p98 = scmp.eq.s32.totalorder %s15, 1
    %p99 = por %p97, %p98
    %p100 = scmp.ne.s32.totalorder %s89, %s90
    %p101 = scmp.eq.s32.totalorder %s15, 0
    %p102 = por %p100, %p101
    %p103 = scmp.ne.s32.totalorder %s89, %s90
    %p104 = scmp.eq.s32.totalorder %s16, 1
    %p105 = por %p103, %p104
    %p107 = scmp.ne.s32.totalorder %s90, %s106
    %p108 = scmp.eq.s32.totalorder %s16, 0
    %p109 = por %p107, %p108
    %s110 = ssub.s32 %s17, %s29
    %s111 = ssub.s32 %s18, %s25
    %s112 = sor.u32 %s110, %s111
    %p113 = scmp.eq.s32.totalorder %s112, 0
    %s115 = sadd.s32 %s114, 1
    %s116 = scalar_select %p113, %s114, %s115
    %p119 = pneg %p113
    %p120 = scmp.eq.s32.totalorder %s10, 1
    %p121 = por %p119, %p120
    %p122 = scmp.ne.s32.totalorder %s114, %s117
    %p123 = scmp.eq.s32.totalorder %s10, 0
    %p124 = por %p122, %p123
    %p125 = scmp.ne.s32.totalorder %s114, %s117
    %p126 = scmp.eq.s32.totalorder %s15, 1
    %p127 = por %p125, %p126
    %p128 = scmp.ne.s32.totalorder %s117, %s118
    %p129 = scmp.eq.s32.totalorder %s15, 0
    %p130 = por %p128, %p129
    %p131 = scmp.ne.s32.totalorder %s117, %s118
    %p132 = scmp.eq.s32.totalorder %s16, 1
    %p133 = por %p131, %p132
    %p135 = scmp.ne.s32.totalorder %s118, %s134
    %p136 = scmp.eq.s32.totalorder %s16, 0
    %p137 = por %p135, %p136
    %s138 = ssub.s32 %s17, %s29
    %s139 = ssub.s32 %s18, %s25
    %s140 = sor.u32 %s138, %s139
    %p141 = scmp.eq.s32.totalorder %s140, 0
    %s143 = sadd.s32 %s142, 1
    %s144 = scalar_select %p141, %s142, %s143
    %p147 = pneg %p141
    %p148 = scmp.eq.s32.totalorder %s10, 1
    %p149 = por %p147, %p148
    %p150 = scmp.ne.s32.totalorder %s142, %s145
    %p151 = scmp.eq.s32.totalorder %s10, 0
    %p152 = por %p150, %p151
    %p153 = scmp.ne.s32.totalorder %s142, %s145
    %p154 = scmp.eq.s32.totalorder %s15, 1
    %p155 = por %p153, %p154
    %p156 = scmp.ne.s32.totalorder %s145, %s146
    %p157 = scmp.eq.s32.totalorder %s15, 0
    %p158 = por %p156, %p157
    %p159 = scmp.ne.s32.totalorder %s145, %s146
    %p160 = scmp.eq.s32.totalorder %s16, 1
    %p161 = por %p159, %p160
    %p163 = scmp.ne.s32.totalorder %s146, %s162
    %p164 = scmp.eq.s32.totalorder %s16, 0
    %p165 = por %p163, %p164
    %p166 = scmp.le.s32.totalorder 1, %s10
    %p167 = scmp.lt.s32.totalorder %s10, 3
    %p168 = pnand %p166, %p167
    %p169 = pneg %p168
    // Predicated region
    $region9: #{basic_block_forward.5} parent=5 // pred_check
      _
    $region10: #{basic_block_forward.5} parent=5 // pred_check_branch
      %171 = sbr.rel (%p168) target = $region12
    $region11: #{basic_block_forward.5} parent=5 // pred_region
      %s172 = ssub.s32 %s10, 1
      // Predicated region
      $region13: #{basic_block_forward.5} parent=11 // pred_check
        %p173 = pneg %p76
      $region14: #{basic_block_forward.5} parent=11 // pred_check_branch
        %175 = sbr.rel (%p173) target = $region16
      $region15: #{basic_block_forward.5} parent=11 // pred_region
        %p176 = scmp.lt.s32.totalorder %s20, 0
        %s177 = scalar_select %p176, %s20, 0
        %s178 = scalar_lea.vmem %s1, %s177
      $region16: #{basic_block_forward.5} parent=11 // pred_fallthru
        _
      // Predicated region
      $region17: #{basic_block_forward.5} parent=11 // pred_check
        %p179 = pneg %p102
      $region18: #{basic_block_forward.5} parent=11 // pred_check_branch
        %181 = sbr.rel (%p179) target = $region20
      $region19: #{basic_block_forward.5} parent=11 // pred_region
        %p182 = scmp.lt.s32.totalorder %s20, 0
        %s183 = scalar_select %p182, %s20, 0
        %s184 = scalar_lea.vmem %s2, %s183
      $region20: #{basic_block_forward.5} parent=11 // pred_fallthru
        _
    $region12: #{basic_block_forward.5} parent=5 // pred_fallthru
      _
    %p185 = scmp.lt.s32.totalorder %s10, 2
    // Predicated region
    $region21: #{basic_block_forward.5} parent=5 // pred_check
      %p186 = pneg %p185
    $region22: #{basic_block_forward.5} parent=5 // pred_check_branch
      %188 = sbr.rel (%p186) target = $region24
    $region23: #{basic_block_forward.5} parent=5 // pred_region
      // Predicated region
      $region25: #{basic_block_forward.5} parent=23 // pred_check
        %p189 = pneg %p44
      $region26: #{basic_block_forward.5} parent=23 // pred_check_branch
        %191 = sbr.rel (%p189) target = $region28
      $region27: #{basic_block_forward.5} parent=23 // pred_region
        %p192 = scmp.lt.s32.totalorder %s17, 1
        %s193 = scalar_select %p192, %s17, 1
        %p194 = scmp.lt.s32.totalorder %s18, 0
        %s195 = scalar_select %p194, %s18, 0
        %s196 = smul.addr %s193, 32
        %s197 = sadd.s32 %s195, %s196
        %s198 = smul.addr %s197, 4
        %s199 = scalar_lea.vmem %s0, %s198
      $region28: #{basic_block_forward.5} parent=23 // pred_fallthru
        _
      // Predicated region
      $region29: #{basic_block_forward.5} parent=23 // pred_check
        %p200 = pneg %p124
      $region30: #{basic_block_forward.5} parent=23 // pred_check_branch
        %202 = sbr.rel (%p200) target = $region32
      $region31: #{basic_block_forward.5} parent=23 // pred_region
        %p203 = scmp.lt.s32.totalorder %s17, 1
        %s204 = scalar_select %p203, %s17, 1
        %p205 = scmp.lt.s32.totalorder %s18, 0
        %s206 = scalar_select %p205, %s18, 0
        %s207 = smul.addr %s204, 32
        %s208 = sadd.s32 %s206, %s207
        %s209 = smul.addr %s208, 8
        %s210 = scalar_lea.vmem %s3, %s209
      $region32: #{basic_block_forward.5} parent=23 // pred_fallthru
        _
    $region24: #{basic_block_forward.5} parent=5 // pred_fallthru
      _
    %p211 = scmp.le.s32.totalorder 1, %s10
    %p212 = scmp.lt.s32.totalorder %s10, 3
    %p213 = pnand %p211, %p212
    %p214 = pneg %p213
    // Predicated region
    $region33: #{basic_block_forward.5} parent=5 // pred_check
      _
    $region34: #{basic_block_forward.5} parent=5 // pred_check_branch
      %216 = sbr.rel (%p213) target = $region36
    $region35: #{basic_block_forward.5} parent=5 // pred_region
      %s217 = ssub.s32 %s10, 1
      %p218 = scmp.lt.s32.totalorder %s19, 1
      %s219 = scalar_select %p218, %s19, 1
      %p220 = scmp.lt.s32.totalorder %s20, 0
      %s221 = scalar_select %p220, %s20, 0
      %s222 = smul.addr %s219, 32
      %s223 = sadd.s32 %s221, %s222
      %s224 = smul.addr %s223, 4
      %s225 = scalar_lea.vmem %s0, %s224
      %p226 = pneg %p50
      %p227 = pneg %p47
      %p228 = scmp.lt.s32.totalorder %s20, 0
      %s229 = scalar_select %p228, %s20, 0
      %s230 = scalar_lea.vmem %s1, %s229
      %p231 = pneg %p76
      %p232 = pneg %p73
      %p233 = scmp.lt.s32.totalorder %s20, 0
      %s234 = scalar_select %p233, %s20, 0
      %s235 = scalar_lea.vmem %s2, %s234
      %p236 = pneg %p102
      %p237 = pneg %p99
      %p238 = scmp.lt.s32.totalorder %s19, 1
      %s239 = scalar_select %p238, %s19, 1
      %p240 = scmp.lt.s32.totalorder %s20, 0
      %s241 = scalar_select %p240, %s20, 0
      %s242 = smul.addr %s239, 32
      %s243 = sadd.s32 %s241, %s242
      %s244 = smul.addr %s243, 8
      %s245 = scalar_lea.vmem %s3, %s244
      %p246 = pneg %p130
      %p247 = pneg %p127
      %p248 = pneg %p158
      %p249 = pneg %p155
      %p250 = scmp.lt.s32.totalorder %s19, 1
      %s251 = scalar_select %p250, %s19, 1
      %p252 = scmp.lt.s32.totalorder %s20, 0
      %s253 = scalar_select %p252, %s20, 0
      %s254 = smul.addr %s251, 32
      %s255 = sadd.s32 %s253, %s254
      %s256 = smul.addr %s255, 8
      %s257 = scalar_lea.vmem %s4, %s256
      %p258 = scmp.lt.s32.totalorder %s19, 1
      %s259 = scalar_select %p258, %s19, 1
      %p260 = scmp.lt.s32.totalorder %s20, 0
      %s261 = scalar_select %p260, %s20, 0
      %s262 = smul.addr %s259, 32
      %s263 = sadd.s32 %s261, %s262
      %s264 = smul.addr %s263, 4
      %s265 = scalar_lea.vmem %s0, %s264
      %p266 = scmp.lt.s32.totalorder %s20, 0
      %s267 = scalar_select %p266, %s20, 0
      %s268 = scalar_lea.vmem %s1, %s267
      %p269 = scmp.lt.s32.totalorder %s20, 0
      %s270 = scalar_select %p269, %s20, 0
      %s271 = scalar_lea.vmem %s2, %s270
      %p272 = scmp.lt.s32.totalorder %s19, 1
      %s273 = scalar_select %p272, %s19, 1
      %p274 = scmp.lt.s32.totalorder %s20, 0
      %s275 = scalar_select %p274, %s20, 0
      %s276 = smul.addr %s273, 32
      %s277 = sadd.s32 %s275, %s276
      %s278 = smul.addr %s277, 8
      %s279 = scalar_lea.vmem %s3, %s278
      %p280 = scmp.lt.s32.totalorder %s19, 1
      %s281 = scalar_select %p280, %s19, 1
      %p282 = scmp.lt.s32.totalorder %s20, 0
      %s283 = scalar_select %p282, %s20, 0
      %s284 = smul.addr %s281, 32
      %s285 = sadd.s32 %s283, %s284
      %s286 = smul.addr %s285, 8
      %s287 = scalar_lea.vmem %s4, %s286
      %v288 = vld [vmem:[%s265] sm:$0xf]
      %v289 = vld [vmem:[%s265 + $0x4] sm:$0xf]
      %v290 = vld [vmem:[%s265 + $0x8] sm:$0xf]
      %v291 = vld [vmem:[%s265 + $0xc] sm:$0xf]
      %v292 = vld [vmem:[%s265 + $0x10] sm:$0xf]
      %v293 = vld [vmem:[%s265 + $0x14] sm:$0xf]
      %v294 = vld [vmem:[%s265 + $0x18] sm:$0xf]
      %v295 = vld [vmem:[%s265 + $0x1c] sm:$0xf]
      %v296 = vld [vmem:[%s265 + $0x20] sm:$0xf]
      %v297 = vld [vmem:[%s265 + $0x24] sm:$0xf]
      %v298 = vld [vmem:[%s265 + $0x28] sm:$0xf]
      %v299 = vld [vmem:[%s265 + $0x2c] sm:$0xf]
      %v300 = vld [vmem:[%s265 + $0x30] sm:$0xf]
      %v301 = vld [vmem:[%s265 + $0x34] sm:$0xf]
      %v302 = vld [vmem:[%s265 + $0x38] sm:$0xf]
      %v303 = vld [vmem:[%s265 + $0x3c] sm:$0xf]
      %v304 = vld [vmem:[%s265 + $0x40] sm:$0xf]
      %v305 = vld [vmem:[%s265 + $0x44] sm:$0xf]
      %v306 = vld [vmem:[%s265 + $0x48] sm:$0xf]
      %v307 = vld [vmem:[%s265 + $0x4c] sm:$0xf]
      %v308 = vld [vmem:[%s265 + $0x50] sm:$0xf]
      %v309 = vld [vmem:[%s265 + $0x54] sm:$0xf]
      %v310 = vld [vmem:[%s265 + $0x58] sm:$0xf]
      %v311 = vld [vmem:[%s265 + $0x5c] sm:$0xf]
      %v312 = vld [vmem:[%s265 + $0x60] sm:$0xf]
      %v313 = vld [vmem:[%s265 + $0x64] sm:$0xf]
      %v314 = vld [vmem:[%s265 + $0x68] sm:$0xf]
      %v315 = vld [vmem:[%s265 + $0x6c] sm:$0xf]
      %v316 = vld [vmem:[%s265 + $0x70] sm:$0xf]
      %v317 = vld [vmem:[%s265 + $0x74] sm:$0xf]
      %v318 = vld [vmem:[%s265 + $0x78] sm:$0xf]
      %v319 = vld [vmem:[%s265 + $0x7c] sm:$0xf]
      %v320 = vunpack.c.l.bf16 %v288
      %v321 = vunpack.c.l.bf16 %v289
      %v322 = vunpack.c.l.bf16 %v290
      %v323 = vunpack.c.l.bf16 %v291
      %v324 = vunpack.c.l.bf16 %v292
      %v325 = vunpack.c.l.bf16 %v293
      %v326 = vunpack.c.l.bf16 %v294
      %v327 = vunpack.c.l.bf16 %v295
      %v328 = vunpack.c.l.bf16 %v296
      %v329 = vunpack.c.l.bf16 %v297
      %v330 = vunpack.c.l.bf16 %v298
      %v331 = vunpack.c.l.bf16 %v299
      %v332 = vunpack.c.l.bf16 %v300
      %v333 = vunpack.c.l.bf16 %v301
      %v334 = vunpack.c.l.bf16 %v302
      %v335 = vunpack.c.l.bf16 %v303
      %v336 = vunpack.c.l.bf16 %v304
      %v337 = vunpack.c.l.bf16 %v305
      %v338 = vunpack.c.l.bf16 %v306
      %v339 = vunpack.c.l.bf16 %v307
      %v340 = vunpack.c.l.bf16 %v308
      %v341 = vunpack.c.l.bf16 %v309
      %v342 = vunpack.c.l.bf16 %v310
      %v343 = vunpack.c.l.bf16 %v311
      %v344 = vunpack.c.l.bf16 %v312
      %v345 = vunpack.c.l.bf16 %v313
      %v346 = vunpack.c.l.bf16 %v314
      %v347 = vunpack.c.l.bf16 %v315
      %v348 = vunpack.c.l.bf16 %v316
      %v349 = vunpack.c.l.bf16 %v317
      %v350 = vunpack.c.l.bf16 %v318
      %v351 = vunpack.c.l.bf16 %v319
      %v352 = vld [vmem:[%s268] sm:$0x1]
      %v354 = vlaneseq
      %v355 = vshrl.u32 %v354, 7
      %v356 = vsub.s32 0, %v355
      %v357 = vrot.slane %v352, %v356
      %v359 = vmul.f32 %v320, %v357
      %v360 = vmul.f32 %v321, %v357
      %v361 = vmul.f32 %v322, %v357
      %v362 = vmul.f32 %v323, %v357
      %v363 = vmul.f32 %v324, %v357
      %v364 = vmul.f32 %v325, %v357
      %v365 = vmul.f32 %v326, %v357
      %v366 = vmul.f32 %v327, %v357
      %v367 = vmul.f32 %v328, %v357
      %v368 = vmul.f32 %v329, %v357
      %v369 = vmul.f32 %v330, %v357
      %v370 = vmul.f32 %v331, %v357
      %v371 = vmul.f32 %v332, %v357
      %v372 = vmul.f32 %v333, %v357
      %v373 = vmul.f32 %v334, %v357
      %v374 = vmul.f32 %v335, %v357
      %v375 = vmul.f32 %v336, %v357
      %v376 = vmul.f32 %v337, %v357
      %v377 = vmul.f32 %v338, %v357
      %v378 = vmul.f32 %v339, %v357
      %v379 = vmul.f32 %v340, %v357
      %v380 = vmul.f32 %v341, %v357
      %v381 = vmul.f32 %v342, %v357
      %v382 = vmul.f32 %v343, %v357
      %v383 = vmul.f32 %v344, %v357
      %v384 = vmul.f32 %v345, %v357
      %v385 = vmul.f32 %v346, %v357
      %v386 = vmul.f32 %v347, %v357
      %v387 = vmul.f32 %v348, %v357
      %v388 = vmul.f32 %v349, %v357
      %v389 = vmul.f32 %v350, %v357
      %v390 = vmul.f32 %v351, %v357
      %v391 = vld [vmem:[%s271] sm:$0x1]
      %v393 = vlaneseq
      %v394 = vshrl.u32 %v393, 7
      %v395 = vsub.s32 0, %v394
      %v396 = vrot.slane %v391, %v395
      %v398 = vadd.f32 %v359, %v396
      %v399 = vadd.f32 %v360, %v396
      %v400 = vadd.f32 %v361, %v396
      %v401 = vadd.f32 %v362, %v396
      %v402 = vadd.f32 %v363, %v396
      %v403 = vadd.f32 %v364, %v396
      %v404 = vadd.f32 %v365, %v396
      %v405 = vadd.f32 %v366, %v396
      %v406 = vadd.f32 %v367, %v396
      %v407 = vadd.f32 %v368, %v396
      %v408 = vadd.f32 %v369, %v396
      %v409 = vadd.f32 %v370, %v396
      %v410 = vadd.f32 %v371, %v396
      %v411 = vadd.f32 %v372, %v396
      %v412 = vadd.f32 %v373, %v396
      %v413 = vadd.f32 %v374, %v396
      %v414 = vadd.f32 %v375, %v396
      %v415 = vadd.f32 %v376, %v396
      %v416 = vadd.f32 %v377, %v396
      %v417 = vadd.f32 %v378, %v396
      %v418 = vadd.f32 %v379, %v396
      %v419 = vadd.f32 %v380, %v396
      %v420 = vadd.f32 %v381, %v396
      %v421 = vadd.f32 %v382, %v396
      %v422 = vadd.f32 %v383, %v396
      %v423 = vadd.f32 %v384, %v396
      %v424 = vadd.f32 %v385, %v396
      %v425 = vadd.f32 %v386, %v396
      %v426 = vadd.f32 %v387, %v396
      %v427 = vadd.f32 %v388, %v396
      %v428 = vadd.f32 %v389, %v396
      %v429 = vadd.f32 %v390, %v396
      %v430 = vld [vmem:[%s279] sm:$0xff]
      %v431 = vld [vmem:[%s279 + $0x8] sm:$0xff]
      %v432 = vld [vmem:[%s279 + $0x10] sm:$0xff]
      %v433 = vld [vmem:[%s279 + $0x18] sm:$0xff]
      %v434 = vld [vmem:[%s279 + $0x20] sm:$0xff]
      %v435 = vld [vmem:[%s279 + $0x28] sm:$0xff]
      %v436 = vld [vmem:[%s279 + $0x30] sm:$0xff]
      %v437 = vld [vmem:[%s279 + $0x38] sm:$0xff]
      %v438 = vld [vmem:[%s279 + $0x40] sm:$0xff]
      %v439 = vld [vmem:[%s279 + $0x48] sm:$0xff]
      %v440 = vld [vmem:[%s279 + $0x50] sm:$0xff]
      %v441 = vld [vmem:[%s279 + $0x58] sm:$0xff]
      %v442 = vld [vmem:[%s279 + $0x60] sm:$0xff]
      %v443 = vld [vmem:[%s279 + $0x68] sm:$0xff]
      %v444 = vld [vmem:[%s279 + $0x70] sm:$0xff]
      %v445 = vld [vmem:[%s279 + $0x78] sm:$0xff]
      %v446 = vld [vmem:[%s279 + $0x80] sm:$0xff]
      %v447 = vld [vmem:[%s279 + $0x88] sm:$0xff]
      %v448 = vld [vmem:[%s279 + $0x90] sm:$0xff]
      %v449 = vld [vmem:[%s279 + $0x98] sm:$0xff]
      %v450 = vld [vmem:[%s279 + $0xa0] sm:$0xff]
      %v451 = vld [vmem:[%s279 + $0xa8] sm:$0xff]
      %v452 = vld [vmem:[%s279 + $0xb0] sm:$0xff]
      %v453 = vld [vmem:[%s279 + $0xb8] sm:$0xff]
      %v454 = vld [vmem:[%s279 + $0xc0] sm:$0xff]
      %v455 = vld [vmem:[%s279 + $0xc8] sm:$0xff]
      %v456 = vld [vmem:[%s279 + $0xd0] sm:$0xff]
      %v457 = vld [vmem:[%s279 + $0xd8] sm:$0xff]
      %v458 = vld [vmem:[%s279 + $0xe0] sm:$0xff]
      %v459 = vld [vmem:[%s279 + $0xe8] sm:$0xff]
      %v460 = vld [vmem:[%s279 + $0xf0] sm:$0xff]
      %v461 = vld [vmem:[%s279 + $0xf8] sm:$0xff]
      %v462 = vadd.f32 %v398, %v430
      %v463 = vadd.f32 %v399, %v431
      %v464 = vadd.f32 %v400, %v432
      %v465 = vadd.f32 %v401, %v433
      %v466 = vadd.f32 %v402, %v434
      %v467 = vadd.f32 %v403, %v435
      %v468 = vadd.f32 %v404, %v436
      %v469 = vadd.f32 %v405, %v437
      %v470 = vadd.f32 %v406, %v438
      %v471 = vadd.f32 %v407, %v439
      %v472 = vadd.f32 %v408, %v440
      %v473 = vadd.f32 %v409, %v441
      %v474 = vadd.f32 %v410, %v442
      %v475 = vadd.f32 %v411, %v443
      %v476 = vadd.f32 %v412, %v444
      %v477 = vadd.f32 %v413, %v445
      %v478 = vadd.f32 %v414, %v446
      %v479 = vadd.f32 %v415, %v447
      %v480 = vadd.f32 %v416, %v448
      %v481 = vadd.f32 %v417, %v449
      %v482 = vadd.f32 %v418, %v450
      %v483 = vadd.f32 %v419, %v451
      %v484 = vadd.f32 %v420, %v452
      %v485 = vadd.f32 %v421, %v453
      %v486 = vadd.f32 %v422, %v454
      %v487 = vadd.f32 %v423, %v455
      %v488 = vadd.f32 %v424, %v456
      %v489 = vadd.f32 %v425, %v457
      %v490 = vadd.f32 %v426, %v458
      %v491 = vadd.f32 %v427, %v459
      %v492 = vadd.f32 %v428, %v460
      %v493 = vadd.f32 %v429, %v461
      %v494 = vadd.f32 %v462, 0.0
      %v495 = vadd.f32 %v463, 0.0
      %v496 = vadd.f32 %v464, 0.0
      %v497 = vadd.f32 %v465, 0.0
      %v498 = vadd.f32 %v466, 0.0
      %v499 = vadd.f32 %v467, 0.0
      %v500 = vadd.f32 %v468, 0.0
      %v501 = vadd.f32 %v469, 0.0
      %v502 = vadd.f32 %v470, 0.0
      %v503 = vadd.f32 %v471, 0.0
      %v504 = vadd.f32 %v472, 0.0
      %v505 = vadd.f32 %v473, 0.0
      %v506 = vadd.f32 %v474, 0.0
      %v507 = vadd.f32 %v475, 0.0
      %v508 = vadd.f32 %v476, 0.0
      %v509 = vadd.f32 %v477, 0.0
      %v510 = vadd.f32 %v478, 0.0
      %v511 = vadd.f32 %v479, 0.0
      %v512 = vadd.f32 %v480, 0.0
      %v513 = vadd.f32 %v481, 0.0
      %v514 = vadd.f32 %v482, 0.0
      %v515 = vadd.f32 %v483, 0.0
      %v516 = vadd.f32 %v484, 0.0
      %v517 = vadd.f32 %v485, 0.0
      %v518 = vadd.f32 %v486, 0.0
      %v519 = vadd.f32 %v487, 0.0
      %v520 = vadd.f32 %v488, 0.0
      %v521 = vadd.f32 %v489, 0.0
      %v522 = vadd.f32 %v490, 0.0
      %v523 = vadd.f32 %v491, 0.0
      %v524 = vadd.f32 %v492, 0.0
      %v525 = vadd.f32 %v493, 0.0
      %v526 = vmax.f32 %v494, 0.0
      %v527 = vmax.f32 %v495, 0.0
      %v528 = vmax.f32 %v496, 0.0
      %v529 = vmax.f32 %v497, 0.0
      %v530 = vmax.f32 %v498, 0.0
      %v531 = vmax.f32 %v499, 0.0
      %v532 = vmax.f32 %v500, 0.0
      %v533 = vmax.f32 %v501, 0.0
      %v534 = vmax.f32 %v502, 0.0
      %v535 = vmax.f32 %v503, 0.0
      %v536 = vmax.f32 %v504, 0.0
      %v537 = vmax.f32 %v505, 0.0
      %v538 = vmax.f32 %v506, 0.0
      %v539 = vmax.f32 %v507, 0.0
      %v540 = vmax.f32 %v508, 0.0
      %v541 = vmax.f32 %v509, 0.0
      %v542 = vmax.f32 %v510, 0.0
      %v543 = vmax.f32 %v511, 0.0
      %v544 = vmax.f32 %v512, 0.0
      %v545 = vmax.f32 %v513, 0.0
      %v546 = vmax.f32 %v514, 0.0
      %v547 = vmax.f32 %v515, 0.0
      %v548 = vmax.f32 %v516, 0.0
      %v549 = vmax.f32 %v517, 0.0
      %v550 = vmax.f32 %v518, 0.0
      %v551 = vmax.f32 %v519, 0.0
      %v552 = vmax.f32 %v520, 0.0
      %v553 = vmax.f32 %v521, 0.0
      %v554 = vmax.f32 %v522, 0.0
      %v555 = vmax.f32 %v523, 0.0
      %v556 = vmax.f32 %v524, 0.0
      %v557 = vmax.f32 %v525, 0.0
      %vm558 = vcmask 31744
      %559 = vst.msk [vmem:[%s287] sm:$0xff] %vm558, %v526
      %560 = vst.msk [vmem:[%s287 + $0x8] sm:$0xff] %vm558, %v527
      %561 = vst.msk [vmem:[%s287 + $0x10] sm:$0xff] %vm558, %v528
      %562 = vst.msk [vmem:[%s287 + $0x18] sm:$0xff] %vm558, %v529
      %563 = vst.msk [vmem:[%s287 + $0x20] sm:$0xff] %vm558, %v530
      %564 = vst.msk [vmem:[%s287 + $0x28] sm:$0xff] %vm558, %v531
      %565 = vst.msk [vmem:[%s287 + $0x30] sm:$0xff] %vm558, %v532
      %566 = vst.msk [vmem:[%s287 + $0x38] sm:$0xff] %vm558, %v533
      %567 = vst.msk [vmem:[%s287 + $0x40] sm:$0xff] %vm558, %v534
      %568 = vst.msk [vmem:[%s287 + $0x48] sm:$0xff] %vm558, %v535
      %569 = vst.msk [vmem:[%s287 + $0x50] sm:$0xff] %vm558, %v536
      %570 = vst.msk [vmem:[%s287 + $0x58] sm:$0xff] %vm558, %v537
      %571 = vst.msk [vmem:[%s287 + $0x60] sm:$0xff] %vm558, %v538
      %572 = vst.msk [vmem:[%s287 + $0x68] sm:$0xff] %vm558, %v539
      %573 = vst.msk [vmem:[%s287 + $0x70] sm:$0xff] %vm558, %v540
      %574 = vst.msk [vmem:[%s287 + $0x78] sm:$0xff] %vm558, %v541
      %575 = vst.msk [vmem:[%s287 + $0x80] sm:$0xff] %vm558, %v542
      %576 = vst.msk [vmem:[%s287 + $0x88] sm:$0xff] %vm558, %v543
      %577 = vst.msk [vmem:[%s287 + $0x90] sm:$0xff] %vm558, %v544
      %578 = vst.msk [vmem:[%s287 + $0x98] sm:$0xff] %vm558, %v545
      %579 = vst.msk [vmem:[%s287 + $0xa0] sm:$0xff] %vm558, %v546
      %580 = vst.msk [vmem:[%s287 + $0xa8] sm:$0xff] %vm558, %v547
      %581 = vst.msk [vmem:[%s287 + $0xb0] sm:$0xff] %vm558, %v548
      %582 = vst.msk [vmem:[%s287 + $0xb8] sm:$0xff] %vm558, %v549
      %583 = vst.msk [vmem:[%s287 + $0xc0] sm:$0xff] %vm558, %v550
      %584 = vst.msk [vmem:[%s287 + $0xc8] sm:$0xff] %vm558, %v551
      %585 = vst.msk [vmem:[%s287 + $0xd0] sm:$0xff] %vm558, %v552
      %586 = vst.msk [vmem:[%s287 + $0xd8] sm:$0xff] %vm558, %v553
      %587 = vst.msk [vmem:[%s287 + $0xe0] sm:$0xff] %vm558, %v554
      %588 = vst.msk [vmem:[%s287 + $0xe8] sm:$0xff] %vm558, %v555
      %589 = vst.msk [vmem:[%s287 + $0xf0] sm:$0xff] %vm558, %v556
      %590 = vst.msk [vmem:[%s287 + $0xf8] sm:$0xff] %vm558, %v557
      %p591 = scmp.lt.s32.totalorder %s19, 1
      %s592 = scalar_select %p591, %s19, 1
      %p593 = scmp.lt.s32.totalorder %s20, 0
      %s594 = scalar_select %p593, %s20, 0
      %s595 = smul.addr %s592, 32
      %s596 = sadd.s32 %s594, %s595
      %s597 = smul.addr %s596, 8
      %s598 = scalar_lea.vmem %s4, %s597
      // Predicated region
      $region37: #{basic_block_forward.5} parent=35 // pred_check
        %p599 = pneg %p155
      $region38: #{basic_block_forward.5} parent=35 // pred_check_branch
        %601 = sbr.rel (%p599) target = $region40
      $region39: #{basic_block_forward.5} parent=35 // pred_region
        _
      $region40: #{basic_block_forward.5} parent=35 // pred_fallthru
        _
    $region36: #{basic_block_forward.5} parent=5 // pred_fallthru
      _
    %p602 = scmp.le.s32.totalorder 2, %s10
    // Predicated region
    $region41: #{basic_block_forward.5} parent=5 // pred_check
      %p603 = pneg %p602
    $region42: #{basic_block_forward.5} parent=5 // pred_check_branch
      %605 = sbr.rel (%p603) target = $region44
    $region43: #{basic_block_forward.5} parent=5 // pred_region
      %s606 = ssub.s32 %s10, 2
      // Predicated region
      $region45: #{basic_block_forward.5} parent=43 // pred_check
        %p607 = pneg %p161
      $region46: #{basic_block_forward.5} parent=43 // pred_check_branch
        %609 = sbr.rel (%p607) target = $region48
      $region47: #{basic_block_forward.5} parent=43 // pred_region
        %p610 = scmp.lt.s32.totalorder %s21, 1
        %s611 = scalar_select %p610, %s21, 1
        %p612 = scmp.lt.s32.totalorder %s22, 0
        %s613 = scalar_select %p612, %s22, 0
        %s614 = smul.addr %s611, 32
        %s615 = sadd.s32 %s613, %s614
        %s616 = smul.addr %s615, 8
        %s617 = scalar_lea.vmem %s4, %s616
      $region48: #{basic_block_forward.5} parent=43 // pred_fallthru
        _
    $region44: #{basic_block_forward.5} parent=5 // pred_fallthru
      _
  $region6: #{basic_block_forward.5} parent=0 // loop_footer
    %s14 = sadd.s32 1, %s10
  $region7: #{basic_block_forward.5} parent=0 // loop_footer_branch
    %9 = sbr.rel target = $region3
  $region8: #{basic_block_forward.5} parent=0 // loop_exit
    _

// kernel: basic_block_forward.3
$region0: #{basic_block_forward.3}
  #allocation0 [shape = 'u32[]', space=smem, size = 0x4, offset = 0x4, fixed_abs, tag = 'smem constant byte address 0x4 - core index']
  #allocation1 [shape = 'u32[144,128]{1,0:T(1,128)}', space=vmem, size = 0x12000, scoped, tag = 'internal scratch']
  #allocation2 [shape = 'bf16[18,18,4]{2,1,0:T(8,128)(2,1)}', space=vmem, size = 0x1b000, scoped, tag = 'scratch operand']
  #allocation3 [shape = 'bf16[16,16,36]{2,1,0:T(8,128)(2,1)}', space=vmem, size = 0x10000, scoped, tag = 'scratch operand']
  %s0 = inlined_call_operand.vmem [shape: f32[2,16,16,4], index: 0, kind: input, shape index: {}]
  %s1 = inlined_call_operand.vmem [shape: bf16[36,4], index: 1, kind: input, shape index: {}]
  %s2 = inlined_call_operand.vmem [shape: bf16[2,16,16,4], index: 2, kind: output, shape index: {0}]
  %s3 = inlined_call_operand.vmem [shape: f32[2,2,4], index: 3, kind: output, shape index: {1}]
  %4 = xla_tuple %s2, %s3
  %s5 = sld [smem:[#allocation0]]
  $region49: #{basic_block_forward.3} parent=0
    _
  %s7 = ssub.s32 1, %s5
  %s8 = scalar_select 0, %s7, %s5
  loop: start=0, step=1, limit=4
  $region2: #{basic_block_forward.3} parent=0 // loop_pre_header
    _
  $region3: #{basic_block_forward.3} parent=0 // loop_header
    %s10 = sphi 0, %s14
    %p11 = scmp.ge.s32.totalorder %s10, 4
    %s17 = sphi 0, %s29
    %s18 = sphi 0, %s25
    %s19 = sphi 0, %s17
    %s20 = sphi 0, %s18
    %s21 = sphi 0, %s19
    %s22 = sphi 0, %s20
    %s32 = sphi 0, %s34
    %s35 = sphi 0, %s32
    %s36 = sphi 0, %s35
    %s52 = sphi 0, %s36
    %s58 = sphi 0, %s60
    %s61 = sphi 0, %s58
    %s62 = sphi 0, %s61
    %s78 = sphi 0, %s62
    %s86 = sphi 0, %s88
    %s89 = sphi 0, %s86
    %s90 = sphi 0, %s89
    %s106 = sphi 0, %s90
    %s114 = sphi 0, %s116
    %s117 = sphi 0, %s114
    %s118 = sphi 0, %s117
    %s134 = sphi 0, %s118
  $region4: #{basic_block_forward.3} parent=0 // loop_header_branch
    %13 = sbr.rel (%p11) target = $region8
  $region5: #{basic_block_forward.3} parent=0 // loop_body
    %s15 = ssub.s32 %s10, 1
    %s16 = ssub.s32 %s10, 2
    %s23 = sadd.s32 1, %s18
    %p24 = scmp.ge.s32.totalorder %s23, 1
    %s25 = scalar_select %p24, 0, %s23
    %s26 = sadd.s32 1, %s17
    %s27 = scalar_select %p24, %s26, %s17
    %p28 = scmp.ge.s32.totalorder %s27, 2
    %s29 = scalar_select %p28, 0, %s27
    %s30 = ssub.s32 %s17, %s29
    %p31 = scmp.eq.s32.totalorder %s30, 0
    %s33 = sadd.s32 %s32, 1
    %s34 = scalar_select %p31, %s32, %s33
    %p37 = pneg %p31
    %p38 = scmp.eq.s32.totalorder %s10, 1
    %p39 = por %p37, %p38
    %p40 = scmp.ne.s32.totalorder %s32, %s35
    %p41 = scmp.eq.s32.totalorder %s10, 0
    %p42 = por %p40, %p41
    %p43 = scmp.ne.s32.totalorder %s32, %s35
    %p44 = scmp.eq.s32.totalorder %s15, 1
    %p45 = por %p43, %p44
    %p46 = scmp.ne.s32.totalorder %s35, %s36
    %p47 = scmp.eq.s32.totalorder %s15, 0
    %p48 = por %p46, %p47
    %p49 = scmp.ne.s32.totalorder %s35, %s36
    %p50 = scmp.eq.s32.totalorder %s16, 1
    %p51 = por %p49, %p50
    %p53 = scmp.ne.s32.totalorder %s36, %s52
    %p54 = scmp.eq.s32.totalorder %s16, 0
    %p55 = por %p53, %p54
    %s56 = ssub.s32 %s18, %s25
    %p57 = scmp.eq.s32.totalorder %s56, 0
    %s59 = sadd.s32 %s58, 1
    %s60 = scalar_select %p57, %s58, %s59
    %p63 = pneg %p57
    %p64 = scmp.eq.s32.totalorder %s10, 1
    %p65 = por %p63, %p64
    %p66 = scmp.ne.s32.totalorder %s58, %s61
    %p67 = scmp.eq.s32.totalorder %s10, 0
    %p68 = por %p66, %p67
    %p69 = scmp.ne.s32.totalorder %s58, %s61
    %p70 = scmp.eq.s32.totalorder %s15, 1
    %p71 = por %p69, %p70
    %p72 = scmp.ne.s32.totalorder %s61, %s62
    %p73 = scmp.eq.s32.totalorder %s15, 0
    %p74 = por %p72, %p73
    %p75 = scmp.ne.s32.totalorder %s61, %s62
    %p76 = scmp.eq.s32.totalorder %s16, 1
    %p77 = por %p75, %p76
    %p79 = scmp.ne.s32.totalorder %s62, %s78
    %p80 = scmp.eq.s32.totalorder %s16, 0
    %p81 = por %p79, %p80
    %s82 = ssub.s32 %s17, %s29
    %s83 = ssub.s32 %s18, %s25
    %s84 = sor.u32 %s82, %s83
    %p85 = scmp.eq.s32.totalorder %s84, 0
    %s87 = sadd.s32 %s86, 1
    %s88 = scalar_select %p85, %s86, %s87
    %p91 = pneg %p85
    %p92 = scmp.eq.s32.totalorder %s10, 1
    %p93 = por %p91, %p92
    %p94 = scmp.ne.s32.totalorder %s86, %s89
    %p95 = scmp.eq.s32.totalorder %s10, 0
    %p96 = por %p94, %p95
    %p97 = scmp.ne.s32.totalorder %s86, %s89
    %p98 = scmp.eq.s32.totalorder %s15, 1
    %p99 = por %p97, %p98
    %p100 = scmp.ne.s32.totalorder %s89, %s90
    %p101 = scmp.eq.s32.totalorder %s15, 0
    %p102 = por %p100, %p101
    %p103 = scmp.ne.s32.totalorder %s89, %s90
    %p104 = scmp.eq.s32.totalorder %s16, 1
    %p105 = por %p103, %p104
    %p107 = scmp.ne.s32.totalorder %s90, %s106
    %p108 = scmp.eq.s32.totalorder %s16, 0
    %p109 = por %p107, %p108
    %s110 = ssub.s32 %s17, %s29
    %s111 = ssub.s32 %s18, %s25
    %s112 = sor.u32 %s110, %s111
    %p113 = scmp.eq.s32.totalorder %s112, 0
    %s115 = sadd.s32 %s114, 1
    %s116 = scalar_select %p113, %s114, %s115
    %p119 = pneg %p113
    %p120 = scmp.eq.s32.totalorder %s10, 1
    %p121 = por %p119, %p120
    %p122 = scmp.ne.s32.totalorder %s114, %s117
    %p123 = scmp.eq.s32.totalorder %s10, 0
    %p124 = por %p122, %p123
    %p125 = scmp.ne.s32.totalorder %s114, %s117
    %p126 = scmp.eq.s32.totalorder %s15, 1
    %p127 = por %p125, %p126
    %p128 = scmp.ne.s32.totalorder %s117, %s118
    %p129 = scmp.eq.s32.totalorder %s15, 0
    %p130 = por %p128, %p129
    %p131 = scmp.ne.s32.totalorder %s117, %s118
    %p132 = scmp.eq.s32.totalorder %s16, 1
    %p133 = por %p131, %p132
    %p135 = scmp.ne.s32.totalorder %s118, %s134
    %p136 = scmp.eq.s32.totalorder %s16, 0
    %p137 = por %p135, %p136
    %p138 = scmp.le.s32.totalorder 1, %s10
    %p139 = scmp.lt.s32.totalorder %s10, 3
    %p140 = pnand %p138, %p139
    %p141 = pneg %p140
    // Predicated region
    $region9: #{basic_block_forward.3} parent=5 // pred_check
      _
    $region10: #{basic_block_forward.3} parent=5 // pred_check_branch
      %143 = sbr.rel (%p140) target = $region12
    $region11: #{basic_block_forward.3} parent=5 // pred_region
      %s144 = ssub.s32 %s10, 1
      // Predicated region
      $region13: #{basic_block_forward.3} parent=11 // pred_check
        %p145 = pneg %p74
      $region14: #{basic_block_forward.3} parent=11 // pred_check_branch
        %147 = sbr.rel (%p145) target = $region16
      $region15: #{basic_block_forward.3} parent=11 // pred_region
        %p148 = scmp.lt.s32.totalorder %s20, 0
        %s149 = scalar_select %p148, %s20, 0
        %s150 = smul.addr %s149, 4
        %s151 = scalar_lea.vmem %s1, %s150
      $region16: #{basic_block_forward.3} parent=11 // pred_fallthru
        _
    $region12: #{basic_block_forward.3} parent=5 // pred_fallthru
      _
    %p152 = scmp.lt.s32.totalorder %s10, 2
    // Predicated region
    $region17: #{basic_block_forward.3} parent=5 // pred_check
      %p153 = pneg %p152
    $region18: #{basic_block_forward.3} parent=5 // pred_check_branch
      %155 = sbr.rel (%p153) target = $region20
    $region19: #{basic_block_forward.3} parent=5 // pred_region
      // Predicated region
      $region21: #{basic_block_forward.3} parent=19 // pred_check
        %p156 = pneg %p42
      $region22: #{basic_block_forward.3} parent=19 // pred_check_branch
        %158 = sbr.rel (%p156) target = $region24
      $region23: #{basic_block_forward.3} parent=19 // pred_region
        %p159 = scmp.lt.s32.totalorder %s17, 1
        %s160 = scalar_select %p159, %s17, 1
        %s161 = smul.addr %s160, 32
        %s162 = smul.addr %s161, 8
        %s163 = scalar_lea.vmem %s0, %s162
      $region24: #{basic_block_forward.3} parent=19 // pred_fallthru
        _
    $region20: #{basic_block_forward.3} parent=5 // pred_fallthru
      _
    %p164 = scmp.le.s32.totalorder 1, %s10
    %p165 = scmp.lt.s32.totalorder %s10, 3
    %p166 = pnand %p164, %p165
    %p167 = pneg %p166
    // Predicated region
    $region25: #{basic_block_forward.3} parent=5 // pred_check
      _
    $region26: #{basic_block_forward.3} parent=5 // pred_check_branch
      %169 = sbr.rel (%p166) target = $region28
    $region27: #{basic_block_forward.3} parent=5 // pred_region
      %s170 = ssub.s32 %s10, 1
      %p171 = scmp.lt.s32.totalorder %s19, 1
      %s172 = scalar_select %p171, %s19, 1
      %s173 = smul.addr %s172, 32
      %s174 = smul.addr %s173, 8
      %s175 = scalar_lea.vmem %s0, %s174
      %p176 = pneg %p48
      %p177 = pneg %p45
      %p178 = scmp.lt.s32.totalorder %s20, 0
      %s179 = scalar_select %p178, %s20, 0
      %s180 = smul.addr %s179, 4
      %s181 = scalar_lea.vmem %s1, %s180
      %p182 = pneg %p74
      %p183 = pneg %p71
      %p184 = pneg %p102
      %p185 = pneg %p99
      %p186 = scmp.lt.s32.totalorder %s19, 1
      %s187 = scalar_select %p186, %s19, 1
      %p188 = scmp.lt.s32.totalorder %s20, 0
      %s189 = scalar_select %p188, %s20, 0
      %s190 = smul.addr %s187, 32
      %s191 = sadd.s32 %s189, %s190
      %s192 = smul.addr %s191, 4
      %s193 = scalar_lea.vmem %s2, %s192
      %p194 = pneg %p130
      %p195 = pneg %p127
      %p196 = scmp.lt.s32.totalorder %s19, 1
      %s197 = scalar_select %p196, %s19, 1
      %p198 = scmp.lt.s32.totalorder %s20, 0
      %s199 = scalar_select %p198, %s20, 0
      %s200 = sadd.s32 %s199, %s197
      %s201 = smul.addr %s200, 2
      %s202 = scalar_lea.vmem %s3, %s201
      %p203 = scmp.lt.s32.totalorder %s19, 1
      %s204 = scalar_select %p203, %s19, 1
      %s205 = smul.addr %s204, 32
      %s206 = smul.addr %s205, 8
      %s207 = scalar_lea.vmem %s0, %s206
      %p208 = scmp.lt.s32.totalorder %s20, 0
      %s209 = scalar_select %p208, %s20, 0
      %s210 = smul.addr %s209, 4
      %s211 = scalar_lea.vmem %s1, %s210
      %p212 = scmp.lt.s32.totalorder %s19, 1
      %s213 = scalar_select %p212, %s19, 1
      %p214 = scmp.lt.s32.totalorder %s20, 0
      %s215 = scalar_select %p214, %s20, 0
      %s216 = smul.addr %s213, 32
      %s217 = sadd.s32 %s215, %s216
      %s218 = smul.addr %s217, 4
      %s219 = scalar_lea.vmem %s2, %s218
      %p220 = scmp.lt.s32.totalorder %s19, 1
      %s221 = scalar_select %p220, %s19, 1
      %p222 = scmp.lt.s32.totalorder %s20, 0
      %s223 = scalar_select %p222, %s20, 0
      %s224 = sadd.s32 %s223, %s221
      %s225 = smul.addr %s224, 2
      %s226 = scalar_lea.vmem %s3, %s225
      %v228 = vld [vmem:[%s207] sm:$0xff]
      %v229 = vld [vmem:[%s207 + $0x8] sm:$0xff]
      %v230 = vld [vmem:[%s207 + $0x10] sm:$0xff]
      %v231 = vld [vmem:[%s207 + $0x18] sm:$0xff]
      %v232 = vld [vmem:[%s207 + $0x20] sm:$0xff]
      %v233 = vld [vmem:[%s207 + $0x28] sm:$0xff]
      %v234 = vld [vmem:[%s207 + $0x30] sm:$0xff]
      %v235 = vld [vmem:[%s207 + $0x38] sm:$0xff]
      %v236 = vld [vmem:[%s207 + $0x40] sm:$0xff]
      %v237 = vld [vmem:[%s207 + $0x48] sm:$0xff]
      %v238 = vld [vmem:[%s207 + $0x50] sm:$0xff]
      %v239 = vld [vmem:[%s207 + $0x58] sm:$0xff]
      %v240 = vld [vmem:[%s207 + $0x60] sm:$0xff]
      %v241 = vld [vmem:[%s207 + $0x68] sm:$0xff]
      %v242 = vld [vmem:[%s207 + $0x70] sm:$0xff]
      %v243 = vld [vmem:[%s207 + $0x78] sm:$0xff]
      %v244 = vld [vmem:[%s207 + $0x80] sm:$0xff]
      %v245 = vld [vmem:[%s207 + $0x88] sm:$0xff]
      %v246 = vld [vmem:[%s207 + $0x90] sm:$0xff]
      %v247 = vld [vmem:[%s207 + $0x98] sm:$0xff]
      %v248 = vld [vmem:[%s207 + $0xa0] sm:$0xff]
      %v249 = vld [vmem:[%s207 + $0xa8] sm:$0xff]
      %v250 = vld [vmem:[%s207 + $0xb0] sm:$0xff]
      %v251 = vld [vmem:[%s207 + $0xb8] sm:$0xff]
      %v252 = vld [vmem:[%s207 + $0xc0] sm:$0xff]
      %v253 = vld [vmem:[%s207 + $0xc8] sm:$0xff]
      %v254 = vld [vmem:[%s207 + $0xd0] sm:$0xff]
      %v255 = vld [vmem:[%s207 + $0xd8] sm:$0xff]
      %v256 = vld [vmem:[%s207 + $0xe0] sm:$0xff]
      %v257 = vld [vmem:[%s207 + $0xe8] sm:$0xff]
      %v258 = vld [vmem:[%s207 + $0xf0] sm:$0xff]
      %v259 = vld [vmem:[%s207 + $0xf8] sm:$0xff]
      %vm260 = vcmask 27648
      %261 = vst.msk [vmem:[#allocation2] sm:$0xf] %vm260, 0
      %262 = vst.msk [vmem:[#allocation2 + $0x4] sm:$0xf] %vm260, 0
      %vm263 = vcmask 24576
      %264 = vst.msk [vmem:[#allocation2 + $0x8] sm:$0x1] %vm263, 0
      %s265 = scalar_lea.vmem [#allocation2], 204
      %266 = vst.msk [vmem:[%s265] sm:$0xf] %vm260, 0
      %267 = vst.msk [vmem:[%s265 + $0x4] sm:$0xf] %vm260, 0
      %268 = vst.msk [vmem:[%s265 + $0x8] sm:$0x1] %vm263, 0
      %vm269 = vcmask 24576
      %vm270 = vsmask.f32 256
      %vm271 = vmand %vm269, %vm270
      %v272 = vld [vmem:[#allocation2] sm:$0x1]
      %v273 = vsel %vm271, 0, %v272
      %274 = vst [vmem:[#allocation2] sm:$0x1] %v273
      %v275 = vld [vmem:[#allocation2 + $0xc] sm:$0x1]
      %v276 = vsel %vm271, 0, %v275
      %277 = vst [vmem:[#allocation2 + $0xc] sm:$0x1] %v276
      %v278 = vld [vmem:[#allocation2 + $0x18] sm:$0x1]
      %v279 = vsel %vm271, 0, %v278
      %280 = vst [vmem:[#allocation2 + $0x18] sm:$0x1] %v279
      %v281 = vld [vmem:[#allocation2 + $0x24] sm:$0x1]
      %v282 = vsel %vm271, 0, %v281
      %283 = vst [vmem:[#allocation2 + $0x24] sm:$0x1] %v282
      %v284 = vld [vmem:[#allocation2 + $0x30] sm:$0x1]
      %v285 = vsel %vm271, 0, %v284
      %286 = vst [vmem:[#allocation2 + $0x30] sm:$0x1] %v285
      %v287 = vld [vmem:[#allocation2 + $0x3c] sm:$0x1]
      %v288 = vsel %vm271, 0, %v287
      %289 = vst [vmem:[#allocation2 + $0x3c] sm:$0x1] %v288
      %v290 = vld [vmem:[#allocation2 + $0x48] sm:$0x1]
      %v291 = vsel %vm271, 0, %v290
      %292 = vst [vmem:[#allocation2 + $0x48] sm:$0x1] %v291
      %v293 = vld [vmem:[#allocation2 + $0x54] sm:$0x1]
      %v294 = vsel %vm271, 0, %v293
      %295 = vst [vmem:[#allocation2 + $0x54] sm:$0x1] %v294
      %v296 = vld [vmem:[#allocation2 + $0x60] sm:$0x1]
      %v297 = vsel %vm271, 0, %v296
      %298 = vst [vmem:[#allocation2 + $0x60] sm:$0x1] %v297
      %v299 = vld [vmem:[#allocation2 + $0x6c] sm:$0x1]
      %v300 = vsel %vm271, 0, %v299
      %301 = vst [vmem:[#allocation2 + $0x6c] sm:$0x1] %v300
      %v302 = vld [vmem:[#allocation2 + $0x78] sm:$0x1]
      %v303 = vsel %vm271, 0, %v302
      %304 = vst [vmem:[#allocation2 + $0x78] sm:$0x1] %v303
      %v305 = vld [vmem:[#allocation2 + $0x84] sm:$0x1]
      %v306 = vsel %vm271, 0, %v305
      %307 = vst [vmem:[#allocation2 + $0x84] sm:$0x1] %v306
      %v308 = vld [vmem:[#allocation2 + $0x90] sm:$0x1]
      %v309 = vsel %vm271, 0, %v308
      %310 = vst [vmem:[#allocation2 + $0x90] sm:$0x1] %v309
      %v311 = vld [vmem:[#allocation2 + $0x9c] sm:$0x1]
      %v312 = vsel %vm271, 0, %v311
      %313 = vst [vmem:[#allocation2 + $0x9c] sm:$0x1] %v312
      %v314 = vld [vmem:[#allocation2 + $0xa8] sm:$0x1]
      %v315 = vsel %vm271, 0, %v314
      %316 = vst [vmem:[#allocation2 + $0xa8] sm:$0x1] %v315
      %v317 = vld [vmem:[#allocation2 + $0xb4] sm:$0x1]
      %v318 = vsel %vm271, 0, %v317
      %319 = vst [vmem:[#allocation2 + $0xb4] sm:$0x1] %v318
      %v320 = vld [vmem:[#allocation2 + $0xc0] sm:$0x1]
      %v321 = vsel %vm271, 0, %v320
      %322 = vst [vmem:[#allocation2 + $0xc0] sm:$0x1] %v321
      %v323 = vld [vmem:[#allocation2 + $0xcc] sm:$0x1]
      %v324 = vsel %vm271, 0, %v323
      %325 = vst [vmem:[#allocation2 + $0xcc] sm:$0x1] %v324
      %vm326 = vsmask.f32 7938
      %vm327 = vmand %vm269, %vm326
      %v328 = vld [vmem:[#allocation2 + $0x8] sm:$0x1]
      %v329 = vsel %vm327, 0, %v328
      %330 = vst [vmem:[#allocation2 + $0x8] sm:$0x1] %v329
      %v331 = vld [vmem:[#allocation2 + $0x14] sm:$0x1]
      %v332 = vsel %vm327, 0, %v331
      %333 = vst [vmem:[#allocation2 + $0x14] sm:$0x1] %v332
      %v334 = vld [vmem:[#allocation2 + $0x20] sm:$0x1]
      %v335 = vsel %vm327, 0, %v334
      %336 = vst [vmem:[#allocation2 + $0x20] sm:$0x1] %v335
      %v337 = vld [vmem:[#allocation2 + $0x2c] sm:$0x1]
      %v338 = vsel %vm327, 0, %v337
      %339 = vst [vmem:[#allocation2 + $0x2c] sm:$0x1] %v338
      %v340 = vld [vmem:[#allocation2 + $0x38] sm:$0x1]
      %v341 = vsel %vm327, 0, %v340
      %342 = vst [vmem:[#allocation2 + $0x38] sm:$0x1] %v341
      %v343 = vld [vmem:[#allocation2 + $0x44] sm:$0x1]
      %v344 = vsel %vm327, 0, %v343
      %345 = vst [vmem:[#allocation2 + $0x44] sm:$0x1] %v344
      %v346 = vld [vmem:[#allocation2 + $0x50] sm:$0x1]
      %v347 = vsel %vm327, 0, %v346
      %348 = vst [vmem:[#allocation2 + $0x50] sm:$0x1] %v347
      %v349 = vld [vmem:[#allocation2 + $0x5c] sm:$0x1]
      %v350 = vsel %vm327, 0, %v349
      %351 = vst [vmem:[#allocation2 + $0x5c] sm:$0x1] %v350
      %v352 = vld [vmem:[#allocation2 + $0x68] sm:$0x1]
      %v353 = vsel %vm327, 0, %v352
      %354 = vst [vmem:[#allocation2 + $0x68] sm:$0x1] %v353
      %v355 = vld [vmem:[#allocation2 + $0x74] sm:$0x1]
      %v356 = vsel %vm327, 0, %v355
      %357 = vst [vmem:[#allocation2 + $0x74] sm:$0x1] %v356
      %v358 = vld [vmem:[#allocation2 + $0x80] sm:$0x1]
      %v359 = vsel %vm327, 0, %v358
      %360 = vst [vmem:[#allocation2 + $0x80] sm:$0x1] %v359
      %v361 = vld [vmem:[#allocation2 + $0x8c] sm:$0x1]
      %v362 = vsel %vm327, 0, %v361
      %363 = vst [vmem:[#allocation2 + $0x8c] sm:$0x1] %v362
      %v364 = vld [vmem:[#allocation2 + $0x98] sm:$0x1]
      %v365 = vsel %vm327, 0, %v364
      %366 = vst [vmem:[#allocation2 + $0x98] sm:$0x1] %v365
      %v367 = vld [vmem:[#allocation2 + $0xa4] sm:$0x1]
      %v368 = vsel %vm327, 0, %v367
      %369 = vst [vmem:[#allocation2 + $0xa4] sm:$0x1] %v368
      %v370 = vld [vmem:[#allocation2 + $0xb0] sm:$0x1]
      %v371 = vsel %vm327, 0, %v370
      %372 = vst [vmem:[#allocation2 + $0xb0] sm:$0x1] %v371
      %v373 = vld [vmem:[#allocation2 + $0xbc] sm:$0x1]
      %v374 = vsel %vm327, 0, %v373
      %375 = vst [vmem:[#allocation2 + $0xbc] sm:$0x1] %v374
      %v376 = vld [vmem:[#allocation2 + $0xc8] sm:$0x1]
      %v377 = vsel %vm327, 0, %v376
      %378 = vst [vmem:[#allocation2 + $0xc8] sm:$0x1] %v377
      %v379 = vld [vmem:[#allocation2 + $0xd4] sm:$0x1]
      %v380 = vsel %vm327, 0, %v379
      %381 = vst [vmem:[#allocation2 + $0xd4] sm:$0x1] %v380
      %v382 = vpack.c.bf16 %v229, %v228
      %v383 = vpack.c.bf16 %v231, %v230
      %v384 = vpack.c.bf16 %v233, %v232
      %v385 = vpack.c.bf16 %v235, %v234
      %v386 = vpack.c.bf16 %v237, %v236
      %v387 = vpack.c.bf16 %v239, %v238
      %v388 = vpack.c.bf16 %v241, %v240
      %v389 = vpack.c.bf16 %v243, %v242
      %v390 = vpack.c.bf16 %v245, %v244
      %v391 = vpack.c.bf16 %v247, %v246
      %v392 = vpack.c.bf16 %v249, %v248
      %v393 = vpack.c.bf16 %v251, %v250
      %v394 = vpack.c.bf16 %v253, %v252
      %v395 = vpack.c.bf16 %v255, %v254
      %v396 = vpack.c.bf16 %v257, %v256
      %v397 = vpack.c.bf16 %v259, %v258
      %v414 = vunpack.c.l.b16 %v382
      %v415 = vunpack.c.h.b16 %v382
      %v416 = vunpack.c.l.b16 %v383
      %v417 = vunpack.c.h.b16 %v383
      %v418 = vunpack.c.l.b16 %v384
      %v419 = vunpack.c.h.b16 %v384
      %v420 = vunpack.c.l.b16 %v385
      %v421 = vunpack.c.h.b16 %v385
      %v422 = vunpack.c.l.b16 %v386
      %v423 = vunpack.c.h.b16 %v386
      %v424 = vunpack.c.l.b16 %v387
      %v425 = vunpack.c.h.b16 %v387
      %v426 = vunpack.c.l.b16 %v388
      %v427 = vunpack.c.h.b16 %v388
      %v428 = vunpack.c.l.b16 %v389
      %v429 = vunpack.c.h.b16 %v389
      %v430 = vunpack.c.l.b16 %v390
      %v431 = vunpack.c.h.b16 %v390
      %v432 = vunpack.c.l.b16 %v391
      %v433 = vunpack.c.h.b16 %v391
      %v434 = vunpack.c.l.b16 %v392
      %v435 = vunpack.c.h.b16 %v392
      %v436 = vunpack.c.l.b16 %v393
      %v437 = vunpack.c.h.b16 %v393
      %v438 = vunpack.c.l.b16 %v394
      %v439 = vunpack.c.h.b16 %v394
      %v440 = vunpack.c.l.b16 %v395
      %v441 = vunpack.c.h.b16 %v395
      %v442 = vunpack.c.l.b16 %v396
      %v443 = vunpack.c.h.b16 %v396
      %v444 = vunpack.c.l.b16 %v397
      %v445 = vunpack.c.h.b16 %v397
      %v446 = vpack.c.b16 %v414, %v414
      %v447 = vpack.c.b16 %v415, %v415
      %v448 = vpack.c.b16 %v416, %v416
      %v449 = vpack.c.b16 %v417, %v417
      %v450 = vpack.c.b16 %v418, %v418
      %v451 = vpack.c.b16 %v419, %v419
      %v452 = vpack.c.b16 %v420, %v420
      %v453 = vpack.c.b16 %v421, %v421
      %v454 = vpack.c.b16 %v422, %v422
      %v455 = vpack.c.b16 %v423, %v423
      %v456 = vpack.c.b16 %v424, %v424
      %v457 = vpack.c.b16 %v425, %v425
      %v458 = vpack.c.b16 %v426, %v426
      %v459 = vpack.c.b16 %v427, %v427
      %v460 = vpack.c.b16 %v428, %v428
      %v461 = vpack.c.b16 %v429, %v429
      %v462 = vpack.c.b16 %v430, %v430
      %v463 = vpack.c.b16 %v431, %v431
      %v464 = vpack.c.b16 %v432, %v432
      %v465 = vpack.c.b16 %v433, %v433
      %v466 = vpack.c.b16 %v434, %v434
      %v467 = vpack.c.b16 %v435, %v435
      %v468 = vpack.c.b16 %v436, %v436
      %v469 = vpack.c.b16 %v437, %v437
      %v470 = vpack.c.b16 %v438, %v438
      %v471 = vpack.c.b16 %v439, %v439
      %v472 = vpack.c.b16 %v440, %v440
      %v473 = vpack.c.b16 %v441, %v441
      %v474 = vpack.c.b16 %v442, %v442
      %v475 = vpack.c.b16 %v443, %v443
      %v476 = vpack.c.b16 %v444, %v444
      %v477 = vpack.c.b16 %v445, %v445
      %vm478 = vsmask.f32 4368
      %vm479 = vmor %vm270, %vm478
      %v481 = vshrl.u32 %v446, 16
      %v483 = vrot.slane %v481, 7
      %v484 = vshll.u32 %v446, 16
      %v486 = vor.u32 %v483, %v484
      %v487 = vrot.slane %v483, 4
      %v489 = vshrl.u32 %v447, 16
      %v491 = vrot.slane %v489, 7
      %v492 = vshll.u32 %v447, 16
      %v494 = vor.u32 %v491, %v492
      %v495 = vsel %vm479, %v487, %v494
      %v496 = vrot.slane %v491, 4
      %v498 = vshrl.u32 %v448, 16
      %v500 = vrot.slane %v498, 7
      %v501 = vshll.u32 %v448, 16
      %v503 = vor.u32 %v500, %v501
      %v504 = vrot.slane %v500, 4
      %v506 = vshrl.u32 %v449, 16
      %v508 = vrot.slane %v506, 7
      %v509 = vshll.u32 %v449, 16
      %v511 = vor.u32 %v508, %v509
      %v512 = vsel %vm479, %v504, %v511
      %v513 = vrot.slane %v508, 4
      %v515 = vshrl.u32 %v450, 16
      %v517 = vrot.slane %v515, 7
      %v518 = vshll.u32 %v450, 16
      %v520 = vor.u32 %v517, %v518
      %v521 = vrot.slane %v517, 4
      %v523 = vshrl.u32 %v451, 16
      %v525 = vrot.slane %v523, 7
      %v526 = vshll.u32 %v451, 16
      %v528 = vor.u32 %v525, %v526
      %v529 = vsel %vm479, %v521, %v528
      %v530 = vrot.slane %v525, 4
      %v532 = vshrl.u32 %v452, 16
      %v534 = vrot.slane %v532, 7
      %v535 = vshll.u32 %v452, 16
      %v537 = vor.u32 %v534, %v535
      %v538 = vrot.slane %v534, 4
      %v540 = vshrl.u32 %v453, 16
      %v542 = vrot.slane %v540, 7
      %v543 = vshll.u32 %v453, 16
      %v545 = vor.u32 %v542, %v543
      %v546 = vsel %vm479, %v538, %v545
      %v547 = vrot.slane %v542, 4
      %v549 = vshrl.u32 %v454, 16
      %v551 = vrot.slane %v549, 7
      %v552 = vshll.u32 %v454, 16
      %v554 = vor.u32 %v551, %v552
      %v555 = vrot.slane %v551, 4
      %v557 = vshrl.u32 %v455, 16
      %v559 = vrot.slane %v557, 7
      %v560 = vshll.u32 %v455, 16
      %v562 = vor.u32 %v559, %v560
      %v563 = vsel %vm479, %v555, %v562
      %v564 = vrot.slane %v559, 4
      %v566 = vshrl.u32 %v456, 16
      %v568 = vrot.slane %v566, 7
      %v569 = vshll.u32 %v456, 16
      %v571 = vor.u32 %v568, %v569
      %v572 = vrot.slane %v568, 4
      %v574 = vshrl.u32 %v457, 16
      %v576 = vrot.slane %v574, 7
      %v577 = vshll.u32 %v457, 16
      %v579 = vor.u32 %v576, %v577
      %v580 = vsel %vm479, %v572, %v579
      %v581 = vrot.slane %v576, 4
      %v583 = vshrl.u32 %v458, 16
      %v585 = vrot.slane %v583, 7
      %v586 = vshll.u32 %v458, 16
      %v588 = vor.u32 %v585, %v586
      %v589 = vrot.slane %v585, 4
      %v591 = vshrl.u32 %v459, 16
      %v593 = vrot.slane %v591, 7
      %v594 = vshll.u32 %v459, 16
      %v596 = vor.u32 %v593, %v594
      %v597 = vsel %vm479, %v589, %v596
      %v598 = vrot.slane %v593, 4
      %v600 = vshrl.u32 %v460, 16
      %v602 = vrot.slane %v600, 7
      %v603 = vshll.u32 %v460, 16
      %v605 = vor.u32 %v602, %v603
      %v606 = vrot.slane %v602, 4
      %v608 = vshrl.u32 %v461, 16
      %v610 = vrot.slane %v608, 7
      %v611 = vshll.u32 %v461, 16
      %v613 = vor.u32 %v610, %v611
      %v614 = vsel %vm479, %v606, %v613
      %v615 = vrot.slane %v610, 4
      %v617 = vshrl.u32 %v462, 16
      %v619 = vrot.slane %v617, 7
      %v620 = vshll.u32 %v462, 16
      %v622 = vor.u32 %v619, %v620
      %v623 = vrot.slane %v619, 4
      %v625 = vshrl.u32 %v463, 16
      %v627 = vrot.slane %v625, 7
      %v628 = vshll.u32 %v463, 16
      %v630 = vor.u32 %v627, %v628
      %v631 = vsel %vm479, %v623, %v630
      %v632 = vrot.slane %v627, 4
      %v634 = vshrl.u32 %v464, 16
      %v636 = vrot.slane %v634, 7
      %v637 = vshll.u32 %v464, 16
      %v639 = vor.u32 %v636, %v637
      %v640 = vrot.slane %v636, 4
      %v642 = vshrl.u32 %v465, 16
      %v644 = vrot.slane %v642, 7
      %v645 = vshll.u32 %v465, 16
      %v647 = vor.u32 %v644, %v645
      %v648 = vsel %vm479, %v640, %v647
      %v649 = vrot.slane %v644, 4
      %v651 = vshrl.u32 %v466, 16
      %v653 = vrot.slane %v651, 7
      %v654 = vshll.u32 %v466, 16
      %v656 = vor.u32 %v653, %v654
      %v657 = vrot.slane %v653, 4
      %v659 = vshrl.u32 %v467, 16
      %v661 = vrot.slane %v659, 7
      %v662 = vshll.u32 %v467, 16
      %v664 = vor.u32 %v661, %v662
      %v665 = vsel %vm479, %v657, %v664
      %v666 = vrot.slane %v661, 4
      %v668 = vshrl.u32 %v468, 16
      %v670 = vrot.slane %v668, 7
      %v671 = vshll.u32 %v468, 16
      %v673 = vor.u32 %v670, %v671
      %v674 = vrot.slane %v670, 4
      %v676 = vshrl.u32 %v469, 16
      %v678 = vrot.slane %v676, 7
      %v679 = vshll.u32 %v469, 16
      %v681 = vor.u32 %v678, %v679
      %v682 = vsel %vm479, %v674, %v681
      %v683 = vrot.slane %v678, 4
      %v685 = vshrl.u32 %v470, 16
      %v687 = vrot.slane %v685, 7
      %v688 = vshll.u32 %v470, 16
      %v690 = vor.u32 %v687, %v688
      %v691 = vrot.slane %v687, 4
      %v693 = vshrl.u32 %v471, 16
      %v695 = vrot.slane %v693, 7
      %v696 = vshll.u32 %v471, 16
      %v698 = vor.u32 %v695, %v696
      %v699 = vsel %vm479, %v691, %v698
      %v700 = vrot.slane %v695, 4
      %v702 = vshrl.u32 %v472, 16
      %v704 = vrot.slane %v702, 7
      %v705 = vshll.u32 %v472, 16
      %v707 = vor.u32 %v704, %v705
      %v708 = vrot.slane %v704, 4
      %v710 = vshrl.u32 %v473, 16
      %v712 = vrot.slane %v710, 7
      %v713 = vshll.u32 %v473, 16
      %v715 = vor.u32 %v712, %v713
      %v716 = vsel %vm479, %v708, %v715
      %v717 = vrot.slane %v712, 4
      %v719 = vshrl.u32 %v474, 16
      %v721 = vrot.slane %v719, 7
      %v722 = vshll.u32 %v474, 16
      %v724 = vor.u32 %v721, %v722
      %v725 = vrot.slane %v721, 4
      %v727 = vshrl.u32 %v475, 16
      %v729 = vrot.slane %v727, 7
      %v730 = vshll.u32 %v475, 16
      %v732 = vor.u32 %v729, %v730
      %v733 = vsel %vm479, %v725, %v732
      %v734 = vrot.slane %v729, 4
      %v736 = vshrl.u32 %v476, 16
      %v738 = vrot.slane %v736, 7
      %v739 = vshll.u32 %v476, 16
      %v741 = vor.u32 %v738, %v739
      %v742 = vrot.slane %v738, 4
      %v744 = vshrl.u32 %v477, 16
      %v746 = vrot.slane %v744, 7
      %v747 = vshll.u32 %v477, 16
      %v749 = vor.u32 %v746, %v747
      %v750 = vsel %vm479, %v742, %v749
      %v751 = vrot.slane %v746, 4
      %s800 = scalar_lea.vmem [#allocation2], 12
      %vm801 = vcmask 27648
      %vm802 = vmand %vm801, %vm326
      %v803 = vld [vmem:[%s800] sm:$0xf]
      %v804 = vsel %vm802, %v486, %v803
      %805 = vst [vmem:[%s800] sm:$0xf] %v804
      %806 = vst.msk [vmem:[%s800 + $0x4] sm:$0xf] %vm260, %v495
      %v807 = vld [vmem:[%s800 + $0x8] sm:$0x1]
      %v808 = vsel %vm271, %v496, %v807
      %809 = vst [vmem:[%s800 + $0x8] sm:$0x1] %v808
      %v810 = vld [vmem:[%s800 + $0xc] sm:$0xf]
      %v811 = vsel %vm802, %v503, %v810
      %812 = vst [vmem:[%s800 + $0xc] sm:$0xf] %v811
      %813 = vst.msk [vmem:[%s800 + $0x10] sm:$0xf] %vm260, %v512
      %v814 = vld [vmem:[%s800 + $0x14] sm:$0x1]
      %v815 = vsel %vm271, %v513, %v814
      %816 = vst [vmem:[%s800 + $0x14] sm:$0x1] %v815
      %v817 = vld [vmem:[%s800 + $0x18] sm:$0xf]
      %v818 = vsel %vm802, %v520, %v817
      %819 = vst [vmem:[%s800 + $0x18] sm:$0xf] %v818
      %820 = vst.msk [vmem:[%s800 + $0x1c] sm:$0xf] %vm260, %v529
      %v821 = vld [vmem:[%s800 + $0x20] sm:$0x1]
      %v822 = vsel %vm271, %v530, %v821
      %823 = vst [vmem:[%s800 + $0x20] sm:$0x1] %v822
      %v824 = vld [vmem:[%s800 + $0x24] sm:$0xf]
      %v825 = vsel %vm802, %v537, %v824
      %826 = vst [vmem:[%s800 + $0x24] sm:$0xf] %v825
      %827 = vst.msk [vmem:[%s800 + $0x28] sm:$0xf] %vm260, %v546
      %v828 = vld [vmem:[%s800 + $0x2c] sm:$0x1]
      %v829 = vsel %vm271, %v547, %v828
      %830 = vst [vmem:[%s800 + $0x2c] sm:$0x1] %v829
      %v831 = vld [vmem:[%s800 + $0x30] sm:$0xf]
      %v832 = vsel %vm802, %v554, %v831
      %833 = vst [vmem:[%s800 + $0x30] sm:$0xf] %v832
      %834 = vst.msk [vmem:[%s800 + $0x34] sm:$0xf] %vm260, %v563
      %v835 = vld [vmem:[%s800 + $0x38] sm:$0x1]
      %v836 = vsel %vm271, %v564, %v835
      %837 = vst [vmem:[%s800 + $0x38] sm:$0x1] %v836
      %v838 = vld [vmem:[%s800 + $0x3c] sm:$0xf]
      %v839 = vsel %vm802, %v571, %v838
      %840 = vst [vmem:[%s800 + $0x3c] sm:$0xf] %v839
      %841 = vst.msk [vmem:[%s800 + $0x40] sm:$0xf] %vm260, %v580
      %v842 = vld [vmem:[%s800 + $0x44] sm:$0x1]
      %v843 = vsel %vm271, %v581, %v842
      %844 = vst [vmem:[%s800 + $0x44] sm:$0x1] %v843
      %v845 = vld [vmem:[%s800 + $0x48] sm:$0xf]
      %v846 = vsel %vm802, %v588, %v845
      %847 = vst [vmem:[%s800 + $0x48] sm:$0xf] %v846
      %848 = vst.msk [vmem:[%s800 + $0x4c] sm:$0xf] %vm260, %v597
      %v849 = vld [vmem:[%s800 + $0x50] sm:$0x1]
      %v850 = vsel %vm271, %v598, %v849
      %851 = vst [vmem:[%s800 + $0x50] sm:$0x1] %v850
      %v852 = vld [vmem:[%s800 + $0x54] sm:$0xf]
      %v853 = vsel %vm802, %v605, %v852
      %854 = vst [vmem:[%s800 + $0x54] sm:$0xf] %v853
      %855 = vst.msk [vmem:[%s800 + $0x58] sm:$0xf] %vm260, %v614
      %v856 = vld [vmem:[%s800 + $0x5c] sm:$0x1]
      %v857 = vsel %vm271, %v615, %v856
      %858 = vst [vmem:[%s800 + $0x5c] sm:$0x1] %v857
      %v859 = vld [vmem:[%s800 + $0x60] sm:$0xf]
      %v860 = vsel %vm802, %v622, %v859
      %861 = vst [vmem:[%s800 + $0x60] sm:$0xf] %v860
      %862 = vst.msk [vmem:[%s800 + $0x64] sm:$0xf] %vm260, %v631
      %v863 = vld [vmem:[%s800 + $0x68] sm:$0x1]
      %v864 = vsel %vm271, %v632, %v863
      %865 = vst [vmem:[%s800 + $0x68] sm:$0x1] %v864
      %v866 = vld [vmem:[%s800 + $0x6c] sm:$0xf]
      %v867 = vsel %vm802, %v639, %v866
      %868 = vst [vmem:[%s800 + $0x6c] sm:$0xf] %v867
      %869 = vst.msk [vmem:[%s800 + $0x70] sm:$0xf] %vm260, %v648
      %v870 = vld [vmem:[%s800 + $0x74] sm:$0x1]
      %v871 = vsel %vm271, %v649, %v870
      %872 = vst [vmem:[%s800 + $0x74] sm:$0x1] %v871
      %v873 = vld [vmem:[%s800 + $0x78] sm:$0xf]
      %v874 = vsel %vm802, %v656, %v873
      %875 = vst [vmem:[%s800 + $0x78] sm:$0xf] %v874
      %876 = vst.msk [vmem:[%s800 + $0x7c] sm:$0xf] %vm260, %v665
      %v877 = vld [vmem:[%s800 + $0x80] sm:$0x1]
      %v878 = vsel %vm271, %v666, %v877
      %879 = vst [vmem:[%s800 + $0x80] sm:$0x1] %v878
      %v880 = vld [vmem:[%s800 + $0x84] sm:$0xf]
      %v881 = vsel %vm802, %v673, %v880
      %882 = vst [vmem:[%s800 + $0x84] sm:$0xf] %v881
      %883 = vst.msk [vmem:[%s800 + $0x88] sm:$0xf] %vm260, %v682
      %v884 = vld [vmem:[%s800 + $0x8c] sm:$0x1]
      %v885 = vsel %vm271, %v683, %v884
      %886 = vst [vmem:[%s800 + $0x8c] sm:$0x1] %v885
      %v887 = vld [vmem:[%s800 + $0x90] sm:$0xf]
      %v888 = vsel %vm802, %v690, %v887
      %889 = vst [vmem:[%s800 + $0x90] sm:$0xf] %v888
      %890 = vst.msk [vmem:[%s800 + $0x94] sm:$0xf] %vm260, %v699
      %v891 = vld [vmem:[%s800 + $0x98] sm:$0x1]
      %v892 = vsel %vm271, %v700, %v891
      %893 = vst [vmem:[%s800 + $0x98] sm:$0x1] %v892
      %v894 = vld [vmem:[%s800 + $0x9c] sm:$0xf]
      %v895 = vsel %vm802, %v707, %v894
      %896 = vst [vmem:[%s800 + $0x9c] sm:$0xf] %v895
      %897 = vst.msk [vmem:[%s800 + $0xa0] sm:$0xf] %vm260, %v716
      %v898 = vld [vmem:[%s800 + $0xa4] sm:$0x1]
      %v899 = vsel %vm271, %v717, %v898
      %900 = vst [vmem:[%s800 + $0xa4] sm:$0x1] %v899
      %v901 = vld [vmem:[%s800 + $0xa8] sm:$0xf]
      %v902 = vsel %vm802, %v724, %v901
      %903 = vst [vmem:[%s800 + $0xa8] sm:$0xf] %v902
      %904 = vst.msk [vmem:[%s800 + $0xac] sm:$0xf] %vm260, %v733
      %v905 = vld [vmem:[%s800 + $0xb0] sm:$0x1]
      %v906 = vsel %vm271, %v734, %v905
      %907 = vst [vmem:[%s800 + $0xb0] sm:$0x1] %v906
      %v908 = vld [vmem:[%s800 + $0xb4] sm:$0xf]
      %v909 = vsel %vm802, %v741, %v908
      %910 = vst [vmem:[%s800 + $0xb4] sm:$0xf] %v909
      %911 = vst.msk [vmem:[%s800 + $0xb8] sm:$0xf] %vm260, %v750
      %v912 = vld [vmem:[%s800 + $0xbc] sm:$0x1]
      %v913 = vsel %vm271, %v751, %v912
      %914 = vst [vmem:[%s800 + $0xbc] sm:$0x1] %v913
      %v915 = vld [vmem:[#allocation2] sm:$0xf]
      %v916 = vld [vmem:[#allocation2 + $0x4] sm:$0xf]
      %v917 = vld [vmem:[#allocation2 + $0xc] sm:$0xf]
      %v918 = vld [vmem:[#allocation2 + $0x10] sm:$0xf]
      %v919 = vld [vmem:[#allocation2 + $0x18] sm:$0xf]
      %v920 = vld [vmem:[#allocation2 + $0x1c] sm:$0xf]
      %v921 = vld [vmem:[#allocation2 + $0x24] sm:$0xf]
      %v922 = vld [vmem:[#allocation2 + $0x28] sm:$0xf]
      %v923 = vld [vmem:[#allocation2 + $0x30] sm:$0xf]
      %v924 = vld [vmem:[#allocation2 + $0x34] sm:$0xf]
      %v925 = vld [vmem:[#allocation2 + $0x3c] sm:$0xf]
      %v926 = vld [vmem:[#allocation2 + $0x40] sm:$0xf]
      %v927 = vld [vmem:[#allocation2 + $0x48] sm:$0xf]
      %v928 = vld [vmem:[#allocation2 + $0x4c] sm:$0xf]
      %v929 = vld [vmem:[#allocation2 + $0x54] sm:$0xf]
      %v930 = vld [vmem:[#allocation2 + $0x58] sm:$0xf]
      %v931 = vld [vmem:[#allocation2 + $0x60] sm:$0xf]
      %v932 = vld [vmem:[#allocation2 + $0x64] sm:$0xf]
      %v933 = vld [vmem:[#allocation2 + $0x6c] sm:$0xf]
      %v934 = vld [vmem:[#allocation2 + $0x70] sm:$0xf]
      %v935 = vld [vmem:[#allocation2 + $0x78] sm:$0xf]
      %v936 = vld [vmem:[#allocation2 + $0x7c] sm:$0xf]
      %v937 = vld [vmem:[#allocation2 + $0x84] sm:$0xf]
      %v938 = vld [vmem:[#allocation2 + $0x88] sm:$0xf]
      %v939 = vld [vmem:[#allocation2 + $0x90] sm:$0xf]
      %v940 = vld [vmem:[#allocation2 + $0x94] sm:$0xf]
      %v941 = vld [vmem:[#allocation2 + $0x9c] sm:$0xf]
      %v942 = vld [vmem:[#allocation2 + $0xa0] sm:$0xf]
      %v943 = vld [vmem:[#allocation2 + $0xa8] sm:$0xf]
      %v944 = vld [vmem:[#allocation2 + $0xac] sm:$0xf]
      %v945 = vld [vmem:[#allocation2 + $0xb4] sm:$0xf]
      %v946 = vld [vmem:[#allocation2 + $0xb8] sm:$0xf]
      %947 = vst.msk [vmem:[#allocation3] sm:$0xf] %vm260, %v915
      %948 = vst.msk [vmem:[#allocation3 + $0x4] sm:$0xf] %vm260, %v916
      %949 = vst.msk [vmem:[#allocation3 + $0x8] sm:$0xf] %vm260, %v917
      %950 = vst.msk [vmem:[#allocation3 + $0xc] sm:$0xf] %vm260, %v918
      %951 = vst.msk [vmem:[#allocation3 + $0x10] sm:$0xf] %vm260, %v919
      %952 = vst.msk [vmem:[#allocation3 + $0x14] sm:$0xf] %vm260, %v920
      %953 = vst.msk [vmem:[#allocation3 + $0x18] sm:$0xf] %vm260, %v921
      %954 = vst.msk [vmem:[#allocation3 + $0x1c] sm:$0xf] %vm260, %v922
      %955 = vst.msk [vmem:[#allocation3 + $0x20] sm:$0xf] %vm260, %v923
      %956 = vst.msk [vmem:[#allocation3 + $0x24] sm:$0xf] %vm260, %v924
      %957 = vst.msk [vmem:[#allocation3 + $0x28] sm:$0xf] %vm260, %v925
      %958 = vst.msk [vmem:[#allocation3 + $0x2c] sm:$0xf] %vm260, %v926
      %959 = vst.msk [vmem:[#allocation3 + $0x30] sm:$0xf] %vm260, %v927
      %960 = vst.msk [vmem:[#allocation3 + $0x34] sm:$0xf] %vm260, %v928
      %961 = vst.msk [vmem:[#allocation3 + $0x38] sm:$0xf] %vm260, %v929
      %962 = vst.msk [vmem:[#allocation3 + $0x3c] sm:$0xf] %vm260, %v930
      %963 = vst.msk [vmem:[#allocation3 + $0x40] sm:$0xf] %vm260, %v931
      %964 = vst.msk [vmem:[#allocation3 + $0x44] sm:$0xf] %vm260, %v932
      %965 = vst.msk [vmem:[#allocation3 + $0x48] sm:$0xf] %vm260, %v933
      %966 = vst.msk [vmem:[#allocation3 + $0x4c] sm:$0xf] %vm260, %v934
      %967 = vst.msk [vmem:[#allocation3 + $0x50] sm:$0xf] %vm260, %v935
      %968 = vst.msk [vmem:[#allocation3 + $0x54] sm:$0xf] %vm260, %v936
      %969 = vst.msk [vmem:[#allocation3 + $0x58] sm:$0xf] %vm260, %v937
      %970 = vst.msk [vmem:[#allocation3 + $0x5c] sm:$0xf] %vm260, %v938
      %971 = vst.msk [vmem:[#allocation3 + $0x60] sm:$0xf] %vm260, %v939
      %972 = vst.msk [vmem:[#allocation3 + $0x64] sm:$0xf] %vm260, %v940
      %973 = vst.msk [vmem:[#allocation3 + $0x68] sm:$0xf] %vm260, %v941
      %974 = vst.msk [vmem:[#allocation3 + $0x6c] sm:$0xf] %vm260, %v942
      %975 = vst.msk [vmem:[#allocation3 + $0x70] sm:$0xf] %vm260, %v943
      %976 = vst.msk [vmem:[#allocation3 + $0x74] sm:$0xf] %vm260, %v944
      %977 = vst.msk [vmem:[#allocation3 + $0x78] sm:$0xf] %vm260, %v945
      %978 = vst.msk [vmem:[#allocation3 + $0x7c] sm:$0xf] %vm260, %v946
      %v979 = vld [vmem:[#allocation2] sm:$0xf]
      %v980 = vld [vmem:[#allocation2 + $0x4] sm:$0xf]
      %v981 = vld [vmem:[#allocation2 + $0x8] sm:$0x1]
      %v982 = vld [vmem:[#allocation2 + $0xc] sm:$0xf]
      %v983 = vld [vmem:[#allocation2 + $0x10] sm:$0xf]
      %v984 = vld [vmem:[#allocation2 + $0x14] sm:$0x1]
      %v985 = vld [vmem:[#allocation2 + $0x18] sm:$0xf]
      %v986 = vld [vmem:[#allocation2 + $0x1c] sm:$0xf]
      %v987 = vld [vmem:[#allocation2 + $0x20] sm:$0x1]
      %v988 = vld [vmem:[#allocation2 + $0x24] sm:$0xf]
      %v989 = vld [vmem:[#allocation2 + $0x28] sm:$0xf]
      %v990 = vld [vmem:[#allocation2 + $0x2c] sm:$0x1]
      %v991 = vld [vmem:[#allocation2 + $0x30] sm:$0xf]
      %v992 = vld [vmem:[#allocation2 + $0x34] sm:$0xf]
      %v993 = vld [vmem:[#allocation2 + $0x38] sm:$0x1]
      %v994 = vld [vmem:[#allocation2 + $0x3c] sm:$0xf]
      %v995 = vld [vmem:[#allocation2 + $0x40] sm:$0xf]
      %v996 = vld [vmem:[#allocation2 + $0x44] sm:$0x1]
      %v997 = vld [vmem:[#allocation2 + $0x48] sm:$0xf]
      %v998 = vld [vmem:[#allocation2 + $0x4c] sm:$0xf]
      %v999 = vld [vmem:[#allocation2 + $0x50] sm:$0x1]
      %v1000 = vld [vmem:[#allocation2 + $0x54] sm:$0xf]
      %v1001 = vld [vmem:[#allocation2 + $0x58] sm:$0xf]
      %v1002 = vld [vmem:[#allocation2 + $0x5c] sm:$0x1]
      %v1003 = vld [vmem:[#allocation2 + $0x60] sm:$0xf]
      %v1004 = vld [vmem:[#allocation2 + $0x64] sm:$0xf]
      %v1005 = vld [vmem:[#allocation2 + $0x68] sm:$0x1]
      %v1006 = vld [vmem:[#allocation2 + $0x6c] sm:$0xf]
      %v1007 = vld [vmem:[#allocation2 + $0x70] sm:$0xf]
      %v1008 = vld [vmem:[#allocation2 + $0x74] sm:$0x1]
      %v1009 = vld [vmem:[#allocation2 + $0x78] sm:$0xf]
      %v1010 = vld [vmem:[#allocation2 + $0x7c] sm:$0xf]
      %v1011 = vld [vmem:[#allocation2 + $0x80] sm:$0x1]
      %v1012 = vld [vmem:[#allocation2 + $0x84] sm:$0xf]
      %v1013 = vld [vmem:[#allocation2 + $0x88] sm:$0xf]
      %v1014 = vld [vmem:[#allocation2 + $0x8c] sm:$0x1]
      %v1015 = vld [vmem:[#allocation2 + $0x90] sm:$0xf]
      %v1016 = vld [vmem:[#allocation2 + $0x94] sm:$0xf]
      %v1017 = vld [vmem:[#allocation2 + $0x98] sm:$0x1]
      %v1018 = vld [vmem:[#allocation2 + $0x9c] sm:$0xf]
      %v1019 = vld [vmem:[#allocation2 + $0xa0] sm:$0xf]
      %v1020 = vld [vmem:[#allocation2 + $0xa4] sm:$0x1]
      %v1021 = vld [vmem:[#allocation2 + $0xa8] sm:$0xf]
      %v1022 = vld [vmem:[#allocation2 + $0xac] sm:$0xf]
      %v1023 = vld [vmem:[#allocation2 + $0xb0] sm:$0x1]
      %v1024 = vld [vmem:[#allocation2 + $0xb4] sm:$0xf]
      %v1025 = vld [vmem:[#allocation2 + $0xb8] sm:$0xf]
      %v1026 = vld [vmem:[#allocation2 + $0xbc] sm:$0x1]
      %vm1027 = vsmask.f32 3328
      %vm1028 = vsmask.f32 7440
      %vm1029 = vmor %vm1027, %vm1028
      %v1031 = vshrl.u32 %v979, 16
      %v1033 = vrot.slane %v1031, 4
      %v1034 = vshll.u32 %v979, 16
      %v1036 = vrot.slane %v1034, 5
      %v1037 = vor.u32 %v1033, %v1036
      %v1038 = vrot.slane %v1037, 4
      %v1040 = vshll.u32 %v980, 16
      %v1042 = vrot.slane %v1040, 5
      %v1043 = vsel %vm1029, %v1038, %v1042
      %v1044 = vshrl.u32 %v980, 16
      %v1046 = vrot.slane %v1044, 4
      %v1047 = vor.u32 %v1046, %v1042
      %v1048 = vrot.slane %v1047, 4
      %v1050 = vshll.u32 %v981, 16
      %v1052 = vrot.slane %v1050, 5
      %v1053 = vsel %vm1029, %v1048, %v1052
      %v1055 = vshrl.u32 %v982, 16
      %v1057 = vrot.slane %v1055, 4
      %v1058 = vshll.u32 %v982, 16
      %v1060 = vrot.slane %v1058, 5
      %v1061 = vor.u32 %v1057, %v1060
      %v1062 = vrot.slane %v1061, 4
      %v1064 = vshll.u32 %v983, 16
      %v1066 = vrot.slane %v1064, 5
      %v1067 = vsel %vm1029, %v1062, %v1066
      %v1068 = vshrl.u32 %v983, 16
      %v1070 = vrot.slane %v1068, 4
      %v1071 = vor.u32 %v1070, %v1066
      %v1072 = vrot.slane %v1071, 4
      %v1074 = vshll.u32 %v984, 16
      %v1076 = vrot.slane %v1074, 5
      %v1077 = vsel %vm1029, %v1072, %v1076
      %v1079 = vshrl.u32 %v985, 16
      %v1081 = vrot.slane %v1079, 4
      %v1082 = vshll.u32 %v985, 16
      %v1084 = vrot.slane %v1082, 5
      %v1085 = vor.u32 %v1081, %v1084
      %v1086 = vrot.slane %v1085, 4
      %v1088 = vshll.u32 %v986, 16
      %v1090 = vrot.slane %v1088, 5
      %v1091 = vsel %vm1029, %v1086, %v1090
      %v1092 = vshrl.u32 %v986, 16
      %v1094 = vrot.slane %v1092, 4
      %v1095 = vor.u32 %v1094, %v1090
      %v1096 = vrot.slane %v1095, 4
      %v1098 = vshll.u32 %v987, 16
      %v1100 = vrot.slane %v1098, 5
      %v1101 = vsel %vm1029, %v1096, %v1100
      %v1103 = vshrl.u32 %v988, 16
      %v1105 = vrot.slane %v1103, 4
      %v1106 = vshll.u32 %v988, 16
      %v1108 = vrot.slane %v1106, 5
      %v1109 = vor.u32 %v1105, %v1108
      %v1110 = vrot.slane %v1109, 4
      %v1112 = vshll.u32 %v989, 16
      %v1114 = vrot.slane %v1112, 5
      %v1115 = vsel %vm1029, %v1110, %v1114
      %v1116 = vshrl.u32 %v989, 16
      %v1118 = vrot.slane %v1116, 4
      %v1119 = vor.u32 %v1118, %v1114
      %v1120 = vrot.slane %v1119, 4
      %v1122 = vshll.u32 %v990, 16
      %v1124 = vrot.slane %v1122, 5
      %v1125 = vsel %vm1029, %v1120, %v1124
      %v1127 = vshrl.u32 %v991, 16
      %v1129 = vrot.slane %v1127, 4
      %v1130 = vshll.u32 %v991, 16
      %v1132 = vrot.slane %v1130, 5
      %v1133 = vor.u32 %v1129, %v1132
      %v1134 = vrot.slane %v1133, 4
      %v1136 = vshll.u32 %v992, 16
      %v1138 = vrot.slane %v1136, 5
      %v1139 = vsel %vm1029, %v1134, %v1138
      %v1140 = vshrl.u32 %v992, 16
      %v1142 = vrot.slane %v1140, 4
      %v1143 = vor.u32 %v1142, %v1138
      %v1144 = vrot.slane %v1143, 4
      %v1146 = vshll.u32 %v993, 16
      %v1148 = vrot.slane %v1146, 5
      %v1149 = vsel %vm1029, %v1144, %v1148
      %v1151 = vshrl.u32 %v994, 16
      %v1153 = vrot.slane %v1151, 4
      %v1154 = vshll.u32 %v994, 16
      %v1156 = vrot.slane %v1154, 5
      %v1157 = vor.u32 %v1153, %v1156
      %v1158 = vrot.slane %v1157, 4
      %v1160 = vshll.u32 %v995, 16
      %v1162 = vrot.slane %v1160, 5
      %v1163 = vsel %vm1029, %v1158, %v1162
      %v1164 = vshrl.u32 %v995, 16
      %v1166 = vrot.slane %v1164, 4
      %v1167 = vor.u32 %v1166, %v1162
      %v1168 = vrot.slane %v1167, 4
      %v1170 = vshll.u32 %v996, 16
      %v1172 = vrot.slane %v1170, 5
      %v1173 = vsel %vm1029, %v1168, %v1172
      %v1175 = vshrl.u32 %v997, 16
      %v1177 = vrot.slane %v1175, 4
      %v1178 = vshll.u32 %v997, 16
      %v1180 = vrot.slane %v1178, 5
      %v1181 = vor.u32 %v1177, %v1180
      %v1182 = vrot.slane %v1181, 4
      %v1184 = vshll.u32 %v998, 16
      %v1186 = vrot.slane %v1184, 5
      %v1187 = vsel %vm1029, %v1182, %v1186
      %v1188 = vshrl.u32 %v998, 16
      %v1190 = vrot.slane %v1188, 4
      %v1191 = vor.u32 %v1190, %v1186
      %v1192 = vrot.slane %v1191, 4
      %v1194 = vshll.u32 %v999, 16
      %v1196 = vrot.slane %v1194, 5
      %v1197 = vsel %vm1029, %v1192, %v1196
      %v1199 = vshrl.u32 %v1000, 16
      %v1201 = vrot.slane %v1199, 4
      %v1202 = vshll.u32 %v1000, 16
      %v1204 = vrot.slane %v1202, 5
      %v1205 = vor.u32 %v1201, %v1204
      %v1206 = vrot.slane %v1205, 4
      %v1208 = vshll.u32 %v1001, 16
      %v1210 = vrot.slane %v1208, 5
      %v1211 = vsel %vm1029, %v1206, %v1210
      %v1212 = vshrl.u32 %v1001, 16
      %v1214 = vrot.slane %v1212, 4
      %v1215 = vor.u32 %v1214, %v1210
      %v1216 = vrot.slane %v1215, 4
      %v1218 = vshll.u32 %v1002, 16
      %v1220 = vrot.slane %v1218, 5
      %v1221 = vsel %vm1029, %v1216, %v1220
      %v1223 = vshrl.u32 %v1003, 16
      %v1225 = vrot.slane %v1223, 4
      %v1226 = vshll.u32 %v1003, 16
      %v1228 = vrot.slane %v1226, 5
      %v1229 = vor.u32 %v1225, %v1228
      %v1230 = vrot.slane %v1229, 4
      %v1232 = vshll.u32 %v1004, 16
      %v1234 = vrot.slane %v1232, 5
      %v1235 = vsel %vm1029, %v1230, %v1234
      %v1236 = vshrl.u32 %v1004, 16
      %v1238 = vrot.slane %v1236, 4
      %v1239 = vor.u32 %v1238, %v1234
      %v1240 = vrot.slane %v1239, 4
      %v1242 = vshll.u32 %v1005, 16
      %v1244 = vrot.slane %v1242, 5
      %v1245 = vsel %vm1029, %v1240, %v1244
      %v1247 = vshrl.u32 %v1006, 16
      %v1249 = vrot.slane %v1247, 4
      %v1250 = vshll.u32 %v1006, 16
      %v1252 = vrot.slane %v1250, 5
      %v1253 = vor.u32 %v1249, %v1252
      %v1254 = vrot.slane %v1253, 4
      %v1256 = vshll.u32 %v1007, 16
      %v1258 = vrot.slane %v1256, 5
      %v1259 = vsel %vm1029, %v1254, %v1258
      %v1260 = vshrl.u32 %v1007, 16
      %v1262 = vrot.slane %v1260, 4
      %v1263 = vor.u32 %v1262, %v1258
      %v1264 = vrot.slane %v1263, 4
      %v1266 = vshll.u32 %v1008, 16
      %v1268 = vrot.slane %v1266, 5
      %v1269 = vsel %vm1029, %v1264, %v1268
      %v1271 = vshrl.u32 %v1009, 16
      %v1273 = vrot.slane %v1271, 4
      %v1274 = vshll.u32 %v1009, 16
      %v1276 = vrot.slane %v1274, 5
      %v1277 = vor.u32 %v1273, %v1276
      %v1278 = vrot.slane %v1277, 4
      %v1280 = vshll.u32 %v1010, 16
      %v1282 = vrot.slane %v1280, 5
      %v1283 = vsel %vm1029, %v1278, %v1282
      %v1284 = vshrl.u32 %v1010, 16
      %v1286 = vrot.slane %v1284, 4
      %v1287 = vor.u32 %v1286, %v1282
      %v1288 = vrot.slane %v1287, 4
      %v1290 = vshll.u32 %v1011, 16
      %v1292 = vrot.slane %v1290, 5
      %v1293 = vsel %vm1029, %v1288, %v1292
      %v1295 = vshrl.u32 %v1012, 16
      %v1297 = vrot.slane %v1295, 4
      %v1298 = vshll.u32 %v1012, 16
      %v1300 = vrot.slane %v1298, 5
      %v1301 = vor.u32 %v1297, %v1300
      %v1302 = vrot.slane %v1301, 4
      %v1304 = vshll.u32 %v1013, 16
      %v1306 = vrot.slane %v1304, 5
      %v1307 = vsel %vm1029, %v1302, %v1306
      %v1308 = vshrl.u32 %v1013, 16
      %v1310 = vrot.slane %v1308, 4
      %v1311 = vor.u32 %v1310, %v1306
      %v1312 = vrot.slane %v1311, 4
      %v1314 = vshll.u32 %v1014, 16
      %v1316 = vrot.slane %v1314, 5
      %v1317 = vsel %vm1029, %v1312, %v1316
      %v1319 = vshrl.u32 %v1015, 16
      %v1321 = vrot.slane %v1319, 4
      %v1322 = vshll.u32 %v1015, 16
      %v1324 = vrot.slane %v1322, 5
      %v1325 = vor.u32 %v1321, %v1324
      %v1326 = vrot.slane %v1325, 4
      %v1328 = vshll.u32 %v1016, 16
      %v1330 = vrot.slane %v1328, 5
      %v1331 = vsel %vm1029, %v1326, %v1330
      %v1332 = vshrl.u32 %v1016, 16
      %v1334 = vrot.slane %v1332, 4
      %v1335 = vor.u32 %v1334, %v1330
      %v1336 = vrot.slane %v1335, 4
      %v1338 = vshll.u32 %v1017, 16
      %v1340 = vrot.slane %v1338, 5
      %v1341 = vsel %vm1029, %v1336, %v1340
      %v1343 = vshrl.u32 %v1018, 16
      %v1345 = vrot.slane %v1343, 4
      %v1346 = vshll.u32 %v1018, 16
      %v1348 = vrot.slane %v1346, 5
      %v1349 = vor.u32 %v1345, %v1348
      %v1350 = vrot.slane %v1349, 4
      %v1352 = vshll.u32 %v1019, 16
      %v1354 = vrot.slane %v1352, 5
      %v1355 = vsel %vm1029, %v1350, %v1354
      %v1356 = vshrl.u32 %v1019, 16
      %v1358 = vrot.slane %v1356, 4
      %v1359 = vor.u32 %v1358, %v1354
      %v1360 = vrot.slane %v1359, 4
      %v1362 = vshll.u32 %v1020, 16
      %v1364 = vrot.slane %v1362, 5
      %v1365 = vsel %vm1029, %v1360, %v1364
      %v1367 = vshrl.u32 %v1021, 16
      %v1369 = vrot.slane %v1367, 4
      %v1370 = vshll.u32 %v1021, 16
      %v1372 = vrot.slane %v1370, 5
      %v1373 = vor.u32 %v1369, %v1372
      %v1374 = vrot.slane %v1373, 4
      %v1376 = vshll.u32 %v1022, 16
      %v1378 = vrot.slane %v1376, 5
      %v1379 = vsel %vm1029, %v1374, %v1378
      %v1380 = vshrl.u32 %v1022, 16
      %v1382 = vrot.slane %v1380, 4
      %v1383 = vor.u32 %v1382, %v1378
      %v1384 = vrot.slane %v1383, 4
      %v1386 = vshll.u32 %v1023, 16
      %v1388 = vrot.slane %v1386, 5
      %v1389 = vsel %vm1029, %v1384, %v1388
      %v1391 = vshrl.u32 %v1024, 16
      %v1393 = vrot.slane %v1391, 4
      %v1394 = vshll.u32 %v1024, 16
      %v1396 = vrot.slane %v1394, 5
      %v1397 = vor.u32 %v1393, %v1396
      %v1398 = vrot.slane %v1397, 4
      %v1400 = vshll.u32 %v1025, 16
      %v1402 = vrot.slane %v1400, 5
      %v1403 = vsel %vm1029, %v1398, %v1402
      %v1404 = vshrl.u32 %v1025, 16
      %v1406 = vrot.slane %v1404, 4
      %v1407 = vor.u32 %v1406, %v1402
      %v1408 = vrot.slane %v1407, 4
      %v1410 = vshll.u32 %v1026, 16
      %v1412 = vrot.slane %v1410, 5
      %v1413 = vsel %vm1029, %v1408, %v1412
      %1414 = vrot.lane.b32.xlu0 %v1043, 4
      %v1415 = vpop.permute.xlu0 %1414
      %1416 = vrot.lane.b32.xlu0 %v1053, 4
      %v1417 = vpop.permute.xlu0 %1416
      %1418 = vrot.lane.b32.xlu0 %v1067, 4
      %v1419 = vpop.permute.xlu0 %1418
      %1420 = vrot.lane.b32.xlu0 %v1077, 4
      %v1421 = vpop.permute.xlu0 %1420
      %1422 = vrot.lane.b32.xlu0 %v1091, 4
      %v1423 = vpop.permute.xlu0 %1422
      %1424 = vrot.lane.b32.xlu0 %v1101, 4
      %v1425 = vpop.permute.xlu0 %1424
      %1426 = vrot.lane.b32.xlu0 %v1115, 4
      %v1427 = vpop.permute.xlu0 %1426
      %1428 = vrot.lane.b32.xlu0 %v1125, 4
      %v1429 = vpop.permute.xlu0 %1428
      %1430 = vrot.lane.b32.xlu0 %v1139, 4
      %v1431 = vpop.permute.xlu0 %1430
      %1432 = vrot.lane.b32.xlu0 %v1149, 4
      %v1433 = vpop.permute.xlu0 %1432
      %1434 = vrot.lane.b32.xlu0 %v1163, 4
      %v1435 = vpop.permute.xlu0 %1434
      %1436 = vrot.lane.b32.xlu0 %v1173, 4
      %v1437 = vpop.permute.xlu0 %1436
      %1438 = vrot.lane.b32.xlu0 %v1187, 4
      %v1439 = vpop.permute.xlu0 %1438
      %1440 = vrot.lane.b32.xlu0 %v1197, 4
      %v1441 = vpop.permute.xlu0 %1440
      %1442 = vrot.lane.b32.xlu0 %v1211, 4
      %v1443 = vpop.permute.xlu0 %1442
      %1444 = vrot.lane.b32.xlu0 %v1221, 4
      %v1445 = vpop.permute.xlu0 %1444
      %1446 = vrot.lane.b32.xlu0 %v1235, 4
      %v1447 = vpop.permute.xlu0 %1446
      %1448 = vrot.lane.b32.xlu0 %v1245, 4
      %v1449 = vpop.permute.xlu0 %1448
      %1450 = vrot.lane.b32.xlu0 %v1259, 4
      %v1451 = vpop.permute.xlu0 %1450
      %1452 = vrot.lane.b32.xlu0 %v1269, 4
      %v1453 = vpop.permute.xlu0 %1452
      %1454 = vrot.lane.b32.xlu0 %v1283, 4
      %v1455 = vpop.permute.xlu0 %1454
      %1456 = vrot.lane.b32.xlu0 %v1293, 4
      %v1457 = vpop.permute.xlu0 %1456
      %1458 = vrot.lane.b32.xlu0 %v1307, 4
      %v1459 = vpop.permute.xlu0 %1458
      %1460 = vrot.lane.b32.xlu0 %v1317, 4
      %v1461 = vpop.permute.xlu0 %1460
      %1462 = vrot.lane.b32.xlu0 %v1331, 4
      %v1463 = vpop.permute.xlu0 %1462
      %1464 = vrot.lane.b32.xlu0 %v1341, 4
      %v1465 = vpop.permute.xlu0 %1464
      %1466 = vrot.lane.b32.xlu0 %v1355, 4
      %v1467 = vpop.permute.xlu0 %1466
      %1468 = vrot.lane.b32.xlu0 %v1365, 4
      %v1469 = vpop.permute.xlu0 %1468
      %1470 = vrot.lane.b32.xlu0 %v1379, 4
      %v1471 = vpop.permute.xlu0 %1470
      %1472 = vrot.lane.b32.xlu0 %v1389, 4
      %v1473 = vpop.permute.xlu0 %1472
      %1474 = vrot.lane.b32.xlu0 %v1403, 4
      %v1475 = vpop.permute.xlu0 %1474
      %1476 = vrot.lane.b32.xlu0 %v1413, 4
      %v1477 = vpop.permute.xlu0 %1476
      %vm1510 = vcmask 60448
      %1511 = vst.msk [vmem:[#allocation3] sm:$0xf] %vm1510, %v1415
      %1512 = vst.msk [vmem:[#allocation3 + $0x4] sm:$0xf] %vm1510, %v1417
      %1513 = vst.msk [vmem:[#allocation3 + $0x8] sm:$0xf] %vm1510, %v1419
      %1514 = vst.msk [vmem:[#allocation3 + $0xc] sm:$0xf] %vm1510, %v1421
      %1515 = vst.msk [vmem:[#allocation3 + $0x10] sm:$0xf] %vm1510, %v1423
      %1516 = vst.msk [vmem:[#allocation3 + $0x14] sm:$0xf] %vm1510, %v1425
      %1517 = vst.msk [vmem:[#allocation3 + $0x18] sm:$0xf] %vm1510, %v1427
      %1518 = vst.msk [vmem:[#allocation3 + $0x1c] sm:$0xf] %vm1510, %v1429
      %1519 = vst.msk [vmem:[#allocation3 + $0x20] sm:$0xf] %vm1510, %v1431
      %1520 = vst.msk [vmem:[#allocation3 + $0x24] sm:$0xf] %vm1510, %v1433
      %1521 = vst.msk [vmem:[#allocation3 + $0x28] sm:$0xf] %vm1510, %v1435
      %1522 = vst.msk [vmem:[#allocation3 + $0x2c] sm:$0xf] %vm1510, %v1437
      %1523 = vst.msk [vmem:[#allocation3 + $0x30] sm:$0xf] %vm1510, %v1439
      %1524 = vst.msk [vmem:[#allocation3 + $0x34] sm:$0xf] %vm1510, %v1441
      %1525 = vst.msk [vmem:[#allocation3 + $0x38] sm:$0xf] %vm1510, %v1443
      %1526 = vst.msk [vmem:[#allocation3 + $0x3c] sm:$0xf] %vm1510, %v1445
      %1527 = vst.msk [vmem:[#allocation3 + $0x40] sm:$0xf] %vm1510, %v1447
      %1528 = vst.msk [vmem:[#allocation3 + $0x44] sm:$0xf] %vm1510, %v1449
      %1529 = vst.msk [vmem:[#allocation3 + $0x48] sm:$0xf] %vm1510, %v1451
      %1530 = vst.msk [vmem:[#allocation3 + $0x4c] sm:$0xf] %vm1510, %v1453
      %1531 = vst.msk [vmem:[#allocation3 + $0x50] sm:$0xf] %vm1510, %v1455
      %1532 = vst.msk [vmem:[#allocation3 + $0x54] sm:$0xf] %vm1510, %v1457
      %1533 = vst.msk [vmem:[#allocation3 + $0x58] sm:$0xf] %vm1510, %v1459
      %1534 = vst.msk [vmem:[#allocation3 + $0x5c] sm:$0xf] %vm1510, %v1461
      %1535 = vst.msk [vmem:[#allocation3 + $0x60] sm:$0xf] %vm1510, %v1463
      %1536 = vst.msk [vmem:[#allocation3 + $0x64] sm:$0xf] %vm1510, %v1465
      %1537 = vst.msk [vmem:[#allocation3 + $0x68] sm:$0xf] %vm1510, %v1467
      %1538 = vst.msk [vmem:[#allocation3 + $0x6c] sm:$0xf] %vm1510, %v1469
      %1539 = vst.msk [vmem:[#allocation3 + $0x70] sm:$0xf] %vm1510, %v1471
      %1540 = vst.msk [vmem:[#allocation3 + $0x74] sm:$0xf] %vm1510, %v1473
      %1541 = vst.msk [vmem:[#allocation3 + $0x78] sm:$0xf] %vm1510, %v1475
      %1542 = vst.msk [vmem:[#allocation3 + $0x7c] sm:$0xf] %vm1510, %v1477
      %v1543 = vld [vmem:[#allocation2] sm:$0xe]
      %v1544 = vld [vmem:[#allocation2 + $0x4] sm:$0xf]
      %v1545 = vld [vmem:[#allocation2 + $0x8] sm:$0x1]
      %v1546 = vld [vmem:[#allocation2 + $0xc] sm:$0xe]
      %v1547 = vld [vmem:[#allocation2 + $0x10] sm:$0xf]
      %v1548 = vld [vmem:[#allocation2 + $0x14] sm:$0x1]
      %v1549 = vld [vmem:[#allocation2 + $0x18] sm:$0xe]
      %v1550 = vld [vmem:[#allocation2 + $0x1c] sm:$0xf]
      %v1551 = vld [vmem:[#allocation2 + $0x20] sm:$0x1]
      %v1552 = vld [vmem:[#allocation2 + $0x24] sm:$0xe]
      %v1553 = vld [vmem:[#allocation2 + $0x28] sm:$0xf]
      %v1554 = vld [vmem:[#allocation2 + $0x2c] sm:$0x1]
      %v1555 = vld [vmem:[#allocation2 + $0x30] sm:$0xe]
      %v1556 = vld [vmem:[#allocation2 + $0x34] sm:$0xf]
      %v1557 = vld [vmem:[#allocation2 + $0x38] sm:$0x1]
      %v1558 = vld [vmem:[#allocation2 + $0x3c] sm:$0xe]
      %v1559 = vld [vmem:[#allocation2 + $0x40] sm:$0xf]
      %v1560 = vld [vmem:[#allocation2 + $0x44] sm:$0x1]
      %v1561 = vld [vmem:[#allocation2 + $0x48] sm:$0xe]
      %v1562 = vld [vmem:[#allocation2 + $0x4c] sm:$0xf]
      %v1563 = vld [vmem:[#allocation2 + $0x50] sm:$0x1]
      %v1564 = vld [vmem:[#allocation2 + $0x54] sm:$0xe]
      %v1565 = vld [vmem:[#allocation2 + $0x58] sm:$0xf]
      %v1566 = vld [vmem:[#allocation2 + $0x5c] sm:$0x1]
      %v1567 = vld [vmem:[#allocation2 + $0x60] sm:$0xe]
      %v1568 = vld [vmem:[#allocation2 + $0x64] sm:$0xf]
      %v1569 = vld [vmem:[#allocation2 + $0x68] sm:$0x1]
      %v1570 = vld [vmem:[#allocation2 + $0x6c] sm:$0xe]
      %v1571 = vld [vmem:[#allocation2 + $0x70] sm:$0xf]
      %v1572 = vld [vmem:[#allocation2 + $0x74] sm:$0x1]
      %v1573 = vld [vmem:[#allocation2 + $0x78] sm:$0xe]
      %v1574 = vld [vmem:[#allocation2 + $0x7c] sm:$0xf]
      %v1575 = vld [vmem:[#allocation2 + $0x80] sm:$0x1]
      %v1576 = vld [vmem:[#allocation2 + $0x84] sm:$0xe]
      %v1577 = vld [vmem:[#allocation2 + $0x88] sm:$0xf]
      %v1578 = vld [vmem:[#allocation2 + $0x8c] sm:$0x1]
      %v1579 = vld [vmem:[#allocation2 + $0x90] sm:$0xe]
      %v1580 = vld [vmem:[#allocation2 + $0x94] sm:$0xf]
      %v1581 = vld [vmem:[#allocation2 + $0x98] sm:$0x1]
      %v1582 = vld [vmem:[#allocation2 + $0x9c] sm:$0xe]
      %v1583 = vld [vmem:[#allocation2 + $0xa0] sm:$0xf]
      %v1584 = vld [vmem:[#allocation2 + $0xa4] sm:$0x1]
      %v1585 = vld [vmem:[#allocation2 + $0xa8] sm:$0xe]
      %v1586 = vld [vmem:[#allocation2 + $0xac] sm:$0xf]
      %v1587 = vld [vmem:[#allocation2 + $0xb0] sm:$0x1]
      %v1588 = vld [vmem:[#allocation2 + $0xb4] sm:$0xe]
      %v1589 = vld [vmem:[#allocation2 + $0xb8] sm:$0xf]
      %v1590 = vld [vmem:[#allocation2 + $0xbc] sm:$0x1]
      %vm1639 = vcmask 1042432
      %vm1640 = vcmask 1046532
      %vm1641 = vmor %vm1639, %vm1640
      %v1642 = vrot.slane %v1543, 5
      %v1643 = vrot.slane %v1642, 4
      %v1644 = vrot.slane %v1544, 5
      %v1645 = vsel %vm1641, %v1643, %v1644
      %v1646 = vrot.slane %v1644, 4
      %v1647 = vrot.slane %v1545, 5
      %v1648 = vsel %vm1641, %v1646, %v1647
      %v1649 = vrot.slane %v1546, 5
      %v1650 = vrot.slane %v1649, 4
      %v1651 = vrot.slane %v1547, 5
      %v1652 = vsel %vm1641, %v1650, %v1651
      %v1653 = vrot.slane %v1651, 4
      %v1654 = vrot.slane %v1548, 5
      %v1655 = vsel %vm1641, %v1653, %v1654
      %v1656 = vrot.slane %v1549, 5
      %v1657 = vrot.slane %v1656, 4
      %v1658 = vrot.slane %v1550, 5
      %v1659 = vsel %vm1641, %v1657, %v1658
      %v1660 = vrot.slane %v1658, 4
      %v1661 = vrot.slane %v1551, 5
      %v1662 = vsel %vm1641, %v1660, %v1661
      %v1663 = vrot.slane %v1552, 5
      %v1664 = vrot.slane %v1663, 4
      %v1665 = vrot.slane %v1553, 5
      %v1666 = vsel %vm1641, %v1664, %v1665
      %v1667 = vrot.slane %v1665, 4
      %v1668 = vrot.slane %v1554, 5
      %v1669 = vsel %vm1641, %v1667, %v1668
      %v1670 = vrot.slane %v1555, 5
      %v1671 = vrot.slane %v1670, 4
      %v1672 = vrot.slane %v1556, 5
      %v1673 = vsel %vm1641, %v1671, %v1672
      %v1674 = vrot.slane %v1672, 4
      %v1675 = vrot.slane %v1557, 5
      %v1676 = vsel %vm1641, %v1674, %v1675
      %v1677 = vrot.slane %v1558, 5
      %v1678 = vrot.slane %v1677, 4
      %v1679 = vrot.slane %v1559, 5
      %v1680 = vsel %vm1641, %v1678, %v1679
      %v1681 = vrot.slane %v1679, 4
      %v1682 = vrot.slane %v1560, 5
      %v1683 = vsel %vm1641, %v1681, %v1682
      %v1684 = vrot.slane %v1561, 5
      %v1685 = vrot.slane %v1684, 4
      %v1686 = vrot.slane %v1562, 5
      %v1687 = vsel %vm1641, %v1685, %v1686
      %v1688 = vrot.slane %v1686, 4
      %v1689 = vrot.slane %v1563, 5
      %v1690 = vsel %vm1641, %v1688, %v1689
      %v1691 = vrot.slane %v1564, 5
      %v1692 = vrot.slane %v1691, 4
      %v1693 = vrot.slane %v1565, 5
      %v1694 = vsel %vm1641, %v1692, %v1693
      %v1695 = vrot.slane %v1693, 4
      %v1696 = vrot.slane %v1566, 5
      %v1697 = vsel %vm1641, %v1695, %v1696
      %v1698 = vrot.slane %v1567, 5
      %v1699 = vrot.slane %v1698, 4
      %v1700 = vrot.slane %v1568, 5
      %v1701 = vsel %vm1641, %v1699, %v1700
      %v1702 = vrot.slane %v1700, 4
      %v1703 = vrot.slane %v1569, 5
      %v1704 = vsel %vm1641, %v1702, %v1703
      %v1705 = vrot.slane %v1570, 5
      %v1706 = vrot.slane %v1705, 4
      %v1707 = vrot.slane %v1571, 5
      %v1708 = vsel %vm1641, %v1706, %v1707
      %v1709 = vrot.slane %v1707, 4
      %v1710 = vrot.slane %v1572, 5
      %v1711 = vsel %vm1641, %v1709, %v1710
      %v1712 = vrot.slane %v1573, 5
      %v1713 = vrot.slane %v1712, 4
      %v1714 = vrot.slane %v1574, 5
      %v1715 = vsel %vm1641, %v1713, %v1714
      %v1716 = vrot.slane %v1714, 4
      %v1717 = vrot.slane %v1575, 5
      %v1718 = vsel %vm1641, %v1716, %v1717
      %v1719 = vrot.slane %v1576, 5
      %v1720 = vrot.slane %v1719, 4
      %v1721 = vrot.slane %v1577, 5
      %v1722 = vsel %vm1641, %v1720, %v1721
      %v1723 = vrot.slane %v1721, 4
      %v1724 = vrot.slane %v1578, 5
      %v1725 = vsel %vm1641, %v1723, %v1724
      %v1726 = vrot.slane %v1579, 5
      %v1727 = vrot.slane %v1726, 4
      %v1728 = vrot.slane %v1580, 5
      %v1729 = vsel %vm1641, %v1727, %v1728
      %v1730 = vrot.slane %v1728, 4
      %v1731 = vrot.slane %v1581, 5
      %v1732 = vsel %vm1641, %v1730, %v1731
      %v1733 = vrot.slane %v1582, 5
      %v1734 = vrot.slane %v1733, 4
      %v1735 = vrot.slane %v1583, 5
      %v1736 = vsel %vm1641, %v1734, %v1735
      %v1737 = vrot.slane %v1735, 4
      %v1738 = vrot.slane %v1584, 5
      %v1739 = vsel %vm1641, %v1737, %v1738
      %v1740 = vrot.slane %v1585, 5
      %v1741 = vrot.slane %v1740, 4
      %v1742 = vrot.slane %v1586, 5
      %v1743 = vsel %vm1641, %v1741, %v1742
      %v1744 = vrot.slane %v1742, 4
      %v1745 = vrot.slane %v1587, 5
      %v1746 = vsel %vm1641, %v1744, %v1745
      %v1747 = vrot.slane %v1588, 5
      %v1748 = vrot.slane %v1747, 4
      %v1749 = vrot.slane %v1589, 5
      %v1750 = vsel %vm1641, %v1748, %v1749
      %v1751 = vrot.slane %v1749, 4
      %v1752 = vrot.slane %v1590, 5
      %v1753 = vsel %vm1641, %v1751, %v1752
      %1754 = vrot.lane.b32.xlu0 %v1645, 8
      %v1755 = vpop.permute.xlu0 %1754
      %1756 = vrot.lane.b32.xlu0 %v1648, 8
      %v1757 = vpop.permute.xlu0 %1756
      %1758 = vrot.lane.b32.xlu0 %v1652, 8
      %v1759 = vpop.permute.xlu0 %1758
      %1760 = vrot.lane.b32.xlu0 %v1655, 8
      %v1761 = vpop.permute.xlu0 %1760
      %1762 = vrot.lane.b32.xlu0 %v1659, 8
      %v1763 = vpop.permute.xlu0 %1762
      %1764 = vrot.lane.b32.xlu0 %v1662, 8
      %v1765 = vpop.permute.xlu0 %1764
      %1766 = vrot.lane.b32.xlu0 %v1666, 8
      %v1767 = vpop.permute.xlu0 %1766
      %1768 = vrot.lane.b32.xlu0 %v1669, 8
      %v1769 = vpop.permute.xlu0 %1768
      %1770 = vrot.lane.b32.xlu0 %v1673, 8
      %v1771 = vpop.permute.xlu0 %1770
      %1772 = vrot.lane.b32.xlu0 %v1676, 8
      %v1773 = vpop.permute.xlu0 %1772
      %1774 = vrot.lane.b32.xlu0 %v1680, 8
      %v1775 = vpop.permute.xlu0 %1774
      %1776 = vrot.lane.b32.xlu0 %v1683, 8
      %v1777 = vpop.permute.xlu0 %1776
      %1778 = vrot.lane.b32.xlu0 %v1687, 8
      %v1779 = vpop.permute.xlu0 %1778
      %1780 = vrot.lane.b32.xlu0 %v1690, 8
      %v1781 = vpop.permute.xlu0 %1780
      %1782 = vrot.lane.b32.xlu0 %v1694, 8
      %v1783 = vpop.permute.xlu0 %1782
      %1784 = vrot.lane.b32.xlu0 %v1697, 8
      %v1785 = vpop.permute.xlu0 %1784
      %1786 = vrot.lane.b32.xlu0 %v1701, 8
      %v1787 = vpop.permute.xlu0 %1786
      %1788 = vrot.lane.b32.xlu0 %v1704, 8
      %v1789 = vpop.permute.xlu0 %1788
      %1790 = vrot.lane.b32.xlu0 %v1708, 8
      %v1791 = vpop.permute.xlu0 %1790
      %1792 = vrot.lane.b32.xlu0 %v1711, 8
      %v1793 = vpop.permute.xlu0 %1792
      %1794 = vrot.lane.b32.xlu0 %v1715, 8
      %v1795 = vpop.permute.xlu0 %1794
      %1796 = vrot.lane.b32.xlu0 %v1718, 8
      %v1797 = vpop.permute.xlu0 %1796
      %1798 = vrot.lane.b32.xlu0 %v1722, 8
      %v1799 = vpop.permute.xlu0 %1798
      %1800 = vrot.lane.b32.xlu0 %v1725, 8
      %v1801 = vpop.permute.xlu0 %1800
      %1802 = vrot.lane.b32.xlu0 %v1729, 8
      %v1803 = vpop.permute.xlu0 %1802
      %1804 = vrot.lane.b32.xlu0 %v1732, 8
      %v1805 = vpop.permute.xlu0 %1804
      %1806 = vrot.lane.b32.xlu0 %v1736, 8
      %v1807 = vpop.permute.xlu0 %1806
      %1808 = vrot.lane.b32.xlu0 %v1739, 8
      %v1809 = vpop.permute.xlu0 %1808
      %1810 = vrot.lane.b32.xlu0 %v1743, 8
      %v1811 = vpop.permute.xlu0 %1810
      %1812 = vrot.lane.b32.xlu0 %v1746, 8
      %v1813 = vpop.permute.xlu0 %1812
      %1814 = vrot.lane.b32.xlu0 %v1750, 8
      %v1815 = vpop.permute.xlu0 %1814
      %1816 = vrot.lane.b32.xlu0 %v1753, 8
      %v1817 = vpop.permute.xlu0 %1816
      %vm1850 = vcmask 93248
      %1851 = vst.msk [vmem:[#allocation3] sm:$0xf] %vm1850, %v1755
      %1852 = vst.msk [vmem:[#allocation3 + $0x4] sm:$0xf] %vm1850, %v1757
      %1853 = vst.msk [vmem:[#allocation3 + $0x8] sm:$0xf] %vm1850, %v1759
      %1854 = vst.msk [vmem:[#allocation3 + $0xc] sm:$0xf] %vm1850, %v1761
      %1855 = vst.msk [vmem:[#allocation3 + $0x10] sm:$0xf] %vm1850, %v1763
      %1856 = vst.msk [vmem:[#allocation3 + $0x14] sm:$0xf] %vm1850, %v1765
      %1857 = vst.msk [vmem:[#allocation3 + $0x18] sm:$0xf] %vm1850, %v1767
      %1858 = vst.msk [vmem:[#allocation3 + $0x1c] sm:$0xf] %vm1850, %v1769
      %1859 = vst.msk [vmem:[#allocation3 + $0x20] sm:$0xf] %vm1850, %v1771
      %1860 = vst.msk [vmem:[#allocation3 + $0x24] sm:$0xf] %vm1850, %v1773
      %1861 = vst.msk [vmem:[#allocation3 + $0x28] sm:$0xf] %vm1850, %v1775
      %1862 = vst.msk [vmem:[#allocation3 + $0x2c] sm:$0xf] %vm1850, %v1777
      %1863 = vst.msk [vmem:[#allocation3 + $0x30] sm:$0xf] %vm1850, %v1779
      %1864 = vst.msk [vmem:[#allocation3 + $0x34] sm:$0xf] %vm1850, %v1781
      %1865 = vst.msk [vmem:[#allocation3 + $0x38] sm:$0xf] %vm1850, %v1783
      %1866 = vst.msk [vmem:[#allocation3 + $0x3c] sm:$0xf] %vm1850, %v1785
      %1867 = vst.msk [vmem:[#allocation3 + $0x40] sm:$0xf] %vm1850, %v1787
      %1868 = vst.msk [vmem:[#allocation3 + $0x44] sm:$0xf] %vm1850, %v1789
      %1869 = vst.msk [vmem:[#allocation3 + $0x48] sm:$0xf] %vm1850, %v1791
      %1870 = vst.msk [vmem:[#allocation3 + $0x4c] sm:$0xf] %vm1850, %v1793
      %1871 = vst.msk [vmem:[#allocation3 + $0x50] sm:$0xf] %vm1850, %v1795
      %1872 = vst.msk [vmem:[#allocation3 + $0x54] sm:$0xf] %vm1850, %v1797
      %1873 = vst.msk [vmem:[#allocation3 + $0x58] sm:$0xf] %vm1850, %v1799
      %1874 = vst.msk [vmem:[#allocation3 + $0x5c] sm:$0xf] %vm1850, %v1801
      %1875 = vst.msk [vmem:[#allocation3 + $0x60] sm:$0xf] %vm1850, %v1803
      %1876 = vst.msk [vmem:[#allocation3 + $0x64] sm:$0xf] %vm1850, %v1805
      %1877 = vst.msk [vmem:[#allocation3 + $0x68] sm:$0xf] %vm1850, %v1807
      %1878 = vst.msk [vmem:[#allocation3 + $0x6c] sm:$0xf] %vm1850, %v1809
      %1879 = vst.msk [vmem:[#allocation3 + $0x70] sm:$0xf] %vm1850, %v1811
      %1880 = vst.msk [vmem:[#allocation3 + $0x74] sm:$0xf] %vm1850, %v1813
      %1881 = vst.msk [vmem:[#allocation3 + $0x78] sm:$0xf] %vm1850, %v1815
      %1882 = vst.msk [vmem:[#allocation3 + $0x7c] sm:$0xf] %vm1850, %v1817
      %v1883 = vld [vmem:[%s800] sm:$0xf]
      %v1884 = vld [vmem:[%s800 + $0x4] sm:$0xf]
      %v1885 = vld [vmem:[%s800 + $0xc] sm:$0xf]
      %v1886 = vld [vmem:[%s800 + $0x10] sm:$0xf]
      %v1887 = vld [vmem:[%s800 + $0x18] sm:$0xf]
      %v1888 = vld [vmem:[%s800 + $0x1c] sm:$0xf]
      %v1889 = vld [vmem:[%s800 + $0x24] sm:$0xf]
      %v1890 = vld [vmem:[%s800 + $0x28] sm:$0xf]
      %v1891 = vld [vmem:[%s800 + $0x30] sm:$0xf]
      %v1892 = vld [vmem:[%s800 + $0x34] sm:$0xf]
      %v1893 = vld [vmem:[%s800 + $0x3c] sm:$0xf]
      %v1894 = vld [vmem:[%s800 + $0x40] sm:$0xf]
      %v1895 = vld [vmem:[%s800 + $0x48] sm:$0xf]
      %v1896 = vld [vmem:[%s800 + $0x4c] sm:$0xf]
      %v1897 = vld [vmem:[%s800 + $0x54] sm:$0xf]
      %v1898 = vld [vmem:[%s800 + $0x58] sm:$0xf]
      %v1899 = vld [vmem:[%s800 + $0x60] sm:$0xf]
      %v1900 = vld [vmem:[%s800 + $0x64] sm:$0xf]
      %v1901 = vld [vmem:[%s800 + $0x6c] sm:$0xf]
      %v1902 = vld [vmem:[%s800 + $0x70] sm:$0xf]
      %v1903 = vld [vmem:[%s800 + $0x78] sm:$0xf]
      %v1904 = vld [vmem:[%s800 + $0x7c] sm:$0xf]
      %v1905 = vld [vmem:[%s800 + $0x84] sm:$0xf]
      %v1906 = vld [vmem:[%s800 + $0x88] sm:$0xf]
      %v1907 = vld [vmem:[%s800 + $0x90] sm:$0xf]
      %v1908 = vld [vmem:[%s800 + $0x94] sm:$0xf]
      %v1909 = vld [vmem:[%s800 + $0x9c] sm:$0xf]
      %v1910 = vld [vmem:[%s800 + $0xa0] sm:$0xf]
      %v1911 = vld [vmem:[%s800 + $0xa8] sm:$0xf]
      %v1912 = vld [vmem:[%s800 + $0xac] sm:$0xf]
      %v1913 = vld [vmem:[%s800 + $0xb4] sm:$0xf]
      %v1914 = vld [vmem:[%s800 + $0xb8] sm:$0xf]
      %1947 = vrot.lane.b32.xlu0 %v1883, 12
      %v1948 = vpop.permute.xlu0 %1947
      %1949 = vrot.lane.b32.xlu0 %v1884, 12
      %v1950 = vpop.permute.xlu0 %1949
      %1951 = vrot.lane.b32.xlu0 %v1885, 12
      %v1952 = vpop.permute.xlu0 %1951
      %1953 = vrot.lane.b32.xlu0 %v1886, 12
      %v1954 = vpop.permute.xlu0 %1953
      %1955 = vrot.lane.b32.xlu0 %v1887, 12
      %v1956 = vpop.permute.xlu0 %1955
      %1957 = vrot.lane.b32.xlu0 %v1888, 12
      %v1958 = vpop.permute.xlu0 %1957
      %1959 = vrot.lane.b32.xlu0 %v1889, 12
      %v1960 = vpop.permute.xlu0 %1959
      %1961 = vrot.lane.b32.xlu0 %v1890, 12
      %v1962 = vpop.permute.xlu0 %1961
      %1963 = vrot.lane.b32.xlu0 %v1891, 12
      %v1964 = vpop.permute.xlu0 %1963
      %1965 = vrot.lane.b32.xlu0 %v1892, 12
      %v1966 = vpop.permute.xlu0 %1965
      %1967 = vrot.lane.b32.xlu0 %v1893, 12
      %v1968 = vpop.permute.xlu0 %1967
      %1969 = vrot.lane.b32.xlu0 %v1894, 12
      %v1970 = vpop.permute.xlu0 %1969
      %1971 = vrot.lane.b32.xlu0 %v1895, 12
      %v1972 = vpop.permute.xlu0 %1971
      %1973 = vrot.lane.b32.xlu0 %v1896, 12
      %v1974 = vpop.permute.xlu0 %1973
      %1975 = vrot.lane.b32.xlu0 %v1897, 12
      %v1976 = vpop.permute.xlu0 %1975
      %1977 = vrot.lane.b32.xlu0 %v1898, 12
      %v1978 = vpop.permute.xlu0 %1977
      %1979 = vrot.lane.b32.xlu0 %v1899, 12
      %v1980 = vpop.permute.xlu0 %1979
      %1981 = vrot.lane.b32.xlu0 %v1900, 12
      %v1982 = vpop.permute.xlu0 %1981
      %1983 = vrot.lane.b32.xlu0 %v1901, 12
      %v1984 = vpop.permute.xlu0 %1983
      %1985 = vrot.lane.b32.xlu0 %v1902, 12
      %v1986 = vpop.permute.xlu0 %1985
      %1987 = vrot.lane.b32.xlu0 %v1903, 12
      %v1988 = vpop.permute.xlu0 %1987
      %1989 = vrot.lane.b32.xlu0 %v1904, 12
      %v1990 = vpop.permute.xlu0 %1989
      %1991 = vrot.lane.b32.xlu0 %v1905, 12
      %v1992 = vpop.permute.xlu0 %1991
      %1993 = vrot.lane.b32.xlu0 %v1906, 12
      %v1994 = vpop.permute.xlu0 %1993
      %1995 = vrot.lane.b32.xlu0 %v1907, 12
      %v1996 = vpop.permute.xlu0 %1995
      %1997 = vrot.lane.b32.xlu0 %v1908, 12
      %v1998 = vpop.permute.xlu0 %1997
      %1999 = vrot.lane.b32.xlu0 %v1909, 12
      %v2000 = vpop.permute.xlu0 %1999
      %2001 = vrot.lane.b32.xlu0 %v1910, 12
      %v2002 = vpop.permute.xlu0 %2001
      %2003 = vrot.lane.b32.xlu0 %v1911, 12
      %v2004 = vpop.permute.xlu0 %2003
      %2005 = vrot.lane.b32.xlu0 %v1912, 12
      %v2006 = vpop.permute.xlu0 %2005
      %2007 = vrot.lane.b32.xlu0 %v1913, 12
      %v2008 = vpop.permute.xlu0 %2007
      %2009 = vrot.lane.b32.xlu0 %v1914, 12
      %v2010 = vpop.permute.xlu0 %2009
      %vm2043 = vcmask 126048
      %2044 = vst.msk [vmem:[#allocation3] sm:$0xf] %vm2043, %v1948
      %2045 = vst.msk [vmem:[#allocation3 + $0x4] sm:$0xf] %vm2043, %v1950
      %2046 = vst.msk [vmem:[#allocation3 + $0x8] sm:$0xf] %vm2043, %v1952
      %2047 = vst.msk [vmem:[#allocation3 + $0xc] sm:$0xf] %vm2043, %v1954
      %2048 = vst.msk [vmem:[#allocation3 + $0x10] sm:$0xf] %vm2043, %v1956
      %2049 = vst.msk [vmem:[#allocation3 + $0x14] sm:$0xf] %vm2043, %v1958
      %2050 = vst.msk [vmem:[#allocation3 + $0x18] sm:$0xf] %vm2043, %v1960
      %2051 = vst.msk [vmem:[#allocation3 + $0x1c] sm:$0xf] %vm2043, %v1962
      %2052 = vst.msk [vmem:[#allocation3 + $0x20] sm:$0xf] %vm2043, %v1964
      %2053 = vst.msk [vmem:[#allocation3 + $0x24] sm:$0xf] %vm2043, %v1966
      %2054 = vst.msk [vmem:[#allocation3 + $0x28] sm:$0xf] %vm2043, %v1968
      %2055 = vst.msk [vmem:[#allocation3 + $0x2c] sm:$0xf] %vm2043, %v1970
      %2056 = vst.msk [vmem:[#allocation3 + $0x30] sm:$0xf] %vm2043, %v1972
      %2057 = vst.msk [vmem:[#allocation3 + $0x34] sm:$0xf] %vm2043, %v1974
      %2058 = vst.msk [vmem:[#allocation3 + $0x38] sm:$0xf] %vm2043, %v1976
      %2059 = vst.msk [vmem:[#allocation3 + $0x3c] sm:$0xf] %vm2043, %v1978
      %2060 = vst.msk [vmem:[#allocation3 + $0x40] sm:$0xf] %vm2043, %v1980
      %2061 = vst.msk [vmem:[#allocation3 + $0x44] sm:$0xf] %vm2043, %v1982
      %2062 = vst.msk [vmem:[#allocation3 + $0x48] sm:$0xf] %vm2043, %v1984
      %2063 = vst.msk [vmem:[#allocation3 + $0x4c] sm:$0xf] %vm2043, %v1986
      %2064 = vst.msk [vmem:[#allocation3 + $0x50] sm:$0xf] %vm2043, %v1988
      %2065 = vst.msk [vmem:[#allocation3 + $0x54] sm:$0xf] %vm2043, %v1990
      %2066 = vst.msk [vmem:[#allocation3 + $0x58] sm:$0xf] %vm2043, %v1992
      %2067 = vst.msk [vmem:[#allocation3 + $0x5c] sm:$0xf] %vm2043, %v1994
      %2068 = vst.msk [vmem:[#allocation3 + $0x60] sm:$0xf] %vm2043, %v1996
      %2069 = vst.msk [vmem:[#allocation3 + $0x64] sm:$0xf] %vm2043, %v1998
      %2070 = vst.msk [vmem:[#allocation3 + $0x68] sm:$0xf] %vm2043, %v2000
      %2071 = vst.msk [vmem:[#allocation3 + $0x6c] sm:$0xf] %vm2043, %v2002
      %2072 = vst.msk [vmem:[#allocation3 + $0x70] sm:$0xf] %vm2043, %v2004
      %2073 = vst.msk [vmem:[#allocation3 + $0x74] sm:$0xf] %vm2043, %v2006
      %2074 = vst.msk [vmem:[#allocation3 + $0x78] sm:$0xf] %vm2043, %v2008
      %2075 = vst.msk [vmem:[#allocation3 + $0x7c] sm:$0xf] %vm2043, %v2010
      %v2076 = vld [vmem:[%s800] sm:$0xf]
      %v2077 = vld [vmem:[%s800 + $0x4] sm:$0xf]
      %v2078 = vld [vmem:[%s800 + $0x8] sm:$0x1]
      %v2079 = vld [vmem:[%s800 + $0xc] sm:$0xf]
      %v2080 = vld [vmem:[%s800 + $0x10] sm:$0xf]
      %v2081 = vld [vmem:[%s800 + $0x14] sm:$0x1]
      %v2082 = vld [vmem:[%s800 + $0x18] sm:$0xf]
      %v2083 = vld [vmem:[%s800 + $0x1c] sm:$0xf]
      %v2084 = vld [vmem:[%s800 + $0x20] sm:$0x1]
      %v2085 = vld [vmem:[%s800 + $0x24] sm:$0xf]
      %v2086 = vld [vmem:[%s800 + $0x28] sm:$0xf]
      %v2087 = vld [vmem:[%s800 + $0x2c] sm:$0x1]
      %v2088 = vld [vmem:[%s800 + $0x30] sm:$0xf]
      %v2089 = vld [vmem:[%s800 + $0x34] sm:$0xf]
      %v2090 = vld [vmem:[%s800 + $0x38] sm:$0x1]
      %v2091 = vld [vmem:[%s800 + $0x3c] sm:$0xf]
      %v2092 = vld [vmem:[%s800 + $0x40] sm:$0xf]
      %v2093 = vld [vmem:[%s800 + $0x44] sm:$0x1]
      %v2094 = vld [vmem:[%s800 + $0x48] sm:$0xf]
      %v2095 = vld [vmem:[%s800 + $0x4c] sm:$0xf]
      %v2096 = vld [vmem:[%s800 + $0x50] sm:$0x1]
      %v2097 = vld [vmem:[%s800 + $0x54] sm:$0xf]
      %v2098 = vld [vmem:[%s800 + $0x58] sm:$0xf]
      %v2099 = vld [vmem:[%s800 + $0x5c] sm:$0x1]
      %v2100 = vld [vmem:[%s800 + $0x60] sm:$0xf]
      %v2101 = vld [vmem:[%s800 + $0x64] sm:$0xf]
      %v2102 = vld [vmem:[%s800 + $0x68] sm:$0x1]
      %v2103 = vld [vmem:[%s800 + $0x6c] sm:$0xf]
      %v2104 = vld [vmem:[%s800 + $0x70] sm:$0xf]
      %v2105 = vld [vmem:[%s800 + $0x74] sm:$0x1]
      %v2106 = vld [vmem:[%s800 + $0x78] sm:$0xf]
      %v2107 = vld [vmem:[%s800 + $0x7c] sm:$0xf]
      %v2108 = vld [vmem:[%s800 + $0x80] sm:$0x1]
      %v2109 = vld [vmem:[%s800 + $0x84] sm:$0xf]
      %v2110 = vld [vmem:[%s800 + $0x88] sm:$0xf]
      %v2111 = vld [vmem:[%s800 + $0x8c] sm:$0x1]
      %v2112 = vld [vmem:[%s800 + $0x90] sm:$0xf]
      %v2113 = vld [vmem:[%s800 + $0x94] sm:$0xf]
      %v2114 = vld [vmem:[%s800 + $0x98] sm:$0x1]
      %v2115 = vld [vmem:[%s800 + $0x9c] sm:$0xf]
      %v2116 = vld [vmem:[%s800 + $0xa0] sm:$0xf]
      %v2117 = vld [vmem:[%s800 + $0xa4] sm:$0x1]
      %v2118 = vld [vmem:[%s800 + $0xa8] sm:$0xf]
      %v2119 = vld [vmem:[%s800 + $0xac] sm:$0xf]
      %v2120 = vld [vmem:[%s800 + $0xb0] sm:$0x1]
      %v2121 = vld [vmem:[%s800 + $0xb4] sm:$0xf]
      %v2122 = vld [vmem:[%s800 + $0xb8] sm:$0xf]
      %v2123 = vld [vmem:[%s800 + $0xbc] sm:$0x1]
      %v2125 = vshrl.u32 %v2076, 16
      %v2127 = vrot.slane %v2125, 4
      %v2128 = vshll.u32 %v2076, 16
      %v2130 = vrot.slane %v2128, 5
      %v2131 = vor.u32 %v2127, %v2130
      %v2132 = vrot.slane %v2131, 4
      %v2134 = vshll.u32 %v2077, 16
      %v2136 = vrot.slane %v2134, 5
      %v2137 = vsel %vm1029, %v2132, %v2136
      %v2138 = vshrl.u32 %v2077, 16
      %v2140 = vrot.slane %v2138, 4
      %v2141 = vor.u32 %v2140, %v2136
      %v2142 = vrot.slane %v2141, 4
      %v2144 = vshll.u32 %v2078, 16
      %v2146 = vrot.slane %v2144, 5
      %v2147 = vsel %vm1029, %v2142, %v2146
      %v2149 = vshrl.u32 %v2079, 16
      %v2151 = vrot.slane %v2149, 4
      %v2152 = vshll.u32 %v2079, 16
      %v2154 = vrot.slane %v2152, 5
      %v2155 = vor.u32 %v2151, %v2154
      %v2156 = vrot.slane %v2155, 4
      %v2158 = vshll.u32 %v2080, 16
      %v2160 = vrot.slane %v2158, 5
      %v2161 = vsel %vm1029, %v2156, %v2160
      %v2162 = vshrl.u32 %v2080, 16
      %v2164 = vrot.slane %v2162, 4
      %v2165 = vor.u32 %v2164, %v2160
      %v2166 = vrot.slane %v2165, 4
      %v2168 = vshll.u32 %v2081, 16
      %v2170 = vrot.slane %v2168, 5
      %v2171 = vsel %vm1029, %v2166, %v2170
      %v2173 = vshrl.u32 %v2082, 16
      %v2175 = vrot.slane %v2173, 4
      %v2176 = vshll.u32 %v2082, 16
      %v2178 = vrot.slane %v2176, 5
      %v2179 = vor.u32 %v2175, %v2178
      %v2180 = vrot.slane %v2179, 4
      %v2182 = vshll.u32 %v2083, 16
      %v2184 = vrot.slane %v2182, 5
      %v2185 = vsel %vm1029, %v2180, %v2184
      %v2186 = vshrl.u32 %v2083, 16
      %v2188 = vrot.slane %v2186, 4
      %v2189 = vor.u32 %v2188, %v2184
      %v2190 = vrot.slane %v2189, 4
      %v2192 = vshll.u32 %v2084, 16
      %v2194 = vrot.slane %v2192, 5
      %v2195 = vsel %vm1029, %v2190, %v2194
      %v2197 = vshrl.u32 %v2085, 16
      %v2199 = vrot.slane %v2197, 4
      %v2200 = vshll.u32 %v2085, 16
      %v2202 = vrot.slane %v2200, 5
      %v2203 = vor.u32 %v2199, %v2202
      %v2204 = vrot.slane %v2203, 4
      %v2206 = vshll.u32 %v2086, 16
      %v2208 = vrot.slane %v2206, 5
      %v2209 = vsel %vm1029, %v2204, %v2208
      %v2210 = vshrl.u32 %v2086, 16
      %v2212 = vrot.slane %v2210, 4
      %v2213 = vor.u32 %v2212, %v2208
      %v2214 = vrot.slane %v2213, 4
      %v2216 = vshll.u32 %v2087, 16
      %v2218 = vrot.slane %v2216, 5
      %v2219 = vsel %vm1029, %v2214, %v2218
      %v2221 = vshrl.u32 %v2088, 16
      %v2223 = vrot.slane %v2221, 4
      %v2224 = vshll.u32 %v2088, 16
      %v2226 = vrot.slane %v2224, 5
      %v2227 = vor.u32 %v2223, %v2226
      %v2228 = vrot.slane %v2227, 4
      %v2230 = vshll.u32 %v2089, 16
      %v2232 = vrot.slane %v2230, 5
      %v2233 = vsel %vm1029, %v2228, %v2232
      %v2234 = vshrl.u32 %v2089, 16
      %v2236 = vrot.slane %v2234, 4
      %v2237 = vor.u32 %v2236, %v2232
      %v2238 = vrot.slane %v2237, 4
      %v2240 = vshll.u32 %v2090, 16
      %v2242 = vrot.slane %v2240, 5
      %v2243 = vsel %vm1029, %v2238, %v2242
      %v2245 = vshrl.u32 %v2091, 16
      %v2247 = vrot.slane %v2245, 4
      %v2248 = vshll.u32 %v2091, 16
      %v2250 = vrot.slane %v2248, 5
      %v2251 = vor.u32 %v2247, %v2250
      %v2252 = vrot.slane %v2251, 4
      %v2254 = vshll.u32 %v2092, 16
      %v2256 = vrot.slane %v2254, 5
      %v2257 = vsel %vm1029, %v2252, %v2256
      %v2258 = vshrl.u32 %v2092, 16
      %v2260 = vrot.slane %v2258, 4
      %v2261 = vor.u32 %v2260, %v2256
      %v2262 = vrot.slane %v2261, 4
      %v2264 = vshll.u32 %v2093, 16
      %v2266 = vrot.slane %v2264, 5
      %v2267 = vsel %vm1029, %v2262, %v2266
      %v2269 = vshrl.u32 %v2094, 16
      %v2271 = vrot.slane %v2269, 4
      %v2272 = vshll.u32 %v2094, 16
      %v2274 = vrot.slane %v2272, 5
      %v2275 = vor.u32 %v2271, %v2274
      %v2276 = vrot.slane %v2275, 4
      %v2278 = vshll.u32 %v2095, 16
      %v2280 = vrot.slane %v2278, 5
      %v2281 = vsel %vm1029, %v2276, %v2280
      %v2282 = vshrl.u32 %v2095, 16
      %v2284 = vrot.slane %v2282, 4
      %v2285 = vor.u32 %v2284, %v2280
      %v2286 = vrot.slane %v2285, 4
      %v2288 = vshll.u32 %v2096, 16
      %v2290 = vrot.slane %v2288, 5
      %v2291 = vsel %vm1029, %v2286, %v2290
      %v2293 = vshrl.u32 %v2097, 16
      %v2295 = vrot.slane %v2293, 4
      %v2296 = vshll.u32 %v2097, 16
      %v2298 = vrot.slane %v2296, 5
      %v2299 = vor.u32 %v2295, %v2298
      %v2300 = vrot.slane %v2299, 4
      %v2302 = vshll.u32 %v2098, 16
      %v2304 = vrot.slane %v2302, 5
      %v2305 = vsel %vm1029, %v2300, %v2304
      %v2306 = vshrl.u32 %v2098, 16
      %v2308 = vrot.slane %v2306, 4
      %v2309 = vor.u32 %v2308, %v2304
      %v2310 = vrot.slane %v2309, 4
      %v2312 = vshll.u32 %v2099, 16
      %v2314 = vrot.slane %v2312, 5
      %v2315 = vsel %vm1029, %v2310, %v2314
      %v2317 = vshrl.u32 %v2100, 16
      %v2319 = vrot.slane %v2317, 4
      %v2320 = vshll.u32 %v2100, 16
      %v2322 = vrot.slane %v2320, 5
      %v2323 = vor.u32 %v2319, %v2322
      %v2324 = vrot.slane %v2323, 4
      %v2326 = vshll.u32 %v2101, 16
      %v2328 = vrot.slane %v2326, 5
      %v2329 = vsel %vm1029, %v2324, %v2328
      %v2330 = vshrl.u32 %v2101, 16
      %v2332 = vrot.slane %v2330, 4
      %v2333 = vor.u32 %v2332, %v2328
      %v2334 = vrot.slane %v2333, 4
      %v2336 = vshll.u32 %v2102, 16
      %v2338 = vrot.slane %v2336, 5
      %v2339 = vsel %vm1029, %v2334, %v2338
      %v2341 = vshrl.u32 %v2103, 16
      %v2343 = vrot.slane %v2341, 4
      %v2344 = vshll.u32 %v2103, 16
      %v2346 = vrot.slane %v2344, 5
      %v2347 = vor.u32 %v2343, %v2346
      %v2348 = vrot.slane %v2347, 4
      %v2350 = vshll.u32 %v2104, 16
      %v2352 = vrot.slane %v2350, 5
      %v2353 = vsel %vm1029, %v2348, %v2352
      %v2354 = vshrl.u32 %v2104, 16
      %v2356 = vrot.slane %v2354, 4
      %v2357 = vor.u32 %v2356, %v2352
      %v2358 = vrot.slane %v2357, 4
      %v2360 = vshll.u32 %v2105, 16
      %v2362 = vrot.slane %v2360, 5
      %v2363 = vsel %vm1029, %v2358, %v2362
      %v2365 = vshrl.u32 %v2106, 16
      %v2367 = vrot.slane %v2365, 4
      %v2368 = vshll.u32 %v2106, 16
      %v2370 = vrot.slane %v2368, 5
      %v2371 = vor.u32 %v2367, %v2370
      %v2372 = vrot.slane %v2371, 4
      %v2374 = vshll.u32 %v2107, 16
      %v2376 = vrot.slane %v2374, 5
      %v2377 = vsel %vm1029, %v2372, %v2376
      %v2378 = vshrl.u32 %v2107, 16
      %v2380 = vrot.slane %v2378, 4
      %v2381 = vor.u32 %v2380, %v2376
      %v2382 = vrot.slane %v2381, 4
      %v2384 = vshll.u32 %v2108, 16
      %v2386 = vrot.slane %v2384, 5
      %v2387 = vsel %vm1029, %v2382, %v2386
      %v2389 = vshrl.u32 %v2109, 16
      %v2391 = vrot.slane %v2389, 4
      %v2392 = vshll.u32 %v2109, 16
      %v2394 = vrot.slane %v2392, 5
      %v2395 = vor.u32 %v2391, %v2394
      %v2396 = vrot.slane %v2395, 4
      %v2398 = vshll.u32 %v2110, 16
      %v2400 = vrot.slane %v2398, 5
      %v2401 = vsel %vm1029, %v2396, %v2400
      %v2402 = vshrl.u32 %v2110, 16
      %v2404 = vrot.slane %v2402, 4
      %v2405 = vor.u32 %v2404, %v2400
      %v2406 = vrot.slane %v2405, 4
      %v2408 = vshll.u32 %v2111, 16
      %v2410 = vrot.slane %v2408, 5
      %v2411 = vsel %vm1029, %v2406, %v2410
      %v2413 = vshrl.u32 %v2112, 16
      %v2415 = vrot.slane %v2413, 4
      %v2416 = vshll.u32 %v2112, 16
      %v2418 = vrot.slane %v2416, 5
      %v2419 = vor.u32 %v2415, %v2418
      %v2420 = vrot.slane %v2419, 4
      %v2422 = vshll.u32 %v2113, 16
      %v2424 = vrot.slane %v2422, 5
      %v2425 = vsel %vm1029, %v2420, %v2424
      %v2426 = vshrl.u32 %v2113, 16
      %v2428 = vrot.slane %v2426, 4
      %v2429 = vor.u32 %v2428, %v2424
      %v2430 = vrot.slane %v2429, 4
      %v2432 = vshll.u32 %v2114, 16
      %v2434 = vrot.slane %v2432, 5
      %v2435 = vsel %vm1029, %v2430, %v2434
      %v2437 = vshrl.u32 %v2115, 16
      %v2439 = vrot.slane %v2437, 4
      %v2440 = vshll.u32 %v2115, 16
      %v2442 = vrot.slane %v2440, 5
      %v2443 = vor.u32 %v2439, %v2442
      %v2444 = vrot.slane %v2443, 4
      %v2446 = vshll.u32 %v2116, 16
      %v2448 = vrot.slane %v2446, 5
      %v2449 = vsel %vm1029, %v2444, %v2448
      %v2450 = vshrl.u32 %v2116, 16
      %v2452 = vrot.slane %v2450, 4
      %v2453 = vor.u32 %v2452, %v2448
      %v2454 = vrot.slane %v2453, 4
      %v2456 = vshll.u32 %v2117, 16
      %v2458 = vrot.slane %v2456, 5
      %v2459 = vsel %vm1029, %v2454, %v2458
      %v2461 = vshrl.u32 %v2118, 16
      %v2463 = vrot.slane %v2461, 4
      %v2464 = vshll.u32 %v2118, 16
      %v2466 = vrot.slane %v2464, 5
      %v2467 = vor.u32 %v2463, %v2466
      %v2468 = vrot.slane %v2467, 4
      %v2470 = vshll.u32 %v2119, 16
      %v2472 = vrot.slane %v2470, 5
      %v2473 = vsel %vm1029, %v2468, %v2472
      %v2474 = vshrl.u32 %v2119, 16
      %v2476 = vrot.slane %v2474, 4
      %v2477 = vor.u32 %v2476, %v2472
      %v2478 = vrot.slane %v2477, 4
      %v2480 = vshll.u32 %v2120, 16
      %v2482 = vrot.slane %v2480, 5
      %v2483 = vsel %vm1029, %v2478, %v2482
      %v2485 = vshrl.u32 %v2121, 16
      %v2487 = vrot.slane %v2485, 4
      %v2488 = vshll.u32 %v2121, 16
      %v2490 = vrot.slane %v2488, 5
      %v2491 = vor.u32 %v2487, %v2490
      %v2492 = vrot.slane %v2491, 4
      %v2494 = vshll.u32 %v2122, 16
      %v2496 = vrot.slane %v2494, 5
      %v2497 = vsel %vm1029, %v2492, %v2496
      %v2498 = vshrl.u32 %v2122, 16
      %v2500 = vrot.slane %v2498, 4
      %v2501 = vor.u32 %v2500, %v2496
      %v2502 = vrot.slane %v2501, 4
      %v2504 = vshll.u32 %v2123, 16
      %v2506 = vrot.slane %v2504, 5
      %v2507 = vsel %vm1029, %v2502, %v2506
      %2508 = vrot.lane.b32.xlu0 %v2137, 16
      %v2509 = vpop.permute.xlu0 %2508
      %2510 = vrot.lane.b32.xlu0 %v2147, 16
      %v2511 = vpop.permute.xlu0 %2510
      %2512 = vrot.lane.b32.xlu0 %v2161, 16
      %v2513 = vpop.permute.xlu0 %2512
      %2514 = vrot.lane.b32.xlu0 %v2171, 16
      %v2515 = vpop.permute.xlu0 %2514
      %2516 = vrot.lane.b32.xlu0 %v2185, 16
      %v2517 = vpop.permute.xlu0 %2516
      %2518 = vrot.lane.b32.xlu0 %v2195, 16
      %v2519 = vpop.permute.xlu0 %2518
      %2520 = vrot.lane.b32.xlu0 %v2209, 16
      %v2521 = vpop.permute.xlu0 %2520
      %2522 = vrot.lane.b32.xlu0 %v2219, 16
      %v2523 = vpop.permute.xlu0 %2522
      %2524 = vrot.lane.b32.xlu0 %v2233, 16
      %v2525 = vpop.permute.xlu0 %2524
      %2526 = vrot.lane.b32.xlu0 %v2243, 16
      %v2527 = vpop.permute.xlu0 %2526
      %2528 = vrot.lane.b32.xlu0 %v2257, 16
      %v2529 = vpop.permute.xlu0 %2528
      %2530 = vrot.lane.b32.xlu0 %v2267, 16
      %v2531 = vpop.permute.xlu0 %2530
      %2532 = vrot.lane.b32.xlu0 %v2281, 16
      %v2533 = vpop.permute.xlu0 %2532
      %2534 = vrot.lane.b32.xlu0 %v2291, 16
      %v2535 = vpop.permute.xlu0 %2534
      %2536 = vrot.lane.b32.xlu0 %v2305, 16
      %v2537 = vpop.permute.xlu0 %2536
      %2538 = vrot.lane.b32.xlu0 %v2315, 16
      %v2539 = vpop.permute.xlu0 %2538
      %2540 = vrot.lane.b32.xlu0 %v2329, 16
      %v2541 = vpop.permute.xlu0 %2540
      %2542 = vrot.lane.b32.xlu0 %v2339, 16
      %v2543 = vpop.permute.xlu0 %2542
      %2544 = vrot.lane.b32.xlu0 %v2353, 16
      %v2545 = vpop.permute.xlu0 %2544
      %2546 = vrot.lane.b32.xlu0 %v2363, 16
      %v2547 = vpop.permute.xlu0 %2546
      %2548 = vrot.lane.b32.xlu0 %v2377, 16
      %v2549 = vpop.permute.xlu0 %2548
      %2550 = vrot.lane.b32.xlu0 %v2387, 16
      %v2551 = vpop.permute.xlu0 %2550
      %2552 = vrot.lane.b32.xlu0 %v2401, 16
      %v2553 = vpop.permute.xlu0 %2552
      %2554 = vrot.lane.b32.xlu0 %v2411, 16
      %v2555 = vpop.permute.xlu0 %2554
      %2556 = vrot.lane.b32.xlu0 %v2425, 16
      %v2557 = vpop.permute.xlu0 %2556
      %2558 = vrot.lane.b32.xlu0 %v2435, 16
      %v2559 = vpop.permute.xlu0 %2558
      %2560 = vrot.lane.b32.xlu0 %v2449, 16
      %v2561 = vpop.permute.xlu0 %2560
      %2562 = vrot.lane.b32.xlu0 %v2459, 16
      %v2563 = vpop.permute.xlu0 %2562
      %2564 = vrot.lane.b32.xlu0 %v2473, 16
      %v2565 = vpop.permute.xlu0 %2564
      %2566 = vrot.lane.b32.xlu0 %v2483, 16
      %v2567 = vpop.permute.xlu0 %2566
      %2568 = vrot.lane.b32.xlu0 %v2497, 16
      %v2569 = vpop.permute.xlu0 %2568
      %2570 = vrot.lane.b32.xlu0 %v2507, 16
      %v2571 = vpop.permute.xlu0 %2570
      %vm2604 = vcmask 158848
      %2605 = vst.msk [vmem:[#allocation3] sm:$0xf] %vm2604, %v2509
      %2606 = vst.msk [vmem:[#allocation3 + $0x4] sm:$0xf] %vm2604, %v2511
      %2607 = vst.msk [vmem:[#allocation3 + $0x8] sm:$0xf] %vm2604, %v2513
      %2608 = vst.msk [vmem:[#allocation3 + $0xc] sm:$0xf] %vm2604, %v2515
      %2609 = vst.msk [vmem:[#allocation3 + $0x10] sm:$0xf] %vm2604, %v2517
      %2610 = vst.msk [vmem:[#allocation3 + $0x14] sm:$0xf] %vm2604, %v2519
      %2611 = vst.msk [vmem:[#allocation3 + $0x18] sm:$0xf] %vm2604, %v2521
      %2612 = vst.msk [vmem:[#allocation3 + $0x1c] sm:$0xf] %vm2604, %v2523
      %2613 = vst.msk [vmem:[#allocation3 + $0x20] sm:$0xf] %vm2604, %v2525
      %2614 = vst.msk [vmem:[#allocation3 + $0x24] sm:$0xf] %vm2604, %v2527
      %2615 = vst.msk [vmem:[#allocation3 + $0x28] sm:$0xf] %vm2604, %v2529
      %2616 = vst.msk [vmem:[#allocation3 + $0x2c] sm:$0xf] %vm2604, %v2531
      %2617 = vst.msk [vmem:[#allocation3 + $0x30] sm:$0xf] %vm2604, %v2533
      %2618 = vst.msk [vmem:[#allocation3 + $0x34] sm:$0xf] %vm2604, %v2535
      %2619 = vst.msk [vmem:[#allocation3 + $0x38] sm:$0xf] %vm2604, %v2537
      %2620 = vst.msk [vmem:[#allocation3 + $0x3c] sm:$0xf] %vm2604, %v2539
      %2621 = vst.msk [vmem:[#allocation3 + $0x40] sm:$0xf] %vm2604, %v2541
      %2622 = vst.msk [vmem:[#allocation3 + $0x44] sm:$0xf] %vm2604, %v2543
      %2623 = vst.msk [vmem:[#allocation3 + $0x48] sm:$0xf] %vm2604, %v2545
      %2624 = vst.msk [vmem:[#allocation3 + $0x4c] sm:$0xf] %vm2604, %v2547
      %2625 = vst.msk [vmem:[#allocation3 + $0x50] sm:$0xf] %vm2604, %v2549
      %2626 = vst.msk [vmem:[#allocation3 + $0x54] sm:$0xf] %vm2604, %v2551
      %2627 = vst.msk [vmem:[#allocation3 + $0x58] sm:$0xf] %vm2604, %v2553
      %2628 = vst.msk [vmem:[#allocation3 + $0x5c] sm:$0xf] %vm2604, %v2555
      %2629 = vst.msk [vmem:[#allocation3 + $0x60] sm:$0xf] %vm2604, %v2557
      %2630 = vst.msk [vmem:[#allocation3 + $0x64] sm:$0xf] %vm2604, %v2559
      %2631 = vst.msk [vmem:[#allocation3 + $0x68] sm:$0xf] %vm2604, %v2561
      %2632 = vst.msk [vmem:[#allocation3 + $0x6c] sm:$0xf] %vm2604, %v2563
      %2633 = vst.msk [vmem:[#allocation3 + $0x70] sm:$0xf] %vm2604, %v2565
      %2634 = vst.msk [vmem:[#allocation3 + $0x74] sm:$0xf] %vm2604, %v2567
      %2635 = vst.msk [vmem:[#allocation3 + $0x78] sm:$0xf] %vm2604, %v2569
      %2636 = vst.msk [vmem:[#allocation3 + $0x7c] sm:$0xf] %vm2604, %v2571
      %v2637 = vld [vmem:[%s800] sm:$0xe]
      %v2638 = vld [vmem:[%s800 + $0x4] sm:$0xf]
      %v2639 = vld [vmem:[%s800 + $0x8] sm:$0x1]
      %v2640 = vld [vmem:[%s800 + $0xc] sm:$0xe]
      %v2641 = vld [vmem:[%s800 + $0x10] sm:$0xf]
      %v2642 = vld [vmem:[%s800 + $0x14] sm:$0x1]
      %v2643 = vld [vmem:[%s800 + $0x18] sm:$0xe]
      %v2644 = vld [vmem:[%s800 + $0x1c] sm:$0xf]
      %v2645 = vld [vmem:[%s800 + $0x20] sm:$0x1]
      %v2646 = vld [vmem:[%s800 + $0x24] sm:$0xe]
      %v2647 = vld [vmem:[%s800 + $0x28] sm:$0xf]
      %v2648 = vld [vmem:[%s800 + $0x2c] sm:$0x1]
      %v2649 = vld [vmem:[%s800 + $0x30] sm:$0xe]
      %v2650 = vld [vmem:[%s800 + $0x34] sm:$0xf]
      %v2651 = vld [vmem:[%s800 + $0x38] sm:$0x1]
      %v2652 = vld [vmem:[%s800 + $0x3c] sm:$0xe]
      %v2653 = vld [vmem:[%s800 + $0x40] sm:$0xf]
      %v2654 = vld [vmem:[%s800 + $0x44] sm:$0x1]
      %v2655 = vld [vmem:[%s800 + $0x48] sm:$0xe]
      %v2656 = vld [vmem:[%s800 + $0x4c] sm:$0xf]
      %v2657 = vld [vmem:[%s800 + $0x50] sm:$0x1]
      %v2658 = vld [vmem:[%s800 + $0x54] sm:$0xe]
      %v2659 = vld [vmem:[%s800 + $0x58] sm:$0xf]
      %v2660 = vld [vmem:[%s800 + $0x5c] sm:$0x1]
      %v2661 = vld [vmem:[%s800 + $0x60] sm:$0xe]
      %v2662 = vld [vmem:[%s800 + $0x64] sm:$0xf]
      %v2663 = vld [vmem:[%s800 + $0x68] sm:$0x1]
      %v2664 = vld [vmem:[%s800 + $0x6c] sm:$0xe]
      %v2665 = vld [vmem:[%s800 + $0x70] sm:$0xf]
      %v2666 = vld [vmem:[%s800 + $0x74] sm:$0x1]
      %v2667 = vld [vmem:[%s800 + $0x78] sm:$0xe]
      %v2668 = vld [vmem:[%s800 + $0x7c] sm:$0xf]
      %v2669 = vld [vmem:[%s800 + $0x80] sm:$0x1]
      %v2670 = vld [vmem:[%s800 + $0x84] sm:$0xe]
      %v2671 = vld [vmem:[%s800 + $0x88] sm:$0xf]
      %v2672 = vld [vmem:[%s800 + $0x8c] sm:$0x1]
      %v2673 = vld [vmem:[%s800 + $0x90] sm:$0xe]
      %v2674 = vld [vmem:[%s800 + $0x94] sm:$0xf]
      %v2675 = vld [vmem:[%s800 + $0x98] sm:$0x1]
      %v2676 = vld [vmem:[%s800 + $0x9c] sm:$0xe]
      %v2677 = vld [vmem:[%s800 + $0xa0] sm:$0xf]
      %v2678 = vld [vmem:[%s800 + $0xa4] sm:$0x1]
      %v2679 = vld [vmem:[%s800 + $0xa8] sm:$0xe]
      %v2680 = vld [vmem:[%s800 + $0xac] sm:$0xf]
      %v2681 = vld [vmem:[%s800 + $0xb0] sm:$0x1]
      %v2682 = vld [vmem:[%s800 + $0xb4] sm:$0xe]
      %v2683 = vld [vmem:[%s800 + $0xb8] sm:$0xf]
      %v2684 = vld [vmem:[%s800 + $0xbc] sm:$0x1]
      %v2733 = vrot.slane %v2637, 5
      %v2734 = vrot.slane %v2733, 4
      %v2735 = vrot.slane %v2638, 5
      %v2736 = vsel %vm1641, %v2734, %v2735
      %v2737 = vrot.slane %v2735, 4
      %v2738 = vrot.slane %v2639, 5
      %v2739 = vsel %vm1641, %v2737, %v2738
      %v2740 = vrot.slane %v2640, 5
      %v2741 = vrot.slane %v2740, 4
      %v2742 = vrot.slane %v2641, 5
      %v2743 = vsel %vm1641, %v2741, %v2742
      %v2744 = vrot.slane %v2742, 4
      %v2745 = vrot.slane %v2642, 5
      %v2746 = vsel %vm1641, %v2744, %v2745
      %v2747 = vrot.slane %v2643, 5
      %v2748 = vrot.slane %v2747, 4
      %v2749 = vrot.slane %v2644, 5
      %v2750 = vsel %vm1641, %v2748, %v2749
      %v2751 = vrot.slane %v2749, 4
      %v2752 = vrot.slane %v2645, 5
      %v2753 = vsel %vm1641, %v2751, %v2752
      %v2754 = vrot.slane %v2646, 5
      %v2755 = vrot.slane %v2754, 4
      %v2756 = vrot.slane %v2647, 5
      %v2757 = vsel %vm1641, %v2755, %v2756
      %v2758 = vrot.slane %v2756, 4
      %v2759 = vrot.slane %v2648, 5
      %v2760 = vsel %vm1641, %v2758, %v2759
      %v2761 = vrot.slane %v2649, 5
      %v2762 = vrot.slane %v2761, 4
      %v2763 = vrot.slane %v2650, 5
      %v2764 = vsel %vm1641, %v2762, %v2763
      %v2765 = vrot.slane %v2763, 4
      %v2766 = vrot.slane %v2651, 5
      %v2767 = vsel %vm1641, %v2765, %v2766
      %v2768 = vrot.slane %v2652, 5
      %v2769 = vrot.slane %v2768, 4
      %v2770 = vrot.slane %v2653, 5
      %v2771 = vsel %vm1641, %v2769, %v2770
      %v2772 = vrot.slane %v2770, 4
      %v2773 = vrot.slane %v2654, 5
      %v2774 = vsel %vm1641, %v2772, %v2773
      %v2775 = vrot.slane %v2655, 5
      %v2776 = vrot.slane %v2775, 4
      %v2777 = vrot.slane %v2656, 5
      %v2778 = vsel %vm1641, %v2776, %v2777
      %v2779 = vrot.slane %v2777, 4
      %v2780 = vrot.slane %v2657, 5
      %v2781 = vsel %vm1641, %v2779, %v2780
      %v2782 = vrot.slane %v2658, 5
      %v2783 = vrot.slane %v2782, 4
      %v2784 = vrot.slane %v2659, 5
      %v2785 = vsel %vm1641, %v2783, %v2784
      %v2786 = vrot.slane %v2784, 4
      %v2787 = vrot.slane %v2660, 5
      %v2788 = vsel %vm1641, %v2786, %v2787
      %v2789 = vrot.slane %v2661, 5
      %v2790 = vrot.slane %v2789, 4
      %v2791 = vrot.slane %v2662, 5
      %v2792 = vsel %vm1641, %v2790, %v2791
      %v2793 = vrot.slane %v2791, 4
      %v2794 = vrot.slane %v2663, 5
      %v2795 = vsel %vm1641, %v2793, %v2794
      %v2796 = vrot.slane %v2664, 5
      %v2797 = vrot.slane %v2796, 4
      %v2798 = vrot.slane %v2665, 5
      %v2799 = vsel %vm1641, %v2797, %v2798
      %v2800 = vrot.slane %v2798, 4
      %v2801 = vrot.slane %v2666, 5
      %v2802 = vsel %vm1641, %v2800, %v2801
      %v2803 = vrot.slane %v2667, 5
      %v2804 = vrot.slane %v2803, 4
      %v2805 = vrot.slane %v2668, 5
      %v2806 = vsel %vm1641, %v2804, %v2805
      %v2807 = vrot.slane %v2805, 4
      %v2808 = vrot.slane %v2669, 5
      %v2809 = vsel %vm1641, %v2807, %v2808
      %v2810 = vrot.slane %v2670, 5
      %v2811 = vrot.slane %v2810, 4
      %v2812 = vrot.slane %v2671, 5
      %v2813 = vsel %vm1641, %v2811, %v2812
      %v2814 = vrot.slane %v2812, 4
      %v2815 = vrot.slane %v2672, 5
      %v2816 = vsel %vm1641, %v2814, %v2815
      %v2817 = vrot.slane %v2673, 5
      %v2818 = vrot.slane %v2817, 4
      %v2819 = vrot.slane %v2674, 5
      %v2820 = vsel %vm1641, %v2818, %v2819
      %v2821 = vrot.slane %v2819, 4
      %v2822 = vrot.slane %v2675, 5
      %v2823 = vsel %vm1641, %v2821, %v2822
      %v2824 = vrot.slane %v2676, 5
      %v2825 = vrot.slane %v2824, 4
      %v2826 = vrot.slane %v2677, 5
      %v2827 = vsel %vm1641, %v2825, %v2826
      %v2828 = vrot.slane %v2826, 4
      %v2829 = vrot.slane %v2678, 5
      %v2830 = vsel %vm1641, %v2828, %v2829
      %v2831 = vrot.slane %v2679, 5
      %v2832 = vrot.slane %v2831, 4
      %v2833 = vrot.slane %v2680, 5
      %v2834 = vsel %vm1641, %v2832, %v2833
      %v2835 = vrot.slane %v2833, 4
      %v2836 = vrot.slane %v2681, 5
      %v2837 = vsel %vm1641, %v2835, %v2836
      %v2838 = vrot.slane %v2682, 5
      %v2839 = vrot.slane %v2838, 4
      %v2840 = vrot.slane %v2683, 5
      %v2841 = vsel %vm1641, %v2839, %v2840
      %v2842 = vrot.slane %v2840, 4
      %v2843 = vrot.slane %v2684, 5
      %v2844 = vsel %vm1641, %v2842, %v2843
      %2845 = vrot.lane.b32.xlu0 %v2736, 20
      %v2846 = vpop.permute.xlu0 %2845
      %2847 = vrot.lane.b32.xlu0 %v2739, 20
      %v2848 = vpop.permute.xlu0 %2847
      %2849 = vrot.lane.b32.xlu0 %v2743, 20
      %v2850 = vpop.permute.xlu0 %2849
      %2851 = vrot.lane.b32.xlu0 %v2746, 20
      %v2852 = vpop.permute.xlu0 %2851
      %2853 = vrot.lane.b32.xlu0 %v2750, 20
      %v2854 = vpop.permute.xlu0 %2853
      %2855 = vrot.lane.b32.xlu0 %v2753, 20
      %v2856 = vpop.permute.xlu0 %2855
      %2857 = vrot.lane.b32.xlu0 %v2757, 20
      %v2858 = vpop.permute.xlu0 %2857
      %2859 = vrot.lane.b32.xlu0 %v2760, 20
      %v2860 = vpop.permute.xlu0 %2859
      %2861 = vrot.lane.b32.xlu0 %v2764, 20
      %v2862 = vpop.permute.xlu0 %2861
      %2863 = vrot.lane.b32.xlu0 %v2767, 20
      %v2864 = vpop.permute.xlu0 %2863
      %2865 = vrot.lane.b32.xlu0 %v2771, 20
      %v2866 = vpop.permute.xlu0 %2865
      %2867 = vrot.lane.b32.xlu0 %v2774, 20
      %v2868 = vpop.permute.xlu0 %2867
      %2869 = vrot.lane.b32.xlu0 %v2778, 20
      %v2870 = vpop.permute.xlu0 %2869
      %2871 = vrot.lane.b32.xlu0 %v2781, 20
      %v2872 = vpop.permute.xlu0 %2871
      %2873 = vrot.lane.b32.xlu0 %v2785, 20
      %v2874 = vpop.permute.xlu0 %2873
      %2875 = vrot.lane.b32.xlu0 %v2788, 20
      %v2876 = vpop.permute.xlu0 %2875
      %2877 = vrot.lane.b32.xlu0 %v2792, 20
      %v2878 = vpop.permute.xlu0 %2877
      %2879 = vrot.lane.b32.xlu0 %v2795, 20
      %v2880 = vpop.permute.xlu0 %2879
      %2881 = vrot.lane.b32.xlu0 %v2799, 20
      %v2882 = vpop.permute.xlu0 %2881
      %2883 = vrot.lane.b32.xlu0 %v2802, 20
      %v2884 = vpop.permute.xlu0 %2883
      %2885 = vrot.lane.b32.xlu0 %v2806, 20
      %v2886 = vpop.permute.xlu0 %2885
      %2887 = vrot.lane.b32.xlu0 %v2809, 20
      %v2888 = vpop.permute.xlu0 %2887
      %2889 = vrot.lane.b32.xlu0 %v2813, 20
      %v2890 = vpop.permute.xlu0 %2889
      %2891 = vrot.lane.b32.xlu0 %v2816, 20
      %v2892 = vpop.permute.xlu0 %2891
      %2893 = vrot.lane.b32.xlu0 %v2820, 20
      %v2894 = vpop.permute.xlu0 %2893
      %2895 = vrot.lane.b32.xlu0 %v2823, 20
      %v2896 = vpop.permute.xlu0 %2895
      %2897 = vrot.lane.b32.xlu0 %v2827, 20
      %v2898 = vpop.permute.xlu0 %2897
      %2899 = vrot.lane.b32.xlu0 %v2830, 20
      %v2900 = vpop.permute.xlu0 %2899
      %2901 = vrot.lane.b32.xlu0 %v2834, 20
      %v2902 = vpop.permute.xlu0 %2901
      %2903 = vrot.lane.b32.xlu0 %v2837, 20
      %v2904 = vpop.permute.xlu0 %2903
      %2905 = vrot.lane.b32.xlu0 %v2841, 20
      %v2906 = vpop.permute.xlu0 %2905
      %2907 = vrot.lane.b32.xlu0 %v2844, 20
      %v2908 = vpop.permute.xlu0 %2907
      %vm2941 = vcmask 191648
      %2942 = vst.msk [vmem:[#allocation3] sm:$0xf] %vm2941, %v2846
      %2943 = vst.msk [vmem:[#allocation3 + $0x4] sm:$0xf] %vm2941, %v2848
      %2944 = vst.msk [vmem:[#allocation3 + $0x8] sm:$0xf] %vm2941, %v2850
      %2945 = vst.msk [vmem:[#allocation3 + $0xc] sm:$0xf] %vm2941, %v2852
      %2946 = vst.msk [vmem:[#allocation3 + $0x10] sm:$0xf] %vm2941, %v2854
      %2947 = vst.msk [vmem:[#allocation3 + $0x14] sm:$0xf] %vm2941, %v2856
      %2948 = vst.msk [vmem:[#allocation3 + $0x18] sm:$0xf] %vm2941, %v2858
      %2949 = vst.msk [vmem:[#allocation3 + $0x1c] sm:$0xf] %vm2941, %v2860
      %2950 = vst.msk [vmem:[#allocation3 + $0x20] sm:$0xf] %vm2941, %v2862
      %2951 = vst.msk [vmem:[#allocation3 + $0x24] sm:$0xf] %vm2941, %v2864
      %2952 = vst.msk [vmem:[#allocation3 + $0x28] sm:$0xf] %vm2941, %v2866
      %2953 = vst.msk [vmem:[#allocation3 + $0x2c] sm:$0xf] %vm2941, %v2868
      %2954 = vst.msk [vmem:[#allocation3 + $0x30] sm:$0xf] %vm2941, %v2870
      %2955 = vst.msk [vmem:[#allocation3 + $0x34] sm:$0xf] %vm2941, %v2872
      %2956 = vst.msk [vmem:[#allocation3 + $0x38] sm:$0xf] %vm2941, %v2874
      %2957 = vst.msk [vmem:[#allocation3 + $0x3c] sm:$0xf] %vm2941, %v2876
      %2958 = vst.msk [vmem:[#allocation3 + $0x40] sm:$0xf] %vm2941, %v2878
      %2959 = vst.msk [vmem:[#allocation3 + $0x44] sm:$0xf] %vm2941, %v2880
      %2960 = vst.msk [vmem:[#allocation3 + $0x48] sm:$0xf] %vm2941, %v2882
      %2961 = vst.msk [vmem:[#allocation3 + $0x4c] sm:$0xf] %vm2941, %v2884
      %2962 = vst.msk [vmem:[#allocation3 + $0x50] sm:$0xf] %vm2941, %v2886
      %2963 = vst.msk [vmem:[#allocation3 + $0x54] sm:$0xf] %vm2941, %v2888
      %2964 = vst.msk [vmem:[#allocation3 + $0x58] sm:$0xf] %vm2941, %v2890
      %2965 = vst.msk [vmem:[#allocation3 + $0x5c] sm:$0xf] %vm2941, %v2892
      %2966 = vst.msk [vmem:[#allocation3 + $0x60] sm:$0xf] %vm2941, %v2894
      %2967 = vst.msk [vmem:[#allocation3 + $0x64] sm:$0xf] %vm2941, %v2896
      %2968 = vst.msk [vmem:[#allocation3 + $0x68] sm:$0xf] %vm2941, %v2898
      %2969 = vst.msk [vmem:[#allocation3 + $0x6c] sm:$0xf] %vm2941, %v2900
      %2970 = vst.msk [vmem:[#allocation3 + $0x70] sm:$0xf] %vm2941, %v2902
      %2971 = vst.msk [vmem:[#allocation3 + $0x74] sm:$0xf] %vm2941, %v2904
      %2972 = vst.msk [vmem:[#allocation3 + $0x78] sm:$0xf] %vm2941, %v2906
      %2973 = vst.msk [vmem:[#allocation3 + $0x7c] sm:$0xf] %vm2941, %v2908
      %s2974 = scalar_lea.vmem [#allocation2], 24
      %v2975 = vld [vmem:[%s2974] sm:$0xf]
      %v2976 = vld [vmem:[%s2974 + $0x4] sm:$0xf]
      %v2977 = vld [vmem:[%s2974 + $0xc] sm:$0xf]
      %v2978 = vld [vmem:[%s2974 + $0x10] sm:$0xf]
      %v2979 = vld [vmem:[%s2974 + $0x18] sm:$0xf]
      %v2980 = vld [vmem:[%s2974 + $0x1c] sm:$0xf]
      %v2981 = vld [vmem:[%s2974 + $0x24] sm:$0xf]
      %v2982 = vld [vmem:[%s2974 + $0x28] sm:$0xf]
      %v2983 = vld [vmem:[%s2974 + $0x30] sm:$0xf]
      %v2984 = vld [vmem:[%s2974 + $0x34] sm:$0xf]
      %v2985 = vld [vmem:[%s2974 + $0x3c] sm:$0xf]
      %v2986 = vld [vmem:[%s2974 + $0x40] sm:$0xf]
      %v2987 = vld [vmem:[%s2974 + $0x48] sm:$0xf]
      %v2988 = vld [vmem:[%s2974 + $0x4c] sm:$0xf]
      %v2989 = vld [vmem:[%s2974 + $0x54] sm:$0xf]
      %v2990 = vld [vmem:[%s2974 + $0x58] sm:$0xf]
      %v2991 = vld [vmem:[%s2974 + $0x60] sm:$0xf]
      %v2992 = vld [vmem:[%s2974 + $0x64] sm:$0xf]
      %v2993 = vld [vmem:[%s2974 + $0x6c] sm:$0xf]
      %v2994 = vld [vmem:[%s2974 + $0x70] sm:$0xf]
      %v2995 = vld [vmem:[%s2974 + $0x78] sm:$0xf]
      %v2996 = vld [vmem:[%s2974 + $0x7c] sm:$0xf]
      %v2997 = vld [vmem:[%s2974 + $0x84] sm:$0xf]
      %v2998 = vld [vmem:[%s2974 + $0x88] sm:$0xf]
      %v2999 = vld [vmem:[%s2974 + $0x90] sm:$0xf]
      %v3000 = vld [vmem:[%s2974 + $0x94] sm:$0xf]
      %v3001 = vld [vmem:[%s2974 + $0x9c] sm:$0xf]
      %v3002 = vld [vmem:[%s2974 + $0xa0] sm:$0xf]
      %v3003 = vld [vmem:[%s2974 + $0xa8] sm:$0xf]
      %v3004 = vld [vmem:[%s2974 + $0xac] sm:$0xf]
      %v3005 = vld [vmem:[%s2974 + $0xb4] sm:$0xf]
      %v3006 = vld [vmem:[%s2974 + $0xb8] sm:$0xf]
      %3039 = vrot.lane.b32.xlu0 %v2975, 24
      %v3040 = vpop.permute.xlu0 %3039
      %3041 = vrot.lane.b32.xlu0 %v2976, 24
      %v3042 = vpop.permute.xlu0 %3041
      %3043 = vrot.lane.b32.xlu0 %v2977, 24
      %v3044 = vpop.permute.xlu0 %3043
      %3045 = vrot.lane.b32.xlu0 %v2978, 24
      %v3046 = vpop.permute.xlu0 %3045
      %3047 = vrot.lane.b32.xlu0 %v2979, 24
      %v3048 = vpop.permute.xlu0 %3047
      %3049 = vrot.lane.b32.xlu0 %v2980, 24
      %v3050 = vpop.permute.xlu0 %3049
      %3051 = vrot.lane.b32.xlu0 %v2981, 24
      %v3052 = vpop.permute.xlu0 %3051
      %3053 = vrot.lane.b32.xlu0 %v2982, 24
      %v3054 = vpop.permute.xlu0 %3053
      %3055 = vrot.lane.b32.xlu0 %v2983, 24
      %v3056 = vpop.permute.xlu0 %3055
      %3057 = vrot.lane.b32.xlu0 %v2984, 24
      %v3058 = vpop.permute.xlu0 %3057
      %3059 = vrot.lane.b32.xlu0 %v2985, 24
      %v3060 = vpop.permute.xlu0 %3059
      %3061 = vrot.lane.b32.xlu0 %v2986, 24
      %v3062 = vpop.permute.xlu0 %3061
      %3063 = vrot.lane.b32.xlu0 %v2987, 24
      %v3064 = vpop.permute.xlu0 %3063
      %3065 = vrot.lane.b32.xlu0 %v2988, 24
      %v3066 = vpop.permute.xlu0 %3065
      %3067 = vrot.lane.b32.xlu0 %v2989, 24
      %v3068 = vpop.permute.xlu0 %3067
      %3069 = vrot.lane.b32.xlu0 %v2990, 24
      %v3070 = vpop.permute.xlu0 %3069
      %3071 = vrot.lane.b32.xlu0 %v2991, 24
      %v3072 = vpop.permute.xlu0 %3071
      %3073 = vrot.lane.b32.xlu0 %v2992, 24
      %v3074 = vpop.permute.xlu0 %3073
      %3075 = vrot.lane.b32.xlu0 %v2993, 24
      %v3076 = vpop.permute.xlu0 %3075
      %3077 = vrot.lane.b32.xlu0 %v2994, 24
      %v3078 = vpop.permute.xlu0 %3077
      %3079 = vrot.lane.b32.xlu0 %v2995, 24
      %v3080 = vpop.permute.xlu0 %3079
      %3081 = vrot.lane.b32.xlu0 %v2996, 24
      %v3082 = vpop.permute.xlu0 %3081
      %3083 = vrot.lane.b32.xlu0 %v2997, 24
      %v3084 = vpop.permute.xlu0 %3083
      %3085 = vrot.lane.b32.xlu0 %v2998, 24
      %v3086 = vpop.permute.xlu0 %3085
      %3087 = vrot.lane.b32.xlu0 %v2999, 24
      %v3088 = vpop.permute.xlu0 %3087
      %3089 = vrot.lane.b32.xlu0 %v3000, 24
      %v3090 = vpop.permute.xlu0 %3089
      %3091 = vrot.lane.b32.xlu0 %v3001, 24
      %v3092 = vpop.permute.xlu0 %3091
      %3093 = vrot.lane.b32.xlu0 %v3002, 24
      %v3094 = vpop.permute.xlu0 %3093
      %3095 = vrot.lane.b32.xlu0 %v3003, 24
      %v3096 = vpop.permute.xlu0 %3095
      %3097 = vrot.lane.b32.xlu0 %v3004, 24
      %v3098 = vpop.permute.xlu0 %3097
      %3099 = vrot.lane.b32.xlu0 %v3005, 24
      %v3100 = vpop.permute.xlu0 %3099
      %3101 = vrot.lane.b32.xlu0 %v3006, 24
      %v3102 = vpop.permute.xlu0 %3101
      %vm3135 = vcmask 224448
      %3136 = vst.msk [vmem:[#allocation3] sm:$0xf] %vm3135, %v3040
      %3137 = vst.msk [vmem:[#allocation3 + $0x4] sm:$0xf] %vm3135, %v3042
      %3138 = vst.msk [vmem:[#allocation3 + $0x8] sm:$0xf] %vm3135, %v3044
      %3139 = vst.msk [vmem:[#allocation3 + $0xc] sm:$0xf] %vm3135, %v3046
      %3140 = vst.msk [vmem:[#allocation3 + $0x10] sm:$0xf] %vm3135, %v3048
      %3141 = vst.msk [vmem:[#allocation3 + $0x14] sm:$0xf] %vm3135, %v3050
      %3142 = vst.msk [vmem:[#allocation3 + $0x18] sm:$0xf] %vm3135, %v3052
      %3143 = vst.msk [vmem:[#allocation3 + $0x1c] sm:$0xf] %vm3135, %v3054
      %3144 = vst.msk [vmem:[#allocation3 + $0x20] sm:$0xf] %vm3135, %v3056
      %3145 = vst.msk [vmem:[#allocation3 + $0x24] sm:$0xf] %vm3135, %v3058
      %3146 = vst.msk [vmem:[#allocation3 + $0x28] sm:$0xf] %vm3135, %v3060
      %3147 = vst.msk [vmem:[#allocation3 + $0x2c] sm:$0xf] %vm3135, %v3062
      %3148 = vst.msk [vmem:[#allocation3 + $0x30] sm:$0xf] %vm3135, %v3064
      %3149 = vst.msk [vmem:[#allocation3 + $0x34] sm:$0xf] %vm3135, %v3066
      %3150 = vst.msk [vmem:[#allocation3 + $0x38] sm:$0xf] %vm3135, %v3068
      %3151 = vst.msk [vmem:[#allocation3 + $0x3c] sm:$0xf] %vm3135, %v3070
      %3152 = vst.msk [vmem:[#allocation3 + $0x40] sm:$0xf] %vm3135, %v3072
      %3153 = vst.msk [vmem:[#allocation3 + $0x44] sm:$0xf] %vm3135, %v3074
      %3154 = vst.msk [vmem:[#allocation3 + $0x48] sm:$0xf] %vm3135, %v3076
      %3155 = vst.msk [vmem:[#allocation3 + $0x4c] sm:$0xf] %vm3135, %v3078
      %3156 = vst.msk [vmem:[#allocation3 + $0x50] sm:$0xf] %vm3135, %v3080
      %3157 = vst.msk [vmem:[#allocation3 + $0x54] sm:$0xf] %vm3135, %v3082
      %3158 = vst.msk [vmem:[#allocation3 + $0x58] sm:$0xf] %vm3135, %v3084
      %3159 = vst.msk [vmem:[#allocation3 + $0x5c] sm:$0xf] %vm3135, %v3086
      %3160 = vst.msk [vmem:[#allocation3 + $0x60] sm:$0xf] %vm3135, %v3088
      %3161 = vst.msk [vmem:[#allocation3 + $0x64] sm:$0xf] %vm3135, %v3090
      %3162 = vst.msk [vmem:[#allocation3 + $0x68] sm:$0xf] %vm3135, %v3092
      %3163 = vst.msk [vmem:[#allocation3 + $0x6c] sm:$0xf] %vm3135, %v3094
      %3164 = vst.msk [vmem:[#allocation3 + $0x70] sm:$0xf] %vm3135, %v3096
      %3165 = vst.msk [vmem:[#allocation3 + $0x74] sm:$0xf] %vm3135, %v3098
      %3166 = vst.msk [vmem:[#allocation3 + $0x78] sm:$0xf] %vm3135, %v3100
      %3167 = vst.msk [vmem:[#allocation3 + $0x7c] sm:$0xf] %vm3135, %v3102
      %v3168 = vld [vmem:[%s2974] sm:$0xf]
      %v3169 = vld [vmem:[%s2974 + $0x4] sm:$0xf]
      %v3170 = vld [vmem:[%s2974 + $0x8] sm:$0x1]
      %v3171 = vld [vmem:[%s2974 + $0xc] sm:$0xf]
      %v3172 = vld [vmem:[%s2974 + $0x10] sm:$0xf]
      %v3173 = vld [vmem:[%s2974 + $0x14] sm:$0x1]
      %v3174 = vld [vmem:[%s2974 + $0x18] sm:$0xf]
      %v3175 = vld [vmem:[%s2974 + $0x1c] sm:$0xf]
      %v3176 = vld [vmem:[%s2974 + $0x20] sm:$0x1]
      %v3177 = vld [vmem:[%s2974 + $0x24] sm:$0xf]
      %v3178 = vld [vmem:[%s2974 + $0x28] sm:$0xf]
      %v3179 = vld [vmem:[%s2974 + $0x2c] sm:$0x1]
      %v3180 = vld [vmem:[%s2974 + $0x30] sm:$0xf]
      %v3181 = vld [vmem:[%s2974 + $0x34] sm:$0xf]
      %v3182 = vld [vmem:[%s2974 + $0x38] sm:$0x1]
      %v3183 = vld [vmem:[%s2974 + $0x3c] sm:$0xf]
      %v3184 = vld [vmem:[%s2974 + $0x40] sm:$0xf]
      %v3185 = vld [vmem:[%s2974 + $0x44] sm:$0x1]
      %v3186 = vld [vmem:[%s2974 + $0x48] sm:$0xf]
      %v3187 = vld [vmem:[%s2974 + $0x4c] sm:$0xf]
      %v3188 = vld [vmem:[%s2974 + $0x50] sm:$0x1]
      %v3189 = vld [vmem:[%s2974 + $0x54] sm:$0xf]
      %v3190 = vld [vmem:[%s2974 + $0x58] sm:$0xf]
      %v3191 = vld [vmem:[%s2974 + $0x5c] sm:$0x1]
      %v3192 = vld [vmem:[%s2974 + $0x60] sm:$0xf]
      %v3193 = vld [vmem:[%s2974 + $0x64] sm:$0xf]
      %v3194 = vld [vmem:[%s2974 + $0x68] sm:$0x1]
      %v3195 = vld [vmem:[%s2974 + $0x6c] sm:$0xf]
      %v3196 = vld [vmem:[%s2974 + $0x70] sm:$0xf]
      %v3197 = vld [vmem:[%s2974 + $0x74] sm:$0x1]
      %v3198 = vld [vmem:[%s2974 + $0x78] sm:$0xf]
      %v3199 = vld [vmem:[%s2974 + $0x7c] sm:$0xf]
      %v3200 = vld [vmem:[%s2974 + $0x80] sm:$0x1]
      %v3201 = vld [vmem:[%s2974 + $0x84] sm:$0xf]
      %v3202 = vld [vmem:[%s2974 + $0x88] sm:$0xf]
      %v3203 = vld [vmem:[%s2974 + $0x8c] sm:$0x1]
      %v3204 = vld [vmem:[%s2974 + $0x90] sm:$0xf]
      %v3205 = vld [vmem:[%s2974 + $0x94] sm:$0xf]
      %v3206 = vld [vmem:[%s2974 + $0x98] sm:$0x1]
      %v3207 = vld [vmem:[%s2974 + $0x9c] sm:$0xf]
      %v3208 = vld [vmem:[%s2974 + $0xa0] sm:$0xf]
      %v3209 = vld [vmem:[%s2974 + $0xa4] sm:$0x1]
      %v3210 = vld [vmem:[%s2974 + $0xa8] sm:$0xf]
      %v3211 = vld [vmem:[%s2974 + $0xac] sm:$0xf]
      %v3212 = vld [vmem:[%s2974 + $0xb0] sm:$0x1]
      %v3213 = vld [vmem:[%s2974 + $0xb4] sm:$0xf]
      %v3214 = vld [vmem:[%s2974 + $0xb8] sm:$0xf]
      %v3215 = vld [vmem:[%s2974 + $0xbc] sm:$0x1]
      %v3217 = vshrl.u32 %v3168, 16
      %v3219 = vrot.slane %v3217, 4
      %v3220 = vshll.u32 %v3168, 16
      %v3222 = vrot.slane %v3220, 5
      %v3223 = vor.u32 %v3219, %v3222
      %v3224 = vrot.slane %v3223, 4
      %v3226 = vshll.u32 %v3169, 16
      %v3228 = vrot.slane %v3226, 5
      %v3229 = vsel %vm1029, %v3224, %v3228
      %v3230 = vshrl.u32 %v3169, 16
      %v3232 = vrot.slane %v3230, 4
      %v3233 = vor.u32 %v3232, %v3228
      %v3234 = vrot.slane %v3233, 4
      %v3236 = vshll.u32 %v3170, 16
      %v3238 = vrot.slane %v3236, 5
      %v3239 = vsel %vm1029, %v3234, %v3238
      %v3241 = vshrl.u32 %v3171, 16
      %v3243 = vrot.slane %v3241, 4
      %v3244 = vshll.u32 %v3171, 16
      %v3246 = vrot.slane %v3244, 5
      %v3247 = vor.u32 %v3243, %v3246
      %v3248 = vrot.slane %v3247, 4
      %v3250 = vshll.u32 %v3172, 16
      %v3252 = vrot.slane %v3250, 5
      %v3253 = vsel %vm1029, %v3248, %v3252
      %v3254 = vshrl.u32 %v3172, 16
      %v3256 = vrot.slane %v3254, 4
      %v3257 = vor.u32 %v3256, %v3252
      %v3258 = vrot.slane %v3257, 4
      %v3260 = vshll.u32 %v3173, 16
      %v3262 = vrot.slane %v3260, 5
      %v3263 = vsel %vm1029, %v3258, %v3262
      %v3265 = vshrl.u32 %v3174, 16
      %v3267 = vrot.slane %v3265, 4
      %v3268 = vshll.u32 %v3174, 16
      %v3270 = vrot.slane %v3268, 5
      %v3271 = vor.u32 %v3267, %v3270
      %v3272 = vrot.slane %v3271, 4
      %v3274 = vshll.u32 %v3175, 16
      %v3276 = vrot.slane %v3274, 5
      %v3277 = vsel %vm1029, %v3272, %v3276
      %v3278 = vshrl.u32 %v3175, 16
      %v3280 = vrot.slane %v3278, 4
      %v3281 = vor.u32 %v3280, %v3276
      %v3282 = vrot.slane %v3281, 4
      %v3284 = vshll.u32 %v3176, 16
      %v3286 = vrot.slane %v3284, 5
      %v3287 = vsel %vm1029, %v3282, %v3286
      %v3289 = vshrl.u32 %v3177, 16
      %v3291 = vrot.slane %v3289, 4
      %v3292 = vshll.u32 %v3177, 16
      %v3294 = vrot.slane %v3292, 5
      %v3295 = vor.u32 %v3291, %v3294
      %v3296 = vrot.slane %v3295, 4
      %v3298 = vshll.u32 %v3178, 16
      %v3300 = vrot.slane %v3298, 5
      %v3301 = vsel %vm1029, %v3296, %v3300
      %v3302 = vshrl.u32 %v3178, 16
      %v3304 = vrot.slane %v3302, 4
      %v3305 = vor.u32 %v3304, %v3300
      %v3306 = vrot.slane %v3305, 4
      %v3308 = vshll.u32 %v3179, 16
      %v3310 = vrot.slane %v3308, 5
      %v3311 = vsel %vm1029, %v3306, %v3310
      %v3313 = vshrl.u32 %v3180, 16
      %v3315 = vrot.slane %v3313, 4
      %v3316 = vshll.u32 %v3180, 16
      %v3318 = vrot.slane %v3316, 5
      %v3319 = vor.u32 %v3315, %v3318
      %v3320 = vrot.slane %v3319, 4
      %v3322 = vshll.u32 %v3181, 16
      %v3324 = vrot.slane %v3322, 5
      %v3325 = vsel %vm1029, %v3320, %v3324
      %v3326 = vshrl.u32 %v3181, 16
      %v3328 = vrot.slane %v3326, 4
      %v3329 = vor.u32 %v3328, %v3324
      %v3330 = vrot.slane %v3329, 4
      %v3332 = vshll.u32 %v3182, 16
      %v3334 = vrot.slane %v3332, 5
      %v3335 = vsel %vm1029, %v3330, %v3334
      %v3337 = vshrl.u32 %v3183, 16
      %v3339 = vrot.slane %v3337, 4
      %v3340 = vshll.u32 %v3183, 16
      %v3342 = vrot.slane %v3340, 5
      %v3343 = vor.u32 %v3339, %v3342
      %v3344 = vrot.slane %v3343, 4
      %v3346 = vshll.u32 %v3184, 16
      %v3348 = vrot.slane %v3346, 5
      %v3349 = vsel %vm1029, %v3344, %v3348
      %v3350 = vshrl.u32 %v3184, 16
      %v3352 = vrot.slane %v3350, 4
      %v3353 = vor.u32 %v3352, %v3348
      %v3354 = vrot.slane %v3353, 4
      %v3356 = vshll.u32 %v3185, 16
      %v3358 = vrot.slane %v3356, 5
      %v3359 = vsel %vm1029, %v3354, %v3358
      %v3361 = vshrl.u32 %v3186, 16
      %v3363 = vrot.slane %v3361, 4
      %v3364 = vshll.u32 %v3186, 16
      %v3366 = vrot.slane %v3364, 5
      %v3367 = vor.u32 %v3363, %v3366
      %v3368 = vrot.slane %v3367, 4
      %v3370 = vshll.u32 %v3187, 16
      %v3372 = vrot.slane %v3370, 5
      %v3373 = vsel %vm1029, %v3368, %v3372
      %v3374 = vshrl.u32 %v3187, 16
      %v3376 = vrot.slane %v3374, 4
      %v3377 = vor.u32 %v3376, %v3372
      %v3378 = vrot.slane %v3377, 4
      %v3380 = vshll.u32 %v3188, 16
      %v3382 = vrot.slane %v3380, 5
      %v3383 = vsel %vm1029, %v3378, %v3382
      %v3385 = vshrl.u32 %v3189, 16
      %v3387 = vrot.slane %v3385, 4
      %v3388 = vshll.u32 %v3189, 16
      %v3390 = vrot.slane %v3388, 5
      %v3391 = vor.u32 %v3387, %v3390
      %v3392 = vrot.slane %v3391, 4
      %v3394 = vshll.u32 %v3190, 16
      %v3396 = vrot.slane %v3394, 5
      %v3397 = vsel %vm1029, %v3392, %v3396
      %v3398 = vshrl.u32 %v3190, 16
      %v3400 = vrot.slane %v3398, 4
      %v3401 = vor.u32 %v3400, %v3396
      %v3402 = vrot.slane %v3401, 4
      %v3404 = vshll.u32 %v3191, 16
      %v3406 = vrot.slane %v3404, 5
      %v3407 = vsel %vm1029, %v3402, %v3406
      %v3409 = vshrl.u32 %v3192, 16
      %v3411 = vrot.slane %v3409, 4
      %v3412 = vshll.u32 %v3192, 16
      %v3414 = vrot.slane %v3412, 5
      %v3415 = vor.u32 %v3411, %v3414
      %v3416 = vrot.slane %v3415, 4
      %v3418 = vshll.u32 %v3193, 16
      %v3420 = vrot.slane %v3418, 5
      %v3421 = vsel %vm1029, %v3416, %v3420
      %v3422 = vshrl.u32 %v3193, 16
      %v3424 = vrot.slane %v3422, 4
      %v3425 = vor.u32 %v3424, %v3420
      %v3426 = vrot.slane %v3425, 4
      %v3428 = vshll.u32 %v3194, 16
      %v3430 = vrot.slane %v3428, 5
      %v3431 = vsel %vm1029, %v3426, %v3430
      %v3433 = vshrl.u32 %v3195, 16
      %v3435 = vrot.slane %v3433, 4
      %v3436 = vshll.u32 %v3195, 16
      %v3438 = vrot.slane %v3436, 5
      %v3439 = vor.u32 %v3435, %v3438
      %v3440 = vrot.slane %v3439, 4
      %v3442 = vshll.u32 %v3196, 16
      %v3444 = vrot.slane %v3442, 5
      %v3445 = vsel %vm1029, %v3440, %v3444
      %v3446 = vshrl.u32 %v3196, 16
      %v3448 = vrot.slane %v3446, 4
      %v3449 = vor.u32 %v3448, %v3444
      %v3450 = vrot.slane %v3449, 4
      %v3452 = vshll.u32 %v3197, 16
      %v3454 = vrot.slane %v3452, 5
      %v3455 = vsel %vm1029, %v3450, %v3454
      %v3457 = vshrl.u32 %v3198, 16
      %v3459 = vrot.slane %v3457, 4
      %v3460 = vshll.u32 %v3198, 16
      %v3462 = vrot.slane %v3460, 5
      %v3463 = vor.u32 %v3459, %v3462
      %v3464 = vrot.slane %v3463, 4
      %v3466 = vshll.u32 %v3199, 16
      %v3468 = vrot.slane %v3466, 5
      %v3469 = vsel %vm1029, %v3464, %v3468
      %v3470 = vshrl.u32 %v3199, 16
      %v3472 = vrot.slane %v3470, 4
      %v3473 = vor.u32 %v3472, %v3468
      %v3474 = vrot.slane %v3473, 4
      %v3476 = vshll.u32 %v3200, 16
      %v3478 = vrot.slane %v3476, 5
      %v3479 = vsel %vm1029, %v3474, %v3478
      %v3481 = vshrl.u32 %v3201, 16
      %v3483 = vrot.slane %v3481, 4
      %v3484 = vshll.u32 %v3201, 16
      %v3486 = vrot.slane %v3484, 5
      %v3487 = vor.u32 %v3483, %v3486
      %v3488 = vrot.slane %v3487, 4
      %v3490 = vshll.u32 %v3202, 16
      %v3492 = vrot.slane %v3490, 5
      %v3493 = vsel %vm1029, %v3488, %v3492
      %v3494 = vshrl.u32 %v3202, 16
      %v3496 = vrot.slane %v3494, 4
      %v3497 = vor.u32 %v3496, %v3492
      %v3498 = vrot.slane %v3497, 4
      %v3500 = vshll.u32 %v3203, 16
      %v3502 = vrot.slane %v3500, 5
      %v3503 = vsel %vm1029, %v3498, %v3502
      %v3505 = vshrl.u32 %v3204, 16
      %v3507 = vrot.slane %v3505, 4
      %v3508 = vshll.u32 %v3204, 16
      %v3510 = vrot.slane %v3508, 5
      %v3511 = vor.u32 %v3507, %v3510
      %v3512 = vrot.slane %v3511, 4
      %v3514 = vshll.u32 %v3205, 16
      %v3516 = vrot.slane %v3514, 5
      %v3517 = vsel %vm1029, %v3512, %v3516
      %v3518 = vshrl.u32 %v3205, 16
      %v3520 = vrot.slane %v3518, 4
      %v3521 = vor.u32 %v3520, %v3516
      %v3522 = vrot.slane %v3521, 4
      %v3524 = vshll.u32 %v3206, 16
      %v3526 = vrot.slane %v3524, 5
      %v3527 = vsel %vm1029, %v3522, %v3526
      %v3529 = vshrl.u32 %v3207, 16
      %v3531 = vrot.slane %v3529, 4
      %v3532 = vshll.u32 %v3207, 16
      %v3534 = vrot.slane %v3532, 5
      %v3535 = vor.u32 %v3531, %v3534
      %v3536 = vrot.slane %v3535, 4
      %v3538 = vshll.u32 %v3208, 16
      %v3540 = vrot.slane %v3538, 5
      %v3541 = vsel %vm1029, %v3536, %v3540
      %v3542 = vshrl.u32 %v3208, 16
      %v3544 = vrot.slane %v3542, 4
      %v3545 = vor.u32 %v3544, %v3540
      %v3546 = vrot.slane %v3545, 4
      %v3548 = vshll.u32 %v3209, 16
      %v3550 = vrot.slane %v3548, 5
      %v3551 = vsel %vm1029, %v3546, %v3550
      %v3553 = vshrl.u32 %v3210, 16
      %v3555 = vrot.slane %v3553, 4
      %v3556 = vshll.u32 %v3210, 16
      %v3558 = vrot.slane %v3556, 5
      %v3559 = vor.u32 %v3555, %v3558
      %v3560 = vrot.slane %v3559, 4
      %v3562 = vshll.u32 %v3211, 16
      %v3564 = vrot.slane %v3562, 5
      %v3565 = vsel %vm1029, %v3560, %v3564
      %v3566 = vshrl.u32 %v3211, 16
      %v3568 = vrot.slane %v3566, 4
      %v3569 = vor.u32 %v3568, %v3564
      %v3570 = vrot.slane %v3569, 4
      %v3572 = vshll.u32 %v3212, 16
      %v3574 = vrot.slane %v3572, 5
      %v3575 = vsel %vm1029, %v3570, %v3574
      %v3577 = vshrl.u32 %v3213, 16
      %v3579 = vrot.slane %v3577, 4
      %v3580 = vshll.u32 %v3213, 16
      %v3582 = vrot.slane %v3580, 5
      %v3583 = vor.u32 %v3579, %v3582
      %v3584 = vrot.slane %v3583, 4
      %v3586 = vshll.u32 %v3214, 16
      %v3588 = vrot.slane %v3586, 5
      %v3589 = vsel %vm1029, %v3584, %v3588
      %v3590 = vshrl.u32 %v3214, 16
      %v3592 = vrot.slane %v3590, 4
      %v3593 = vor.u32 %v3592, %v3588
      %v3594 = vrot.slane %v3593, 4
      %v3596 = vshll.u32 %v3215, 16
      %v3598 = vrot.slane %v3596, 5
      %v3599 = vsel %vm1029, %v3594, %v3598
      %3600 = vrot.lane.b32.xlu0 %v3229, 28
      %v3601 = vpop.permute.xlu0 %3600
      %3602 = vrot.lane.b32.xlu0 %v3239, 28
      %v3603 = vpop.permute.xlu0 %3602
      %3604 = vrot.lane.b32.xlu0 %v3253, 28
      %v3605 = vpop.permute.xlu0 %3604
      %3606 = vrot.lane.b32.xlu0 %v3263, 28
      %v3607 = vpop.permute.xlu0 %3606
      %3608 = vrot.lane.b32.xlu0 %v3277, 28
      %v3609 = vpop.permute.xlu0 %3608
      %3610 = vrot.lane.b32.xlu0 %v3287, 28
      %v3611 = vpop.permute.xlu0 %3610
      %3612 = vrot.lane.b32.xlu0 %v3301, 28
      %v3613 = vpop.permute.xlu0 %3612
      %3614 = vrot.lane.b32.xlu0 %v3311, 28
      %v3615 = vpop.permute.xlu0 %3614
      %3616 = vrot.lane.b32.xlu0 %v3325, 28
      %v3617 = vpop.permute.xlu0 %3616
      %3618 = vrot.lane.b32.xlu0 %v3335, 28
      %v3619 = vpop.permute.xlu0 %3618
      %3620 = vrot.lane.b32.xlu0 %v3349, 28
      %v3621 = vpop.permute.xlu0 %3620
      %3622 = vrot.lane.b32.xlu0 %v3359, 28
      %v3623 = vpop.permute.xlu0 %3622
      %3624 = vrot.lane.b32.xlu0 %v3373, 28
      %v3625 = vpop.permute.xlu0 %3624
      %3626 = vrot.lane.b32.xlu0 %v3383, 28
      %v3627 = vpop.permute.xlu0 %3626
      %3628 = vrot.lane.b32.xlu0 %v3397, 28
      %v3629 = vpop.permute.xlu0 %3628
      %3630 = vrot.lane.b32.xlu0 %v3407, 28
      %v3631 = vpop.permute.xlu0 %3630
      %3632 = vrot.lane.b32.xlu0 %v3421, 28
      %v3633 = vpop.permute.xlu0 %3632
      %3634 = vrot.lane.b32.xlu0 %v3431, 28
      %v3635 = vpop.permute.xlu0 %3634
      %3636 = vrot.lane.b32.xlu0 %v3445, 28
      %v3637 = vpop.permute.xlu0 %3636
      %3638 = vrot.lane.b32.xlu0 %v3455, 28
      %v3639 = vpop.permute.xlu0 %3638
      %3640 = vrot.lane.b32.xlu0 %v3469, 28
      %v3641 = vpop.permute.xlu0 %3640
      %3642 = vrot.lane.b32.xlu0 %v3479, 28
      %v3643 = vpop.permute.xlu0 %3642
      %3644 = vrot.lane.b32.xlu0 %v3493, 28
      %v3645 = vpop.permute.xlu0 %3644
      %3646 = vrot.lane.b32.xlu0 %v3503, 28
      %v3647 = vpop.permute.xlu0 %3646
      %3648 = vrot.lane.b32.xlu0 %v3517, 28
      %v3649 = vpop.permute.xlu0 %3648
      %3650 = vrot.lane.b32.xlu0 %v3527, 28
      %v3651 = vpop.permute.xlu0 %3650
      %3652 = vrot.lane.b32.xlu0 %v3541, 28
      %v3653 = vpop.permute.xlu0 %3652
      %3654 = vrot.lane.b32.xlu0 %v3551, 28
      %v3655 = vpop.permute.xlu0 %3654
      %3656 = vrot.lane.b32.xlu0 %v3565, 28
      %v3657 = vpop.permute.xlu0 %3656
      %3658 = vrot.lane.b32.xlu0 %v3575, 28
      %v3659 = vpop.permute.xlu0 %3658
      %3660 = vrot.lane.b32.xlu0 %v3589, 28
      %v3661 = vpop.permute.xlu0 %3660
      %3662 = vrot.lane.b32.xlu0 %v3599, 28
      %v3663 = vpop.permute.xlu0 %3662
      %vm3696 = vcmask 257248
      %3697 = vst.msk [vmem:[#allocation3] sm:$0xf] %vm3696, %v3601
      %3698 = vst.msk [vmem:[#allocation3 + $0x4] sm:$0xf] %vm3696, %v3603
      %3699 = vst.msk [vmem:[#allocation3 + $0x8] sm:$0xf] %vm3696, %v3605
      %3700 = vst.msk [vmem:[#allocation3 + $0xc] sm:$0xf] %vm3696, %v3607
      %3701 = vst.msk [vmem:[#allocation3 + $0x10] sm:$0xf] %vm3696, %v3609
      %3702 = vst.msk [vmem:[#allocation3 + $0x14] sm:$0xf] %vm3696, %v3611
      %3703 = vst.msk [vmem:[#allocation3 + $0x18] sm:$0xf] %vm3696, %v3613
      %3704 = vst.msk [vmem:[#allocation3 + $0x1c] sm:$0xf] %vm3696, %v3615
      %3705 = vst.msk [vmem:[#allocation3 + $0x20] sm:$0xf] %vm3696, %v3617
      %3706 = vst.msk [vmem:[#allocation3 + $0x24] sm:$0xf] %vm3696, %v3619
      %3707 = vst.msk [vmem:[#allocation3 + $0x28] sm:$0xf] %vm3696, %v3621
      %3708 = vst.msk [vmem:[#allocation3 + $0x2c] sm:$0xf] %vm3696, %v3623
      %3709 = vst.msk [vmem:[#allocation3 + $0x30] sm:$0xf] %vm3696, %v3625
      %3710 = vst.msk [vmem:[#allocation3 + $0x34] sm:$0xf] %vm3696, %v3627
      %3711 = vst.msk [vmem:[#allocation3 + $0x38] sm:$0xf] %vm3696, %v3629
      %3712 = vst.msk [vmem:[#allocation3 + $0x3c] sm:$0xf] %vm3696, %v3631
      %3713 = vst.msk [vmem:[#allocation3 + $0x40] sm:$0xf] %vm3696, %v3633
      %3714 = vst.msk [vmem:[#allocation3 + $0x44] sm:$0xf] %vm3696, %v3635
      %3715 = vst.msk [vmem:[#allocation3 + $0x48] sm:$0xf] %vm3696, %v3637
      %3716 = vst.msk [vmem:[#allocation3 + $0x4c] sm:$0xf] %vm3696, %v3639
      %3717 = vst.msk [vmem:[#allocation3 + $0x50] sm:$0xf] %vm3696, %v3641
      %3718 = vst.msk [vmem:[#allocation3 + $0x54] sm:$0xf] %vm3696, %v3643
      %3719 = vst.msk [vmem:[#allocation3 + $0x58] sm:$0xf] %vm3696, %v3645
      %3720 = vst.msk [vmem:[#allocation3 + $0x5c] sm:$0xf] %vm3696, %v3647
      %3721 = vst.msk [vmem:[#allocation3 + $0x60] sm:$0xf] %vm3696, %v3649
      %3722 = vst.msk [vmem:[#allocation3 + $0x64] sm:$0xf] %vm3696, %v3651
      %3723 = vst.msk [vmem:[#allocation3 + $0x68] sm:$0xf] %vm3696, %v3653
      %3724 = vst.msk [vmem:[#allocation3 + $0x6c] sm:$0xf] %vm3696, %v3655
      %3725 = vst.msk [vmem:[#allocation3 + $0x70] sm:$0xf] %vm3696, %v3657
      %3726 = vst.msk [vmem:[#allocation3 + $0x74] sm:$0xf] %vm3696, %v3659
      %3727 = vst.msk [vmem:[#allocation3 + $0x78] sm:$0xf] %vm3696, %v3661
      %3728 = vst.msk [vmem:[#allocation3 + $0x7c] sm:$0xf] %vm3696, %v3663
      %v3729 = vld [vmem:[%s2974] sm:$0xe]
      %v3730 = vld [vmem:[%s2974 + $0x4] sm:$0xf]
      %v3731 = vld [vmem:[%s2974 + $0x8] sm:$0x1]
      %v3732 = vld [vmem:[%s2974 + $0xc] sm:$0xe]
      %v3733 = vld [vmem:[%s2974 + $0x10] sm:$0xf]
      %v3734 = vld [vmem:[%s2974 + $0x14] sm:$0x1]
      %v3735 = vld [vmem:[%s2974 + $0x18] sm:$0xe]
      %v3736 = vld [vmem:[%s2974 + $0x1c] sm:$0xf]
      %v3737 = vld [vmem:[%s2974 + $0x20] sm:$0x1]
      %v3738 = vld [vmem:[%s2974 + $0x24] sm:$0xe]
      %v3739 = vld [vmem:[%s2974 + $0x28] sm:$0xf]
      %v3740 = vld [vmem:[%s2974 + $0x2c] sm:$0x1]
      %v3741 = vld [vmem:[%s2974 + $0x30] sm:$0xe]
      %v3742 = vld [vmem:[%s2974 + $0x34] sm:$0xf]
      %v3743 = vld [vmem:[%s2974 + $0x38] sm:$0x1]
      %v3744 = vld [vmem:[%s2974 + $0x3c] sm:$0xe]
      %v3745 = vld [vmem:[%s2974 + $0x40] sm:$0xf]
      %v3746 = vld [vmem:[%s2974 + $0x44] sm:$0x1]
      %v3747 = vld [vmem:[%s2974 + $0x48] sm:$0xe]
      %v3748 = vld [vmem:[%s2974 + $0x4c] sm:$0xf]
      %v3749 = vld [vmem:[%s2974 + $0x50] sm:$0x1]
      %v3750 = vld [vmem:[%s2974 + $0x54] sm:$0xe]
      %v3751 = vld [vmem:[%s2974 + $0x58] sm:$0xf]
      %v3752 = vld [vmem:[%s2974 + $0x5c] sm:$0x1]
      %v3753 = vld [vmem:[%s2974 + $0x60] sm:$0xe]
      %v3754 = vld [vmem:[%s2974 + $0x64] sm:$0xf]
      %v3755 = vld [vmem:[%s2974 + $0x68] sm:$0x1]
      %v3756 = vld [vmem:[%s2974 + $0x6c] sm:$0xe]
      %v3757 = vld [vmem:[%s2974 + $0x70] sm:$0xf]
      %v3758 = vld [vmem:[%s2974 + $0x74] sm:$0x1]
      %v3759 = vld [vmem:[%s2974 + $0x78] sm:$0xe]
      %v3760 = vld [vmem:[%s2974 + $0x7c] sm:$0xf]
      %v3761 = vld [vmem:[%s2974 + $0x80] sm:$0x1]
      %v3762 = vld [vmem:[%s2974 + $0x84] sm:$0xe]
      %v3763 = vld [vmem:[%s2974 + $0x88] sm:$0xf]
      %v3764 = vld [vmem:[%s2974 + $0x8c] sm:$0x1]
      %v3765 = vld [vmem:[%s2974 + $0x90] sm:$0xe]
      %v3766 = vld [vmem:[%s2974 + $0x94] sm:$0xf]
      %v3767 = vld [vmem:[%s2974 + $0x98] sm:$0x1]
      %v3768 = vld [vmem:[%s2974 + $0x9c] sm:$0xe]
      %v3769 = vld [vmem:[%s2974 + $0xa0] sm:$0xf]
      %v3770 = vld [vmem:[%s2974 + $0xa4] sm:$0x1]
      %v3771 = vld [vmem:[%s2974 + $0xa8] sm:$0xe]
      %v3772 = vld [vmem:[%s2974 + $0xac] sm:$0xf]
      %v3773 = vld [vmem:[%s2974 + $0xb0] sm:$0x1]
      %v3774 = vld [vmem:[%s2974 + $0xb4] sm:$0xe]
      %v3775 = vld [vmem:[%s2974 + $0xb8] sm:$0xf]
      %v3776 = vld [vmem:[%s2974 + $0xbc] sm:$0x1]
      %v3825 = vrot.slane %v3729, 5
      %v3826 = vrot.slane %v3825, 4
      %v3827 = vrot.slane %v3730, 5
      %v3828 = vsel %vm1641, %v3826, %v3827
      %v3829 = vrot.slane %v3827, 4
      %v3830 = vrot.slane %v3731, 5
      %v3831 = vsel %vm1641, %v3829, %v3830
      %v3832 = vrot.slane %v3732, 5
      %v3833 = vrot.slane %v3832, 4
      %v3834 = vrot.slane %v3733, 5
      %v3835 = vsel %vm1641, %v3833, %v3834
      %v3836 = vrot.slane %v3834, 4
      %v3837 = vrot.slane %v3734, 5
      %v3838 = vsel %vm1641, %v3836, %v3837
      %v3839 = vrot.slane %v3735, 5
      %v3840 = vrot.slane %v3839, 4
      %v3841 = vrot.slane %v3736, 5
      %v3842 = vsel %vm1641, %v3840, %v3841
      %v3843 = vrot.slane %v3841, 4
      %v3844 = vrot.slane %v3737, 5
      %v3845 = vsel %vm1641, %v3843, %v3844
      %v3846 = vrot.slane %v3738, 5
      %v3847 = vrot.slane %v3846, 4
      %v3848 = vrot.slane %v3739, 5
      %v3849 = vsel %vm1641, %v3847, %v3848
      %v3850 = vrot.slane %v3848, 4
      %v3851 = vrot.slane %v3740, 5
      %v3852 = vsel %vm1641, %v3850, %v3851
      %v3853 = vrot.slane %v3741, 5
      %v3854 = vrot.slane %v3853, 4
      %v3855 = vrot.slane %v3742, 5
      %v3856 = vsel %vm1641, %v3854, %v3855
      %v3857 = vrot.slane %v3855, 4
      %v3858 = vrot.slane %v3743, 5
      %v3859 = vsel %vm1641, %v3857, %v3858
      %v3860 = vrot.slane %v3744, 5
      %v3861 = vrot.slane %v3860, 4
      %v3862 = vrot.slane %v3745, 5
      %v3863 = vsel %vm1641, %v3861, %v3862
      %v3864 = vrot.slane %v3862, 4
      %v3865 = vrot.slane %v3746, 5
      %v3866 = vsel %vm1641, %v3864, %v3865
      %v3867 = vrot.slane %v3747, 5
      %v3868 = vrot.slane %v3867, 4
      %v3869 = vrot.slane %v3748, 5
      %v3870 = vsel %vm1641, %v3868, %v3869
      %v3871 = vrot.slane %v3869, 4
      %v3872 = vrot.slane %v3749, 5
      %v3873 = vsel %vm1641, %v3871, %v3872
      %v3874 = vrot.slane %v3750, 5
      %v3875 = vrot.slane %v3874, 4
      %v3876 = vrot.slane %v3751, 5
      %v3877 = vsel %vm1641, %v3875, %v3876
      %v3878 = vrot.slane %v3876, 4
      %v3879 = vrot.slane %v3752, 5
      %v3880 = vsel %vm1641, %v3878, %v3879
      %v3881 = vrot.slane %v3753, 5
      %v3882 = vrot.slane %v3881, 4
      %v3883 = vrot.slane %v3754, 5
      %v3884 = vsel %vm1641, %v3882, %v3883
      %v3885 = vrot.slane %v3883, 4
      %v3886 = vrot.slane %v3755, 5
      %v3887 = vsel %vm1641, %v3885, %v3886
      %v3888 = vrot.slane %v3756, 5
      %v3889 = vrot.slane %v3888, 4
      %v3890 = vrot.slane %v3757, 5
      %v3891 = vsel %vm1641, %v3889, %v3890
      %v3892 = vrot.slane %v3890, 4
      %v3893 = vrot.slane %v3758, 5
      %v3894 = vsel %vm1641, %v3892, %v3893
      %v3895 = vrot.slane %v3759, 5
      %v3896 = vrot.slane %v3895, 4
      %v3897 = vrot.slane %v3760, 5
      %v3898 = vsel %vm1641, %v3896, %v3897
      %v3899 = vrot.slane %v3897, 4
      %v3900 = vrot.slane %v3761, 5
      %v3901 = vsel %vm1641, %v3899, %v3900
      %v3902 = vrot.slane %v3762, 5
      %v3903 = vrot.slane %v3902, 4
      %v3904 = vrot.slane %v3763, 5
      %v3905 = vsel %vm1641, %v3903, %v3904
      %v3906 = vrot.slane %v3904, 4
      %v3907 = vrot.slane %v3764, 5
      %v3908 = vsel %vm1641, %v3906, %v3907
      %v3909 = vrot.slane %v3765, 5
      %v3910 = vrot.slane %v3909, 4
      %v3911 = vrot.slane %v3766, 5
      %v3912 = vsel %vm1641, %v3910, %v3911
      %v3913 = vrot.slane %v3911, 4
      %v3914 = vrot.slane %v3767, 5
      %v3915 = vsel %vm1641, %v3913, %v3914
      %v3916 = vrot.slane %v3768, 5
      %v3917 = vrot.slane %v3916, 4
      %v3918 = vrot.slane %v3769, 5
      %v3919 = vsel %vm1641, %v3917, %v3918
      %v3920 = vrot.slane %v3918, 4
      %v3921 = vrot.slane %v3770, 5
      %v3922 = vsel %vm1641, %v3920, %v3921
      %v3923 = vrot.slane %v3771, 5
      %v3924 = vrot.slane %v3923, 4
      %v3925 = vrot.slane %v3772, 5
      %v3926 = vsel %vm1641, %v3924, %v3925
      %v3927 = vrot.slane %v3925, 4
      %v3928 = vrot.slane %v3773, 5
      %v3929 = vsel %vm1641, %v3927, %v3928
      %v3930 = vrot.slane %v3774, 5
      %v3931 = vrot.slane %v3930, 4
      %v3932 = vrot.slane %v3775, 5
      %v3933 = vsel %vm1641, %v3931, %v3932
      %v3934 = vrot.slane %v3932, 4
      %v3935 = vrot.slane %v3776, 5
      %v3936 = vsel %vm1641, %v3934, %v3935
      %3937 = vrot.lane.b32.xlu0 %v3828, 32
      %v3938 = vpop.permute.xlu0 %3937
      %3939 = vrot.lane.b32.xlu0 %v3831, 32
      %v3940 = vpop.permute.xlu0 %3939
      %3941 = vrot.lane.b32.xlu0 %v3835, 32
      %v3942 = vpop.permute.xlu0 %3941
      %3943 = vrot.lane.b32.xlu0 %v3838, 32
      %v3944 = vpop.permute.xlu0 %3943
      %3945 = vrot.lane.b32.xlu0 %v3842, 32
      %v3946 = vpop.permute.xlu0 %3945
      %3947 = vrot.lane.b32.xlu0 %v3845, 32
      %v3948 = vpop.permute.xlu0 %3947
      %3949 = vrot.lane.b32.xlu0 %v3849, 32
      %v3950 = vpop.permute.xlu0 %3949
      %3951 = vrot.lane.b32.xlu0 %v3852, 32
      %v3952 = vpop.permute.xlu0 %3951
      %3953 = vrot.lane.b32.xlu0 %v3856, 32
      %v3954 = vpop.permute.xlu0 %3953
      %3955 = vrot.lane.b32.xlu0 %v3859, 32
      %v3956 = vpop.permute.xlu0 %3955
      %3957 = vrot.lane.b32.xlu0 %v3863, 32
      %v3958 = vpop.permute.xlu0 %3957
      %3959 = vrot.lane.b32.xlu0 %v3866, 32
      %v3960 = vpop.permute.xlu0 %3959
      %3961 = vrot.lane.b32.xlu0 %v3870, 32
      %v3962 = vpop.permute.xlu0 %3961
      %3963 = vrot.lane.b32.xlu0 %v3873, 32
      %v3964 = vpop.permute.xlu0 %3963
      %3965 = vrot.lane.b32.xlu0 %v3877, 32
      %v3966 = vpop.permute.xlu0 %3965
      %3967 = vrot.lane.b32.xlu0 %v3880, 32
      %v3968 = vpop.permute.xlu0 %3967
      %3969 = vrot.lane.b32.xlu0 %v3884, 32
      %v3970 = vpop.permute.xlu0 %3969
      %3971 = vrot.lane.b32.xlu0 %v3887, 32
      %v3972 = vpop.permute.xlu0 %3971
      %3973 = vrot.lane.b32.xlu0 %v3891, 32
      %v3974 = vpop.permute.xlu0 %3973
      %3975 = vrot.lane.b32.xlu0 %v3894, 32
      %v3976 = vpop.permute.xlu0 %3975
      %3977 = vrot.lane.b32.xlu0 %v3898, 32
      %v3978 = vpop.permute.xlu0 %3977
      %3979 = vrot.lane.b32.xlu0 %v3901, 32
      %v3980 = vpop.permute.xlu0 %3979
      %3981 = vrot.lane.b32.xlu0 %v3905, 32
      %v3982 = vpop.permute.xlu0 %3981
      %3983 = vrot.lane.b32.xlu0 %v3908, 32
      %v3984 = vpop.permute.xlu0 %3983
      %3985 = vrot.lane.b32.xlu0 %v3912, 32
      %v3986 = vpop.permute.xlu0 %3985
      %3987 = vrot.lane.b32.xlu0 %v3915, 32
      %v3988 = vpop.permute.xlu0 %3987
      %3989 = vrot.lane.b32.xlu0 %v3919, 32
      %v3990 = vpop.permute.xlu0 %3989
      %3991 = vrot.lane.b32.xlu0 %v3922, 32
      %v3992 = vpop.permute.xlu0 %3991
      %3993 = vrot.lane.b32.xlu0 %v3926, 32
      %v3994 = vpop.permute.xlu0 %3993
      %3995 = vrot.lane.b32.xlu0 %v3929, 32
      %v3996 = vpop.permute.xlu0 %3995
      %3997 = vrot.lane.b32.xlu0 %v3933, 32
      %v3998 = vpop.permute.xlu0 %3997
      %3999 = vrot.lane.b32.xlu0 %v3936, 32
      %v4000 = vpop.permute.xlu0 %3999
      %vm4033 = vcmask 290048
      %4034 = vst.msk [vmem:[#allocation3] sm:$0xf] %vm4033, %v3938
      %4035 = vst.msk [vmem:[#allocation3 + $0x4] sm:$0xf] %vm4033, %v3940
      %4036 = vst.msk [vmem:[#allocation3 + $0x8] sm:$0xf] %vm4033, %v3942
      %4037 = vst.msk [vmem:[#allocation3 + $0xc] sm:$0xf] %vm4033, %v3944
      %4038 = vst.msk [vmem:[#allocation3 + $0x10] sm:$0xf] %vm4033, %v3946
      %4039 = vst.msk [vmem:[#allocation3 + $0x14] sm:$0xf] %vm4033, %v3948
      %4040 = vst.msk [vmem:[#allocation3 + $0x18] sm:$0xf] %vm4033, %v3950
      %4041 = vst.msk [vmem:[#allocation3 + $0x1c] sm:$0xf] %vm4033, %v3952
      %4042 = vst.msk [vmem:[#allocation3 + $0x20] sm:$0xf] %vm4033, %v3954
      %4043 = vst.msk [vmem:[#allocation3 + $0x24] sm:$0xf] %vm4033, %v3956
      %4044 = vst.msk [vmem:[#allocation3 + $0x28] sm:$0xf] %vm4033, %v3958
      %4045 = vst.msk [vmem:[#allocation3 + $0x2c] sm:$0xf] %vm4033, %v3960
      %4046 = vst.msk [vmem:[#allocation3 + $0x30] sm:$0xf] %vm4033, %v3962
      %4047 = vst.msk [vmem:[#allocation3 + $0x34] sm:$0xf] %vm4033, %v3964
      %4048 = vst.msk [vmem:[#allocation3 + $0x38] sm:$0xf] %vm4033, %v3966
      %4049 = vst.msk [vmem:[#allocation3 + $0x3c] sm:$0xf] %vm4033, %v3968
      %4050 = vst.msk [vmem:[#allocation3 + $0x40] sm:$0xf] %vm4033, %v3970
      %4051 = vst.msk [vmem:[#allocation3 + $0x44] sm:$0xf] %vm4033, %v3972
      %4052 = vst.msk [vmem:[#allocation3 + $0x48] sm:$0xf] %vm4033, %v3974
      %4053 = vst.msk [vmem:[#allocation3 + $0x4c] sm:$0xf] %vm4033, %v3976
      %4054 = vst.msk [vmem:[#allocation3 + $0x50] sm:$0xf] %vm4033, %v3978
      %4055 = vst.msk [vmem:[#allocation3 + $0x54] sm:$0xf] %vm4033, %v3980
      %4056 = vst.msk [vmem:[#allocation3 + $0x58] sm:$0xf] %vm4033, %v3982
      %4057 = vst.msk [vmem:[#allocation3 + $0x5c] sm:$0xf] %vm4033, %v3984
      %4058 = vst.msk [vmem:[#allocation3 + $0x60] sm:$0xf] %vm4033, %v3986
      %4059 = vst.msk [vmem:[#allocation3 + $0x64] sm:$0xf] %vm4033, %v3988
      %4060 = vst.msk [vmem:[#allocation3 + $0x68] sm:$0xf] %vm4033, %v3990
      %4061 = vst.msk [vmem:[#allocation3 + $0x6c] sm:$0xf] %vm4033, %v3992
      %4062 = vst.msk [vmem:[#allocation3 + $0x70] sm:$0xf] %vm4033, %v3994
      %4063 = vst.msk [vmem:[#allocation3 + $0x74] sm:$0xf] %vm4033, %v3996
      %4064 = vst.msk [vmem:[#allocation3 + $0x78] sm:$0xf] %vm4033, %v3998
      %4065 = vst.msk [vmem:[#allocation3 + $0x7c] sm:$0xf] %vm4033, %v4000
      %v4066 = vld [vmem:[#allocation3] sm:$0xf]
      %v4067 = vld [vmem:[#allocation3 + $0x4] sm:$0xf]
      %v4068 = vld [vmem:[#allocation3 + $0x8] sm:$0xf]
      %v4069 = vld [vmem:[#allocation3 + $0xc] sm:$0xf]
      %v4070 = vld [vmem:[#allocation3 + $0x10] sm:$0xf]
      %v4071 = vld [vmem:[#allocation3 + $0x14] sm:$0xf]
      %v4072 = vld [vmem:[#allocation3 + $0x18] sm:$0xf]
      %v4073 = vld [vmem:[#allocation3 + $0x1c] sm:$0xf]
      %v4074 = vld [vmem:[#allocation3 + $0x20] sm:$0xf]
      %v4075 = vld [vmem:[#allocation3 + $0x24] sm:$0xf]
      %v4076 = vld [vmem:[#allocation3 + $0x28] sm:$0xf]
      %v4077 = vld [vmem:[#allocation3 + $0x2c] sm:$0xf]
      %v4078 = vld [vmem:[#allocation3 + $0x30] sm:$0xf]
      %v4079 = vld [vmem:[#allocation3 + $0x34] sm:$0xf]
      %v4080 = vld [vmem:[#allocation3 + $0x38] sm:$0xf]
      %v4081 = vld [vmem:[#allocation3 + $0x3c] sm:$0xf]
      %v4082 = vld [vmem:[#allocation3 + $0x40] sm:$0xf]
      %v4083 = vld [vmem:[#allocation3 + $0x44] sm:$0xf]
      %v4084 = vld [vmem:[#allocation3 + $0x48] sm:$0xf]
      %v4085 = vld [vmem:[#allocation3 + $0x4c] sm:$0xf]
      %v4086 = vld [vmem:[#allocation3 + $0x50] sm:$0xf]
      %v4087 = vld [vmem:[#allocation3 + $0x54] sm:$0xf]
      %v4088 = vld [vmem:[#allocation3 + $0x58] sm:$0xf]
      %v4089 = vld [vmem:[#allocation3 + $0x5c] sm:$0xf]
      %v4090 = vld [vmem:[#allocation3 + $0x60] sm:$0xf]
      %v4091 = vld [vmem:[#allocation3 + $0x64] sm:$0xf]
      %v4092 = vld [vmem:[#allocation3 + $0x68] sm:$0xf]
      %v4093 = vld [vmem:[#allocation3 + $0x6c] sm:$0xf]
      %v4094 = vld [vmem:[#allocation3 + $0x70] sm:$0xf]
      %v4095 = vld [vmem:[#allocation3 + $0x74] sm:$0xf]
      %v4096 = vld [vmem:[#allocation3 + $0x78] sm:$0xf]
      %v4097 = vld [vmem:[#allocation3 + $0x7c] sm:$0xf]
      %v4098 = vld [vmem:[%s211] sm:$0xf]
      %v4099 = vld [vmem:[%s211 + $0x4] sm:$0xf]
      %v4100 = vld [vmem:[%s211 + $0x8] sm:$0xf]
      %v4101 = vld [vmem:[%s211 + $0xc] sm:$0xf]
      %v4102 = vld [vmem:[%s211 + $0x10] sm:$0x3]
      %v4135 = vunpack.c.l.b16 %v4066
      %v4136 = vunpack.c.l.b16 %v4067
      %v4137 = vunpack.c.l.b16 %v4068
      %v4138 = vunpack.c.l.b16 %v4069
      %v4139 = vunpack.c.l.b16 %v4070
      %v4140 = vunpack.c.l.b16 %v4071
      %v4141 = vunpack.c.l.b16 %v4072
      %v4142 = vunpack.c.l.b16 %v4073
      %v4143 = vunpack.c.l.b16 %v4074
      %v4144 = vunpack.c.l.b16 %v4075
      %v4145 = vunpack.c.l.b16 %v4076
      %v4146 = vunpack.c.l.b16 %v4077
      %v4147 = vunpack.c.l.b16 %v4078
      %v4148 = vunpack.c.l.b16 %v4079
      %v4149 = vunpack.c.l.b16 %v4080
      %v4150 = vunpack.c.l.b16 %v4081
      %v4151 = vunpack.c.l.b16 %v4082
      %v4152 = vunpack.c.l.b16 %v4083
      %v4153 = vunpack.c.l.b16 %v4084
      %v4154 = vunpack.c.l.b16 %v4085
      %v4155 = vunpack.c.l.b16 %v4086
      %v4156 = vunpack.c.l.b16 %v4087
      %v4157 = vunpack.c.l.b16 %v4088
      %v4158 = vunpack.c.l.b16 %v4089
      %v4159 = vunpack.c.l.b16 %v4090
      %v4160 = vunpack.c.l.b16 %v4091
      %v4161 = vunpack.c.l.b16 %v4092
      %v4162 = vunpack.c.l.b16 %v4093
      %v4163 = vunpack.c.l.b16 %v4094
      %v4164 = vunpack.c.l.b16 %v4095
      %v4165 = vunpack.c.l.b16 %v4096
      %v4166 = vunpack.c.l.b16 %v4097
      %v4167 = vpack.c.b16 %v4136, %v4135
      %v4168 = vpack.c.b16 %v4138, %v4137
      %v4169 = vpack.c.b16 %v4140, %v4139
      %v4170 = vpack.c.b16 %v4142, %v4141
      %v4171 = vpack.c.b16 %v4144, %v4143
      %v4172 = vpack.c.b16 %v4146, %v4145
      %v4173 = vpack.c.b16 %v4148, %v4147
      %v4174 = vpack.c.b16 %v4150, %v4149
      %v4175 = vpack.c.b16 %v4152, %v4151
      %v4176 = vpack.c.b16 %v4154, %v4153
      %v4177 = vpack.c.b16 %v4156, %v4155
      %v4178 = vpack.c.b16 %v4158, %v4157
      %v4179 = vpack.c.b16 %v4160, %v4159
      %v4180 = vpack.c.b16 %v4162, %v4161
      %v4181 = vpack.c.b16 %v4164, %v4163
      %v4182 = vpack.c.b16 %v4166, %v4165
      %v4188 = vunpack.c.l.b16 %v4098
      %v4189 = vunpack.c.l.b16 %v4099
      %v4190 = vunpack.c.l.b16 %v4100
      %v4191 = vunpack.c.l.b16 %v4101
      %v4192 = vunpack.c.l.b16 %v4102
      %v4193 = vpack.c.b16 %v4189, %v4188
      %v4194 = vpack.c.b16 %v4191, %v4190
      %v4195 = vpack.c.b16 %v4192, %v4192
      %vm4198 = vcmask 293888
      %v4200 = vsel %vm4198, %v4167, 0
      %v4203 = vsel %vm4198, %v4168, 0
      %v4206 = vsel %vm4198, %v4169, 0
      %v4209 = vsel %vm4198, %v4170, 0
      %v4212 = vsel %vm4198, %v4171, 0
      %v4215 = vsel %vm4198, %v4172, 0
      %v4218 = vsel %vm4198, %v4173, 0
      %v4221 = vsel %vm4198, %v4174, 0
      %v4224 = vsel %vm4198, %v4175, 0
      %v4227 = vsel %vm4198, %v4176, 0
      %v4230 = vsel %vm4198, %v4177, 0
      %v4233 = vsel %vm4198, %v4178, 0
      %v4236 = vsel %vm4198, %v4179, 0
      %v4239 = vsel %vm4198, %v4180, 0
      %v4242 = vsel %vm4198, %v4181, 0
      %v4245 = vsel %vm4198, %v4182, 0
      %vm4247 = vcmask 1041408
      %v4249 = vsel %vm4247, %v4195, 0
      %4251 = vmatprep.subr.bf16.mxu0 0
      %4252 = vmatpush1.bf16.msra.mxu0 0
      %4253 = vmatprep.subr.bf16.mxu0 0
      %4254 = vmatpush1.bf16.msra.mxu0 0
      %4255 = vmatprep.subr.bf16.mxu0 0
      %4256 = vmatpush1.bf16.msra.mxu0 0
      %4257 = vmatprep.subr.bf16.mxu0 0
      %4258 = vmatpush1.bf16.msra.mxu0 0
      %4259 = vmatprep.subr.bf16.mxu0 0
      %4260 = vmatpush1.bf16.msra.mxu0 0
      %4261 = vmatprep.subr.bf16.mxu0 0
      %4262 = vmatpush1.bf16.msra.mxu0 %v4249
      %4263 = vmatprep.subr.bf16.mxu0 0
      %4264 = vmatpush1.bf16.msra.mxu0 %v4194
      %4265 = vmatprep.subr.bf16.mxu0 0
      %4266 = vmatpush1.bf16.msra.mxu0 %v4193
      %4267 = vmatprep.subr.bf16.mxu0 0
      %4268 = vmatpush2.bf16.msra.mxu0 0
      %4269 = vmatprep.subr.bf16.mxu0 0
      %4270 = vmatpush2.bf16.msra.mxu0 0
      %4271 = vmatprep.subr.bf16.mxu0 0
      %4272 = vmatpush2.bf16.msra.mxu0 0
      %4273 = vmatprep.subr.bf16.mxu0 0
      %4274 = vmatpush2.bf16.msra.mxu0 0
      %4275 = vmatprep.subr.bf16.mxu0 0
      %4276 = vmatpush2.bf16.msra.mxu0 0
      %4277 = vmatprep.subr.bf16.mxu0 0
      %4278 = vmatpush2.bf16.msra.mxu0 0
      %4279 = vmatprep.subr.bf16.mxu0 0
      %4280 = vmatpush2.bf16.msra.mxu0 0
      %4281 = vmatprep.subr.bf16.mxu0 0
      %4282 = vmatpush2.bf16.msra.mxu0 0
      %4283 = vmatprep.mubr.bf16.mxu0 0
      %4284 = vmatmul.mubr.bf16.gmra.mxu0 %v4200
      %v4285 = vpop.f32.mrf.mxu0
      %v4286 = vadd.f32 0.0, %v4285
      %v4287 = vpop.f32.mrf.mxu0
      %v4288 = vpop.f32.mrf.mxu0
      %v4289 = vadd.f32 0.0, %v4288
      %v4290 = vpop.f32.mrf.mxu0
      %4291 = vmatprep.mubr.bf16.mxu0 0
      %4292 = vmatmul.mubr.bf16.gmra.mxu0 %v4203
      %v4293 = vpop.f32.mrf.mxu0
      %v4294 = vadd.f32 0.0, %v4293
      %v4295 = vpop.f32.mrf.mxu0
      %v4296 = vpop.f32.mrf.mxu0
      %v4297 = vadd.f32 0.0, %v4296
      %v4298 = vpop.f32.mrf.mxu0
      %4299 = vmatprep.mubr.bf16.mxu0 0
      %4300 = vmatmul.mubr.bf16.gmra.mxu0 %v4206
      %v4301 = vpop.f32.mrf.mxu0
      %v4302 = vadd.f32 0.0, %v4301
      %v4303 = vpop.f32.mrf.mxu0
      %v4304 = vpop.f32.mrf.mxu0
      %v4305 = vadd.f32 0.0, %v4304
      %v4306 = vpop.f32.mrf.mxu0
      %4307 = vmatprep.mubr.bf16.mxu0 0
      %4308 = vmatmul.mubr.bf16.gmra.mxu0 %v4209
      %v4309 = vpop.f32.mrf.mxu0
      %v4310 = vadd.f32 0.0, %v4309
      %v4311 = vpop.f32.mrf.mxu0
      %v4312 = vpop.f32.mrf.mxu0
      %v4313 = vadd.f32 0.0, %v4312
      %v4314 = vpop.f32.mrf.mxu0
      %4315 = vmatprep.mubr.bf16.mxu0 0
      %4316 = vmatmul.mubr.bf16.gmra.mxu0 %v4212
      %v4317 = vpop.f32.mrf.mxu0
      %v4318 = vadd.f32 0.0, %v4317
      %v4319 = vpop.f32.mrf.mxu0
      %v4320 = vpop.f32.mrf.mxu0
      %v4321 = vadd.f32 0.0, %v4320
      %v4322 = vpop.f32.mrf.mxu0
      %4323 = vmatprep.mubr.bf16.mxu0 0
      %4324 = vmatmul.mubr.bf16.gmra.mxu0 %v4215
      %v4325 = vpop.f32.mrf.mxu0
      %v4326 = vadd.f32 0.0, %v4325
      %v4327 = vpop.f32.mrf.mxu0
      %v4328 = vpop.f32.mrf.mxu0
      %v4329 = vadd.f32 0.0, %v4328
      %v4330 = vpop.f32.mrf.mxu0
      %4331 = vmatprep.mubr.bf16.mxu0 0
      %4332 = vmatmul.mubr.bf16.gmra.mxu0 %v4218
      %v4333 = vpop.f32.mrf.mxu0
      %v4334 = vadd.f32 0.0, %v4333
      %v4335 = vpop.f32.mrf.mxu0
      %v4336 = vpop.f32.mrf.mxu0
      %v4337 = vadd.f32 0.0, %v4336
      %v4338 = vpop.f32.mrf.mxu0
      %4339 = vmatprep.mubr.bf16.mxu0 0
      %4340 = vmatmul.mubr.bf16.gmra.mxu0 %v4221
      %v4341 = vpop.f32.mrf.mxu0
      %v4342 = vadd.f32 0.0, %v4341
      %v4343 = vpop.f32.mrf.mxu0
      %v4344 = vpop.f32.mrf.mxu0
      %v4345 = vadd.f32 0.0, %v4344
      %v4346 = vpop.f32.mrf.mxu0
      %4347 = vmatprep.mubr.bf16.mxu0 0
      %4348 = vmatmul.mubr.bf16.gmra.mxu0 %v4224
      %v4349 = vpop.f32.mrf.mxu0
      %v4350 = vadd.f32 0.0, %v4349
      %v4351 = vpop.f32.mrf.mxu0
      %v4352 = vpop.f32.mrf.mxu0
      %v4353 = vadd.f32 0.0, %v4352
      %v4354 = vpop.f32.mrf.mxu0
      %4355 = vmatprep.mubr.bf16.mxu0 0
      %4356 = vmatmul.mubr.bf16.gmra.mxu0 %v4227
      %v4357 = vpop.f32.mrf.mxu0
      %v4358 = vadd.f32 0.0, %v4357
      %v4359 = vpop.f32.mrf.mxu0
      %v4360 = vpop.f32.mrf.mxu0
      %v4361 = vadd.f32 0.0, %v4360
      %v4362 = vpop.f32.mrf.mxu0
      %4363 = vmatprep.mubr.bf16.mxu0 0
      %4364 = vmatmul.mubr.bf16.gmra.mxu0 %v4230
      %v4365 = vpop.f32.mrf.mxu0
      %v4366 = vadd.f32 0.0, %v4365
      %v4367 = vpop.f32.mrf.mxu0
      %v4368 = vpop.f32.mrf.mxu0
      %v4369 = vadd.f32 0.0, %v4368
      %v4370 = vpop.f32.mrf.mxu0
      %4371 = vmatprep.mubr.bf16.mxu0 0
      %4372 = vmatmul.mubr.bf16.gmra.mxu0 %v4233
      %v4373 = vpop.f32.mrf.mxu0
      %v4374 = vadd.f32 0.0, %v4373
      %v4375 = vpop.f32.mrf.mxu0
      %v4376 = vpop.f32.mrf.mxu0
      %v4377 = vadd.f32 0.0, %v4376
      %v4378 = vpop.f32.mrf.mxu0
      %4379 = vmatprep.mubr.bf16.mxu0 0
      %4380 = vmatmul.mubr.bf16.gmra.mxu0 %v4236
      %v4381 = vpop.f32.mrf.mxu0
      %v4382 = vadd.f32 0.0, %v4381
      %v4383 = vpop.f32.mrf.mxu0
      %v4384 = vpop.f32.mrf.mxu0
      %v4385 = vadd.f32 0.0, %v4384
      %v4386 = vpop.f32.mrf.mxu0
      %4387 = vmatprep.mubr.bf16.mxu0 0
      %4388 = vmatmul.mubr.bf16.gmra.mxu0 %v4239
      %v4389 = vpop.f32.mrf.mxu0
      %v4390 = vadd.f32 0.0, %v4389
      %v4391 = vpop.f32.mrf.mxu0
      %v4392 = vpop.f32.mrf.mxu0
      %v4393 = vadd.f32 0.0, %v4392
      %v4394 = vpop.f32.mrf.mxu0
      %4395 = vmatprep.mubr.bf16.mxu0 0
      %4396 = vmatmul.mubr.bf16.gmra.mxu0 %v4242
      %v4397 = vpop.f32.mrf.mxu0
      %v4398 = vadd.f32 0.0, %v4397
      %v4399 = vpop.f32.mrf.mxu0
      %v4400 = vpop.f32.mrf.mxu0
      %v4401 = vadd.f32 0.0, %v4400
      %v4402 = vpop.f32.mrf.mxu0
      %4403 = vmatprep.mubr.bf16.mxu0 0
      %4404 = vmatmul.mubr.bf16.gmra.mxu0 %v4245
      %v4405 = vpop.f32.mrf.mxu0
      %v4406 = vadd.f32 0.0, %v4405
      %v4407 = vpop.f32.mrf.mxu0
      %v4408 = vpop.f32.mrf.mxu0
      %v4409 = vadd.f32 0.0, %v4408
      %v4410 = vpop.f32.mrf.mxu0
      %4411 = vdwg.mxu0
      %v4412 = vpack.c.bf16 %v4289, %v4286
      %v4413 = vpack.c.bf16 %v4297, %v4294
      %v4414 = vpack.c.bf16 %v4305, %v4302
      %v4415 = vpack.c.bf16 %v4313, %v4310
      %v4416 = vpack.c.bf16 %v4321, %v4318
      %v4417 = vpack.c.bf16 %v4329, %v4326
      %v4418 = vpack.c.bf16 %v4337, %v4334
      %v4419 = vpack.c.bf16 %v4345, %v4342
      %v4420 = vpack.c.bf16 %v4353, %v4350
      %v4421 = vpack.c.bf16 %v4361, %v4358
      %v4422 = vpack.c.bf16 %v4369, %v4366
      %v4423 = vpack.c.bf16 %v4377, %v4374
      %v4424 = vpack.c.bf16 %v4385, %v4382
      %v4425 = vpack.c.bf16 %v4393, %v4390
      %v4426 = vpack.c.bf16 %v4401, %v4398
      %v4427 = vpack.c.bf16 %v4409, %v4406
      %v4444 = vunpack.c.l.b16 %v4412
      %v4445 = vunpack.c.h.b16 %v4412
      %v4446 = vunpack.c.l.b16 %v4413
      %v4447 = vunpack.c.h.b16 %v4413
      %v4448 = vunpack.c.l.b16 %v4414
      %v4449 = vunpack.c.h.b16 %v4414
      %v4450 = vunpack.c.l.b16 %v4415
      %v4451 = vunpack.c.h.b16 %v4415
      %v4452 = vunpack.c.l.b16 %v4416
      %v4453 = vunpack.c.h.b16 %v4416
      %v4454 = vunpack.c.l.b16 %v4417
      %v4455 = vunpack.c.h.b16 %v4417
      %v4456 = vunpack.c.l.b16 %v4418
      %v4457 = vunpack.c.h.b16 %v4418
      %v4458 = vunpack.c.l.b16 %v4419
      %v4459 = vunpack.c.h.b16 %v4419
      %v4460 = vunpack.c.l.b16 %v4420
      %v4461 = vunpack.c.h.b16 %v4420
      %v4462 = vunpack.c.l.b16 %v4421
      %v4463 = vunpack.c.h.b16 %v4421
      %v4464 = vunpack.c.l.b16 %v4422
      %v4465 = vunpack.c.h.b16 %v4422
      %v4466 = vunpack.c.l.b16 %v4423
      %v4467 = vunpack.c.h.b16 %v4423
      %v4468 = vunpack.c.l.b16 %v4424
      %v4469 = vunpack.c.h.b16 %v4424
      %v4470 = vunpack.c.l.b16 %v4425
      %v4471 = vunpack.c.h.b16 %v4425
      %v4472 = vunpack.c.l.b16 %v4426
      %v4473 = vunpack.c.h.b16 %v4426
      %v4474 = vunpack.c.l.b16 %v4427
      %v4475 = vunpack.c.h.b16 %v4427
      %v4476 = vpack.c.b16 %v4444, %v4444
      %v4477 = vpack.c.b16 %v4445, %v4445
      %v4478 = vpack.c.b16 %v4446, %v4446
      %v4479 = vpack.c.b16 %v4447, %v4447
      %v4480 = vpack.c.b16 %v4448, %v4448
      %v4481 = vpack.c.b16 %v4449, %v4449
      %v4482 = vpack.c.b16 %v4450, %v4450
      %v4483 = vpack.c.b16 %v4451, %v4451
      %v4484 = vpack.c.b16 %v4452, %v4452
      %v4485 = vpack.c.b16 %v4453, %v4453
      %v4486 = vpack.c.b16 %v4454, %v4454
      %v4487 = vpack.c.b16 %v4455, %v4455
      %v4488 = vpack.c.b16 %v4456, %v4456
      %v4489 = vpack.c.b16 %v4457, %v4457
      %v4490 = vpack.c.b16 %v4458, %v4458
      %v4491 = vpack.c.b16 %v4459, %v4459
      %v4492 = vpack.c.b16 %v4460, %v4460
      %v4493 = vpack.c.b16 %v4461, %v4461
      %v4494 = vpack.c.b16 %v4462, %v4462
      %v4495 = vpack.c.b16 %v4463, %v4463
      %v4496 = vpack.c.b16 %v4464, %v4464
      %v4497 = vpack.c.b16 %v4465, %v4465
      %v4498 = vpack.c.b16 %v4466, %v4466
      %v4499 = vpack.c.b16 %v4467, %v4467
      %v4500 = vpack.c.b16 %v4468, %v4468
      %v4501 = vpack.c.b16 %v4469, %v4469
      %v4502 = vpack.c.b16 %v4470, %v4470
      %v4503 = vpack.c.b16 %v4471, %v4471
      %v4504 = vpack.c.b16 %v4472, %v4472
      %v4505 = vpack.c.b16 %v4473, %v4473
      %v4506 = vpack.c.b16 %v4474, %v4474
      %v4507 = vpack.c.b16 %v4475, %v4475
      %4540 = vst.msk [vmem:[%s219] sm:$0xf] %vm260, %v4476
      %4541 = vst.msk [vmem:[%s219 + $0x4] sm:$0xf] %vm260, %v4477
      %4542 = vst.msk [vmem:[%s219 + $0x8] sm:$0xf] %vm260, %v4478
      %4543 = vst.msk [vmem:[%s219 + $0xc] sm:$0xf] %vm260, %v4479
      %4544 = vst.msk [vmem:[%s219 + $0x10] sm:$0xf] %vm260, %v4480
      %4545 = vst.msk [vmem:[%s219 + $0x14] sm:$0xf] %vm260, %v4481
      %4546 = vst.msk [vmem:[%s219 + $0x18] sm:$0xf] %vm260, %v4482
      %4547 = vst.msk [vmem:[%s219 + $0x1c] sm:$0xf] %vm260, %v4483
      %4548 = vst.msk [vmem:[%s219 + $0x20] sm:$0xf] %vm260, %v4484
      %4549 = vst.msk [vmem:[%s219 + $0x24] sm:$0xf] %vm260, %v4485
      %4550 = vst.msk [vmem:[%s219 + $0x28] sm:$0xf] %vm260, %v4486
      %4551 = vst.msk [vmem:[%s219 + $0x2c] sm:$0xf] %vm260, %v4487
      %4552 = vst.msk [vmem:[%s219 + $0x30] sm:$0xf] %vm260, %v4488
      %4553 = vst.msk [vmem:[%s219 + $0x34] sm:$0xf] %vm260, %v4489
      %4554 = vst.msk [vmem:[%s219 + $0x38] sm:$0xf] %vm260, %v4490
      %4555 = vst.msk [vmem:[%s219 + $0x3c] sm:$0xf] %vm260, %v4491
      %4556 = vst.msk [vmem:[%s219 + $0x40] sm:$0xf] %vm260, %v4492
      %4557 = vst.msk [vmem:[%s219 + $0x44] sm:$0xf] %vm260, %v4493
      %4558 = vst.msk [vmem:[%s219 + $0x48] sm:$0xf] %vm260, %v4494
      %4559 = vst.msk [vmem:[%s219 + $0x4c] sm:$0xf] %vm260, %v4495
      %4560 = vst.msk [vmem:[%s219 + $0x50] sm:$0xf] %vm260, %v4496
      %4561 = vst.msk [vmem:[%s219 + $0x54] sm:$0xf] %vm260, %v4497
      %4562 = vst.msk [vmem:[%s219 + $0x58] sm:$0xf] %vm260, %v4498
      %4563 = vst.msk [vmem:[%s219 + $0x5c] sm:$0xf] %vm260, %v4499
      %4564 = vst.msk [vmem:[%s219 + $0x60] sm:$0xf] %vm260, %v4500
      %4565 = vst.msk [vmem:[%s219 + $0x64] sm:$0xf] %vm260, %v4501
      %4566 = vst.msk [vmem:[%s219 + $0x68] sm:$0xf] %vm260, %v4502
      %4567 = vst.msk [vmem:[%s219 + $0x6c] sm:$0xf] %vm260, %v4503
      %4568 = vst.msk [vmem:[%s219 + $0x70] sm:$0xf] %vm260, %v4504
      %4569 = vst.msk [vmem:[%s219 + $0x74] sm:$0xf] %vm260, %v4505
      %4570 = vst.msk [vmem:[%s219 + $0x78] sm:$0xf] %vm260, %v4506
      %4571 = vst.msk [vmem:[%s219 + $0x7c] sm:$0xf] %vm260, %v4507
      %vm4572 = vcmask 31744
      %v4573 = vsel %vm4572, %v4286, 0.0
      %v4574 = vsel %vm4572, %v4289, 0.0
      %v4575 = vadd.f32 %v4573, %v4574
      %v4576 = vsel %vm4572, %v4294, 0.0
      %v4577 = vadd.f32 %v4575, %v4576
      %v4578 = vsel %vm4572, %v4297, 0.0
      %v4579 = vadd.f32 %v4577, %v4578
      %v4580 = vsel %vm4572, %v4302, 0.0
      %v4581 = vadd.f32 %v4579, %v4580
      %v4582 = vsel %vm4572, %v4305, 0.0
      %v4583 = vadd.f32 %v4581, %v4582
      %v4584 = vsel %vm4572, %v4310, 0.0
      %v4585 = vadd.f32 %v4583, %v4584
      %v4586 = vsel %vm4572, %v4313, 0.0
      %v4587 = vadd.f32 %v4585, %v4586
      %v4588 = vsel %vm4572, %v4318, 0.0
      %v4589 = vadd.f32 %v4587, %v4588
      %v4590 = vsel %vm4572, %v4321, 0.0
      %v4591 = vadd.f32 %v4589, %v4590
      %v4592 = vsel %vm4572, %v4326, 0.0
      %v4593 = vadd.f32 %v4591, %v4592
      %v4594 = vsel %vm4572, %v4329, 0.0
      %v4595 = vadd.f32 %v4593, %v4594
      %v4596 = vsel %vm4572, %v4334, 0.0
      %v4597 = vadd.f32 %v4595, %v4596
      %v4598 = vsel %vm4572, %v4337, 0.0
      %v4599 = vadd.f32 %v4597, %v4598
      %v4600 = vsel %vm4572, %v4342, 0.0
      %v4601 = vadd.f32 %v4599, %v4600
      %v4602 = vsel %vm4572, %v4345, 0.0
      %v4603 = vadd.f32 %v4601, %v4602
      %v4604 = vsel %vm4572, %v4350, 0.0
      %v4605 = vadd.f32 %v4603, %v4604
      %v4606 = vsel %vm4572, %v4353, 0.0
      %v4607 = vadd.f32 %v4605, %v4606
      %v4608 = vsel %vm4572, %v4358, 0.0
      %v4609 = vadd.f32 %v4607, %v4608
      %v4610 = vsel %vm4572, %v4361, 0.0
      %v4611 = vadd.f32 %v4609, %v4610
      %v4612 = vsel %vm4572, %v4366, 0.0
      %v4613 = vadd.f32 %v4611, %v4612
      %v4614 = vsel %vm4572, %v4369, 0.0
      %v4615 = vadd.f32 %v4613, %v4614
      %v4616 = vsel %vm4572, %v4374, 0.0
      %v4617 = vadd.f32 %v4615, %v4616
      %v4618 = vsel %vm4572, %v4377, 0.0
      %v4619 = vadd.f32 %v4617, %v4618
      %v4620 = vsel %vm4572, %v4382, 0.0
      %v4621 = vadd.f32 %v4619, %v4620
      %v4622 = vsel %vm4572, %v4385, 0.0
      %v4623 = vadd.f32 %v4621, %v4622
      %v4624 = vsel %vm4572, %v4390, 0.0
      %v4625 = vadd.f32 %v4623, %v4624
      %v4626 = vsel %vm4572, %v4393, 0.0
      %v4627 = vadd.f32 %v4625, %v4626
      %v4628 = vsel %vm4572, %v4398, 0.0
      %v4629 = vadd.f32 %v4627, %v4628
      %v4630 = vsel %vm4572, %v4401, 0.0
      %v4631 = vadd.f32 %v4629, %v4630
      %v4632 = vsel %vm4572, %v4406, 0.0
      %v4633 = vadd.f32 %v4631, %v4632
      %v4634 = vsel %vm4572, %v4409, 0.0
      %v4635 = vadd.f32 %v4633, %v4634
      %v4636 = vrot.slane %v4635, 4
      %v4637 = vadd.f32 %v4635, %v4636
      %v4638 = vrot.slane %v4637, 2
      %v4639 = vadd.f32 %v4637, %v4638
      %v4640 = vrot.slane %v4639, 1
      %v4641 = vadd.f32 %v4639, %v4640
      %v4642 = vmul.f32 %v4286, %v4286
      %v4643 = vmul.f32 %v4289, %v4289
      %v4644 = vmul.f32 %v4294, %v4294
      %v4645 = vmul.f32 %v4297, %v4297
      %v4646 = vmul.f32 %v4302, %v4302
      %v4647 = vmul.f32 %v4305, %v4305
      %v4648 = vmul.f32 %v4310, %v4310
      %v4649 = vmul.f32 %v4313, %v4313
      %v4650 = vmul.f32 %v4318, %v4318
      %v4651 = vmul.f32 %v4321, %v4321
      %v4652 = vmul.f32 %v4326, %v4326
      %v4653 = vmul.f32 %v4329, %v4329
      %v4654 = vmul.f32 %v4334, %v4334
      %v4655 = vmul.f32 %v4337, %v4337
      %v4656 = vmul.f32 %v4342, %v4342
      %v4657 = vmul.f32 %v4345, %v4345
      %v4658 = vmul.f32 %v4350, %v4350
      %v4659 = vmul.f32 %v4353, %v4353
      %v4660 = vmul.f32 %v4358, %v4358
      %v4661 = vmul.f32 %v4361, %v4361
      %v4662 = vmul.f32 %v4366, %v4366
      %v4663 = vmul.f32 %v4369, %v4369
      %v4664 = vmul.f32 %v4374, %v4374
      %v4665 = vmul.f32 %v4377, %v4377
      %v4666 = vmul.f32 %v4382, %v4382
      %v4667 = vmul.f32 %v4385, %v4385
      %v4668 = vmul.f32 %v4390, %v4390
      %v4669 = vmul.f32 %v4393, %v4393
      %v4670 = vmul.f32 %v4398, %v4398
      %v4671 = vmul.f32 %v4401, %v4401
      %v4672 = vmul.f32 %v4406, %v4406
      %v4673 = vmul.f32 %v4409, %v4409
      %v4674 = vsel %vm4572, %v4642, 0.0
      %v4675 = vsel %vm4572, %v4643, 0.0
      %v4676 = vadd.f32 %v4674, %v4675
      %v4677 = vsel %vm4572, %v4644, 0.0
      %v4678 = vadd.f32 %v4676, %v4677
      %v4679 = vsel %vm4572, %v4645, 0.0
      %v4680 = vadd.f32 %v4678, %v4679
      %v4681 = vsel %vm4572, %v4646, 0.0
      %v4682 = vadd.f32 %v4680, %v4681
      %v4683 = vsel %vm4572, %v4647, 0.0
      %v4684 = vadd.f32 %v4682, %v4683
      %v4685 = vsel %vm4572, %v4648, 0.0
      %v4686 = vadd.f32 %v4684, %v4685
      %v4687 = vsel %vm4572, %v4649, 0.0
      %v4688 = vadd.f32 %v4686, %v4687
      %v4689 = vsel %vm4572, %v4650, 0.0
      %v4690 = vadd.f32 %v4688, %v4689
      %v4691 = vsel %vm4572, %v4651, 0.0
      %v4692 = vadd.f32 %v4690, %v4691
      %v4693 = vsel %vm4572, %v4652, 0.0
      %v4694 = vadd.f32 %v4692, %v4693
      %v4695 = vsel %vm4572, %v4653, 0.0
      %v4696 = vadd.f32 %v4694, %v4695
      %v4697 = vsel %vm4572, %v4654, 0.0
      %v4698 = vadd.f32 %v4696, %v4697
      %v4699 = vsel %vm4572, %v4655, 0.0
      %v4700 = vadd.f32 %v4698, %v4699
      %v4701 = vsel %vm4572, %v4656, 0.0
      %v4702 = vadd.f32 %v4700, %v4701
      %v4703 = vsel %vm4572, %v4657, 0.0
      %v4704 = vadd.f32 %v4702, %v4703
      %v4705 = vsel %vm4572, %v4658, 0.0
      %v4706 = vadd.f32 %v4704, %v4705
      %v4707 = vsel %vm4572, %v4659, 0.0
      %v4708 = vadd.f32 %v4706, %v4707
      %v4709 = vsel %vm4572, %v4660, 0.0
      %v4710 = vadd.f32 %v4708, %v4709
      %v4711 = vsel %vm4572, %v4661, 0.0
      %v4712 = vadd.f32 %v4710, %v4711
      %v4713 = vsel %vm4572, %v4662, 0.0
      %v4714 = vadd.f32 %v4712, %v4713
      %v4715 = vsel %vm4572, %v4663, 0.0
      %v4716 = vadd.f32 %v4714, %v4715
      %v4717 = vsel %vm4572, %v4664, 0.0
      %v4718 = vadd.f32 %v4716, %v4717
      %v4719 = vsel %vm4572, %v4665, 0.0
      %v4720 = vadd.f32 %v4718, %v4719
      %v4721 = vsel %vm4572, %v4666, 0.0
      %v4722 = vadd.f32 %v4720, %v4721
      %v4723 = vsel %vm4572, %v4667, 0.0
      %v4724 = vadd.f32 %v4722, %v4723
      %v4725 = vsel %vm4572, %v4668, 0.0
      %v4726 = vadd.f32 %v4724, %v4725
      %v4727 = vsel %vm4572, %v4669, 0.0
      %v4728 = vadd.f32 %v4726, %v4727
      %v4729 = vsel %vm4572, %v4670, 0.0
      %v4730 = vadd.f32 %v4728, %v4729
      %v4731 = vsel %vm4572, %v4671, 0.0
      %v4732 = vadd.f32 %v4730, %v4731
      %v4733 = vsel %vm4572, %v4672, 0.0
      %v4734 = vadd.f32 %v4732, %v4733
      %v4735 = vsel %vm4572, %v4673, 0.0
      %v4736 = vadd.f32 %v4734, %v4735
      %v4737 = vrot.slane %v4736, 4
      %v4738 = vadd.f32 %v4736, %v4737
      %v4739 = vrot.slane %v4738, 2
      %v4740 = vadd.f32 %v4738, %v4739
      %v4741 = vrot.slane %v4740, 1
      %v4742 = vadd.f32 %v4740, %v4741
      %vm4743 = vcmask 1040384
      %v4744 = vsel %vm4743, %v4641, %v4742
      %vm4745 = vcmask 25600
      %4746 = vst.msk [vmem:[%s226] sm:$0x3] %vm4745, %v4744
      %p4747 = scmp.lt.s32.totalorder %s19, 1
      %s4748 = scalar_select %p4747, %s19, 1
      %p4749 = scmp.lt.s32.totalorder %s20, 0
      %s4750 = scalar_select %p4749, %s20, 0
      %s4751 = smul.addr %s4748, 32
      %s4752 = sadd.s32 %s4750, %s4751
      %s4753 = smul.addr %s4752, 4
      %s4754 = scalar_lea.vmem %s2, %s4753
      %p4755 = scmp.lt.s32.totalorder %s19, 1
      %s4756 = scalar_select %p4755, %s19, 1
      %p4757 = scmp.lt.s32.totalorder %s20, 0
      %s4758 = scalar_select %p4757, %s20, 0
      %s4759 = sadd.s32 %s4758, %s4756
      %s4760 = smul.addr %s4759, 2
      %s4761 = scalar_lea.vmem %s3, %s4760
      // Predicated region
      $region29: #{basic_block_forward.3} parent=27 // pred_check
        %p4762 = pneg %p99
      $region30: #{basic_block_forward.3} parent=27 // pred_check_branch
        %4764 = sbr.rel (%p4762) target = $region32
      $region31: #{basic_block_forward.3} parent=27 // pred_region
        _
      $region32: #{basic_block_forward.3} parent=27 // pred_fallthru
        _
      // Predicated region
      $region33: #{basic_block_forward.3} parent=27 // pred_check
        %p4765 = pneg %p127
      $region34: #{basic_block_forward.3} parent=27 // pred_check_branch
        %4767 = sbr.rel (%p4765) target = $region36
      $region35: #{basic_block_forward.3} parent=27 // pred_region
        _
      $region36: #{basic_block_forward.3} parent=27 // pred_fallthru
        _
    $region28: #{basic_block_forward.3} parent=5 // pred_fallthru
      _
    %p4768 = scmp.le.s32.totalorder 2, %s10
    // Predicated region
    $region37: #{basic_block_forward.3} parent=5 // pred_check
      %p4769 = pneg %p4768
    $region38: #{basic_block_forward.3} parent=5 // pred_check_branch
      %4771 = sbr.rel (%p4769) target = $region40
    $region39: #{basic_block_forward.3} parent=5 // pred_region
      %s4772 = ssub.s32 %s10, 2
      // Predicated region
      $region41: #{basic_block_forward.3} parent=39 // pred_check
        %p4773 = pneg %p105
      $region42: #{basic_block_forward.3} parent=39 // pred_check_branch
        %4775 = sbr.rel (%p4773) target = $region44
      $region43: #{basic_block_forward.3} parent=39 // pred_region
        %p4776 = scmp.lt.s32.totalorder %s21, 1
        %s4777 = scalar_select %p4776, %s21, 1
        %p4778 = scmp.lt.s32.totalorder %s22, 0
        %s4779 = scalar_select %p4778, %s22, 0
        %s4780 = smul.addr %s4777, 32
        %s4781 = sadd.s32 %s4779, %s4780
        %s4782 = smul.addr %s4781, 4
        %s4783 = scalar_lea.vmem %s2, %s4782
      $region44: #{basic_block_forward.3} parent=39 // pred_fallthru
        _
      // Predicated region
      $region45: #{basic_block_forward.3} parent=39 // pred_check
        %p4784 = pneg %p133
      $region46: #{basic_block_forward.3} parent=39 // pred_check_branch
        %4786 = sbr.rel (%p4784) target = $region48
      $region47: #{basic_block_forward.3} parent=39 // pred_region
        %p4787 = scmp.lt.s32.totalorder %s21, 1
        %s4788 = scalar_select %p4787, %s21, 1
        %p4789 = scmp.lt.s32.totalorder %s22, 0
        %s4790 = scalar_select %p4789, %s22, 0
        %s4791 = sadd.s32 %s4790, %s4788
        %s4792 = smul.addr %s4791, 2
        %s4793 = scalar_lea.vmem %s3, %s4792
      $region48: #{basic_block_forward.3} parent=39 // pred_fallthru
        _
    $region40: #{basic_block_forward.3} parent=5 // pred_fallthru
      _
  $region6: #{basic_block_forward.3} parent=0 // loop_footer
    %s14 = sadd.s32 1, %s10
  $region7: #{basic_block_forward.3} parent=0 // loop_footer_branch
    %9 = sbr.rel target = $region3
  $region8: #{basic_block_forward.3} parent=0 // loop_exit
    _

// kernel: basic_block_forward.4
$region0: #{basic_block_forward.4}
  #allocation0 [shape = 'u32[]', space=smem, size = 0x4, offset = 0x4, fixed_abs, tag = 'smem constant byte address 0x4 - core index']
  #allocation1 [shape = 'u32[144,128]{1,0:T(1,128)}', space=vmem, size = 0x12000, scoped, tag = 'internal scratch']
  #allocation2 [shape = 'bf16[18,18,4]{2,1,0:T(8,128)(2,1)}', space=vmem, size = 0x1b000, scoped, tag = 'scratch operand']
  #allocation3 [shape = 'bf16[16,16,36]{2,1,0:T(8,128)(2,1)}', space=vmem, size = 0x10000, scoped, tag = 'scratch operand']
  %s0 = inlined_call_operand.vmem [shape: bf16[2,16,16,4], index: 0, kind: input, shape index: {}]
  %s1 = inlined_call_operand.vmem [shape: bf16[36,4], index: 1, kind: input, shape index: {}]
  %s2 = inlined_call_operand.vmem [shape: f32[1,4], index: 2, kind: input, shape index: {}]
  %s3 = inlined_call_operand.vmem [shape: f32[1,4], index: 3, kind: input, shape index: {}]
  %s4 = inlined_call_operand.vmem [shape: bf16[2,16,16,4], index: 4, kind: output, shape index: {0}]
  %s5 = inlined_call_operand.vmem [shape: f32[2,2,4], index: 5, kind: output, shape index: {1}]
  %6 = xla_tuple %s4, %s5
  %s7 = sld [smem:[#allocation0]]
  $region57: #{basic_block_forward.4} parent=0
    _
  %s9 = ssub.s32 1, %s7
  %s10 = scalar_select 0, %s9, %s7
  loop: start=0, step=1, limit=4
  $region2: #{basic_block_forward.4} parent=0 // loop_pre_header
    _
  $region3: #{basic_block_forward.4} parent=0 // loop_header
    %s12 = sphi 0, %s16
    %p13 = scmp.ge.s32.totalorder %s12, 4
    %s19 = sphi 0, %s31
    %s20 = sphi 0, %s27
    %s21 = sphi 0, %s19
    %s22 = sphi 0, %s20
    %s23 = sphi 0, %s21
    %s24 = sphi 0, %s22
    %s34 = sphi 0, %s36
    %s37 = sphi 0, %s34
    %s38 = sphi 0, %s37
    %s54 = sphi 0, %s38
    %s60 = sphi 0, %s62
    %s63 = sphi 0, %s60
    %s64 = sphi 0, %s63
    %s80 = sphi 0, %s64
    %s84 = sphi 0, %s84
    %s86 = sphi 0, %s84
    %s87 = sphi 0, %s86
    %s101 = sphi 0, %s87
    %s105 = sphi 0, %s105
    %s107 = sphi 0, %s105
    %s108 = sphi 0, %s107
    %s122 = sphi 0, %s108
    %s130 = sphi 0, %s132
    %s133 = sphi 0, %s130
    %s134 = sphi 0, %s133
    %s150 = sphi 0, %s134
    %s158 = sphi 0, %s160
    %s161 = sphi 0, %s158
    %s162 = sphi 0, %s161
    %s178 = sphi 0, %s162
  $region4: #{basic_block_forward.4} parent=0 // loop_header_branch
    %15 = sbr.rel (%p13) target = $region8
  $region5: #{basic_block_forward.4} parent=0 // loop_body
    %s17 = ssub.s32 %s12, 1
    %s18 = ssub.s32 %s12, 2
    %s25 = sadd.s32 1, %s20
    %p26 = scmp.ge.s32.totalorder %s25, 1
    %s27 = scalar_select %p26, 0, %s25
    %s28 = sadd.s32 1, %s19
    %s29 = scalar_select %p26, %s28, %s19
    %p30 = scmp.ge.s32.totalorder %s29, 2
    %s31 = scalar_select %p30, 0, %s29
    %s32 = ssub.s32 %s19, %s31
    %p33 = scmp.eq.s32.totalorder %s32, 0
    %s35 = sadd.s32 %s34, 1
    %s36 = scalar_select %p33, %s34, %s35
    %p39 = pneg %p33
    %p40 = scmp.eq.s32.totalorder %s12, 1
    %p41 = por %p39, %p40
    %p42 = scmp.ne.s32.totalorder %s34, %s37
    %p43 = scmp.eq.s32.totalorder %s12, 0
    %p44 = por %p42, %p43
    %p45 = scmp.ne.s32.totalorder %s34, %s37
    %p46 = scmp.eq.s32.totalorder %s17, 1
    %p47 = por %p45, %p46
    %p48 = scmp.ne.s32.totalorder %s37, %s38
    %p49 = scmp.eq.s32.totalorder %s17, 0
    %p50 = por %p48, %p49
    %p51 = scmp.ne.s32.totalorder %s37, %s38
    %p52 = scmp.eq.s32.totalorder %s18, 1
    %p53 = por %p51, %p52
    %p55 = scmp.ne.s32.totalorder %s38, %s54
    %p56 = scmp.eq.s32.totalorder %s18, 0
    %p57 = por %p55, %p56
    %s58 = ssub.s32 %s20, %s27
    %p59 = scmp.eq.s32.totalorder %s58, 0
    %s61 = sadd.s32 %s60, 1
    %s62 = scalar_select %p59, %s60, %s61
    %p65 = pneg %p59
    %p66 = scmp.eq.s32.totalorder %s12, 1
    %p67 = por %p65, %p66
    %p68 = scmp.ne.s32.totalorder %s60, %s63
    %p69 = scmp.eq.s32.totalorder %s12, 0
    %p70 = por %p68, %p69
    %p71 = scmp.ne.s32.totalorder %s60, %s63
    %p72 = scmp.eq.s32.totalorder %s17, 1
    %p73 = por %p71, %p72
    %p74 = scmp.ne.s32.totalorder %s63, %s64
    %p75 = scmp.eq.s32.totalorder %s17, 0
    %p76 = por %p74, %p75
    %p77 = scmp.ne.s32.totalorder %s63, %s64
    %p78 = scmp.eq.s32.totalorder %s18, 1
    %p79 = por %p77, %p78
    %p81 = scmp.ne.s32.totalorder %s64, %s80
    %p82 = scmp.eq.s32.totalorder %s18, 0
    %p83 = por %p81, %p82
    %s85 = sadd.s32 %s84, 1
    %p88 = scmp.eq.s32.totalorder %s12, 1
    %p89 = scmp.ne.s32.totalorder %s84, %s86
    %p90 = scmp.eq.s32.totalorder %s12, 0
    %p91 = por %p89, %p90
    %p92 = scmp.ne.s32.totalorder %s84, %s86
    %p93 = scmp.eq.s32.totalorder %s17, 1
    %p94 = por %p92, %p93
    %p95 = scmp.ne.s32.totalorder %s86, %s87
    %p96 = scmp.eq.s32.totalorder %s17, 0
    %p97 = por %p95, %p96
    %p98 = scmp.ne.s32.totalorder %s86, %s87
    %p99 = scmp.eq.s32.totalorder %s18, 1
    %p100 = por %p98, %p99
    %p102 = scmp.ne.s32.totalorder %s87, %s101
    %p103 = scmp.eq.s32.totalorder %s18, 0
    %p104 = por %p102, %p103
    %s106 = sadd.s32 %s105, 1
    %p109 = scmp.eq.s32.totalorder %s12, 1
    %p110 = scmp.ne.s32.totalorder %s105, %s107
    %p111 = scmp.eq.s32.totalorder %s12, 0
    %p112 = por %p110, %p111
    %p113 = scmp.ne.s32.totalorder %s105, %s107
    %p114 = scmp.eq.s32.totalorder %s17, 1
    %p115 = por %p113, %p114
    %p116 = scmp.ne.s32.totalorder %s107, %s108
    %p117 = scmp.eq.s32.totalorder %s17, 0
    %p118 = por %p116, %p117
    %p119 = scmp.ne.s32.totalorder %s107, %s108
    %p120 = scmp.eq.s32.totalorder %s18, 1
    %p121 = por %p119, %p120
    %p123 = scmp.ne.s32.totalorder %s108, %s122
    %p124 = scmp.eq.s32.totalorder %s18, 0
    %p125 = por %p123, %p124
    %s126 = ssub.s32 %s19, %s31
    %s127 = ssub.s32 %s20, %s27
    %s128 = sor.u32 %s126, %s127
    %p129 = scmp.eq.s32.totalorder %s128, 0
    %s131 = sadd.s32 %s130, 1
    %s132 = scalar_select %p129, %s130, %s131
    %p135 = pneg %p129
    %p136 = scmp.eq.s32.totalorder %s12, 1
    %p137 = por %p135, %p136
    %p138 = scmp.ne.s32.totalorder %s130, %s133
    %p139 = scmp.eq.s32.totalorder %s12, 0
    %p140 = por %p138, %p139
    %p141 = scmp.ne.s32.totalorder %s130, %s133
    %p142 = scmp.eq.s32.totalorder %s17, 1
    %p143 = por %p141, %p142
    %p144 = scmp.ne.s32.totalorder %s133, %s134
    %p145 = scmp.eq.s32.totalorder %s17, 0
    %p146 = por %p144, %p145
    %p147 = scmp.ne.s32.totalorder %s133, %s134
    %p148 = scmp.eq.s32.totalorder %s18, 1
    %p149 = por %p147, %p148
    %p151 = scmp.ne.s32.totalorder %s134, %s150
    %p152 = scmp.eq.s32.totalorder %s18, 0
    %p153 = por %p151, %p152
    %s154 = ssub.s32 %s19, %s31
    %s155 = ssub.s32 %s20, %s27
    %s156 = sor.u32 %s154, %s155
    %p157 = scmp.eq.s32.totalorder %s156, 0
    %s159 = sadd.s32 %s158, 1
    %s160 = scalar_select %p157, %s158, %s159
    %p163 = pneg %p157
    %p164 = scmp.eq.s32.totalorder %s12, 1
    %p165 = por %p163, %p164
    %p166 = scmp.ne.s32.totalorder %s158, %s161
    %p167 = scmp.eq.s32.totalorder %s12, 0
    %p168 = por %p166, %p167
    %p169 = scmp.ne.s32.totalorder %s158, %s161
    %p170 = scmp.eq.s32.totalorder %s17, 1
    %p171 = por %p169, %p170
    %p172 = scmp.ne.s32.totalorder %s161, %s162
    %p173 = scmp.eq.s32.totalorder %s17, 0
    %p174 = por %p172, %p173
    %p175 = scmp.ne.s32.totalorder %s161, %s162
    %p176 = scmp.eq.s32.totalorder %s18, 1
    %p177 = por %p175, %p176
    %p179 = scmp.ne.s32.totalorder %s162, %s178
    %p180 = scmp.eq.s32.totalorder %s18, 0
    %p181 = por %p179, %p180
    %p182 = scmp.le.s32.totalorder 1, %s12
    %p183 = scmp.lt.s32.totalorder %s12, 3
    %p184 = pnand %p182, %p183
    %p185 = pneg %p184
    // Predicated region
    $region9: #{basic_block_forward.4} parent=5 // pred_check
      _
    $region10: #{basic_block_forward.4} parent=5 // pred_check_branch
      %187 = sbr.rel (%p184) target = $region12
    $region11: #{basic_block_forward.4} parent=5 // pred_region
      %s188 = ssub.s32 %s12, 1
      // Predicated region
      $region13: #{basic_block_forward.4} parent=11 // pred_check
        %p189 = pneg %p76
      $region14: #{basic_block_forward.4} parent=11 // pred_check_branch
        %191 = sbr.rel (%p189) target = $region16
      $region15: #{basic_block_forward.4} parent=11 // pred_region
        %p192 = scmp.lt.s32.totalorder %s22, 0
        %s193 = scalar_select %p192, %s22, 0
        %s194 = smul.addr %s193, 4
        %s195 = scalar_lea.vmem %s1, %s194
      $region16: #{basic_block_forward.4} parent=11 // pred_fallthru
        _
      // Predicated region
      $region17: #{basic_block_forward.4} parent=11 // pred_check
        %p196 = pneg %p97
      $region18: #{basic_block_forward.4} parent=11 // pred_check_branch
        %198 = sbr.rel (%p196) target = $region20
      $region19: #{basic_block_forward.4} parent=11 // pred_region
        _
      $region20: #{basic_block_forward.4} parent=11 // pred_fallthru
        _
      // Predicated region
      $region21: #{basic_block_forward.4} parent=11 // pred_check
        %p199 = pneg %p118
      $region22: #{basic_block_forward.4} parent=11 // pred_check_branch
        %201 = sbr.rel (%p199) target = $region24
      $region23: #{basic_block_forward.4} parent=11 // pred_region
        _
      $region24: #{basic_block_forward.4} parent=11 // pred_fallthru
        _
    $region12: #{basic_block_forward.4} parent=5 // pred_fallthru
      _
    %p202 = scmp.lt.s32.totalorder %s12, 2
    // Predicated region
    $region25: #{basic_block_forward.4} parent=5 // pred_check
      %p203 = pneg %p202
    $region26: #{basic_block_forward.4} parent=5 // pred_check_branch
      %205 = sbr.rel (%p203) target = $region28
    $region27: #{basic_block_forward.4} parent=5 // pred_region
      // Predicated region
      $region29: #{basic_block_forward.4} parent=27 // pred_check
        %p206 = pneg %p44
      $region30: #{basic_block_forward.4} parent=27 // pred_check_branch
        %208 = sbr.rel (%p206) target = $region32
      $region31: #{basic_block_forward.4} parent=27 // pred_region
        %p209 = scmp.lt.s32.totalorder %s19, 1
        %s210 = scalar_select %p209, %s19, 1
        %s211 = smul.addr %s210, 32
        %s212 = smul.addr %s211, 4
        %s213 = scalar_lea.vmem %s0, %s212
      $region32: #{basic_block_forward.4} parent=27 // pred_fallthru
        _
    $region28: #{basic_block_forward.4} parent=5 // pred_fallthru
      _
    %p214 = scmp.le.s32.totalorder 1, %s12
    %p215 = scmp.lt.s32.totalorder %s12, 3
    %p216 = pnand %p214, %p215
    %p217 = pneg %p216
    // Predicated region
    $region33: #{basic_block_forward.4} parent=5 // pred_check
      _
    $region34: #{basic_block_forward.4} parent=5 // pred_check_branch
      %219 = sbr.rel (%p216) target = $region36
    $region35: #{basic_block_forward.4} parent=5 // pred_region
      %s220 = ssub.s32 %s12, 1
      %p221 = scmp.lt.s32.totalorder %s21, 1
      %s222 = scalar_select %p221, %s21, 1
      %s223 = smul.addr %s222, 32
      %s224 = smul.addr %s223, 4
      %s225 = scalar_lea.vmem %s0, %s224
      %p226 = pneg %p50
      %p227 = pneg %p47
      %p228 = scmp.lt.s32.totalorder %s22, 0
      %s229 = scalar_select %p228, %s22, 0
      %s230 = smul.addr %s229, 4
      %s231 = scalar_lea.vmem %s1, %s230
      %p232 = pneg %p76
      %p233 = pneg %p73
      %p234 = pneg %p97
      %p235 = pneg %p94
      %p236 = pneg %p118
      %p237 = pneg %p115
      %p238 = pneg %p146
      %p239 = pneg %p143
      %p240 = scmp.lt.s32.totalorder %s21, 1
      %s241 = scalar_select %p240, %s21, 1
      %p242 = scmp.lt.s32.totalorder %s22, 0
      %s243 = scalar_select %p242, %s22, 0
      %s244 = smul.addr %s241, 32
      %s245 = sadd.s32 %s243, %s244
      %s246 = smul.addr %s245, 4
      %s247 = scalar_lea.vmem %s4, %s246
      %p248 = pneg %p174
      %p249 = pneg %p171
      %p250 = scmp.lt.s32.totalorder %s21, 1
      %s251 = scalar_select %p250, %s21, 1
      %p252 = scmp.lt.s32.totalorder %s22, 0
      %s253 = scalar_select %p252, %s22, 0
      %s254 = sadd.s32 %s253, %s251
      %s255 = smul.addr %s254, 2
      %s256 = scalar_lea.vmem %s5, %s255
      %p257 = scmp.lt.s32.totalorder %s21, 1
      %s258 = scalar_select %p257, %s21, 1
      %s259 = smul.addr %s258, 32
      %s260 = smul.addr %s259, 4
      %s261 = scalar_lea.vmem %s0, %s260
      %p262 = scmp.lt.s32.totalorder %s22, 0
      %s263 = scalar_select %p262, %s22, 0
      %s264 = smul.addr %s263, 4
      %s265 = scalar_lea.vmem %s1, %s264
      %p266 = scmp.lt.s32.totalorder %s21, 1
      %s267 = scalar_select %p266, %s21, 1
      %p268 = scmp.lt.s32.totalorder %s22, 0
      %s269 = scalar_select %p268, %s22, 0
      %s270 = smul.addr %s267, 32
      %s271 = sadd.s32 %s269, %s270
      %s272 = smul.addr %s271, 4
      %s273 = scalar_lea.vmem %s4, %s272
      %p274 = scmp.lt.s32.totalorder %s21, 1
      %s275 = scalar_select %p274, %s21, 1
      %p276 = scmp.lt.s32.totalorder %s22, 0
      %s277 = scalar_select %p276, %s22, 0
      %s278 = sadd.s32 %s277, %s275
      %s279 = smul.addr %s278, 2
      %s280 = scalar_lea.vmem %s5, %s279
      %v282 = vld [vmem:[%s261] sm:$0xf]
      %v283 = vld [vmem:[%s261 + $0x4] sm:$0xf]
      %v284 = vld [vmem:[%s261 + $0x8] sm:$0xf]
      %v285 = vld [vmem:[%s261 + $0xc] sm:$0xf]
      %v286 = vld [vmem:[%s261 + $0x10] sm:$0xf]
      %v287 = vld [vmem:[%s261 + $0x14] sm:$0xf]
      %v288 = vld [vmem:[%s261 + $0x18] sm:$0xf]
      %v289 = vld [vmem:[%s261 + $0x1c] sm:$0xf]
      %v290 = vld [vmem:[%s261 + $0x20] sm:$0xf]
      %v291 = vld [vmem:[%s261 + $0x24] sm:$0xf]
      %v292 = vld [vmem:[%s261 + $0x28] sm:$0xf]
      %v293 = vld [vmem:[%s261 + $0x2c] sm:$0xf]
      %v294 = vld [vmem:[%s261 + $0x30] sm:$0xf]
      %v295 = vld [vmem:[%s261 + $0x34] sm:$0xf]
      %v296 = vld [vmem:[%s261 + $0x38] sm:$0xf]
      %v297 = vld [vmem:[%s261 + $0x3c] sm:$0xf]
      %v298 = vld [vmem:[%s261 + $0x40] sm:$0xf]
      %v299 = vld [vmem:[%s261 + $0x44] sm:$0xf]
      %v300 = vld [vmem:[%s261 + $0x48] sm:$0xf]
      %v301 = vld [vmem:[%s261 + $0x4c] sm:$0xf]
      %v302 = vld [vmem:[%s261 + $0x50] sm:$0xf]
      %v303 = vld [vmem:[%s261 + $0x54] sm:$0xf]
      %v304 = vld [vmem:[%s261 + $0x58] sm:$0xf]
      %v305 = vld [vmem:[%s261 + $0x5c] sm:$0xf]
      %v306 = vld [vmem:[%s261 + $0x60] sm:$0xf]
      %v307 = vld [vmem:[%s261 + $0x64] sm:$0xf]
      %v308 = vld [vmem:[%s261 + $0x68] sm:$0xf]
      %v309 = vld [vmem:[%s261 + $0x6c] sm:$0xf]
      %v310 = vld [vmem:[%s261 + $0x70] sm:$0xf]
      %v311 = vld [vmem:[%s261 + $0x74] sm:$0xf]
      %v312 = vld [vmem:[%s261 + $0x78] sm:$0xf]
      %v313 = vld [vmem:[%s261 + $0x7c] sm:$0xf]
      %v314 = vunpack.c.l.bf16 %v282
      %v315 = vunpack.c.l.bf16 %v283
      %v316 = vunpack.c.l.bf16 %v284
      %v317 = vunpack.c.l.bf16 %v285
      %v318 = vunpack.c.l.bf16 %v286
      %v319 = vunpack.c.l.bf16 %v287
      %v320 = vunpack.c.l.bf16 %v288
      %v321 = vunpack.c.l.bf16 %v289
      %v322 = vunpack.c.l.bf16 %v290
      %v323 = vunpack.c.l.bf16 %v291
      %v324 = vunpack.c.l.bf16 %v292
      %v325 = vunpack.c.l.bf16 %v293
      %v326 = vunpack.c.l.bf16 %v294
      %v327 = vunpack.c.l.bf16 %v295
      %v328 = vunpack.c.l.bf16 %v296
      %v329 = vunpack.c.l.bf16 %v297
      %v330 = vunpack.c.l.bf16 %v298
      %v331 = vunpack.c.l.bf16 %v299
      %v332 = vunpack.c.l.bf16 %v300
      %v333 = vunpack.c.l.bf16 %v301
      %v334 = vunpack.c.l.bf16 %v302
      %v335 = vunpack.c.l.bf16 %v303
      %v336 = vunpack.c.l.bf16 %v304
      %v337 = vunpack.c.l.bf16 %v305
      %v338 = vunpack.c.l.bf16 %v306
      %v339 = vunpack.c.l.bf16 %v307
      %v340 = vunpack.c.l.bf16 %v308
      %v341 = vunpack.c.l.bf16 %v309
      %v342 = vunpack.c.l.bf16 %v310
      %v343 = vunpack.c.l.bf16 %v311
      %v344 = vunpack.c.l.bf16 %v312
      %v345 = vunpack.c.l.bf16 %v313
      %v346 = vld [vmem:[%s2] sm:$0x1]
      %v348 = vlaneseq
      %v349 = vshrl.u32 %v348, 7
      %v350 = vsub.s32 0, %v349
      %v351 = vrot.slane %v346, %v350
      %v353 = vmul.f32 %v314, %v351
      %v354 = vmul.f32 %v315, %v351
      %v355 = vmul.f32 %v316, %v351
      %v356 = vmul.f32 %v317, %v351
      %v357 = vmul.f32 %v318, %v351
      %v358 = vmul.f32 %v319, %v351
      %v359 = vmul.f32 %v320, %v351
      %v360 = vmul.f32 %v321, %v351
      %v361 = vmul.f32 %v322, %v351
      %v362 = vmul.f32 %v323, %v351
      %v363 = vmul.f32 %v324, %v351
      %v364 = vmul.f32 %v325, %v351
      %v365 = vmul.f32 %v326, %v351
      %v366 = vmul.f32 %v327, %v351
      %v367 = vmul.f32 %v328, %v351
      %v368 = vmul.f32 %v329, %v351
      %v369 = vmul.f32 %v330, %v351
      %v370 = vmul.f32 %v331, %v351
      %v371 = vmul.f32 %v332, %v351
      %v372 = vmul.f32 %v333, %v351
      %v373 = vmul.f32 %v334, %v351
      %v374 = vmul.f32 %v335, %v351
      %v375 = vmul.f32 %v336, %v351
      %v376 = vmul.f32 %v337, %v351
      %v377 = vmul.f32 %v338, %v351
      %v378 = vmul.f32 %v339, %v351
      %v379 = vmul.f32 %v340, %v351
      %v380 = vmul.f32 %v341, %v351
      %v381 = vmul.f32 %v342, %v351
      %v382 = vmul.f32 %v343, %v351
      %v383 = vmul.f32 %v344, %v351
      %v384 = vmul.f32 %v345, %v351
      %v385 = vld [vmem:[%s3] sm:$0x1]
      %v387 = vlaneseq
      %v388 = vshrl.u32 %v387, 7
      %v389 = vsub.s32 0, %v388
      %v390 = vrot.slane %v385, %v389
      %v392 = vadd.f32 %v353, %v390
      %v393 = vadd.f32 %v354, %v390
      %v394 = vadd.f32 %v355, %v390
      %v395 = vadd.f32 %v356, %v390
      %v396 = vadd.f32 %v357, %v390
      %v397 = vadd.f32 %v358, %v390
      %v398 = vadd.f32 %v359, %v390
      %v399 = vadd.f32 %v360, %v390
      %v400 = vadd.f32 %v361, %v390
      %v401 = vadd.f32 %v362, %v390
      %v402 = vadd.f32 %v363, %v390
      %v403 = vadd.f32 %v364, %v390
      %v404 = vadd.f32 %v365, %v390
      %v405 = vadd.f32 %v366, %v390
      %v406 = vadd.f32 %v367, %v390
      %v407 = vadd.f32 %v368, %v390
      %v408 = vadd.f32 %v369, %v390
      %v409 = vadd.f32 %v370, %v390
      %v410 = vadd.f32 %v371, %v390
      %v411 = vadd.f32 %v372, %v390
      %v412 = vadd.f32 %v373, %v390
      %v413 = vadd.f32 %v374, %v390
      %v414 = vadd.f32 %v375, %v390
      %v415 = vadd.f32 %v376, %v390
      %v416 = vadd.f32 %v377, %v390
      %v417 = vadd.f32 %v378, %v390
      %v418 = vadd.f32 %v379, %v390
      %v419 = vadd.f32 %v380, %v390
      %v420 = vadd.f32 %v381, %v390
      %v421 = vadd.f32 %v382, %v390
      %v422 = vadd.f32 %v383, %v390
      %v423 = vadd.f32 %v384, %v390
      %v424 = vmax.f32 %v392, 0.0
      %v425 = vmax.f32 %v393, 0.0
      %v426 = vmax.f32 %v394, 0.0
      %v427 = vmax.f32 %v395, 0.0
      %v428 = vmax.f32 %v396, 0.0
      %v429 = vmax.f32 %v397, 0.0
      %v430 = vmax.f32 %v398, 0.0
      %v431 = vmax.f32 %v399, 0.0
      %v432 = vmax.f32 %v400, 0.0
      %v433 = vmax.f32 %v401, 0.0
      %v434 = vmax.f32 %v402, 0.0
      %v435 = vmax.f32 %v403, 0.0
      %v436 = vmax.f32 %v404, 0.0
      %v437 = vmax.f32 %v405, 0.0
      %v438 = vmax.f32 %v406, 0.0
      %v439 = vmax.f32 %v407, 0.0
      %v440 = vmax.f32 %v408, 0.0
      %v441 = vmax.f32 %v409, 0.0
      %v442 = vmax.f32 %v410, 0.0
      %v443 = vmax.f32 %v411, 0.0
      %v444 = vmax.f32 %v412, 0.0
      %v445 = vmax.f32 %v413, 0.0
      %v446 = vmax.f32 %v414, 0.0
      %v447 = vmax.f32 %v415, 0.0
      %v448 = vmax.f32 %v416, 0.0
      %v449 = vmax.f32 %v417, 0.0
      %v450 = vmax.f32 %v418, 0.0
      %v451 = vmax.f32 %v419, 0.0
      %v452 = vmax.f32 %v420, 0.0
      %v453 = vmax.f32 %v421, 0.0
      %v454 = vmax.f32 %v422, 0.0
      %v455 = vmax.f32 %v423, 0.0
      %vm456 = vcmask 27648
      %457 = vst.msk [vmem:[#allocation2] sm:$0xf] %vm456, 0
      %458 = vst.msk [vmem:[#allocation2 + $0x4] sm:$0xf] %vm456, 0
      %vm459 = vcmask 24576
      %460 = vst.msk [vmem:[#allocation2 + $0x8] sm:$0x1] %vm459, 0
      %s461 = scalar_lea.vmem [#allocation2], 204
      %462 = vst.msk [vmem:[%s461] sm:$0xf] %vm456, 0
      %463 = vst.msk [vmem:[%s461 + $0x4] sm:$0xf] %vm456, 0
      %464 = vst.msk [vmem:[%s461 + $0x8] sm:$0x1] %vm459, 0
      %vm465 = vcmask 24576
      %vm466 = vsmask.f32 256
      %vm467 = vmand %vm465, %vm466
      %v468 = vld [vmem:[#allocation2] sm:$0x1]
      %v469 = vsel %vm467, 0, %v468
      %470 = vst [vmem:[#allocation2] sm:$0x1] %v469
      %v471 = vld [vmem:[#allocation2 + $0xc] sm:$0x1]
      %v472 = vsel %vm467, 0, %v471
      %473 = vst [vmem:[#allocation2 + $0xc] sm:$0x1] %v472
      %v474 = vld [vmem:[#allocation2 + $0x18] sm:$0x1]
      %v475 = vsel %vm467, 0, %v474
      %476 = vst [vmem:[#allocation2 + $0x18] sm:$0x1] %v475
      %v477 = vld [vmem:[#allocation2 + $0x24] sm:$0x1]
      %v478 = vsel %vm467, 0, %v477
      %479 = vst [vmem:[#allocation2 + $0x24] sm:$0x1] %v478
      %v480 = vld [vmem:[#allocation2 + $0x30] sm:$0x1]
      %v481 = vsel %vm467, 0, %v480
      %482 = vst [vmem:[#allocation2 + $0x30] sm:$0x1] %v481
      %v483 = vld [vmem:[#allocation2 + $0x3c] sm:$0x1]
      %v484 = vsel %vm467, 0, %v483
      %485 = vst [vmem:[#allocation2 + $0x3c] sm:$0x1] %v484
      %v486 = vld [vmem:[#allocation2 + $0x48] sm:$0x1]
      %v487 = vsel %vm467, 0, %v486
      %488 = vst [vmem:[#allocation2 + $0x48] sm:$0x1] %v487
      %v489 = vld [vmem:[#allocation2 + $0x54] sm:$0x1]
      %v490 = vsel %vm467, 0, %v489
      %491 = vst [vmem:[#allocation2 + $0x54] sm:$0x1] %v490
      %v492 = vld [vmem:[#allocation2 + $0x60] sm:$0x1]
      %v493 = vsel %vm467, 0, %v492
      %494 = vst [vmem:[#allocation2 + $0x60] sm:$0x1] %v493
      %v495 = vld [vmem:[#allocation2 + $0x6c] sm:$0x1]
      %v496 = vsel %vm467, 0, %v495
      %497 = vst [vmem:[#allocation2 + $0x6c] sm:$0x1] %v496
      %v498 = vld [vmem:[#allocation2 + $0x78] sm:$0x1]
      %v499 = vsel %vm467, 0, %v498
      %500 = vst [vmem:[#allocation2 + $0x78] sm:$0x1] %v499
      %v501 = vld [vmem:[#allocation2 + $0x84] sm:$0x1]
      %v502 = vsel %vm467, 0, %v501
      %503 = vst [vmem:[#allocation2 + $0x84] sm:$0x1] %v502
      %v504 = vld [vmem:[#allocation2 + $0x90] sm:$0x1]
      %v505 = vsel %vm467, 0, %v504
      %506 = vst [vmem:[#allocation2 + $0x90] sm:$0x1] %v505
      %v507 = vld [vmem:[#allocation2 + $0x9c] sm:$0x1]
      %v508 = vsel %vm467, 0, %v507
      %509 = vst [vmem:[#allocation2 + $0x9c] sm:$0x1] %v508
      %v510 = vld [vmem:[#allocation2 + $0xa8] sm:$0x1]
      %v511 = vsel %vm467, 0, %v510
      %512 = vst [vmem:[#allocation2 + $0xa8] sm:$0x1] %v511
      %v513 = vld [vmem:[#allocation2 + $0xb4] sm:$0x1]
      %v514 = vsel %vm467, 0, %v513
      %515 = vst [vmem:[#allocation2 + $0xb4] sm:$0x1] %v514
      %v516 = vld [vmem:[#allocation2 + $0xc0] sm:$0x1]
      %v517 = vsel %vm467, 0, %v516
      %518 = vst [vmem:[#allocation2 + $0xc0] sm:$0x1] %v517
      %v519 = vld [vmem:[#allocation2 + $0xcc] sm:$0x1]
      %v520 = vsel %vm467, 0, %v519
      %521 = vst [vmem:[#allocation2 + $0xcc] sm:$0x1] %v520
      %vm522 = vsmask.f32 7938
      %vm523 = vmand %vm465, %vm522
      %v524 = vld [vmem:[#allocation2 + $0x8] sm:$0x1]
      %v525 = vsel %vm523, 0, %v524
      %526 = vst [vmem:[#allocation2 + $0x8] sm:$0x1] %v525
      %v527 = vld [vmem:[#allocation2 + $0x14] sm:$0x1]
      %v528 = vsel %vm523, 0, %v527
      %529 = vst [vmem:[#allocation2 + $0x14] sm:$0x1] %v528
      %v530 = vld [vmem:[#allocation2 + $0x20] sm:$0x1]
      %v531 = vsel %vm523, 0, %v530
      %532 = vst [vmem:[#allocation2 + $0x20] sm:$0x1] %v531
      %v533 = vld [vmem:[#allocation2 + $0x2c] sm:$0x1]
      %v534 = vsel %vm523, 0, %v533
      %535 = vst [vmem:[#allocation2 + $0x2c] sm:$0x1] %v534
      %v536 = vld [vmem:[#allocation2 + $0x38] sm:$0x1]
      %v537 = vsel %vm523, 0, %v536
      %538 = vst [vmem:[#allocation2 + $0x38] sm:$0x1] %v537
      %v539 = vld [vmem:[#allocation2 + $0x44] sm:$0x1]
      %v540 = vsel %vm523, 0, %v539
      %541 = vst [vmem:[#allocation2 + $0x44] sm:$0x1] %v540
      %v542 = vld [vmem:[#allocation2 + $0x50] sm:$0x1]
      %v543 = vsel %vm523, 0, %v542
      %544 = vst [vmem:[#allocation2 + $0x50] sm:$0x1] %v543
      %v545 = vld [vmem:[#allocation2 + $0x5c] sm:$0x1]
      %v546 = vsel %vm523, 0, %v545
      %547 = vst [vmem:[#allocation2 + $0x5c] sm:$0x1] %v546
      %v548 = vld [vmem:[#allocation2 + $0x68] sm:$0x1]
      %v549 = vsel %vm523, 0, %v548
      %550 = vst [vmem:[#allocation2 + $0x68] sm:$0x1] %v549
      %v551 = vld [vmem:[#allocation2 + $0x74] sm:$0x1]
      %v552 = vsel %vm523, 0, %v551
      %553 = vst [vmem:[#allocation2 + $0x74] sm:$0x1] %v552
      %v554 = vld [vmem:[#allocation2 + $0x80] sm:$0x1]
      %v555 = vsel %vm523, 0, %v554
      %556 = vst [vmem:[#allocation2 + $0x80] sm:$0x1] %v555
      %v557 = vld [vmem:[#allocation2 + $0x8c] sm:$0x1]
      %v558 = vsel %vm523, 0, %v557
      %559 = vst [vmem:[#allocation2 + $0x8c] sm:$0x1] %v558
      %v560 = vld [vmem:[#allocation2 + $0x98] sm:$0x1]
      %v561 = vsel %vm523, 0, %v560
      %562 = vst [vmem:[#allocation2 + $0x98] sm:$0x1] %v561
      %v563 = vld [vmem:[#allocation2 + $0xa4] sm:$0x1]
      %v564 = vsel %vm523, 0, %v563
      %565 = vst [vmem:[#allocation2 + $0xa4] sm:$0x1] %v564
      %v566 = vld [vmem:[#allocation2 + $0xb0] sm:$0x1]
      %v567 = vsel %vm523, 0, %v566
      %568 = vst [vmem:[#allocation2 + $0xb0] sm:$0x1] %v567
      %v569 = vld [vmem:[#allocation2 + $0xbc] sm:$0x1]
      %v570 = vsel %vm523, 0, %v569
      %571 = vst [vmem:[#allocation2 + $0xbc] sm:$0x1] %v570
      %v572 = vld [vmem:[#allocation2 + $0xc8] sm:$0x1]
      %v573 = vsel %vm523, 0, %v572
      %574 = vst [vmem:[#allocation2 + $0xc8] sm:$0x1] %v573
      %v575 = vld [vmem:[#allocation2 + $0xd4] sm:$0x1]
      %v576 = vsel %vm523, 0, %v575
      %577 = vst [vmem:[#allocation2 + $0xd4] sm:$0x1] %v576
      %v578 = vpack.c.bf16 %v425, %v424
      %v579 = vpack.c.bf16 %v427, %v426
      %v580 = vpack.c.bf16 %v429, %v428
      %v581 = vpack.c.bf16 %v431, %v430
      %v582 = vpack.c.bf16 %v433, %v432
      %v583 = vpack.c.bf16 %v435, %v434
      %v584 = vpack.c.bf16 %v437, %v436
      %v585 = vpack.c.bf16 %v439, %v438
      %v586 = vpack.c.bf16 %v441, %v440
      %v587 = vpack.c.bf16 %v443, %v442
      %v588 = vpack.c.bf16 %v445, %v444
      %v589 = vpack.c.bf16 %v447, %v446
      %v590 = vpack.c.bf16 %v449, %v448
      %v591 = vpack.c.bf16 %v451, %v450
      %v592 = vpack.c.bf16 %v453, %v452
      %v593 = vpack.c.bf16 %v455, %v454
      %v610 = vunpack.c.l.b16 %v578
      %v611 = vunpack.c.h.b16 %v578
      %v612 = vunpack.c.l.b16 %v579
      %v613 = vunpack.c.h.b16 %v579
      %v614 = vunpack.c.l.b16 %v580
      %v615 = vunpack.c.h.b16 %v580
      %v616 = vunpack.c.l.b16 %v581
      %v617 = vunpack.c.h.b16 %v581
      %v618 = vunpack.c.l.b16 %v582
      %v619 = vunpack.c.h.b16 %v582
      %v620 = vunpack.c.l.b16 %v583
      %v621 = vunpack.c.h.b16 %v583
      %v622 = vunpack.c.l.b16 %v584
      %v623 = vunpack.c.h.b16 %v584
      %v624 = vunpack.c.l.b16 %v585
      %v625 = vunpack.c.h.b16 %v585
      %v626 = vunpack.c.l.b16 %v586
      %v627 = vunpack.c.h.b16 %v586
      %v628 = vunpack.c.l.b16 %v587
      %v629 = vunpack.c.h.b16 %v587
      %v630 = vunpack.c.l.b16 %v588
      %v631 = vunpack.c.h.b16 %v588
      %v632 = vunpack.c.l.b16 %v589
      %v633 = vunpack.c.h.b16 %v589
      %v634 = vunpack.c.l.b16 %v590
      %v635 = vunpack.c.h.b16 %v590
      %v636 = vunpack.c.l.b16 %v591
      %v637 = vunpack.c.h.b16 %v591
      %v638 = vunpack.c.l.b16 %v592
      %v639 = vunpack.c.h.b16 %v592
      %v640 = vunpack.c.l.b16 %v593
      %v641 = vunpack.c.h.b16 %v593
      %v642 = vpack.c.b16 %v610, %v610
      %v643 = vpack.c.b16 %v611, %v611
      %v644 = vpack.c.b16 %v612, %v612
      %v645 = vpack.c.b16 %v613, %v613
      %v646 = vpack.c.b16 %v614, %v614
      %v647 = vpack.c.b16 %v615, %v615
      %v648 = vpack.c.b16 %v616, %v616
      %v649 = vpack.c.b16 %v617, %v617
      %v650 = vpack.c.b16 %v618, %v618
      %v651 = vpack.c.b16 %v619, %v619
      %v652 = vpack.c.b16 %v620, %v620
      %v653 = vpack.c.b16 %v621, %v621
      %v654 = vpack.c.b16 %v622, %v622
      %v655 = vpack.c.b16 %v623, %v623
      %v656 = vpack.c.b16 %v624, %v624
      %v657 = vpack.c.b16 %v625, %v625
      %v658 = vpack.c.b16 %v626, %v626
      %v659 = vpack.c.b16 %v627, %v627
      %v660 = vpack.c.b16 %v628, %v628
      %v661 = vpack.c.b16 %v629, %v629
      %v662 = vpack.c.b16 %v630, %v630
      %v663 = vpack.c.b16 %v631, %v631
      %v664 = vpack.c.b16 %v632, %v632
      %v665 = vpack.c.b16 %v633, %v633
      %v666 = vpack.c.b16 %v634, %v634
      %v667 = vpack.c.b16 %v635, %v635
      %v668 = vpack.c.b16 %v636, %v636
      %v669 = vpack.c.b16 %v637, %v637
      %v670 = vpack.c.b16 %v638, %v638
      %v671 = vpack.c.b16 %v639, %v639
      %v672 = vpack.c.b16 %v640, %v640
      %v673 = vpack.c.b16 %v641, %v641
      %vm674 = vsmask.f32 4368
      %vm675 = vmor %vm466, %vm674
      %v677 = vshrl.u32 %v642, 16
      %v679 = vrot.slane %v677, 7
      %v680 = vshll.u32 %v642, 16
      %v682 = vor.u32 %v679, %v680
      %v683 = vrot.slane %v679, 4
      %v685 = vshrl.u32 %v643, 16
      %v687 = vrot.slane %v685, 7
      %v688 = vshll.u32 %v643, 16
      %v690 = vor.u32 %v687, %v688
      %v691 = vsel %vm675, %v683, %v690
      %v692 = vrot.slane %v687, 4
      %v694 = vshrl.u32 %v644, 16
      %v696 = vrot.slane %v694, 7
      %v697 = vshll.u32 %v644, 16
      %v699 = vor.u32 %v696, %v697
      %v700 = vrot.slane %v696, 4
      %v702 = vshrl.u32 %v645, 16
      %v704 = vrot.slane %v702, 7
      %v705 = vshll.u32 %v645, 16
      %v707 = vor.u32 %v704, %v705
      %v708 = vsel %vm675, %v700, %v707
      %v709 = vrot.slane %v704, 4
      %v711 = vshrl.u32 %v646, 16
      %v713 = vrot.slane %v711, 7
      %v714 = vshll.u32 %v646, 16
      %v716 = vor.u32 %v713, %v714
      %v717 = vrot.slane %v713, 4
      %v719 = vshrl.u32 %v647, 16
      %v721 = vrot.slane %v719, 7
      %v722 = vshll.u32 %v647, 16
      %v724 = vor.u32 %v721, %v722
      %v725 = vsel %vm675, %v717, %v724
      %v726 = vrot.slane %v721, 4
      %v728 = vshrl.u32 %v648, 16
      %v730 = vrot.slane %v728, 7
      %v731 = vshll.u32 %v648, 16
      %v733 = vor.u32 %v730, %v731
      %v734 = vrot.slane %v730, 4
      %v736 = vshrl.u32 %v649, 16
      %v738 = vrot.slane %v736, 7
      %v739 = vshll.u32 %v649, 16
      %v741 = vor.u32 %v738, %v739
      %v742 = vsel %vm675, %v734, %v741
      %v743 = vrot.slane %v738, 4
      %v745 = vshrl.u32 %v650, 16
      %v747 = vrot.slane %v745, 7
      %v748 = vshll.u32 %v650, 16
      %v750 = vor.u32 %v747, %v748
      %v751 = vrot.slane %v747, 4
      %v753 = vshrl.u32 %v651, 16
      %v755 = vrot.slane %v753, 7
      %v756 = vshll.u32 %v651, 16
      %v758 = vor.u32 %v755, %v756
      %v759 = vsel %vm675, %v751, %v758
      %v760 = vrot.slane %v755, 4
      %v762 = vshrl.u32 %v652, 16
      %v764 = vrot.slane %v762, 7
      %v765 = vshll.u32 %v652, 16
      %v767 = vor.u32 %v764, %v765
      %v768 = vrot.slane %v764, 4
      %v770 = vshrl.u32 %v653, 16
      %v772 = vrot.slane %v770, 7
      %v773 = vshll.u32 %v653, 16
      %v775 = vor.u32 %v772, %v773
      %v776 = vsel %vm675, %v768, %v775
      %v777 = vrot.slane %v772, 4
      %v779 = vshrl.u32 %v654, 16
      %v781 = vrot.slane %v779, 7
      %v782 = vshll.u32 %v654, 16
      %v784 = vor.u32 %v781, %v782
      %v785 = vrot.slane %v781, 4
      %v787 = vshrl.u32 %v655, 16
      %v789 = vrot.slane %v787, 7
      %v790 = vshll.u32 %v655, 16
      %v792 = vor.u32 %v789, %v790
      %v793 = vsel %vm675, %v785, %v792
      %v794 = vrot.slane %v789, 4
      %v796 = vshrl.u32 %v656, 16
      %v798 = vrot.slane %v796, 7
      %v799 = vshll.u32 %v656, 16
      %v801 = vor.u32 %v798, %v799
      %v802 = vrot.slane %v798, 4
      %v804 = vshrl.u32 %v657, 16
      %v806 = vrot.slane %v804, 7
      %v807 = vshll.u32 %v657, 16
      %v809 = vor.u32 %v806, %v807
      %v810 = vsel %vm675, %v802, %v809
      %v811 = vrot.slane %v806, 4
      %v813 = vshrl.u32 %v658, 16
      %v815 = vrot.slane %v813, 7
      %v816 = vshll.u32 %v658, 16
      %v818 = vor.u32 %v815, %v816
      %v819 = vrot.slane %v815, 4
      %v821 = vshrl.u32 %v659, 16
      %v823 = vrot.slane %v821, 7
      %v824 = vshll.u32 %v659, 16
      %v826 = vor.u32 %v823, %v824
      %v827 = vsel %vm675, %v819, %v826
      %v828 = vrot.slane %v823, 4
      %v830 = vshrl.u32 %v660, 16
      %v832 = vrot.slane %v830, 7
      %v833 = vshll.u32 %v660, 16
      %v835 = vor.u32 %v832, %v833
      %v836 = vrot.slane %v832, 4
      %v838 = vshrl.u32 %v661, 16
      %v840 = vrot.slane %v838, 7
      %v841 = vshll.u32 %v661, 16
      %v843 = vor.u32 %v840, %v841
      %v844 = vsel %vm675, %v836, %v843
      %v845 = vrot.slane %v840, 4
      %v847 = vshrl.u32 %v662, 16
      %v849 = vrot.slane %v847, 7
      %v850 = vshll.u32 %v662, 16
      %v852 = vor.u32 %v849, %v850
      %v853 = vrot.slane %v849, 4
      %v855 = vshrl.u32 %v663, 16
      %v857 = vrot.slane %v855, 7
      %v858 = vshll.u32 %v663, 16
      %v860 = vor.u32 %v857, %v858
      %v861 = vsel %vm675, %v853, %v860
      %v862 = vrot.slane %v857, 4
      %v864 = vshrl.u32 %v664, 16
      %v866 = vrot.slane %v864, 7
      %v867 = vshll.u32 %v664, 16
      %v869 = vor.u32 %v866, %v867
      %v870 = vrot.slane %v866, 4
      %v872 = vshrl.u32 %v665, 16
      %v874 = vrot.slane %v872, 7
      %v875 = vshll.u32 %v665, 16
      %v877 = vor.u32 %v874, %v875
      %v878 = vsel %vm675, %v870, %v877
      %v879 = vrot.slane %v874, 4
      %v881 = vshrl.u32 %v666, 16
      %v883 = vrot.slane %v881, 7
      %v884 = vshll.u32 %v666, 16
      %v886 = vor.u32 %v883, %v884
      %v887 = vrot.slane %v883, 4
      %v889 = vshrl.u32 %v667, 16
      %v891 = vrot.slane %v889, 7
      %v892 = vshll.u32 %v667, 16
      %v894 = vor.u32 %v891, %v892
      %v895 = vsel %vm675, %v887, %v894
      %v896 = vrot.slane %v891, 4
      %v898 = vshrl.u32 %v668, 16
      %v900 = vrot.slane %v898, 7
      %v901 = vshll.u32 %v668, 16
      %v903 = vor.u32 %v900, %v901
      %v904 = vrot.slane %v900, 4
      %v906 = vshrl.u32 %v669, 16
      %v908 = vrot.slane %v906, 7
      %v909 = vshll.u32 %v669, 16
      %v911 = vor.u32 %v908, %v909
      %v912 = vsel %vm675, %v904, %v911
      %v913 = vrot.slane %v908, 4
      %v915 = vshrl.u32 %v670, 16
      %v917 = vrot.slane %v915, 7
      %v918 = vshll.u32 %v670, 16
      %v920 = vor.u32 %v917, %v918
      %v921 = vrot.slane %v917, 4
      %v923 = vshrl.u32 %v671, 16
      %v925 = vrot.slane %v923, 7
      %v926 = vshll.u32 %v671, 16
      %v928 = vor.u32 %v925, %v926
      %v929 = vsel %vm675, %v921, %v928
      %v930 = vrot.slane %v925, 4
      %v932 = vshrl.u32 %v672, 16
      %v934 = vrot.slane %v932, 7
      %v935 = vshll.u32 %v672, 16
      %v937 = vor.u32 %v934, %v935
      %v938 = vrot.slane %v934, 4
      %v940 = vshrl.u32 %v673, 16
      %v942 = vrot.slane %v940, 7
      %v943 = vshll.u32 %v673, 16
      %v945 = vor.u32 %v942, %v943
      %v946 = vsel %vm675, %v938, %v945
      %v947 = vrot.slane %v942, 4
      %s996 = scalar_lea.vmem [#allocation2], 12
      %vm997 = vcmask 27648
      %vm998 = vmand %vm997, %vm522
      %v999 = vld [vmem:[%s996] sm:$0xf]
      %v1000 = vsel %vm998, %v682, %v999
      %1001 = vst [vmem:[%s996] sm:$0xf] %v1000
      %1002 = vst.msk [vmem:[%s996 + $0x4] sm:$0xf] %vm456, %v691
      %v1003 = vld [vmem:[%s996 + $0x8] sm:$0x1]
      %v1004 = vsel %vm467, %v692, %v1003
      %1005 = vst [vmem:[%s996 + $0x8] sm:$0x1] %v1004
      %v1006 = vld [vmem:[%s996 + $0xc] sm:$0xf]
      %v1007 = vsel %vm998, %v699, %v1006
      %1008 = vst [vmem:[%s996 + $0xc] sm:$0xf] %v1007
      %1009 = vst.msk [vmem:[%s996 + $0x10] sm:$0xf] %vm456, %v708
      %v1010 = vld [vmem:[%s996 + $0x14] sm:$0x1]
      %v1011 = vsel %vm467, %v709, %v1010
      %1012 = vst [vmem:[%s996 + $0x14] sm:$0x1] %v1011
      %v1013 = vld [vmem:[%s996 + $0x18] sm:$0xf]
      %v1014 = vsel %vm998, %v716, %v1013
      %1015 = vst [vmem:[%s996 + $0x18] sm:$0xf] %v1014
      %1016 = vst.msk [vmem:[%s996 + $0x1c] sm:$0xf] %vm456, %v725
      %v1017 = vld [vmem:[%s996 + $0x20] sm:$0x1]
      %v1018 = vsel %vm467, %v726, %v1017
      %1019 = vst [vmem:[%s996 + $0x20] sm:$0x1] %v1018
      %v1020 = vld [vmem:[%s996 + $0x24] sm:$0xf]
      %v1021 = vsel %vm998, %v733, %v1020
      %1022 = vst [vmem:[%s996 + $0x24] sm:$0xf] %v1021
      %1023 = vst.msk [vmem:[%s996 + $0x28] sm:$0xf] %vm456, %v742
      %v1024 = vld [vmem:[%s996 + $0x2c] sm:$0x1]
      %v1025 = vsel %vm467, %v743, %v1024
      %1026 = vst [vmem:[%s996 + $0x2c] sm:$0x1] %v1025
      %v1027 = vld [vmem:[%s996 + $0x30] sm:$0xf]
      %v1028 = vsel %vm998, %v750, %v1027
      %1029 = vst [vmem:[%s996 + $0x30] sm:$0xf] %v1028
      %1030 = vst.msk [vmem:[%s996 + $0x34] sm:$0xf] %vm456, %v759
      %v1031 = vld [vmem:[%s996 + $0x38] sm:$0x1]
      %v1032 = vsel %vm467, %v760, %v1031
      %1033 = vst [vmem:[%s996 + $0x38] sm:$0x1] %v1032
      %v1034 = vld [vmem:[%s996 + $0x3c] sm:$0xf]
      %v1035 = vsel %vm998, %v767, %v1034
      %1036 = vst [vmem:[%s996 + $0x3c] sm:$0xf] %v1035
      %1037 = vst.msk [vmem:[%s996 + $0x40] sm:$0xf] %vm456, %v776
      %v1038 = vld [vmem:[%s996 + $0x44] sm:$0x1]
      %v1039 = vsel %vm467, %v777, %v1038
      %1040 = vst [vmem:[%s996 + $0x44] sm:$0x1] %v1039
      %v1041 = vld [vmem:[%s996 + $0x48] sm:$0xf]
      %v1042 = vsel %vm998, %v784, %v1041
      %1043 = vst [vmem:[%s996 + $0x48] sm:$0xf] %v1042
      %1044 = vst.msk [vmem:[%s996 + $0x4c] sm:$0xf] %vm456, %v793
      %v1045 = vld [vmem:[%s996 + $0x50] sm:$0x1]
      %v1046 = vsel %vm467, %v794, %v1045
      %1047 = vst [vmem:[%s996 + $0x50] sm:$0x1] %v1046
      %v1048 = vld [vmem:[%s996 + $0x54] sm:$0xf]
      %v1049 = vsel %vm998, %v801, %v1048
      %1050 = vst [vmem:[%s996 + $0x54] sm:$0xf] %v1049
      %1051 = vst.msk [vmem:[%s996 + $0x58] sm:$0xf] %vm456, %v810
      %v1052 = vld [vmem:[%s996 + $0x5c] sm:$0x1]
      %v1053 = vsel %vm467, %v811, %v1052
      %1054 = vst [vmem:[%s996 + $0x5c] sm:$0x1] %v1053
      %v1055 = vld [vmem:[%s996 + $0x60] sm:$0xf]
      %v1056 = vsel %vm998, %v818, %v1055
      %1057 = vst [vmem:[%s996 + $0x60] sm:$0xf] %v1056
      %1058 = vst.msk [vmem:[%s996 + $0x64] sm:$0xf] %vm456, %v827
      %v1059 = vld [vmem:[%s996 + $0x68] sm:$0x1]
      %v1060 = vsel %vm467, %v828, %v1059
      %1061 = vst [vmem:[%s996 + $0x68] sm:$0x1] %v1060
      %v1062 = vld [vmem:[%s996 + $0x6c] sm:$0xf]
      %v1063 = vsel %vm998, %v835, %v1062
      %1064 = vst [vmem:[%s996 + $0x6c] sm:$0xf] %v1063
      %1065 = vst.msk [vmem:[%s996 + $0x70] sm:$0xf] %vm456, %v844
      %v1066 = vld [vmem:[%s996 + $0x74] sm:$0x1]
      %v1067 = vsel %vm467, %v845, %v1066
      %1068 = vst [vmem:[%s996 + $0x74] sm:$0x1] %v1067
      %v1069 = vld [vmem:[%s996 + $0x78] sm:$0xf]
      %v1070 = vsel %vm998, %v852, %v1069
      %1071 = vst [vmem:[%s996 + $0x78] sm:$0xf] %v1070
      %1072 = vst.msk [vmem:[%s996 + $0x7c] sm:$0xf] %vm456, %v861
      %v1073 = vld [vmem:[%s996 + $0x80] sm:$0x1]
      %v1074 = vsel %vm467, %v862, %v1073
      %1075 = vst [vmem:[%s996 + $0x80] sm:$0x1] %v1074
      %v1076 = vld [vmem:[%s996 + $0x84] sm:$0xf]
      %v1077 = vsel %vm998, %v869, %v1076
      %1078 = vst [vmem:[%s996 + $0x84] sm:$0xf] %v1077
      %1079 = vst.msk [vmem:[%s996 + $0x88] sm:$0xf] %vm456, %v878
      %v1080 = vld [vmem:[%s996 + $0x8c] sm:$0x1]
      %v1081 = vsel %vm467, %v879, %v1080
      %1082 = vst [vmem:[%s996 + $0x8c] sm:$0x1] %v1081
      %v1083 = vld [vmem:[%s996 + $0x90] sm:$0xf]
      %v1084 = vsel %vm998, %v886, %v1083
      %1085 = vst [vmem:[%s996 + $0x90] sm:$0xf] %v1084
      %1086 = vst.msk [vmem:[%s996 + $0x94] sm:$0xf] %vm456, %v895
      %v1087 = vld [vmem:[%s996 + $0x98] sm:$0x1]
      %v1088 = vsel %vm467, %v896, %v1087
      %1089 = vst [vmem:[%s996 + $0x98] sm:$0x1] %v1088
      %v1090 = vld [vmem:[%s996 + $0x9c] sm:$0xf]
      %v1091 = vsel %vm998, %v903, %v1090
      %1092 = vst [vmem:[%s996 + $0x9c] sm:$0xf] %v1091
      %1093 = vst.msk [vmem:[%s996 + $0xa0] sm:$0xf] %vm456, %v912
      %v1094 = vld [vmem:[%s996 + $0xa4] sm:$0x1]
      %v1095 = vsel %vm467, %v913, %v1094
      %1096 = vst [vmem:[%s996 + $0xa4] sm:$0x1] %v1095
      %v1097 = vld [vmem:[%s996 + $0xa8] sm:$0xf]
      %v1098 = vsel %vm998, %v920, %v1097
      %1099 = vst [vmem:[%s996 + $0xa8] sm:$0xf] %v1098
      %1100 = vst.msk [vmem:[%s996 + $0xac] sm:$0xf] %vm456, %v929
      %v1101 = vld [vmem:[%s996 + $0xb0] sm:$0x1]
      %v1102 = vsel %vm467, %v930, %v1101
      %1103 = vst [vmem:[%s996 + $0xb0] sm:$0x1] %v1102
      %v1104 = vld [vmem:[%s996 + $0xb4] sm:$0xf]
      %v1105 = vsel %vm998, %v937, %v1104
      %1106 = vst [vmem:[%s996 + $0xb4] sm:$0xf] %v1105
      %1107 = vst.msk [vmem:[%s996 + $0xb8] sm:$0xf] %vm456, %v946
      %v1108 = vld [vmem:[%s996 + $0xbc] sm:$0x1]
      %v1109 = vsel %vm467, %v947, %v1108
      %1110 = vst [vmem:[%s996 + $0xbc] sm:$0x1] %v1109
      %v1111 = vld [vmem:[#allocation2] sm:$0xf]
      %v1112 = vld [vmem:[#allocation2 + $0x4] sm:$0xf]
      %v1113 = vld [vmem:[#allocation2 + $0xc] sm:$0xf]
      %v1114 = vld [vmem:[#allocation2 + $0x10] sm:$0xf]
      %v1115 = vld [vmem:[#allocation2 + $0x18] sm:$0xf]
      %v1116 = vld [vmem:[#allocation2 + $0x1c] sm:$0xf]
      %v1117 = vld [vmem:[#allocation2 + $0x24] sm:$0xf]
      %v1118 = vld [vmem:[#allocation2 + $0x28] sm:$0xf]
      %v1119 = vld [vmem:[#allocation2 + $0x30] sm:$0xf]
      %v1120 = vld [vmem:[#allocation2 + $0x34] sm:$0xf]
      %v1121 = vld [vmem:[#allocation2 + $0x3c] sm:$0xf]
      %v1122 = vld [vmem:[#allocation2 + $0x40] sm:$0xf]
      %v1123 = vld [vmem:[#allocation2 + $0x48] sm:$0xf]
      %v1124 = vld [vmem:[#allocation2 + $0x4c] sm:$0xf]
      %v1125 = vld [vmem:[#allocation2 + $0x54] sm:$0xf]
      %v1126 = vld [vmem:[#allocation2 + $0x58] sm:$0xf]
      %v1127 = vld [vmem:[#allocation2 + $0x60] sm:$0xf]
      %v1128 = vld [vmem:[#allocation2 + $0x64] sm:$0xf]
      %v1129 = vld [vmem:[#allocation2 + $0x6c] sm:$0xf]
      %v1130 = vld [vmem:[#allocation2 + $0x70] sm:$0xf]
      %v1131 = vld [vmem:[#allocation2 + $0x78] sm:$0xf]
      %v1132 = vld [vmem:[#allocation2 + $0x7c] sm:$0xf]
      %v1133 = vld [vmem:[#allocation2 + $0x84] sm:$0xf]
      %v1134 = vld [vmem:[#allocation2 + $0x88] sm:$0xf]
      %v1135 = vld [vmem:[#allocation2 + $0x90] sm:$0xf]
      %v1136 = vld [vmem:[#allocation2 + $0x94] sm:$0xf]
      %v1137 = vld [vmem:[#allocation2 + $0x9c] sm:$0xf]
      %v1138 = vld [vmem:[#allocation2 + $0xa0] sm:$0xf]
      %v1139 = vld [vmem:[#allocation2 + $0xa8] sm:$0xf]
      %v1140 = vld [vmem:[#allocation2 + $0xac] sm:$0xf]
      %v1141 = vld [vmem:[#allocation2 + $0xb4] sm:$0xf]
      %v1142 = vld [vmem:[#allocation2 + $0xb8] sm:$0xf]
      %1143 = vst.msk [vmem:[#allocation3] sm:$0xf] %vm456, %v1111
      %1144 = vst.msk [vmem:[#allocation3 + $0x4] sm:$0xf] %vm456, %v1112
      %1145 = vst.msk [vmem:[#allocation3 + $0x8] sm:$0xf] %vm456, %v1113
      %1146 = vst.msk [vmem:[#allocation3 + $0xc] sm:$0xf] %vm456, %v1114
      %1147 = vst.msk [vmem:[#allocation3 + $0x10] sm:$0xf] %vm456, %v1115
      %1148 = vst.msk [vmem:[#allocation3 + $0x14] sm:$0xf] %vm456, %v1116
      %1149 = vst.msk [vmem:[#allocation3 + $0x18] sm:$0xf] %vm456, %v1117
      %1150 = vst.msk [vmem:[#allocation3 + $0x1c] sm:$0xf] %vm456, %v1118
      %1151 = vst.msk [vmem:[#allocation3 + $0x20] sm:$0xf] %vm456, %v1119
      %1152 = vst.msk [vmem:[#allocation3 + $0x24] sm:$0xf] %vm456, %v1120
      %1153 = vst.msk [vmem:[#allocation3 + $0x28] sm:$0xf] %vm456, %v1121
      %1154 = vst.msk [vmem:[#allocation3 + $0x2c] sm:$0xf] %vm456, %v1122
      %1155 = vst.msk [vmem:[#allocation3 + $0x30] sm:$0xf] %vm456, %v1123
      %1156 = vst.msk [vmem:[#allocation3 + $0x34] sm:$0xf] %vm456, %v1124
      %1157 = vst.msk [vmem:[#allocation3 + $0x38] sm:$0xf] %vm456, %v1125
      %1158 = vst.msk [vmem:[#allocation3 + $0x3c] sm:$0xf] %vm456, %v1126
      %1159 = vst.msk [vmem:[#allocation3 + $0x40] sm:$0xf] %vm456, %v1127
      %1160 = vst.msk [vmem:[#allocation3 + $0x44] sm:$0xf] %vm456, %v1128
      %1161 = vst.msk [vmem:[#allocation3 + $0x48] sm:$0xf] %vm456, %v1129
      %1162 = vst.msk [vmem:[#allocation3 + $0x4c] sm:$0xf] %vm456, %v1130
      %1163 = vst.msk [vmem:[#allocation3 + $0x50] sm:$0xf] %vm456, %v1131
      %1164 = vst.msk [vmem:[#allocation3 + $0x54] sm:$0xf] %vm456, %v1132
      %1165 = vst.msk [vmem:[#allocation3 + $0x58] sm:$0xf] %vm456, %v1133
      %1166 = vst.msk [vmem:[#allocation3 + $0x5c] sm:$0xf] %vm456, %v1134
      %1167 = vst.msk [vmem:[#allocation3 + $0x60] sm:$0xf] %vm456, %v1135
      %1168 = vst.msk [vmem:[#allocation3 + $0x64] sm:$0xf] %vm456, %v1136
      %1169 = vst.msk [vmem:[#allocation3 + $0x68] sm:$0xf] %vm456, %v1137
      %1170 = vst.msk [vmem:[#allocation3 + $0x6c] sm:$0xf] %vm456, %v1138
      %1171 = vst.msk [vmem:[#allocation3 + $0x70] sm:$0xf] %vm456, %v1139
      %1172 = vst.msk [vmem:[#allocation3 + $0x74] sm:$0xf] %vm456, %v1140
      %1173 = vst.msk [vmem:[#allocation3 + $0x78] sm:$0xf] %vm456, %v1141
      %1174 = vst.msk [vmem:[#allocation3 + $0x7c] sm:$0xf] %vm456, %v1142
      %v1175 = vld [vmem:[#allocation2] sm:$0xf]
      %v1176 = vld [vmem:[#allocation2 + $0x4] sm:$0xf]
      %v1177 = vld [vmem:[#allocation2 + $0x8] sm:$0x1]
      %v1178 = vld [vmem:[#allocation2 + $0xc] sm:$0xf]
      %v1179 = vld [vmem:[#allocation2 + $0x10] sm:$0xf]
      %v1180 = vld [vmem:[#allocation2 + $0x14] sm:$0x1]
      %v1181 = vld [vmem:[#allocation2 + $0x18] sm:$0xf]
      %v1182 = vld [vmem:[#allocation2 + $0x1c] sm:$0xf]
      %v1183 = vld [vmem:[#allocation2 + $0x20] sm:$0x1]
      %v1184 = vld [vmem:[#allocation2 + $0x24] sm:$0xf]
      %v1185 = vld [vmem:[#allocation2 + $0x28] sm:$0xf]
      %v1186 = vld [vmem:[#allocation2 + $0x2c] sm:$0x1]
      %v1187 = vld [vmem:[#allocation2 + $0x30] sm:$0xf]
      %v1188 = vld [vmem:[#allocation2 + $0x34] sm:$0xf]
      %v1189 = vld [vmem:[#allocation2 + $0x38] sm:$0x1]
      %v1190 = vld [vmem:[#allocation2 + $0x3c] sm:$0xf]
      %v1191 = vld [vmem:[#allocation2 + $0x40] sm:$0xf]
      %v1192 = vld [vmem:[#allocation2 + $0x44] sm:$0x1]
      %v1193 = vld [vmem:[#allocation2 + $0x48] sm:$0xf]
      %v1194 = vld [vmem:[#allocation2 + $0x4c] sm:$0xf]
      %v1195 = vld [vmem:[#allocation2 + $0x50] sm:$0x1]
      %v1196 = vld [vmem:[#allocation2 + $0x54] sm:$0xf]
      %v1197 = vld [vmem:[#allocation2 + $0x58] sm:$0xf]
      %v1198 = vld [vmem:[#allocation2 + $0x5c] sm:$0x1]
      %v1199 = vld [vmem:[#allocation2 + $0x60] sm:$0xf]
      %v1200 = vld [vmem:[#allocation2 + $0x64] sm:$0xf]
      %v1201 = vld [vmem:[#allocation2 + $0x68] sm:$0x1]
      %v1202 = vld [vmem:[#allocation2 + $0x6c] sm:$0xf]
      %v1203 = vld [vmem:[#allocation2 + $0x70] sm:$0xf]
      %v1204 = vld [vmem:[#allocation2 + $0x74] sm:$0x1]
      %v1205 = vld [vmem:[#allocation2 + $0x78] sm:$0xf]
      %v1206 = vld [vmem:[#allocation2 + $0x7c] sm:$0xf]
      %v1207 = vld [vmem:[#allocation2 + $0x80] sm:$0x1]
      %v1208 = vld [vmem:[#allocation2 + $0x84] sm:$0xf]
      %v1209 = vld [vmem:[#allocation2 + $0x88] sm:$0xf]
      %v1210 = vld [vmem:[#allocation2 + $0x8c] sm:$0x1]
      %v1211 = vld [vmem:[#allocation2 + $0x90] sm:$0xf]
      %v1212 = vld [vmem:[#allocation2 + $0x94] sm:$0xf]
      %v1213 = vld [vmem:[#allocation2 + $0x98] sm:$0x1]
      %v1214 = vld [vmem:[#allocation2 + $0x9c] sm:$0xf]
      %v1215 = vld [vmem:[#allocation2 + $0xa0] sm:$0xf]
      %v1216 = vld [vmem:[#allocation2 + $0xa4] sm:$0x1]
      %v1217 = vld [vmem:[#allocation2 + $0xa8] sm:$0xf]
      %v1218 = vld [vmem:[#allocation2 + $0xac] sm:$0xf]
      %v1219 = vld [vmem:[#allocation2 + $0xb0] sm:$0x1]
      %v1220 = vld [vmem:[#allocation2 + $0xb4] sm:$0xf]
      %v1221 = vld [vmem:[#allocation2 + $0xb8] sm:$0xf]
      %v1222 = vld [vmem:[#allocation2 + $0xbc] sm:$0x1]
      %vm1223 = vsmask.f32 3328
      %vm1224 = vsmask.f32 7440
      %vm1225 = vmor %vm1223, %vm1224
      %v1227 = vshrl.u32 %v1175, 16
      %v1229 = vrot.slane %v1227, 4
      %v1230 = vshll.u32 %v1175, 16
      %v1232 = vrot.slane %v1230, 5
      %v1233 = vor.u32 %v1229, %v1232
      %v1234 = vrot.slane %v1233, 4
      %v1236 = vshll.u32 %v1176, 16
      %v1238 = vrot.slane %v1236, 5
      %v1239 = vsel %vm1225, %v1234, %v1238
      %v1240 = vshrl.u32 %v1176, 16
      %v1242 = vrot.slane %v1240, 4
      %v1243 = vor.u32 %v1242, %v1238
      %v1244 = vrot.slane %v1243, 4
      %v1246 = vshll.u32 %v1177, 16
      %v1248 = vrot.slane %v1246, 5
      %v1249 = vsel %vm1225, %v1244, %v1248
      %v1251 = vshrl.u32 %v1178, 16
      %v1253 = vrot.slane %v1251, 4
      %v1254 = vshll.u32 %v1178, 16
      %v1256 = vrot.slane %v1254, 5
      %v1257 = vor.u32 %v1253, %v1256
      %v1258 = vrot.slane %v1257, 4
      %v1260 = vshll.u32 %v1179, 16
      %v1262 = vrot.slane %v1260, 5
      %v1263 = vsel %vm1225, %v1258, %v1262
      %v1264 = vshrl.u32 %v1179, 16
      %v1266 = vrot.slane %v1264, 4
      %v1267 = vor.u32 %v1266, %v1262
      %v1268 = vrot.slane %v1267, 4
      %v1270 = vshll.u32 %v1180, 16
      %v1272 = vrot.slane %v1270, 5
      %v1273 = vsel %vm1225, %v1268, %v1272
      %v1275 = vshrl.u32 %v1181, 16
      %v1277 = vrot.slane %v1275, 4
      %v1278 = vshll.u32 %v1181, 16
      %v1280 = vrot.slane %v1278, 5
      %v1281 = vor.u32 %v1277, %v1280
      %v1282 = vrot.slane %v1281, 4
      %v1284 = vshll.u32 %v1182, 16
      %v1286 = vrot.slane %v1284, 5
      %v1287 = vsel %vm1225, %v1282, %v1286
      %v1288 = vshrl.u32 %v1182, 16
      %v1290 = vrot.slane %v1288, 4
      %v1291 = vor.u32 %v1290, %v1286
      %v1292 = vrot.slane %v1291, 4
      %v1294 = vshll.u32 %v1183, 16
      %v1296 = vrot.slane %v1294, 5
      %v1297 = vsel %vm1225, %v1292, %v1296
      %v1299 = vshrl.u32 %v1184, 16
      %v1301 = vrot.slane %v1299, 4
      %v1302 = vshll.u32 %v1184, 16
      %v1304 = vrot.slane %v1302, 5
      %v1305 = vor.u32 %v1301, %v1304
      %v1306 = vrot.slane %v1305, 4
      %v1308 = vshll.u32 %v1185, 16
      %v1310 = vrot.slane %v1308, 5
      %v1311 = vsel %vm1225, %v1306, %v1310
      %v1312 = vshrl.u32 %v1185, 16
      %v1314 = vrot.slane %v1312, 4
      %v1315 = vor.u32 %v1314, %v1310
      %v1316 = vrot.slane %v1315, 4
      %v1318 = vshll.u32 %v1186, 16
      %v1320 = vrot.slane %v1318, 5
      %v1321 = vsel %vm1225, %v1316, %v1320
      %v1323 = vshrl.u32 %v1187, 16
      %v1325 = vrot.slane %v1323, 4
      %v1326 = vshll.u32 %v1187, 16
      %v1328 = vrot.slane %v1326, 5
      %v1329 = vor.u32 %v1325, %v1328
      %v1330 = vrot.slane %v1329, 4
      %v1332 = vshll.u32 %v1188, 16
      %v1334 = vrot.slane %v1332, 5
      %v1335 = vsel %vm1225, %v1330, %v1334
      %v1336 = vshrl.u32 %v1188, 16
      %v1338 = vrot.slane %v1336, 4
      %v1339 = vor.u32 %v1338, %v1334
      %v1340 = vrot.slane %v1339, 4
      %v1342 = vshll.u32 %v1189, 16
      %v1344 = vrot.slane %v1342, 5
      %v1345 = vsel %vm1225, %v1340, %v1344
      %v1347 = vshrl.u32 %v1190, 16
      %v1349 = vrot.slane %v1347, 4
      %v1350 = vshll.u32 %v1190, 16
      %v1352 = vrot.slane %v1350, 5
      %v1353 = vor.u32 %v1349, %v1352
      %v1354 = vrot.slane %v1353, 4
      %v1356 = vshll.u32 %v1191, 16
      %v1358 = vrot.slane %v1356, 5
      %v1359 = vsel %vm1225, %v1354, %v1358
      %v1360 = vshrl.u32 %v1191, 16
      %v1362 = vrot.slane %v1360, 4
      %v1363 = vor.u32 %v1362, %v1358
      %v1364 = vrot.slane %v1363, 4
      %v1366 = vshll.u32 %v1192, 16
      %v1368 = vrot.slane %v1366, 5
      %v1369 = vsel %vm1225, %v1364, %v1368
      %v1371 = vshrl.u32 %v1193, 16
      %v1373 = vrot.slane %v1371, 4
      %v1374 = vshll.u32 %v1193, 16
      %v1376 = vrot.slane %v1374, 5
      %v1377 = vor.u32 %v1373, %v1376
      %v1378 = vrot.slane %v1377, 4
      %v1380 = vshll.u32 %v1194, 16
      %v1382 = vrot.slane %v1380, 5
      %v1383 = vsel %vm1225, %v1378, %v1382
      %v1384 = vshrl.u32 %v1194, 16
      %v1386 = vrot.slane %v1384, 4
      %v1387 = vor.u32 %v1386, %v1382
      %v1388 = vrot.slane %v1387, 4
      %v1390 = vshll.u32 %v1195, 16
      %v1392 = vrot.slane %v1390, 5
      %v1393 = vsel %vm1225, %v1388, %v1392
      %v1395 = vshrl.u32 %v1196, 16
      %v1397 = vrot.slane %v1395, 4
      %v1398 = vshll.u32 %v1196, 16
      %v1400 = vrot.slane %v1398, 5
      %v1401 = vor.u32 %v1397, %v1400
      %v1402 = vrot.slane %v1401, 4
      %v1404 = vshll.u32 %v1197, 16
      %v1406 = vrot.slane %v1404, 5
      %v1407 = vsel %vm1225, %v1402, %v1406
      %v1408 = vshrl.u32 %v1197, 16
      %v1410 = vrot.slane %v1408, 4
      %v1411 = vor.u32 %v1410, %v1406
      %v1412 = vrot.slane %v1411, 4
      %v1414 = vshll.u32 %v1198, 16
      %v1416 = vrot.slane %v1414, 5
      %v1417 = vsel %vm1225, %v1412, %v1416
      %v1419 = vshrl.u32 %v1199, 16
      %v1421 = vrot.slane %v1419, 4
      %v1422 = vshll.u32 %v1199, 16
      %v1424 = vrot.slane %v1422, 5
      %v1425 = vor.u32 %v1421, %v1424
      %v1426 = vrot.slane %v1425, 4
      %v1428 = vshll.u32 %v1200, 16
      %v1430 = vrot.slane %v1428, 5
      %v1431 = vsel %vm1225, %v1426, %v1430
      %v1432 = vshrl.u32 %v1200, 16
      %v1434 = vrot.slane %v1432, 4
      %v1435 = vor.u32 %v1434, %v1430
      %v1436 = vrot.slane %v1435, 4
      %v1438 = vshll.u32 %v1201, 16
      %v1440 = vrot.slane %v1438, 5
      %v1441 = vsel %vm1225, %v1436, %v1440
      %v1443 = vshrl.u32 %v1202, 16
      %v1445 = vrot.slane %v1443, 4
      %v1446 = vshll.u32 %v1202, 16
      %v1448 = vrot.slane %v1446, 5
      %v1449 = vor.u32 %v1445, %v1448
      %v1450 = vrot.slane %v1449, 4
      %v1452 = vshll.u32 %v1203, 16
      %v1454 = vrot.slane %v1452, 5
      %v1455 = vsel %vm1225, %v1450, %v1454
      %v1456 = vshrl.u32 %v1203, 16
      %v1458 = vrot.slane %v1456, 4
      %v1459 = vor.u32 %v1458, %v1454
      %v1460 = vrot.slane %v1459, 4
      %v1462 = vshll.u32 %v1204, 16
      %v1464 = vrot.slane %v1462, 5
      %v1465 = vsel %vm1225, %v1460, %v1464
      %v1467 = vshrl.u32 %v1205, 16
      %v1469 = vrot.slane %v1467, 4
      %v1470 = vshll.u32 %v1205, 16
      %v1472 = vrot.slane %v1470, 5
      %v1473 = vor.u32 %v1469, %v1472
      %v1474 = vrot.slane %v1473, 4
      %v1476 = vshll.u32 %v1206, 16
      %v1478 = vrot.slane %v1476, 5
      %v1479 = vsel %vm1225, %v1474, %v1478
      %v1480 = vshrl.u32 %v1206, 16
      %v1482 = vrot.slane %v1480, 4
      %v1483 = vor.u32 %v1482, %v1478
      %v1484 = vrot.slane %v1483, 4
      %v1486 = vshll.u32 %v1207, 16
      %v1488 = vrot.slane %v1486, 5
      %v1489 = vsel %vm1225, %v1484, %v1488
      %v1491 = vshrl.u32 %v1208, 16
      %v1493 = vrot.slane %v1491, 4
      %v1494 = vshll.u32 %v1208, 16
      %v1496 = vrot.slane %v1494, 5
      %v1497 = vor.u32 %v1493, %v1496
      %v1498 = vrot.slane %v1497, 4
      %v1500 = vshll.u32 %v1209, 16
      %v1502 = vrot.slane %v1500, 5
      %v1503 = vsel %vm1225, %v1498, %v1502
      %v1504 = vshrl.u32 %v1209, 16
      %v1506 = vrot.slane %v1504, 4
      %v1507 = vor.u32 %v1506, %v1502
      %v1508 = vrot.slane %v1507, 4
      %v1510 = vshll.u32 %v1210, 16
      %v1512 = vrot.slane %v1510, 5
      %v1513 = vsel %vm1225, %v1508, %v1512
      %v1515 = vshrl.u32 %v1211, 16
      %v1517 = vrot.slane %v1515, 4
      %v1518 = vshll.u32 %v1211, 16
      %v1520 = vrot.slane %v1518, 5
      %v1521 = vor.u32 %v1517, %v1520
      %v1522 = vrot.slane %v1521, 4
      %v1524 = vshll.u32 %v1212, 16
      %v1526 = vrot.slane %v1524, 5
      %v1527 = vsel %vm1225, %v1522, %v1526
      %v1528 = vshrl.u32 %v1212, 16
      %v1530 = vrot.slane %v1528, 4
      %v1531 = vor.u32 %v1530, %v1526
      %v1532 = vrot.slane %v1531, 4
      %v1534 = vshll.u32 %v1213, 16
      %v1536 = vrot.slane %v1534, 5
      %v1537 = vsel %vm1225, %v1532, %v1536
      %v1539 = vshrl.u32 %v1214, 16
      %v1541 = vrot.slane %v1539, 4
      %v1542 = vshll.u32 %v1214, 16
      %v1544 = vrot.slane %v1542, 5
      %v1545 = vor.u32 %v1541, %v1544
      %v1546 = vrot.slane %v1545, 4
      %v1548 = vshll.u32 %v1215, 16
      %v1550 = vrot.slane %v1548, 5
      %v1551 = vsel %vm1225, %v1546, %v1550
      %v1552 = vshrl.u32 %v1215, 16
      %v1554 = vrot.slane %v1552, 4
      %v1555 = vor.u32 %v1554, %v1550
      %v1556 = vrot.slane %v1555, 4
      %v1558 = vshll.u32 %v1216, 16
      %v1560 = vrot.slane %v1558, 5
      %v1561 = vsel %vm1225, %v1556, %v1560
      %v1563 = vshrl.u32 %v1217, 16
      %v1565 = vrot.slane %v1563, 4
      %v1566 = vshll.u32 %v1217, 16
      %v1568 = vrot.slane %v1566, 5
      %v1569 = vor.u32 %v1565, %v1568
      %v1570 = vrot.slane %v1569, 4
      %v1572 = vshll.u32 %v1218, 16
      %v1574 = vrot.slane %v1572, 5
      %v1575 = vsel %vm1225, %v1570, %v1574
      %v1576 = vshrl.u32 %v1218, 16
      %v1578 = vrot.slane %v1576, 4
      %v1579 = vor.u32 %v1578, %v1574
      %v1580 = vrot.slane %v1579, 4
      %v1582 = vshll.u32 %v1219, 16
      %v1584 = vrot.slane %v1582, 5
      %v1585 = vsel %vm1225, %v1580, %v1584
      %v1587 = vshrl.u32 %v1220, 16
      %v1589 = vrot.slane %v1587, 4
      %v1590 = vshll.u32 %v1220, 16
      %v1592 = vrot.slane %v1590, 5
      %v1593 = vor.u32 %v1589, %v1592
      %v1594 = vrot.slane %v1593, 4
      %v1596 = vshll.u32 %v1221, 16
      %v1598 = vrot.slane %v1596, 5
      %v1599 = vsel %vm1225, %v1594, %v1598
      %v1600 = vshrl.u32 %v1221, 16
      %v1602 = vrot.slane %v1600, 4
      %v1603 = vor.u32 %v1602, %v1598
      %v1604 = vrot.slane %v1603, 4
      %v1606 = vshll.u32 %v1222, 16
      %v1608 = vrot.slane %v1606, 5
      %v1609 = vsel %vm1225, %v1604, %v1608
      %1610 = vrot.lane.b32.xlu0 %v1239, 4
      %v1611 = vpop.permute.xlu0 %1610
      %1612 = vrot.lane.b32.xlu0 %v1249, 4
      %v1613 = vpop.permute.xlu0 %1612
      %1614 = vrot.lane.b32.xlu0 %v1263, 4
      %v1615 = vpop.permute.xlu0 %1614
      %1616 = vrot.lane.b32.xlu0 %v1273, 4
      %v1617 = vpop.permute.xlu0 %1616
      %1618 = vrot.lane.b32.xlu0 %v1287, 4
      %v1619 = vpop.permute.xlu0 %1618
      %1620 = vrot.lane.b32.xlu0 %v1297, 4
      %v1621 = vpop.permute.xlu0 %1620
      %1622 = vrot.lane.b32.xlu0 %v1311, 4
      %v1623 = vpop.permute.xlu0 %1622
      %1624 = vrot.lane.b32.xlu0 %v1321, 4
      %v1625 = vpop.permute.xlu0 %1624
      %1626 = vrot.lane.b32.xlu0 %v1335, 4
      %v1627 = vpop.permute.xlu0 %1626
      %1628 = vrot.lane.b32.xlu0 %v1345, 4
      %v1629 = vpop.permute.xlu0 %1628
      %1630 = vrot.lane.b32.xlu0 %v1359, 4
      %v1631 = vpop.permute.xlu0 %1630
      %1632 = vrot.lane.b32.xlu0 %v1369, 4
      %v1633 = vpop.permute.xlu0 %1632
      %1634 = vrot.lane.b32.xlu0 %v1383, 4
      %v1635 = vpop.permute.xlu0 %1634
      %1636 = vrot.lane.b32.xlu0 %v1393, 4
      %v1637 = vpop.permute.xlu0 %1636
      %1638 = vrot.lane.b32.xlu0 %v1407, 4
      %v1639 = vpop.permute.xlu0 %1638
      %1640 = vrot.lane.b32.xlu0 %v1417, 4
      %v1641 = vpop.permute.xlu0 %1640
      %1642 = vrot.lane.b32.xlu0 %v1431, 4
      %v1643 = vpop.permute.xlu0 %1642
      %1644 = vrot.lane.b32.xlu0 %v1441, 4
      %v1645 = vpop.permute.xlu0 %1644
      %1646 = vrot.lane.b32.xlu0 %v1455, 4
      %v1647 = vpop.permute.xlu0 %1646
      %1648 = vrot.lane.b32.xlu0 %v1465, 4
      %v1649 = vpop.permute.xlu0 %1648
      %1650 = vrot.lane.b32.xlu0 %v1479, 4
      %v1651 = vpop.permute.xlu0 %1650
      %1652 = vrot.lane.b32.xlu0 %v1489, 4
      %v1653 = vpop.permute.xlu0 %1652
      %1654 = vrot.lane.b32.xlu0 %v1503, 4
      %v1655 = vpop.permute.xlu0 %1654
      %1656 = vrot.lane.b32.xlu0 %v1513, 4
      %v1657 = vpop.permute.xlu0 %1656
      %1658 = vrot.lane.b32.xlu0 %v1527, 4
      %v1659 = vpop.permute.xlu0 %1658
      %1660 = vrot.lane.b32.xlu0 %v1537, 4
      %v1661 = vpop.permute.xlu0 %1660
      %1662 = vrot.lane.b32.xlu0 %v1551, 4
      %v1663 = vpop.permute.xlu0 %1662
      %1664 = vrot.lane.b32.xlu0 %v1561, 4
      %v1665 = vpop.permute.xlu0 %1664
      %1666 = vrot.lane.b32.xlu0 %v1575, 4
      %v1667 = vpop.permute.xlu0 %1666
      %1668 = vrot.lane.b32.xlu0 %v1585, 4
      %v1669 = vpop.permute.xlu0 %1668
      %1670 = vrot.lane.b32.xlu0 %v1599, 4
      %v1671 = vpop.permute.xlu0 %1670
      %1672 = vrot.lane.b32.xlu0 %v1609, 4
      %v1673 = vpop.permute.xlu0 %1672
      %vm1706 = vcmask 60448
      %1707 = vst.msk [vmem:[#allocation3] sm:$0xf] %vm1706, %v1611
      %1708 = vst.msk [vmem:[#allocation3 + $0x4] sm:$0xf] %vm1706, %v1613
      %1709 = vst.msk [vmem:[#allocation3 + $0x8] sm:$0xf] %vm1706, %v1615
      %1710 = vst.msk [vmem:[#allocation3 + $0xc] sm:$0xf] %vm1706, %v1617
      %1711 = vst.msk [vmem:[#allocation3 + $0x10] sm:$0xf] %vm1706, %v1619
      %1712 = vst.msk [vmem:[#allocation3 + $0x14] sm:$0xf] %vm1706, %v1621
      %1713 = vst.msk [vmem:[#allocation3 + $0x18] sm:$0xf] %vm1706, %v1623
      %1714 = vst.msk [vmem:[#allocation3 + $0x1c] sm:$0xf] %vm1706, %v1625
      %1715 = vst.msk [vmem:[#allocation3 + $0x20] sm:$0xf] %vm1706, %v1627
      %1716 = vst.msk [vmem:[#allocation3 + $0x24] sm:$0xf] %vm1706, %v1629
      %1717 = vst.msk [vmem:[#allocation3 + $0x28] sm:$0xf] %vm1706, %v1631
      %1718 = vst.msk [vmem:[#allocation3 + $0x2c] sm:$0xf] %vm1706, %v1633
      %1719 = vst.msk [vmem:[#allocation3 + $0x30] sm:$0xf] %vm1706, %v1635
      %1720 = vst.msk [vmem:[#allocation3 + $0x34] sm:$0xf] %vm1706, %v1637
      %1721 = vst.msk [vmem:[#allocation3 + $0x38] sm:$0xf] %vm1706, %v1639
      %1722 = vst.msk [vmem:[#allocation3 + $0x3c] sm:$0xf] %vm1706, %v1641
      %1723 = vst.msk [vmem:[#allocation3 + $0x40] sm:$0xf] %vm1706, %v1643
      %1724 = vst.msk [vmem:[#allocation3 + $0x44] sm:$0xf] %vm1706, %v1645
      %1725 = vst.msk [vmem:[#allocation3 + $0x48] sm:$0xf] %vm1706, %v1647
      %1726 = vst.msk [vmem:[#allocation3 + $0x4c] sm:$0xf] %vm1706, %v1649
      %1727 = vst.msk [vmem:[#allocation3 + $0x50] sm:$0xf] %vm1706, %v1651
      %1728 = vst.msk [vmem:[#allocation3 + $0x54] sm:$0xf] %vm1706, %v1653
      %1729 = vst.msk [vmem:[#allocation3 + $0x58] sm:$0xf] %vm1706, %v1655
      %1730 = vst.msk [vmem:[#allocation3 + $0x5c] sm:$0xf] %vm1706, %v1657
      %1731 = vst.msk [vmem:[#allocation3 + $0x60] sm:$0xf] %vm1706, %v1659
      %1732 = vst.msk [vmem:[#allocation3 + $0x64] sm:$0xf] %vm1706, %v1661
      %1733 = vst.msk [vmem:[#allocation3 + $0x68] sm:$0xf] %vm1706, %v1663
      %1734 = vst.msk [vmem:[#allocation3 + $0x6c] sm:$0xf] %vm1706, %v1665
      %1735 = vst.msk [vmem:[#allocation3 + $0x70] sm:$0xf] %vm1706, %v1667
      %1736 = vst.msk [vmem:[#allocation3 + $0x74] sm:$0xf] %vm1706, %v1669
      %1737 = vst.msk [vmem:[#allocation3 + $0x78] sm:$0xf] %vm1706, %v1671
      %1738 = vst.msk [vmem:[#allocation3 + $0x7c] sm:$0xf] %vm1706, %v1673
      %v1739 = vld [vmem:[#allocation2] sm:$0xe]
      %v1740 = vld [vmem:[#allocation2 + $0x4] sm:$0xf]
      %v1741 = vld [vmem:[#allocation2 + $0x8] sm:$0x1]
      %v1742 = vld [vmem:[#allocation2 + $0xc] sm:$0xe]
      %v1743 = vld [vmem:[#allocation2 + $0x10] sm:$0xf]
      %v1744 = vld [vmem:[#allocation2 + $0x14] sm:$0x1]
      %v1745 = vld [vmem:[#allocation2 + $0x18] sm:$0xe]
      %v1746 = vld [vmem:[#allocation2 + $0x1c] sm:$0xf]
      %v1747 = vld [vmem:[#allocation2 + $0x20] sm:$0x1]
      %v1748 = vld [vmem:[#allocation2 + $0x24] sm:$0xe]
      %v1749 = vld [vmem:[#allocation2 + $0x28] sm:$0xf]
      %v1750 = vld [vmem:[#allocation2 + $0x2c] sm:$0x1]
      %v1751 = vld [vmem:[#allocation2 + $0x30] sm:$0xe]
      %v1752 = vld [vmem:[#allocation2 + $0x34] sm:$0xf]
      %v1753 = vld [vmem:[#allocation2 + $0x38] sm:$0x1]
      %v1754 = vld [vmem:[#allocation2 + $0x3c] sm:$0xe]
      %v1755 = vld [vmem:[#allocation2 + $0x40] sm:$0xf]
      %v1756 = vld [vmem:[#allocation2 + $0x44] sm:$0x1]
      %v1757 = vld [vmem:[#allocation2 + $0x48] sm:$0xe]
      %v1758 = vld [vmem:[#allocation2 + $0x4c] sm:$0xf]
      %v1759 = vld [vmem:[#allocation2 + $0x50] sm:$0x1]
      %v1760 = vld [vmem:[#allocation2 + $0x54] sm:$0xe]
      %v1761 = vld [vmem:[#allocation2 + $0x58] sm:$0xf]
      %v1762 = vld [vmem:[#allocation2 + $0x5c] sm:$0x1]
      %v1763 = vld [vmem:[#allocation2 + $0x60] sm:$0xe]
      %v1764 = vld [vmem:[#allocation2 + $0x64] sm:$0xf]
      %v1765 = vld [vmem:[#allocation2 + $0x68] sm:$0x1]
      %v1766 = vld [vmem:[#allocation2 + $0x6c] sm:$0xe]
      %v1767 = vld [vmem:[#allocation2 + $0x70] sm:$0xf]
      %v1768 = vld [vmem:[#allocation2 + $0x74] sm:$0x1]
      %v1769 = vld [vmem:[#allocation2 + $0x78] sm:$0xe]
      %v1770 = vld [vmem:[#allocation2 + $0x7c] sm:$0xf]
      %v1771 = vld [vmem:[#allocation2 + $0x80] sm:$0x1]
      %v1772 = vld [vmem:[#allocation2 + $0x84] sm:$0xe]
      %v1773 = vld [vmem:[#allocation2 + $0x88] sm:$0xf]
      %v1774 = vld [vmem:[#allocation2 + $0x8c] sm:$0x1]
      %v1775 = vld [vmem:[#allocation2 + $0x90] sm:$0xe]
      %v1776 = vld [vmem:[#allocation2 + $0x94] sm:$0xf]
      %v1777 = vld [vmem:[#allocation2 + $0x98] sm:$0x1]
      %v1778 = vld [vmem:[#allocation2 + $0x9c] sm:$0xe]
      %v1779 = vld [vmem:[#allocation2 + $0xa0] sm:$0xf]
      %v1780 = vld [vmem:[#allocation2 + $0xa4] sm:$0x1]
      %v1781 = vld [vmem:[#allocation2 + $0xa8] sm:$0xe]
      %v1782 = vld [vmem:[#allocation2 + $0xac] sm:$0xf]
      %v1783 = vld [vmem:[#allocation2 + $0xb0] sm:$0x1]
      %v1784 = vld [vmem:[#allocation2 + $0xb4] sm:$0xe]
      %v1785 = vld [vmem:[#allocation2 + $0xb8] sm:$0xf]
      %v1786 = vld [vmem:[#allocation2 + $0xbc] sm:$0x1]
      %vm1835 = vcmask 1042432
      %vm1836 = vcmask 1046532
      %vm1837 = vmor %vm1835, %vm1836
      %v1838 = vrot.slane %v1739, 5
      %v1839 = vrot.slane %v1838, 4
      %v1840 = vrot.slane %v1740, 5
      %v1841 = vsel %vm1837, %v1839, %v1840
      %v1842 = vrot.slane %v1840, 4
      %v1843 = vrot.slane %v1741, 5
      %v1844 = vsel %vm1837, %v1842, %v1843
      %v1845 = vrot.slane %v1742, 5
      %v1846 = vrot.slane %v1845, 4
      %v1847 = vrot.slane %v1743, 5
      %v1848 = vsel %vm1837, %v1846, %v1847
      %v1849 = vrot.slane %v1847, 4
      %v1850 = vrot.slane %v1744, 5
      %v1851 = vsel %vm1837, %v1849, %v1850
      %v1852 = vrot.slane %v1745, 5
      %v1853 = vrot.slane %v1852, 4
      %v1854 = vrot.slane %v1746, 5
      %v1855 = vsel %vm1837, %v1853, %v1854
      %v1856 = vrot.slane %v1854, 4
      %v1857 = vrot.slane %v1747, 5
      %v1858 = vsel %vm1837, %v1856, %v1857
      %v1859 = vrot.slane %v1748, 5
      %v1860 = vrot.slane %v1859, 4
      %v1861 = vrot.slane %v1749, 5
      %v1862 = vsel %vm1837, %v1860, %v1861
      %v1863 = vrot.slane %v1861, 4
      %v1864 = vrot.slane %v1750, 5
      %v1865 = vsel %vm1837, %v1863, %v1864
      %v1866 = vrot.slane %v1751, 5
      %v1867 = vrot.slane %v1866, 4
      %v1868 = vrot.slane %v1752, 5
      %v1869 = vsel %vm1837, %v1867, %v1868
      %v1870 = vrot.slane %v1868, 4
      %v1871 = vrot.slane %v1753, 5
      %v1872 = vsel %vm1837, %v1870, %v1871
      %v1873 = vrot.slane %v1754, 5
      %v1874 = vrot.slane %v1873, 4
      %v1875 = vrot.slane %v1755, 5
      %v1876 = vsel %vm1837, %v1874, %v1875
      %v1877 = vrot.slane %v1875, 4
      %v1878 = vrot.slane %v1756, 5
      %v1879 = vsel %vm1837, %v1877, %v1878
      %v1880 = vrot.slane %v1757, 5
      %v1881 = vrot.slane %v1880, 4
      %v1882 = vrot.slane %v1758, 5
      %v1883 = vsel %vm1837, %v1881, %v1882
      %v1884 = vrot.slane %v1882, 4
      %v1885 = vrot.slane %v1759, 5
      %v1886 = vsel %vm1837, %v1884, %v1885
      %v1887 = vrot.slane %v1760, 5
      %v1888 = vrot.slane %v1887, 4
      %v1889 = vrot.slane %v1761, 5
      %v1890 = vsel %vm1837, %v1888, %v1889
      %v1891 = vrot.slane %v1889, 4
      %v1892 = vrot.slane %v1762, 5
      %v1893 = vsel %vm1837, %v1891, %v1892
      %v1894 = vrot.slane %v1763, 5
      %v1895 = vrot.slane %v1894, 4
      %v1896 = vrot.slane %v1764, 5
      %v1897 = vsel %vm1837, %v1895, %v1896
      %v1898 = vrot.slane %v1896, 4
      %v1899 = vrot.slane %v1765, 5
      %v1900 = vsel %vm1837, %v1898, %v1899
      %v1901 = vrot.slane %v1766, 5
      %v1902 = vrot.slane %v1901, 4
      %v1903 = vrot.slane %v1767, 5
      %v1904 = vsel %vm1837, %v1902, %v1903
      %v1905 = vrot.slane %v1903, 4
      %v1906 = vrot.slane %v1768, 5
      %v1907 = vsel %vm1837, %v1905, %v1906
      %v1908 = vrot.slane %v1769, 5
      %v1909 = vrot.slane %v1908, 4
      %v1910 = vrot.slane %v1770, 5
      %v1911 = vsel %vm1837, %v1909, %v1910
      %v1912 = vrot.slane %v1910, 4
      %v1913 = vrot.slane %v1771, 5
      %v1914 = vsel %vm1837, %v1912, %v1913
      %v1915 = vrot.slane %v1772, 5
      %v1916 = vrot.slane %v1915, 4
      %v1917 = vrot.slane %v1773, 5
      %v1918 = vsel %vm1837, %v1916, %v1917
      %v1919 = vrot.slane %v1917, 4
      %v1920 = vrot.slane %v1774, 5
      %v1921 = vsel %vm1837, %v1919, %v1920
      %v1922 = vrot.slane %v1775, 5
      %v1923 = vrot.slane %v1922, 4
      %v1924 = vrot.slane %v1776, 5
      %v1925 = vsel %vm1837, %v1923, %v1924
      %v1926 = vrot.slane %v1924, 4
      %v1927 = vrot.slane %v1777, 5
      %v1928 = vsel %vm1837, %v1926, %v1927
      %v1929 = vrot.slane %v1778, 5
      %v1930 = vrot.slane %v1929, 4
      %v1931 = vrot.slane %v1779, 5
      %v1932 = vsel %vm1837, %v1930, %v1931
      %v1933 = vrot.slane %v1931, 4
      %v1934 = vrot.slane %v1780, 5
      %v1935 = vsel %vm1837, %v1933, %v1934
      %v1936 = vrot.slane %v1781, 5
      %v1937 = vrot.slane %v1936, 4
      %v1938 = vrot.slane %v1782, 5
      %v1939 = vsel %vm1837, %v1937, %v1938
      %v1940 = vrot.slane %v1938, 4
      %v1941 = vrot.slane %v1783, 5
      %v1942 = vsel %vm1837, %v1940, %v1941
      %v1943 = vrot.slane %v1784, 5
      %v1944 = vrot.slane %v1943, 4
      %v1945 = vrot.slane %v1785, 5
      %v1946 = vsel %vm1837, %v1944, %v1945
      %v1947 = vrot.slane %v1945, 4
      %v1948 = vrot.slane %v1786, 5
      %v1949 = vsel %vm1837, %v1947, %v1948
      %1950 = vrot.lane.b32.xlu0 %v1841, 8
      %v1951 = vpop.permute.xlu0 %1950
      %1952 = vrot.lane.b32.xlu0 %v1844, 8
      %v1953 = vpop.permute.xlu0 %1952
      %1954 = vrot.lane.b32.xlu0 %v1848, 8
      %v1955 = vpop.permute.xlu0 %1954
      %1956 = vrot.lane.b32.xlu0 %v1851, 8
      %v1957 = vpop.permute.xlu0 %1956
      %1958 = vrot.lane.b32.xlu0 %v1855, 8
      %v1959 = vpop.permute.xlu0 %1958
      %1960 = vrot.lane.b32.xlu0 %v1858, 8
      %v1961 = vpop.permute.xlu0 %1960
      %1962 = vrot.lane.b32.xlu0 %v1862, 8
      %v1963 = vpop.permute.xlu0 %1962
      %1964 = vrot.lane.b32.xlu0 %v1865, 8
      %v1965 = vpop.permute.xlu0 %1964
      %1966 = vrot.lane.b32.xlu0 %v1869, 8
      %v1967 = vpop.permute.xlu0 %1966
      %1968 = vrot.lane.b32.xlu0 %v1872, 8
      %v1969 = vpop.permute.xlu0 %1968
      %1970 = vrot.lane.b32.xlu0 %v1876, 8
      %v1971 = vpop.permute.xlu0 %1970
      %1972 = vrot.lane.b32.xlu0 %v1879, 8
      %v1973 = vpop.permute.xlu0 %1972
      %1974 = vrot.lane.b32.xlu0 %v1883, 8
      %v1975 = vpop.permute.xlu0 %1974
      %1976 = vrot.lane.b32.xlu0 %v1886, 8
      %v1977 = vpop.permute.xlu0 %1976
      %1978 = vrot.lane.b32.xlu0 %v1890, 8
      %v1979 = vpop.permute.xlu0 %1978
      %1980 = vrot.lane.b32.xlu0 %v1893, 8
      %v1981 = vpop.permute.xlu0 %1980
      %1982 = vrot.lane.b32.xlu0 %v1897, 8
      %v1983 = vpop.permute.xlu0 %1982
      %1984 = vrot.lane.b32.xlu0 %v1900, 8
      %v1985 = vpop.permute.xlu0 %1984
      %1986 = vrot.lane.b32.xlu0 %v1904, 8
      %v1987 = vpop.permute.xlu0 %1986
      %1988 = vrot.lane.b32.xlu0 %v1907, 8
      %v1989 = vpop.permute.xlu0 %1988
      %1990 = vrot.lane.b32.xlu0 %v1911, 8
      %v1991 = vpop.permute.xlu0 %1990
      %1992 = vrot.lane.b32.xlu0 %v1914, 8
      %v1993 = vpop.permute.xlu0 %1992
      %1994 = vrot.lane.b32.xlu0 %v1918, 8
      %v1995 = vpop.permute.xlu0 %1994
      %1996 = vrot.lane.b32.xlu0 %v1921, 8
      %v1997 = vpop.permute.xlu0 %1996
      %1998 = vrot.lane.b32.xlu0 %v1925, 8
      %v1999 = vpop.permute.xlu0 %1998
      %2000 = vrot.lane.b32.xlu0 %v1928, 8
      %v2001 = vpop.permute.xlu0 %2000
      %2002 = vrot.lane.b32.xlu0 %v1932, 8
      %v2003 = vpop.permute.xlu0 %2002
      %2004 = vrot.lane.b32.xlu0 %v1935, 8
      %v2005 = vpop.permute.xlu0 %2004
      %2006 = vrot.lane.b32.xlu0 %v1939, 8
      %v2007 = vpop.permute.xlu0 %2006
      %2008 = vrot.lane.b32.xlu0 %v1942, 8
      %v2009 = vpop.permute.xlu0 %2008
      %2010 = vrot.lane.b32.xlu0 %v1946, 8
      %v2011 = vpop.permute.xlu0 %2010
      %2012 = vrot.lane.b32.xlu0 %v1949, 8
      %v2013 = vpop.permute.xlu0 %2012
      %vm2046 = vcmask 93248
      %2047 = vst.msk [vmem:[#allocation3] sm:$0xf] %vm2046, %v1951
      %2048 = vst.msk [vmem:[#allocation3 + $0x4] sm:$0xf] %vm2046, %v1953
      %2049 = vst.msk [vmem:[#allocation3 + $0x8] sm:$0xf] %vm2046, %v1955
      %2050 = vst.msk [vmem:[#allocation3 + $0xc] sm:$0xf] %vm2046, %v1957
      %2051 = vst.msk [vmem:[#allocation3 + $0x10] sm:$0xf] %vm2046, %v1959
      %2052 = vst.msk [vmem:[#allocation3 + $0x14] sm:$0xf] %vm2046, %v1961
      %2053 = vst.msk [vmem:[#allocation3 + $0x18] sm:$0xf] %vm2046, %v1963
      %2054 = vst.msk [vmem:[#allocation3 + $0x1c] sm:$0xf] %vm2046, %v1965
      %2055 = vst.msk [vmem:[#allocation3 + $0x20] sm:$0xf] %vm2046, %v1967
      %2056 = vst.msk [vmem:[#allocation3 + $0x24] sm:$0xf] %vm2046, %v1969
      %2057 = vst.msk [vmem:[#allocation3 + $0x28] sm:$0xf] %vm2046, %v1971
      %2058 = vst.msk [vmem:[#allocation3 + $0x2c] sm:$0xf] %vm2046, %v1973
      %2059 = vst.msk [vmem:[#allocation3 + $0x30] sm:$0xf] %vm2046, %v1975
      %2060 = vst.msk [vmem:[#allocation3 + $0x34] sm:$0xf] %vm2046, %v1977
      %2061 = vst.msk [vmem:[#allocation3 + $0x38] sm:$0xf] %vm2046, %v1979
      %2062 = vst.msk [vmem:[#allocation3 + $0x3c] sm:$0xf] %vm2046, %v1981
      %2063 = vst.msk [vmem:[#allocation3 + $0x40] sm:$0xf] %vm2046, %v1983
      %2064 = vst.msk [vmem:[#allocation3 + $0x44] sm:$0xf] %vm2046, %v1985
      %2065 = vst.msk [vmem:[#allocation3 + $0x48] sm:$0xf] %vm2046, %v1987
      %2066 = vst.msk [vmem:[#allocation3 + $0x4c] sm:$0xf] %vm2046, %v1989
      %2067 = vst.msk [vmem:[#allocation3 + $0x50] sm:$0xf] %vm2046, %v1991
      %2068 = vst.msk [vmem:[#allocation3 + $0x54] sm:$0xf] %vm2046, %v1993
      %2069 = vst.msk [vmem:[#allocation3 + $0x58] sm:$0xf] %vm2046, %v1995
      %2070 = vst.msk [vmem:[#allocation3 + $0x5c] sm:$0xf] %vm2046, %v1997
      %2071 = vst.msk [vmem:[#allocation3 + $0x60] sm:$0xf] %vm2046, %v1999
      %2072 = vst.msk [vmem:[#allocation3 + $0x64] sm:$0xf] %vm2046, %v2001
      %2073 = vst.msk [vmem:[#allocation3 + $0x68] sm:$0xf] %vm2046, %v2003
      %2074 = vst.msk [vmem:[#allocation3 + $0x6c] sm:$0xf] %vm2046, %v2005
      %2075 = vst.msk [vmem:[#allocation3 + $0x70] sm:$0xf] %vm2046, %v2007
      %2076 = vst.msk [vmem:[#allocation3 + $0x74] sm:$0xf] %vm2046, %v2009
      %2077 = vst.msk [vmem:[#allocation3 + $0x78] sm:$0xf] %vm2046, %v2011
      %2078 = vst.msk [vmem:[#allocation3 + $0x7c] sm:$0xf] %vm2046, %v2013
      %v2079 = vld [vmem:[%s996] sm:$0xf]
      %v2080 = vld [vmem:[%s996 + $0x4] sm:$0xf]
      %v2081 = vld [vmem:[%s996 + $0xc] sm:$0xf]
      %v2082 = vld [vmem:[%s996 + $0x10] sm:$0xf]
      %v2083 = vld [vmem:[%s996 + $0x18] sm:$0xf]
      %v2084 = vld [vmem:[%s996 + $0x1c] sm:$0xf]
      %v2085 = vld [vmem:[%s996 + $0x24] sm:$0xf]
      %v2086 = vld [vmem:[%s996 + $0x28] sm:$0xf]
      %v2087 = vld [vmem:[%s996 + $0x30] sm:$0xf]
      %v2088 = vld [vmem:[%s996 + $0x34] sm:$0xf]
      %v2089 = vld [vmem:[%s996 + $0x3c] sm:$0xf]
      %v2090 = vld [vmem:[%s996 + $0x40] sm:$0xf]
      %v2091 = vld [vmem:[%s996 + $0x48] sm:$0xf]
      %v2092 = vld [vmem:[%s996 + $0x4c] sm:$0xf]
      %v2093 = vld [vmem:[%s996 + $0x54] sm:$0xf]
      %v2094 = vld [vmem:[%s996 + $0x58] sm:$0xf]
      %v2095 = vld [vmem:[%s996 + $0x60] sm:$0xf]
      %v2096 = vld [vmem:[%s996 + $0x64] sm:$0xf]
      %v2097 = vld [vmem:[%s996 + $0x6c] sm:$0xf]
      %v2098 = vld [vmem:[%s996 + $0x70] sm:$0xf]
      %v2099 = vld [vmem:[%s996 + $0x78] sm:$0xf]
      %v2100 = vld [vmem:[%s996 + $0x7c] sm:$0xf]
      %v2101 = vld [vmem:[%s996 + $0x84] sm:$0xf]
      %v2102 = vld [vmem:[%s996 + $0x88] sm:$0xf]
      %v2103 = vld [vmem:[%s996 + $0x90] sm:$0xf]
      %v2104 = vld [vmem:[%s996 + $0x94] sm:$0xf]
      %v2105 = vld [vmem:[%s996 + $0x9c] sm:$0xf]
      %v2106 = vld [vmem:[%s996 + $0xa0] sm:$0xf]
      %v2107 = vld [vmem:[%s996 + $0xa8] sm:$0xf]
      %v2108 = vld [vmem:[%s996 + $0xac] sm:$0xf]
      %v2109 = vld [vmem:[%s996 + $0xb4] sm:$0xf]
      %v2110 = vld [vmem:[%s996 + $0xb8] sm:$0xf]
      %2143 = vrot.lane.b32.xlu0 %v2079, 12
      %v2144 = vpop.permute.xlu0 %2143
      %2145 = vrot.lane.b32.xlu0 %v2080, 12
      %v2146 = vpop.permute.xlu0 %2145
      %2147 = vrot.lane.b32.xlu0 %v2081, 12
      %v2148 = vpop.permute.xlu0 %2147
      %2149 = vrot.lane.b32.xlu0 %v2082, 12
      %v2150 = vpop.permute.xlu0 %2149
      %2151 = vrot.lane.b32.xlu0 %v2083, 12
      %v2152 = vpop.permute.xlu0 %2151
      %2153 = vrot.lane.b32.xlu0 %v2084, 12
      %v2154 = vpop.permute.xlu0 %2153
      %2155 = vrot.lane.b32.xlu0 %v2085, 12
      %v2156 = vpop.permute.xlu0 %2155
      %2157 = vrot.lane.b32.xlu0 %v2086, 12
      %v2158 = vpop.permute.xlu0 %2157
      %2159 = vrot.lane.b32.xlu0 %v2087, 12
      %v2160 = vpop.permute.xlu0 %2159
      %2161 = vrot.lane.b32.xlu0 %v2088, 12
      %v2162 = vpop.permute.xlu0 %2161
      %2163 = vrot.lane.b32.xlu0 %v2089, 12
      %v2164 = vpop.permute.xlu0 %2163
      %2165 = vrot.lane.b32.xlu0 %v2090, 12
      %v2166 = vpop.permute.xlu0 %2165
      %2167 = vrot.lane.b32.xlu0 %v2091, 12
      %v2168 = vpop.permute.xlu0 %2167
      %2169 = vrot.lane.b32.xlu0 %v2092, 12
      %v2170 = vpop.permute.xlu0 %2169
      %2171 = vrot.lane.b32.xlu0 %v2093, 12
      %v2172 = vpop.permute.xlu0 %2171
      %2173 = vrot.lane.b32.xlu0 %v2094, 12
      %v2174 = vpop.permute.xlu0 %2173
      %2175 = vrot.lane.b32.xlu0 %v2095, 12
      %v2176 = vpop.permute.xlu0 %2175
      %2177 = vrot.lane.b32.xlu0 %v2096, 12
      %v2178 = vpop.permute.xlu0 %2177
      %2179 = vrot.lane.b32.xlu0 %v2097, 12
      %v2180 = vpop.permute.xlu0 %2179
      %2181 = vrot.lane.b32.xlu0 %v2098, 12
      %v2182 = vpop.permute.xlu0 %2181
      %2183 = vrot.lane.b32.xlu0 %v2099, 12
      %v2184 = vpop.permute.xlu0 %2183
      %2185 = vrot.lane.b32.xlu0 %v2100, 12
      %v2186 = vpop.permute.xlu0 %2185
      %2187 = vrot.lane.b32.xlu0 %v2101, 12
      %v2188 = vpop.permute.xlu0 %2187
      %2189 = vrot.lane.b32.xlu0 %v2102, 12
      %v2190 = vpop.permute.xlu0 %2189
      %2191 = vrot.lane.b32.xlu0 %v2103, 12
      %v2192 = vpop.permute.xlu0 %2191
      %2193 = vrot.lane.b32.xlu0 %v2104, 12
      %v2194 = vpop.permute.xlu0 %2193
      %2195 = vrot.lane.b32.xlu0 %v2105, 12
      %v2196 = vpop.permute.xlu0 %2195
      %2197 = vrot.lane.b32.xlu0 %v2106, 12
      %v2198 = vpop.permute.xlu0 %2197
      %2199 = vrot.lane.b32.xlu0 %v2107, 12
      %v2200 = vpop.permute.xlu0 %2199
      %2201 = vrot.lane.b32.xlu0 %v2108, 12
      %v2202 = vpop.permute.xlu0 %2201
      %2203 = vrot.lane.b32.xlu0 %v2109, 12
      %v2204 = vpop.permute.xlu0 %2203
      %2205 = vrot.lane.b32.xlu0 %v2110, 12
      %v2206 = vpop.permute.xlu0 %2205
      %vm2239 = vcmask 126048
      %2240 = vst.msk [vmem:[#allocation3] sm:$0xf] %vm2239, %v2144
      %2241 = vst.msk [vmem:[#allocation3 + $0x4] sm:$0xf] %vm2239, %v2146
      %2242 = vst.msk [vmem:[#allocation3 + $0x8] sm:$0xf] %vm2239, %v2148
      %2243 = vst.msk [vmem:[#allocation3 + $0xc] sm:$0xf] %vm2239, %v2150
      %2244 = vst.msk [vmem:[#allocation3 + $0x10] sm:$0xf] %vm2239, %v2152
      %2245 = vst.msk [vmem:[#allocation3 + $0x14] sm:$0xf] %vm2239, %v2154
      %2246 = vst.msk [vmem:[#allocation3 + $0x18] sm:$0xf] %vm2239, %v2156
      %2247 = vst.msk [vmem:[#allocation3 + $0x1c] sm:$0xf] %vm2239, %v2158
      %2248 = vst.msk [vmem:[#allocation3 + $0x20] sm:$0xf] %vm2239, %v2160
      %2249 = vst.msk [vmem:[#allocation3 + $0x24] sm:$0xf] %vm2239, %v2162
      %2250 = vst.msk [vmem:[#allocation3 + $0x28] sm:$0xf] %vm2239, %v2164
      %2251 = vst.msk [vmem:[#allocation3 + $0x2c] sm:$0xf] %vm2239, %v2166
      %2252 = vst.msk [vmem:[#allocation3 + $0x30] sm:$0xf] %vm2239, %v2168
      %2253 = vst.msk [vmem:[#allocation3 + $0x34] sm:$0xf] %vm2239, %v2170
      %2254 = vst.msk [vmem:[#allocation3 + $0x38] sm:$0xf] %vm2239, %v2172
      %2255 = vst.msk [vmem:[#allocation3 + $0x3c] sm:$0xf] %vm2239, %v2174
      %2256 = vst.msk [vmem:[#allocation3 + $0x40] sm:$0xf] %vm2239, %v2176
      %2257 = vst.msk [vmem:[#allocation3 + $0x44] sm:$0xf] %vm2239, %v2178
      %2258 = vst.msk [vmem:[#allocation3 + $0x48] sm:$0xf] %vm2239, %v2180
      %2259 = vst.msk [vmem:[#allocation3 + $0x4c] sm:$0xf] %vm2239, %v2182
      %2260 = vst.msk [vmem:[#allocation3 + $0x50] sm:$0xf] %vm2239, %v2184
      %2261 = vst.msk [vmem:[#allocation3 + $0x54] sm:$0xf] %vm2239, %v2186
      %2262 = vst.msk [vmem:[#allocation3 + $0x58] sm:$0xf] %vm2239, %v2188
      %2263 = vst.msk [vmem:[#allocation3 + $0x5c] sm:$0xf] %vm2239, %v2190
      %2264 = vst.msk [vmem:[#allocation3 + $0x60] sm:$0xf] %vm2239, %v2192
      %2265 = vst.msk [vmem:[#allocation3 + $0x64] sm:$0xf] %vm2239, %v2194
      %2266 = vst.msk [vmem:[#allocation3 + $0x68] sm:$0xf] %vm2239, %v2196
      %2267 = vst.msk [vmem:[#allocation3 + $0x6c] sm:$0xf] %vm2239, %v2198
      %2268 = vst.msk [vmem:[#allocation3 + $0x70] sm:$0xf] %vm2239, %v2200
      %2269 = vst.msk [vmem:[#allocation3 + $0x74] sm:$0xf] %vm2239, %v2202
      %2270 = vst.msk [vmem:[#allocation3 + $0x78] sm:$0xf] %vm2239, %v2204
      %2271 = vst.msk [vmem:[#allocation3 + $0x7c] sm:$0xf] %vm2239, %v2206
      %v2272 = vld [vmem:[%s996] sm:$0xf]
      %v2273 = vld [vmem:[%s996 + $0x4] sm:$0xf]
      %v2274 = vld [vmem:[%s996 + $0x8] sm:$0x1]
      %v2275 = vld [vmem:[%s996 + $0xc] sm:$0xf]
      %v2276 = vld [vmem:[%s996 + $0x10] sm:$0xf]
      %v2277 = vld [vmem:[%s996 + $0x14] sm:$0x1]
      %v2278 = vld [vmem:[%s996 + $0x18] sm:$0xf]
      %v2279 = vld [vmem:[%s996 + $0x1c] sm:$0xf]
      %v2280 = vld [vmem:[%s996 + $0x20] sm:$0x1]
      %v2281 = vld [vmem:[%s996 + $0x24] sm:$0xf]
      %v2282 = vld [vmem:[%s996 + $0x28] sm:$0xf]
      %v2283 = vld [vmem:[%s996 + $0x2c] sm:$0x1]
      %v2284 = vld [vmem:[%s996 + $0x30] sm:$0xf]
      %v2285 = vld [vmem:[%s996 + $0x34] sm:$0xf]
      %v2286 = vld [vmem:[%s996 + $0x38] sm:$0x1]
      %v2287 = vld [vmem:[%s996 + $0x3c] sm:$0xf]
      %v2288 = vld [vmem:[%s996 + $0x40] sm:$0xf]
      %v2289 = vld [vmem:[%s996 + $0x44] sm:$0x1]
      %v2290 = vld [vmem:[%s996 + $0x48] sm:$0xf]
      %v2291 = vld [vmem:[%s996 + $0x4c] sm:$0xf]
      %v2292 = vld [vmem:[%s996 + $0x50] sm:$0x1]
      %v2293 = vld [vmem:[%s996 + $0x54] sm:$0xf]
      %v2294 = vld [vmem:[%s996 + $0x58] sm:$0xf]
      %v2295 = vld [vmem:[%s996 + $0x5c] sm:$0x1]
      %v2296 = vld [vmem:[%s996 + $0x60] sm:$0xf]
      %v2297 = vld [vmem:[%s996 + $0x64] sm:$0xf]
      %v2298 = vld [vmem:[%s996 + $0x68] sm:$0x1]
      %v2299 = vld [vmem:[%s996 + $0x6c] sm:$0xf]
      %v2300 = vld [vmem:[%s996 + $0x70] sm:$0xf]
      %v2301 = vld [vmem:[%s996 + $0x74] sm:$0x1]
      %v2302 = vld [vmem:[%s996 + $0x78] sm:$0xf]
      %v2303 = vld [vmem:[%s996 + $0x7c] sm:$0xf]
      %v2304 = vld [vmem:[%s996 + $0x80] sm:$0x1]
      %v2305 = vld [vmem:[%s996 + $0x84] sm:$0xf]
      %v2306 = vld [vmem:[%s996 + $0x88] sm:$0xf]
      %v2307 = vld [vmem:[%s996 + $0x8c] sm:$0x1]
      %v2308 = vld [vmem:[%s996 + $0x90] sm:$0xf]
      %v2309 = vld [vmem:[%s996 + $0x94] sm:$0xf]
      %v2310 = vld [vmem:[%s996 + $0x98] sm:$0x1]
      %v2311 = vld [vmem:[%s996 + $0x9c] sm:$0xf]
      %v2312 = vld [vmem:[%s996 + $0xa0] sm:$0xf]
      %v2313 = vld [vmem:[%s996 + $0xa4] sm:$0x1]
      %v2314 = vld [vmem:[%s996 + $0xa8] sm:$0xf]
      %v2315 = vld [vmem:[%s996 + $0xac] sm:$0xf]
      %v2316 = vld [vmem:[%s996 + $0xb0] sm:$0x1]
      %v2317 = vld [vmem:[%s996 + $0xb4] sm:$0xf]
      %v2318 = vld [vmem:[%s996 + $0xb8] sm:$0xf]
      %v2319 = vld [vmem:[%s996 + $0xbc] sm:$0x1]
      %v2321 = vshrl.u32 %v2272, 16
      %v2323 = vrot.slane %v2321, 4
      %v2324 = vshll.u32 %v2272, 16
      %v2326 = vrot.slane %v2324, 5
      %v2327 = vor.u32 %v2323, %v2326
      %v2328 = vrot.slane %v2327, 4
      %v2330 = vshll.u32 %v2273, 16
      %v2332 = vrot.slane %v2330, 5
      %v2333 = vsel %vm1225, %v2328, %v2332
      %v2334 = vshrl.u32 %v2273, 16
      %v2336 = vrot.slane %v2334, 4
      %v2337 = vor.u32 %v2336, %v2332
      %v2338 = vrot.slane %v2337, 4
      %v2340 = vshll.u32 %v2274, 16
      %v2342 = vrot.slane %v2340, 5
      %v2343 = vsel %vm1225, %v2338, %v2342
      %v2345 = vshrl.u32 %v2275, 16
      %v2347 = vrot.slane %v2345, 4
      %v2348 = vshll.u32 %v2275, 16
      %v2350 = vrot.slane %v2348, 5
      %v2351 = vor.u32 %v2347, %v2350
      %v2352 = vrot.slane %v2351, 4
      %v2354 = vshll.u32 %v2276, 16
      %v2356 = vrot.slane %v2354, 5
      %v2357 = vsel %vm1225, %v2352, %v2356
      %v2358 = vshrl.u32 %v2276, 16
      %v2360 = vrot.slane %v2358, 4
      %v2361 = vor.u32 %v2360, %v2356
      %v2362 = vrot.slane %v2361, 4
      %v2364 = vshll.u32 %v2277, 16
      %v2366 = vrot.slane %v2364, 5
      %v2367 = vsel %vm1225, %v2362, %v2366
      %v2369 = vshrl.u32 %v2278, 16
      %v2371 = vrot.slane %v2369, 4
      %v2372 = vshll.u32 %v2278, 16
      %v2374 = vrot.slane %v2372, 5
      %v2375 = vor.u32 %v2371, %v2374
      %v2376 = vrot.slane %v2375, 4
      %v2378 = vshll.u32 %v2279, 16
      %v2380 = vrot.slane %v2378, 5
      %v2381 = vsel %vm1225, %v2376, %v2380
      %v2382 = vshrl.u32 %v2279, 16
      %v2384 = vrot.slane %v2382, 4
      %v2385 = vor.u32 %v2384, %v2380
      %v2386 = vrot.slane %v2385, 4
      %v2388 = vshll.u32 %v2280, 16
      %v2390 = vrot.slane %v2388, 5
      %v2391 = vsel %vm1225, %v2386, %v2390
      %v2393 = vshrl.u32 %v2281, 16
      %v2395 = vrot.slane %v2393, 4
      %v2396 = vshll.u32 %v2281, 16
      %v2398 = vrot.slane %v2396, 5
      %v2399 = vor.u32 %v2395, %v2398
      %v2400 = vrot.slane %v2399, 4
      %v2402 = vshll.u32 %v2282, 16
      %v2404 = vrot.slane %v2402, 5
      %v2405 = vsel %vm1225, %v2400, %v2404
      %v2406 = vshrl.u32 %v2282, 16
      %v2408 = vrot.slane %v2406, 4
      %v2409 = vor.u32 %v2408, %v2404
      %v2410 = vrot.slane %v2409, 4
      %v2412 = vshll.u32 %v2283, 16
      %v2414 = vrot.slane %v2412, 5
      %v2415 = vsel %vm1225, %v2410, %v2414
      %v2417 = vshrl.u32 %v2284, 16
      %v2419 = vrot.slane %v2417, 4
      %v2420 = vshll.u32 %v2284, 16
      %v2422 = vrot.slane %v2420, 5
      %v2423 = vor.u32 %v2419, %v2422
      %v2424 = vrot.slane %v2423, 4
      %v2426 = vshll.u32 %v2285, 16
      %v2428 = vrot.slane %v2426, 5
      %v2429 = vsel %vm1225, %v2424, %v2428
      %v2430 = vshrl.u32 %v2285, 16
      %v2432 = vrot.slane %v2430, 4
      %v2433 = vor.u32 %v2432, %v2428
      %v2434 = vrot.slane %v2433, 4
      %v2436 = vshll.u32 %v2286, 16
      %v2438 = vrot.slane %v2436, 5
      %v2439 = vsel %vm1225, %v2434, %v2438
      %v2441 = vshrl.u32 %v2287, 16
      %v2443 = vrot.slane %v2441, 4
      %v2444 = vshll.u32 %v2287, 16
      %v2446 = vrot.slane %v2444, 5
      %v2447 = vor.u32 %v2443, %v2446
      %v2448 = vrot.slane %v2447, 4
      %v2450 = vshll.u32 %v2288, 16
      %v2452 = vrot.slane %v2450, 5
      %v2453 = vsel %vm1225, %v2448, %v2452
      %v2454 = vshrl.u32 %v2288, 16
      %v2456 = vrot.slane %v2454, 4
      %v2457 = vor.u32 %v2456, %v2452
      %v2458 = vrot.slane %v2457, 4
      %v2460 = vshll.u32 %v2289, 16
      %v2462 = vrot.slane %v2460, 5
      %v2463 = vsel %vm1225, %v2458, %v2462
      %v2465 = vshrl.u32 %v2290, 16
      %v2467 = vrot.slane %v2465, 4
      %v2468 = vshll.u32 %v2290, 16
      %v2470 = vrot.slane %v2468, 5
      %v2471 = vor.u32 %v2467, %v2470
      %v2472 = vrot.slane %v2471, 4
      %v2474 = vshll.u32 %v2291, 16
      %v2476 = vrot.slane %v2474, 5
      %v2477 = vsel %vm1225, %v2472, %v2476
      %v2478 = vshrl.u32 %v2291, 16
      %v2480 = vrot.slane %v2478, 4
      %v2481 = vor.u32 %v2480, %v2476
      %v2482 = vrot.slane %v2481, 4
      %v2484 = vshll.u32 %v2292, 16
      %v2486 = vrot.slane %v2484, 5
      %v2487 = vsel %vm1225, %v2482, %v2486
      %v2489 = vshrl.u32 %v2293, 16
      %v2491 = vrot.slane %v2489, 4
      %v2492 = vshll.u32 %v2293, 16
      %v2494 = vrot.slane %v2492, 5
      %v2495 = vor.u32 %v2491, %v2494
      %v2496 = vrot.slane %v2495, 4
      %v2498 = vshll.u32 %v2294, 16
      %v2500 = vrot.slane %v2498, 5
      %v2501 = vsel %vm1225, %v2496, %v2500
      %v2502 = vshrl.u32 %v2294, 16
      %v2504 = vrot.slane %v2502, 4
      %v2505 = vor.u32 %v2504, %v2500
      %v2506 = vrot.slane %v2505, 4
      %v2508 = vshll.u32 %v2295, 16
      %v2510 = vrot.slane %v2508, 5
      %v2511 = vsel %vm1225, %v2506, %v2510
      %v2513 = vshrl.u32 %v2296, 16
      %v2515 = vrot.slane %v2513, 4
      %v2516 = vshll.u32 %v2296, 16
      %v2518 = vrot.slane %v2516, 5
      %v2519 = vor.u32 %v2515, %v2518
      %v2520 = vrot.slane %v2519, 4
      %v2522 = vshll.u32 %v2297, 16
      %v2524 = vrot.slane %v2522, 5
      %v2525 = vsel %vm1225, %v2520, %v2524
      %v2526 = vshrl.u32 %v2297, 16
      %v2528 = vrot.slane %v2526, 4
      %v2529 = vor.u32 %v2528, %v2524
      %v2530 = vrot.slane %v2529, 4
      %v2532 = vshll.u32 %v2298, 16
      %v2534 = vrot.slane %v2532, 5
      %v2535 = vsel %vm1225, %v2530, %v2534
      %v2537 = vshrl.u32 %v2299, 16
      %v2539 = vrot.slane %v2537, 4
      %v2540 = vshll.u32 %v2299, 16
      %v2542 = vrot.slane %v2540, 5
      %v2543 = vor.u32 %v2539, %v2542
      %v2544 = vrot.slane %v2543, 4
      %v2546 = vshll.u32 %v2300, 16
      %v2548 = vrot.slane %v2546, 5
      %v2549 = vsel %vm1225, %v2544, %v2548
      %v2550 = vshrl.u32 %v2300, 16
      %v2552 = vrot.slane %v2550, 4
      %v2553 = vor.u32 %v2552, %v2548
      %v2554 = vrot.slane %v2553, 4
      %v2556 = vshll.u32 %v2301, 16
      %v2558 = vrot.slane %v2556, 5
      %v2559 = vsel %vm1225, %v2554, %v2558
      %v2561 = vshrl.u32 %v2302, 16
      %v2563 = vrot.slane %v2561, 4
      %v2564 = vshll.u32 %v2302, 16
      %v2566 = vrot.slane %v2564, 5
      %v2567 = vor.u32 %v2563, %v2566
      %v2568 = vrot.slane %v2567, 4
      %v2570 = vshll.u32 %v2303, 16
      %v2572 = vrot.slane %v2570, 5
      %v2573 = vsel %vm1225, %v2568, %v2572
      %v2574 = vshrl.u32 %v2303, 16
      %v2576 = vrot.slane %v2574, 4
      %v2577 = vor.u32 %v2576, %v2572
      %v2578 = vrot.slane %v2577, 4
      %v2580 = vshll.u32 %v2304, 16
      %v2582 = vrot.slane %v2580, 5
      %v2583 = vsel %vm1225, %v2578, %v2582
      %v2585 = vshrl.u32 %v2305, 16
      %v2587 = vrot.slane %v2585, 4
      %v2588 = vshll.u32 %v2305, 16
      %v2590 = vrot.slane %v2588, 5
      %v2591 = vor.u32 %v2587, %v2590
      %v2592 = vrot.slane %v2591, 4
      %v2594 = vshll.u32 %v2306, 16
      %v2596 = vrot.slane %v2594, 5
      %v2597 = vsel %vm1225, %v2592, %v2596
      %v2598 = vshrl.u32 %v2306, 16
      %v2600 = vrot.slane %v2598, 4
      %v2601 = vor.u32 %v2600, %v2596
      %v2602 = vrot.slane %v2601, 4
      %v2604 = vshll.u32 %v2307, 16
      %v2606 = vrot.slane %v2604, 5
      %v2607 = vsel %vm1225, %v2602, %v2606
      %v2609 = vshrl.u32 %v2308, 16
      %v2611 = vrot.slane %v2609, 4
      %v2612 = vshll.u32 %v2308, 16
      %v2614 = vrot.slane %v2612, 5
      %v2615 = vor.u32 %v2611, %v2614
      %v2616 = vrot.slane %v2615, 4
      %v2618 = vshll.u32 %v2309, 16
      %v2620 = vrot.slane %v2618, 5
      %v2621 = vsel %vm1225, %v2616, %v2620
      %v2622 = vshrl.u32 %v2309, 16
      %v2624 = vrot.slane %v2622, 4
      %v2625 = vor.u32 %v2624, %v2620
      %v2626 = vrot.slane %v2625, 4
      %v2628 = vshll.u32 %v2310, 16
      %v2630 = vrot.slane %v2628, 5
      %v2631 = vsel %vm1225, %v2626, %v2630
      %v2633 = vshrl.u32 %v2311, 16
      %v2635 = vrot.slane %v2633, 4
      %v2636 = vshll.u32 %v2311, 16
      %v2638 = vrot.slane %v2636, 5
      %v2639 = vor.u32 %v2635, %v2638
      %v2640 = vrot.slane %v2639, 4
      %v2642 = vshll.u32 %v2312, 16
      %v2644 = vrot.slane %v2642, 5
      %v2645 = vsel %vm1225, %v2640, %v2644
      %v2646 = vshrl.u32 %v2312, 16
      %v2648 = vrot.slane %v2646, 4
      %v2649 = vor.u32 %v2648, %v2644
      %v2650 = vrot.slane %v2649, 4
      %v2652 = vshll.u32 %v2313, 16
      %v2654 = vrot.slane %v2652, 5
      %v2655 = vsel %vm1225, %v2650, %v2654
      %v2657 = vshrl.u32 %v2314, 16
      %v2659 = vrot.slane %v2657, 4
      %v2660 = vshll.u32 %v2314, 16
      %v2662 = vrot.slane %v2660, 5
      %v2663 = vor.u32 %v2659, %v2662
      %v2664 = vrot.slane %v2663, 4
      %v2666 = vshll.u32 %v2315, 16
      %v2668 = vrot.slane %v2666, 5
      %v2669 = vsel %vm1225, %v2664, %v2668
      %v2670 = vshrl.u32 %v2315, 16
      %v2672 = vrot.slane %v2670, 4
      %v2673 = vor.u32 %v2672, %v2668
      %v2674 = vrot.slane %v2673, 4
      %v2676 = vshll.u32 %v2316, 16
      %v2678 = vrot.slane %v2676, 5
      %v2679 = vsel %vm1225, %v2674, %v2678
      %v2681 = vshrl.u32 %v2317, 16
      %v2683 = vrot.slane %v2681, 4
      %v2684 = vshll.u32 %v2317, 16
      %v2686 = vrot.slane %v2684, 5
      %v2687 = vor.u32 %v2683, %v2686
      %v2688 = vrot.slane %v2687, 4
      %v2690 = vshll.u32 %v2318, 16
      %v2692 = vrot.slane %v2690, 5
      %v2693 = vsel %vm1225, %v2688, %v2692
      %v2694 = vshrl.u32 %v2318, 16
      %v2696 = vrot.slane %v2694, 4
      %v2697 = vor.u32 %v2696, %v2692
      %v2698 = vrot.slane %v2697, 4
      %v2700 = vshll.u32 %v2319, 16
      %v2702 = vrot.slane %v2700, 5
      %v2703 = vsel %vm1225, %v2698, %v2702
      %2704 = vrot.lane.b32.xlu0 %v2333, 16
      %v2705 = vpop.permute.xlu0 %2704
      %2706 = vrot.lane.b32.xlu0 %v2343, 16
      %v2707 = vpop.permute.xlu0 %2706
      %2708 = vrot.lane.b32.xlu0 %v2357, 16
      %v2709 = vpop.permute.xlu0 %2708
      %2710 = vrot.lane.b32.xlu0 %v2367, 16
      %v2711 = vpop.permute.xlu0 %2710
      %2712 = vrot.lane.b32.xlu0 %v2381, 16
      %v2713 = vpop.permute.xlu0 %2712
      %2714 = vrot.lane.b32.xlu0 %v2391, 16
      %v2715 = vpop.permute.xlu0 %2714
      %2716 = vrot.lane.b32.xlu0 %v2405, 16
      %v2717 = vpop.permute.xlu0 %2716
      %2718 = vrot.lane.b32.xlu0 %v2415, 16
      %v2719 = vpop.permute.xlu0 %2718
      %2720 = vrot.lane.b32.xlu0 %v2429, 16
      %v2721 = vpop.permute.xlu0 %2720
      %2722 = vrot.lane.b32.xlu0 %v2439, 16
      %v2723 = vpop.permute.xlu0 %2722
      %2724 = vrot.lane.b32.xlu0 %v2453, 16
      %v2725 = vpop.permute.xlu0 %2724
      %2726 = vrot.lane.b32.xlu0 %v2463, 16
      %v2727 = vpop.permute.xlu0 %2726
      %2728 = vrot.lane.b32.xlu0 %v2477, 16
      %v2729 = vpop.permute.xlu0 %2728
      %2730 = vrot.lane.b32.xlu0 %v2487, 16
      %v2731 = vpop.permute.xlu0 %2730
      %2732 = vrot.lane.b32.xlu0 %v2501, 16
      %v2733 = vpop.permute.xlu0 %2732
      %2734 = vrot.lane.b32.xlu0 %v2511, 16
      %v2735 = vpop.permute.xlu0 %2734
      %2736 = vrot.lane.b32.xlu0 %v2525, 16
      %v2737 = vpop.permute.xlu0 %2736
      %2738 = vrot.lane.b32.xlu0 %v2535, 16
      %v2739 = vpop.permute.xlu0 %2738
      %2740 = vrot.lane.b32.xlu0 %v2549, 16
      %v2741 = vpop.permute.xlu0 %2740
      %2742 = vrot.lane.b32.xlu0 %v2559, 16
      %v2743 = vpop.permute.xlu0 %2742
      %2744 = vrot.lane.b32.xlu0 %v2573, 16
      %v2745 = vpop.permute.xlu0 %2744
      %2746 = vrot.lane.b32.xlu0 %v2583, 16
      %v2747 = vpop.permute.xlu0 %2746
      %2748 = vrot.lane.b32.xlu0 %v2597, 16
      %v2749 = vpop.permute.xlu0 %2748
      %2750 = vrot.lane.b32.xlu0 %v2607, 16
      %v2751 = vpop.permute.xlu0 %2750
      %2752 = vrot.lane.b32.xlu0 %v2621, 16
      %v2753 = vpop.permute.xlu0 %2752
      %2754 = vrot.lane.b32.xlu0 %v2631, 16
      %v2755 = vpop.permute.xlu0 %2754
      %2756 = vrot.lane.b32.xlu0 %v2645, 16
      %v2757 = vpop.permute.xlu0 %2756
      %2758 = vrot.lane.b32.xlu0 %v2655, 16
      %v2759 = vpop.permute.xlu0 %2758
      %2760 = vrot.lane.b32.xlu0 %v2669, 16
      %v2761 = vpop.permute.xlu0 %2760
      %2762 = vrot.lane.b32.xlu0 %v2679, 16
      %v2763 = vpop.permute.xlu0 %2762
      %2764 = vrot.lane.b32.xlu0 %v2693, 16
      %v2765 = vpop.permute.xlu0 %2764
      %2766 = vrot.lane.b32.xlu0 %v2703, 16
      %v2767 = vpop.permute.xlu0 %2766
      %vm2800 = vcmask 158848
      %2801 = vst.msk [vmem:[#allocation3] sm:$0xf] %vm2800, %v2705
      %2802 = vst.msk [vmem:[#allocation3 + $0x4] sm:$0xf] %vm2800, %v2707
      %2803 = vst.msk [vmem:[#allocation3 + $0x8] sm:$0xf] %vm2800, %v2709
      %2804 = vst.msk [vmem:[#allocation3 + $0xc] sm:$0xf] %vm2800, %v2711
      %2805 = vst.msk [vmem:[#allocation3 + $0x10] sm:$0xf] %vm2800, %v2713
      %2806 = vst.msk [vmem:[#allocation3 + $0x14] sm:$0xf] %vm2800, %v2715
      %2807 = vst.msk [vmem:[#allocation3 + $0x18] sm:$0xf] %vm2800, %v2717
      %2808 = vst.msk [vmem:[#allocation3 + $0x1c] sm:$0xf] %vm2800, %v2719
      %2809 = vst.msk [vmem:[#allocation3 + $0x20] sm:$0xf] %vm2800, %v2721
      %2810 = vst.msk [vmem:[#allocation3 + $0x24] sm:$0xf] %vm2800, %v2723
      %2811 = vst.msk [vmem:[#allocation3 + $0x28] sm:$0xf] %vm2800, %v2725
      %2812 = vst.msk [vmem:[#allocation3 + $0x2c] sm:$0xf] %vm2800, %v2727
      %2813 = vst.msk [vmem:[#allocation3 + $0x30] sm:$0xf] %vm2800, %v2729
      %2814 = vst.msk [vmem:[#allocation3 + $0x34] sm:$0xf] %vm2800, %v2731
      %2815 = vst.msk [vmem:[#allocation3 + $0x38] sm:$0xf] %vm2800, %v2733
      %2816 = vst.msk [vmem:[#allocation3 + $0x3c] sm:$0xf] %vm2800, %v2735
      %2817 = vst.msk [vmem:[#allocation3 + $0x40] sm:$0xf] %vm2800, %v2737
      %2818 = vst.msk [vmem:[#allocation3 + $0x44] sm:$0xf] %vm2800, %v2739
      %2819 = vst.msk [vmem:[#allocation3 + $0x48] sm:$0xf] %vm2800, %v2741
      %2820 = vst.msk [vmem:[#allocation3 + $0x4c] sm:$0xf] %vm2800, %v2743
      %2821 = vst.msk [vmem:[#allocation3 + $0x50] sm:$0xf] %vm2800, %v2745
      %2822 = vst.msk [vmem:[#allocation3 + $0x54] sm:$0xf] %vm2800, %v2747
      %2823 = vst.msk [vmem:[#allocation3 + $0x58] sm:$0xf] %vm2800, %v2749
      %2824 = vst.msk [vmem:[#allocation3 + $0x5c] sm:$0xf] %vm2800, %v2751
      %2825 = vst.msk [vmem:[#allocation3 + $0x60] sm:$0xf] %vm2800, %v2753
      %2826 = vst.msk [vmem:[#allocation3 + $0x64] sm:$0xf] %vm2800, %v2755
      %2827 = vst.msk [vmem:[#allocation3 + $0x68] sm:$0xf] %vm2800, %v2757
      %2828 = vst.msk [vmem:[#allocation3 + $0x6c] sm:$0xf] %vm2800, %v2759
      %2829 = vst.msk [vmem:[#allocation3 + $0x70] sm:$0xf] %vm2800, %v2761
      %2830 = vst.msk [vmem:[#allocation3 + $0x74] sm:$0xf] %vm2800, %v2763
      %2831 = vst.msk [vmem:[#allocation3 + $0x78] sm:$0xf] %vm2800, %v2765
      %2832 = vst.msk [vmem:[#allocation3 + $0x7c] sm:$0xf] %vm2800, %v2767
      %v2833 = vld [vmem:[%s996] sm:$0xe]
      %v2834 = vld [vmem:[%s996 + $0x4] sm:$0xf]
      %v2835 = vld [vmem:[%s996 + $0x8] sm:$0x1]
      %v2836 = vld [vmem:[%s996 + $0xc] sm:$0xe]
      %v2837 = vld [vmem:[%s996 + $0x10] sm:$0xf]
      %v2838 = vld [vmem:[%s996 + $0x14] sm:$0x1]
      %v2839 = vld [vmem:[%s996 + $0x18] sm:$0xe]
      %v2840 = vld [vmem:[%s996 + $0x1c] sm:$0xf]
      %v2841 = vld [vmem:[%s996 + $0x20] sm:$0x1]
      %v2842 = vld [vmem:[%s996 + $0x24] sm:$0xe]
      %v2843 = vld [vmem:[%s996 + $0x28] sm:$0xf]
      %v2844 = vld [vmem:[%s996 + $0x2c] sm:$0x1]
      %v2845 = vld [vmem:[%s996 + $0x30] sm:$0xe]
      %v2846 = vld [vmem:[%s996 + $0x34] sm:$0xf]
      %v2847 = vld [vmem:[%s996 + $0x38] sm:$0x1]
      %v2848 = vld [vmem:[%s996 + $0x3c] sm:$0xe]
      %v2849 = vld [vmem:[%s996 + $0x40] sm:$0xf]
      %v2850 = vld [vmem:[%s996 + $0x44] sm:$0x1]
      %v2851 = vld [vmem:[%s996 + $0x48] sm:$0xe]
      %v2852 = vld [vmem:[%s996 + $0x4c] sm:$0xf]
      %v2853 = vld [vmem:[%s996 + $0x50] sm:$0x1]
      %v2854 = vld [vmem:[%s996 + $0x54] sm:$0xe]
      %v2855 = vld [vmem:[%s996 + $0x58] sm:$0xf]
      %v2856 = vld [vmem:[%s996 + $0x5c] sm:$0x1]
      %v2857 = vld [vmem:[%s996 + $0x60] sm:$0xe]
      %v2858 = vld [vmem:[%s996 + $0x64] sm:$0xf]
      %v2859 = vld [vmem:[%s996 + $0x68] sm:$0x1]
      %v2860 = vld [vmem:[%s996 + $0x6c] sm:$0xe]
      %v2861 = vld [vmem:[%s996 + $0x70] sm:$0xf]
      %v2862 = vld [vmem:[%s996 + $0x74] sm:$0x1]
      %v2863 = vld [vmem:[%s996 + $0x78] sm:$0xe]
      %v2864 = vld [vmem:[%s996 + $0x7c] sm:$0xf]
      %v2865 = vld [vmem:[%s996 + $0x80] sm:$0x1]
      %v2866 = vld [vmem:[%s996 + $0x84] sm:$0xe]
      %v2867 = vld [vmem:[%s996 + $0x88] sm:$0xf]
      %v2868 = vld [vmem:[%s996 + $0x8c] sm:$0x1]
      %v2869 = vld [vmem:[%s996 + $0x90] sm:$0xe]
      %v2870 = vld [vmem:[%s996 + $0x94] sm:$0xf]
      %v2871 = vld [vmem:[%s996 + $0x98] sm:$0x1]
      %v2872 = vld [vmem:[%s996 + $0x9c] sm:$0xe]
      %v2873 = vld [vmem:[%s996 + $0xa0] sm:$0xf]
      %v2874 = vld [vmem:[%s996 + $0xa4] sm:$0x1]
      %v2875 = vld [vmem:[%s996 + $0xa8] sm:$0xe]
      %v2876 = vld [vmem:[%s996 + $0xac] sm:$0xf]
      %v2877 = vld [vmem:[%s996 + $0xb0] sm:$0x1]
      %v2878 = vld [vmem:[%s996 + $0xb4] sm:$0xe]
      %v2879 = vld [vmem:[%s996 + $0xb8] sm:$0xf]
      %v2880 = vld [vmem:[%s996 + $0xbc] sm:$0x1]
      %v2929 = vrot.slane %v2833, 5
      %v2930 = vrot.slane %v2929, 4
      %v2931 = vrot.slane %v2834, 5
      %v2932 = vsel %vm1837, %v2930, %v2931
      %v2933 = vrot.slane %v2931, 4
      %v2934 = vrot.slane %v2835, 5
      %v2935 = vsel %vm1837, %v2933, %v2934
      %v2936 = vrot.slane %v2836, 5
      %v2937 = vrot.slane %v2936, 4
      %v2938 = vrot.slane %v2837, 5
      %v2939 = vsel %vm1837, %v2937, %v2938
      %v2940 = vrot.slane %v2938, 4
      %v2941 = vrot.slane %v2838, 5
      %v2942 = vsel %vm1837, %v2940, %v2941
      %v2943 = vrot.slane %v2839, 5
      %v2944 = vrot.slane %v2943, 4
      %v2945 = vrot.slane %v2840, 5
      %v2946 = vsel %vm1837, %v2944, %v2945
      %v2947 = vrot.slane %v2945, 4
      %v2948 = vrot.slane %v2841, 5
      %v2949 = vsel %vm1837, %v2947, %v2948
      %v2950 = vrot.slane %v2842, 5
      %v2951 = vrot.slane %v2950, 4
      %v2952 = vrot.slane %v2843, 5
      %v2953 = vsel %vm1837, %v2951, %v2952
      %v2954 = vrot.slane %v2952, 4
      %v2955 = vrot.slane %v2844, 5
      %v2956 = vsel %vm1837, %v2954, %v2955
      %v2957 = vrot.slane %v2845, 5
      %v2958 = vrot.slane %v2957, 4
      %v2959 = vrot.slane %v2846, 5
      %v2960 = vsel %vm1837, %v2958, %v2959
      %v2961 = vrot.slane %v2959, 4
      %v2962 = vrot.slane %v2847, 5
      %v2963 = vsel %vm1837, %v2961, %v2962
      %v2964 = vrot.slane %v2848, 5
      %v2965 = vrot.slane %v2964, 4
      %v2966 = vrot.slane %v2849, 5
      %v2967 = vsel %vm1837, %v2965, %v2966
      %v2968 = vrot.slane %v2966, 4
      %v2969 = vrot.slane %v2850, 5
      %v2970 = vsel %vm1837, %v2968, %v2969
      %v2971 = vrot.slane %v2851, 5
      %v2972 = vrot.slane %v2971, 4
      %v2973 = vrot.slane %v2852, 5
      %v2974 = vsel %vm1837, %v2972, %v2973
      %v2975 = vrot.slane %v2973, 4
      %v2976 = vrot.slane %v2853, 5
      %v2977 = vsel %vm1837, %v2975, %v2976
      %v2978 = vrot.slane %v2854, 5
      %v2979 = vrot.slane %v2978, 4
      %v2980 = vrot.slane %v2855, 5
      %v2981 = vsel %vm1837, %v2979, %v2980
      %v2982 = vrot.slane %v2980, 4
      %v2983 = vrot.slane %v2856, 5
      %v2984 = vsel %vm1837, %v2982, %v2983
      %v2985 = vrot.slane %v2857, 5
      %v2986 = vrot.slane %v2985, 4
      %v2987 = vrot.slane %v2858, 5
      %v2988 = vsel %vm1837, %v2986, %v2987
      %v2989 = vrot.slane %v2987, 4
      %v2990 = vrot.slane %v2859, 5
      %v2991 = vsel %vm1837, %v2989, %v2990
      %v2992 = vrot.slane %v2860, 5
      %v2993 = vrot.slane %v2992, 4
      %v2994 = vrot.slane %v2861, 5
      %v2995 = vsel %vm1837, %v2993, %v2994
      %v2996 = vrot.slane %v2994, 4
      %v2997 = vrot.slane %v2862, 5
      %v2998 = vsel %vm1837, %v2996, %v2997
      %v2999 = vrot.slane %v2863, 5
      %v3000 = vrot.slane %v2999, 4
      %v3001 = vrot.slane %v2864, 5
      %v3002 = vsel %vm1837, %v3000, %v3001
      %v3003 = vrot.slane %v3001, 4
      %v3004 = vrot.slane %v2865, 5
      %v3005 = vsel %vm1837, %v3003, %v3004
      %v3006 = vrot.slane %v2866, 5
      %v3007 = vrot.slane %v3006, 4
      %v3008 = vrot.slane %v2867, 5
      %v3009 = vsel %vm1837, %v3007, %v3008
      %v3010 = vrot.slane %v3008, 4
      %v3011 = vrot.slane %v2868, 5
      %v3012 = vsel %vm1837, %v3010, %v3011
      %v3013 = vrot.slane %v2869, 5
      %v3014 = vrot.slane %v3013, 4
      %v3015 = vrot.slane %v2870, 5
      %v3016 = vsel %vm1837, %v3014, %v3015
      %v3017 = vrot.slane %v3015, 4
      %v3018 = vrot.slane %v2871, 5
      %v3019 = vsel %vm1837, %v3017, %v3018
      %v3020 = vrot.slane %v2872, 5
      %v3021 = vrot.slane %v3020, 4
      %v3022 = vrot.slane %v2873, 5
      %v3023 = vsel %vm1837, %v3021, %v3022
      %v3024 = vrot.slane %v3022, 4
      %v3025 = vrot.slane %v2874, 5
      %v3026 = vsel %vm1837, %v3024, %v3025
      %v3027 = vrot.slane %v2875, 5
      %v3028 = vrot.slane %v3027, 4
      %v3029 = vrot.slane %v2876, 5
      %v3030 = vsel %vm1837, %v3028, %v3029
      %v3031 = vrot.slane %v3029, 4
      %v3032 = vrot.slane %v2877, 5
      %v3033 = vsel %vm1837, %v3031, %v3032
      %v3034 = vrot.slane %v2878, 5
      %v3035 = vrot.slane %v3034, 4
      %v3036 = vrot.slane %v2879, 5
      %v3037 = vsel %vm1837, %v3035, %v3036
      %v3038 = vrot.slane %v3036, 4
      %v3039 = vrot.slane %v2880, 5
      %v3040 = vsel %vm1837, %v3038, %v3039
      %3041 = vrot.lane.b32.xlu0 %v2932, 20
      %v3042 = vpop.permute.xlu0 %3041
      %3043 = vrot.lane.b32.xlu0 %v2935, 20
      %v3044 = vpop.permute.xlu0 %3043
      %3045 = vrot.lane.b32.xlu0 %v2939, 20
      %v3046 = vpop.permute.xlu0 %3045
      %3047 = vrot.lane.b32.xlu0 %v2942, 20
      %v3048 = vpop.permute.xlu0 %3047
      %3049 = vrot.lane.b32.xlu0 %v2946, 20
      %v3050 = vpop.permute.xlu0 %3049
      %3051 = vrot.lane.b32.xlu0 %v2949, 20
      %v3052 = vpop.permute.xlu0 %3051
      %3053 = vrot.lane.b32.xlu0 %v2953, 20
      %v3054 = vpop.permute.xlu0 %3053
      %3055 = vrot.lane.b32.xlu0 %v2956, 20
      %v3056 = vpop.permute.xlu0 %3055
      %3057 = vrot.lane.b32.xlu0 %v2960, 20
      %v3058 = vpop.permute.xlu0 %3057
      %3059 = vrot.lane.b32.xlu0 %v2963, 20
      %v3060 = vpop.permute.xlu0 %3059
      %3061 = vrot.lane.b32.xlu0 %v2967, 20
      %v3062 = vpop.permute.xlu0 %3061
      %3063 = vrot.lane.b32.xlu0 %v2970, 20
      %v3064 = vpop.permute.xlu0 %3063
      %3065 = vrot.lane.b32.xlu0 %v2974, 20
      %v3066 = vpop.permute.xlu0 %3065
      %3067 = vrot.lane.b32.xlu0 %v2977, 20
      %v3068 = vpop.permute.xlu0 %3067
      %3069 = vrot.lane.b32.xlu0 %v2981, 20
      %v3070 = vpop.permute.xlu0 %3069
      %3071 = vrot.lane.b32.xlu0 %v2984, 20
      %v3072 = vpop.permute.xlu0 %3071
      %3073 = vrot.lane.b32.xlu0 %v2988, 20
      %v3074 = vpop.permute.xlu0 %3073
      %3075 = vrot.lane.b32.xlu0 %v2991, 20
      %v3076 = vpop.permute.xlu0 %3075
      %3077 = vrot.lane.b32.xlu0 %v2995, 20
      %v3078 = vpop.permute.xlu0 %3077
      %3079 = vrot.lane.b32.xlu0 %v2998, 20
      %v3080 = vpop.permute.xlu0 %3079
      %3081 = vrot.lane.b32.xlu0 %v3002, 20
      %v3082 = vpop.permute.xlu0 %3081
      %3083 = vrot.lane.b32.xlu0 %v3005, 20
      %v3084 = vpop.permute.xlu0 %3083
      %3085 = vrot.lane.b32.xlu0 %v3009, 20
      %v3086 = vpop.permute.xlu0 %3085
      %3087 = vrot.lane.b32.xlu0 %v3012, 20
      %v3088 = vpop.permute.xlu0 %3087
      %3089 = vrot.lane.b32.xlu0 %v3016, 20
      %v3090 = vpop.permute.xlu0 %3089
      %3091 = vrot.lane.b32.xlu0 %v3019, 20
      %v3092 = vpop.permute.xlu0 %3091
      %3093 = vrot.lane.b32.xlu0 %v3023, 20
      %v3094 = vpop.permute.xlu0 %3093
      %3095 = vrot.lane.b32.xlu0 %v3026, 20
      %v3096 = vpop.permute.xlu0 %3095
      %3097 = vrot.lane.b32.xlu0 %v3030, 20
      %v3098 = vpop.permute.xlu0 %3097
      %3099 = vrot.lane.b32.xlu0 %v3033, 20
      %v3100 = vpop.permute.xlu0 %3099
      %3101 = vrot.lane.b32.xlu0 %v3037, 20
      %v3102 = vpop.permute.xlu0 %3101
      %3103 = vrot.lane.b32.xlu0 %v3040, 20
      %v3104 = vpop.permute.xlu0 %3103
      %vm3137 = vcmask 191648
      %3138 = vst.msk [vmem:[#allocation3] sm:$0xf] %vm3137, %v3042
      %3139 = vst.msk [vmem:[#allocation3 + $0x4] sm:$0xf] %vm3137, %v3044
      %3140 = vst.msk [vmem:[#allocation3 + $0x8] sm:$0xf] %vm3137, %v3046
      %3141 = vst.msk [vmem:[#allocation3 + $0xc] sm:$0xf] %vm3137, %v3048
      %3142 = vst.msk [vmem:[#allocation3 + $0x10] sm:$0xf] %vm3137, %v3050
      %3143 = vst.msk [vmem:[#allocation3 + $0x14] sm:$0xf] %vm3137, %v3052
      %3144 = vst.msk [vmem:[#allocation3 + $0x18] sm:$0xf] %vm3137, %v3054
      %3145 = vst.msk [vmem:[#allocation3 + $0x1c] sm:$0xf] %vm3137, %v3056
      %3146 = vst.msk [vmem:[#allocation3 + $0x20] sm:$0xf] %vm3137, %v3058
      %3147 = vst.msk [vmem:[#allocation3 + $0x24] sm:$0xf] %vm3137, %v3060
      %3148 = vst.msk [vmem:[#allocation3 + $0x28] sm:$0xf] %vm3137, %v3062
      %3149 = vst.msk [vmem:[#allocation3 + $0x2c] sm:$0xf] %vm3137, %v3064
      %3150 = vst.msk [vmem:[#allocation3 + $0x30] sm:$0xf] %vm3137, %v3066
      %3151 = vst.msk [vmem:[#allocation3 + $0x34] sm:$0xf] %vm3137, %v3068
      %3152 = vst.msk [vmem:[#allocation3 + $0x38] sm:$0xf] %vm3137, %v3070
      %3153 = vst.msk [vmem:[#allocation3 + $0x3c] sm:$0xf] %vm3137, %v3072
      %3154 = vst.msk [vmem:[#allocation3 + $0x40] sm:$0xf] %vm3137, %v3074
      %3155 = vst.msk [vmem:[#allocation3 + $0x44] sm:$0xf] %vm3137, %v3076
      %3156 = vst.msk [vmem:[#allocation3 + $0x48] sm:$0xf] %vm3137, %v3078
      %3157 = vst.msk [vmem:[#allocation3 + $0x4c] sm:$0xf] %vm3137, %v3080
      %3158 = vst.msk [vmem:[#allocation3 + $0x50] sm:$0xf] %vm3137, %v3082
      %3159 = vst.msk [vmem:[#allocation3 + $0x54] sm:$0xf] %vm3137, %v3084
      %3160 = vst.msk [vmem:[#allocation3 + $0x58] sm:$0xf] %vm3137, %v3086
      %3161 = vst.msk [vmem:[#allocation3 + $0x5c] sm:$0xf] %vm3137, %v3088
      %3162 = vst.msk [vmem:[#allocation3 + $0x60] sm:$0xf] %vm3137, %v3090
      %3163 = vst.msk [vmem:[#allocation3 + $0x64] sm:$0xf] %vm3137, %v3092
      %3164 = vst.msk [vmem:[#allocation3 + $0x68] sm:$0xf] %vm3137, %v3094
      %3165 = vst.msk [vmem:[#allocation3 + $0x6c] sm:$0xf] %vm3137, %v3096
      %3166 = vst.msk [vmem:[#allocation3 + $0x70] sm:$0xf] %vm3137, %v3098
      %3167 = vst.msk [vmem:[#allocation3 + $0x74] sm:$0xf] %vm3137, %v3100
      %3168 = vst.msk [vmem:[#allocation3 + $0x78] sm:$0xf] %vm3137, %v3102
      %3169 = vst.msk [vmem:[#allocation3 + $0x7c] sm:$0xf] %vm3137, %v3104
      %s3170 = scalar_lea.vmem [#allocation2], 24
      %v3171 = vld [vmem:[%s3170] sm:$0xf]
      %v3172 = vld [vmem:[%s3170 + $0x4] sm:$0xf]
      %v3173 = vld [vmem:[%s3170 + $0xc] sm:$0xf]
      %v3174 = vld [vmem:[%s3170 + $0x10] sm:$0xf]
      %v3175 = vld [vmem:[%s3170 + $0x18] sm:$0xf]
      %v3176 = vld [vmem:[%s3170 + $0x1c] sm:$0xf]
      %v3177 = vld [vmem:[%s3170 + $0x24] sm:$0xf]
      %v3178 = vld [vmem:[%s3170 + $0x28] sm:$0xf]
      %v3179 = vld [vmem:[%s3170 + $0x30] sm:$0xf]
      %v3180 = vld [vmem:[%s3170 + $0x34] sm:$0xf]
      %v3181 = vld [vmem:[%s3170 + $0x3c] sm:$0xf]
      %v3182 = vld [vmem:[%s3170 + $0x40] sm:$0xf]
      %v3183 = vld [vmem:[%s3170 + $0x48] sm:$0xf]
      %v3184 = vld [vmem:[%s3170 + $0x4c] sm:$0xf]
      %v3185 = vld [vmem:[%s3170 + $0x54] sm:$0xf]
      %v3186 = vld [vmem:[%s3170 + $0x58] sm:$0xf]
      %v3187 = vld [vmem:[%s3170 + $0x60] sm:$0xf]
      %v3188 = vld [vmem:[%s3170 + $0x64] sm:$0xf]
      %v3189 = vld [vmem:[%s3170 + $0x6c] sm:$0xf]
      %v3190 = vld [vmem:[%s3170 + $0x70] sm:$0xf]
      %v3191 = vld [vmem:[%s3170 + $0x78] sm:$0xf]
      %v3192 = vld [vmem:[%s3170 + $0x7c] sm:$0xf]
      %v3193 = vld [vmem:[%s3170 + $0x84] sm:$0xf]
      %v3194 = vld [vmem:[%s3170 + $0x88] sm:$0xf]
      %v3195 = vld [vmem:[%s3170 + $0x90] sm:$0xf]
      %v3196 = vld [vmem:[%s3170 + $0x94] sm:$0xf]
      %v3197 = vld [vmem:[%s3170 + $0x9c] sm:$0xf]
      %v3198 = vld [vmem:[%s3170 + $0xa0] sm:$0xf]
      %v3199 = vld [vmem:[%s3170 + $0xa8] sm:$0xf]
      %v3200 = vld [vmem:[%s3170 + $0xac] sm:$0xf]
      %v3201 = vld [vmem:[%s3170 + $0xb4] sm:$0xf]
      %v3202 = vld [vmem:[%s3170 + $0xb8] sm:$0xf]
      %3235 = vrot.lane.b32.xlu0 %v3171, 24
      %v3236 = vpop.permute.xlu0 %3235
      %3237 = vrot.lane.b32.xlu0 %v3172, 24
      %v3238 = vpop.permute.xlu0 %3237
      %3239 = vrot.lane.b32.xlu0 %v3173, 24
      %v3240 = vpop.permute.xlu0 %3239
      %3241 = vrot.lane.b32.xlu0 %v3174, 24
      %v3242 = vpop.permute.xlu0 %3241
      %3243 = vrot.lane.b32.xlu0 %v3175, 24
      %v3244 = vpop.permute.xlu0 %3243
      %3245 = vrot.lane.b32.xlu0 %v3176, 24
      %v3246 = vpop.permute.xlu0 %3245
      %3247 = vrot.lane.b32.xlu0 %v3177, 24
      %v3248 = vpop.permute.xlu0 %3247
      %3249 = vrot.lane.b32.xlu0 %v3178, 24
      %v3250 = vpop.permute.xlu0 %3249
      %3251 = vrot.lane.b32.xlu0 %v3179, 24
      %v3252 = vpop.permute.xlu0 %3251
      %3253 = vrot.lane.b32.xlu0 %v3180, 24
      %v3254 = vpop.permute.xlu0 %3253
      %3255 = vrot.lane.b32.xlu0 %v3181, 24
      %v3256 = vpop.permute.xlu0 %3255
      %3257 = vrot.lane.b32.xlu0 %v3182, 24
      %v3258 = vpop.permute.xlu0 %3257
      %3259 = vrot.lane.b32.xlu0 %v3183, 24
      %v3260 = vpop.permute.xlu0 %3259
      %3261 = vrot.lane.b32.xlu0 %v3184, 24
      %v3262 = vpop.permute.xlu0 %3261
      %3263 = vrot.lane.b32.xlu0 %v3185, 24
      %v3264 = vpop.permute.xlu0 %3263
      %3265 = vrot.lane.b32.xlu0 %v3186, 24
      %v3266 = vpop.permute.xlu0 %3265
      %3267 = vrot.lane.b32.xlu0 %v3187, 24
      %v3268 = vpop.permute.xlu0 %3267
      %3269 = vrot.lane.b32.xlu0 %v3188, 24
      %v3270 = vpop.permute.xlu0 %3269
      %3271 = vrot.lane.b32.xlu0 %v3189, 24
      %v3272 = vpop.permute.xlu0 %3271
      %3273 = vrot.lane.b32.xlu0 %v3190, 24
      %v3274 = vpop.permute.xlu0 %3273
      %3275 = vrot.lane.b32.xlu0 %v3191, 24
      %v3276 = vpop.permute.xlu0 %3275
      %3277 = vrot.lane.b32.xlu0 %v3192, 24
      %v3278 = vpop.permute.xlu0 %3277
      %3279 = vrot.lane.b32.xlu0 %v3193, 24
      %v3280 = vpop.permute.xlu0 %3279
      %3281 = vrot.lane.b32.xlu0 %v3194, 24
      %v3282 = vpop.permute.xlu0 %3281
      %3283 = vrot.lane.b32.xlu0 %v3195, 24
      %v3284 = vpop.permute.xlu0 %3283
      %3285 = vrot.lane.b32.xlu0 %v3196, 24
      %v3286 = vpop.permute.xlu0 %3285
      %3287 = vrot.lane.b32.xlu0 %v3197, 24
      %v3288 = vpop.permute.xlu0 %3287
      %3289 = vrot.lane.b32.xlu0 %v3198, 24
      %v3290 = vpop.permute.xlu0 %3289
      %3291 = vrot.lane.b32.xlu0 %v3199, 24
      %v3292 = vpop.permute.xlu0 %3291
      %3293 = vrot.lane.b32.xlu0 %v3200, 24
      %v3294 = vpop.permute.xlu0 %3293
      %3295 = vrot.lane.b32.xlu0 %v3201, 24
      %v3296 = vpop.permute.xlu0 %3295
      %3297 = vrot.lane.b32.xlu0 %v3202, 24
      %v3298 = vpop.permute.xlu0 %3297
      %vm3331 = vcmask 224448
      %3332 = vst.msk [vmem:[#allocation3] sm:$0xf] %vm3331, %v3236
      %3333 = vst.msk [vmem:[#allocation3 + $0x4] sm:$0xf] %vm3331, %v3238
      %3334 = vst.msk [vmem:[#allocation3 + $0x8] sm:$0xf] %vm3331, %v3240
      %3335 = vst.msk [vmem:[#allocation3 + $0xc] sm:$0xf] %vm3331, %v3242
      %3336 = vst.msk [vmem:[#allocation3 + $0x10] sm:$0xf] %vm3331, %v3244
      %3337 = vst.msk [vmem:[#allocation3 + $0x14] sm:$0xf] %vm3331, %v3246
      %3338 = vst.msk [vmem:[#allocation3 + $0x18] sm:$0xf] %vm3331, %v3248
      %3339 = vst.msk [vmem:[#allocation3 + $0x1c] sm:$0xf] %vm3331, %v3250
      %3340 = vst.msk [vmem:[#allocation3 + $0x20] sm:$0xf] %vm3331, %v3252
      %3341 = vst.msk [vmem:[#allocation3 + $0x24] sm:$0xf] %vm3331, %v3254
      %3342 = vst.msk [vmem:[#allocation3 + $0x28] sm:$0xf] %vm3331, %v3256
      %3343 = vst.msk [vmem:[#allocation3 + $0x2c] sm:$0xf] %vm3331, %v3258
      %3344 = vst.msk [vmem:[#allocation3 + $0x30] sm:$0xf] %vm3331, %v3260
      %3345 = vst.msk [vmem:[#allocation3 + $0x34] sm:$0xf] %vm3331, %v3262
      %3346 = vst.msk [vmem:[#allocation3 + $0x38] sm:$0xf] %vm3331, %v3264
      %3347 = vst.msk [vmem:[#allocation3 + $0x3c] sm:$0xf] %vm3331, %v3266
      %3348 = vst.msk [vmem:[#allocation3 + $0x40] sm:$0xf] %vm3331, %v3268
      %3349 = vst.msk [vmem:[#allocation3 + $0x44] sm:$0xf] %vm3331, %v3270
      %3350 = vst.msk [vmem:[#allocation3 + $0x48] sm:$0xf] %vm3331, %v3272
      %3351 = vst.msk [vmem:[#allocation3 + $0x4c] sm:$0xf] %vm3331, %v3274
      %3352 = vst.msk [vmem:[#allocation3 + $0x50] sm:$0xf] %vm3331, %v3276
      %3353 = vst.msk [vmem:[#allocation3 + $0x54] sm:$0xf] %vm3331, %v3278
      %3354 = vst.msk [vmem:[#allocation3 + $0x58] sm:$0xf] %vm3331, %v3280
      %3355 = vst.msk [vmem:[#allocation3 + $0x5c] sm:$0xf] %vm3331, %v3282
      %3356 = vst.msk [vmem:[#allocation3 + $0x60] sm:$0xf] %vm3331, %v3284
      %3357 = vst.msk [vmem:[#allocation3 + $0x64] sm:$0xf] %vm3331, %v3286
      %3358 = vst.msk [vmem:[#allocation3 + $0x68] sm:$0xf] %vm3331, %v3288
      %3359 = vst.msk [vmem:[#allocation3 + $0x6c] sm:$0xf] %vm3331, %v3290
      %3360 = vst.msk [vmem:[#allocation3 + $0x70] sm:$0xf] %vm3331, %v3292
      %3361 = vst.msk [vmem:[#allocation3 + $0x74] sm:$0xf] %vm3331, %v3294
      %3362 = vst.msk [vmem:[#allocation3 + $0x78] sm:$0xf] %vm3331, %v3296
      %3363 = vst.msk [vmem:[#allocation3 + $0x7c] sm:$0xf] %vm3331, %v3298
      %v3364 = vld [vmem:[%s3170] sm:$0xf]
      %v3365 = vld [vmem:[%s3170 + $0x4] sm:$0xf]
      %v3366 = vld [vmem:[%s3170 + $0x8] sm:$0x1]
      %v3367 = vld [vmem:[%s3170 + $0xc] sm:$0xf]
      %v3368 = vld [vmem:[%s3170 + $0x10] sm:$0xf]
      %v3369 = vld [vmem:[%s3170 + $0x14] sm:$0x1]
      %v3370 = vld [vmem:[%s3170 + $0x18] sm:$0xf]
      %v3371 = vld [vmem:[%s3170 + $0x1c] sm:$0xf]
      %v3372 = vld [vmem:[%s3170 + $0x20] sm:$0x1]
      %v3373 = vld [vmem:[%s3170 + $0x24] sm:$0xf]
      %v3374 = vld [vmem:[%s3170 + $0x28] sm:$0xf]
      %v3375 = vld [vmem:[%s3170 + $0x2c] sm:$0x1]
      %v3376 = vld [vmem:[%s3170 + $0x30] sm:$0xf]
      %v3377 = vld [vmem:[%s3170 + $0x34] sm:$0xf]
      %v3378 = vld [vmem:[%s3170 + $0x38] sm:$0x1]
      %v3379 = vld [vmem:[%s3170 + $0x3c] sm:$0xf]
      %v3380 = vld [vmem:[%s3170 + $0x40] sm:$0xf]
      %v3381 = vld [vmem:[%s3170 + $0x44] sm:$0x1]
      %v3382 = vld [vmem:[%s3170 + $0x48] sm:$0xf]
      %v3383 = vld [vmem:[%s3170 + $0x4c] sm:$0xf]
      %v3384 = vld [vmem:[%s3170 + $0x50] sm:$0x1]
      %v3385 = vld [vmem:[%s3170 + $0x54] sm:$0xf]
      %v3386 = vld [vmem:[%s3170 + $0x58] sm:$0xf]
      %v3387 = vld [vmem:[%s3170 + $0x5c] sm:$0x1]
      %v3388 = vld [vmem:[%s3170 + $0x60] sm:$0xf]
      %v3389 = vld [vmem:[%s3170 + $0x64] sm:$0xf]
      %v3390 = vld [vmem:[%s3170 + $0x68] sm:$0x1]
      %v3391 = vld [vmem:[%s3170 + $0x6c] sm:$0xf]
      %v3392 = vld [vmem:[%s3170 + $0x70] sm:$0xf]
      %v3393 = vld [vmem:[%s3170 + $0x74] sm:$0x1]
      %v3394 = vld [vmem:[%s3170 + $0x78] sm:$0xf]
      %v3395 = vld [vmem:[%s3170 + $0x7c] sm:$0xf]
      %v3396 = vld [vmem:[%s3170 + $0x80] sm:$0x1]
      %v3397 = vld [vmem:[%s3170 + $0x84] sm:$0xf]
      %v3398 = vld [vmem:[%s3170 + $0x88] sm:$0xf]
      %v3399 = vld [vmem:[%s3170 + $0x8c] sm:$0x1]
      %v3400 = vld [vmem:[%s3170 + $0x90] sm:$0xf]
      %v3401 = vld [vmem:[%s3170 + $0x94] sm:$0xf]
      %v3402 = vld [vmem:[%s3170 + $0x98] sm:$0x1]
      %v3403 = vld [vmem:[%s3170 + $0x9c] sm:$0xf]
      %v3404 = vld [vmem:[%s3170 + $0xa0] sm:$0xf]
      %v3405 = vld [vmem:[%s3170 + $0xa4] sm:$0x1]
      %v3406 = vld [vmem:[%s3170 + $0xa8] sm:$0xf]
      %v3407 = vld [vmem:[%s3170 + $0xac] sm:$0xf]
      %v3408 = vld [vmem:[%s3170 + $0xb0] sm:$0x1]
      %v3409 = vld [vmem:[%s3170 + $0xb4] sm:$0xf]
      %v3410 = vld [vmem:[%s3170 + $0xb8] sm:$0xf]
      %v3411 = vld [vmem:[%s3170 + $0xbc] sm:$0x1]
      %v3413 = vshrl.u32 %v3364, 16
      %v3415 = vrot.slane %v3413, 4
      %v3416 = vshll.u32 %v3364, 16
      %v3418 = vrot.slane %v3416, 5
      %v3419 = vor.u32 %v3415, %v3418
      %v3420 = vrot.slane %v3419, 4
      %v3422 = vshll.u32 %v3365, 16
      %v3424 = vrot.slane %v3422, 5
      %v3425 = vsel %vm1225, %v3420, %v3424
      %v3426 = vshrl.u32 %v3365, 16
      %v3428 = vrot.slane %v3426, 4
      %v3429 = vor.u32 %v3428, %v3424
      %v3430 = vrot.slane %v3429, 4
      %v3432 = vshll.u32 %v3366, 16
      %v3434 = vrot.slane %v3432, 5
      %v3435 = vsel %vm1225, %v3430, %v3434
      %v3437 = vshrl.u32 %v3367, 16
      %v3439 = vrot.slane %v3437, 4
      %v3440 = vshll.u32 %v3367, 16
      %v3442 = vrot.slane %v3440, 5
      %v3443 = vor.u32 %v3439, %v3442
      %v3444 = vrot.slane %v3443, 4
      %v3446 = vshll.u32 %v3368, 16
      %v3448 = vrot.slane %v3446, 5
      %v3449 = vsel %vm1225, %v3444, %v3448
      %v3450 = vshrl.u32 %v3368, 16
      %v3452 = vrot.slane %v3450, 4
      %v3453 = vor.u32 %v3452, %v3448
      %v3454 = vrot.slane %v3453, 4
      %v3456 = vshll.u32 %v3369, 16
      %v3458 = vrot.slane %v3456, 5
      %v3459 = vsel %vm1225, %v3454, %v3458
      %v3461 = vshrl.u32 %v3370, 16
      %v3463 = vrot.slane %v3461, 4
      %v3464 = vshll.u32 %v3370, 16
      %v3466 = vrot.slane %v3464, 5
      %v3467 = vor.u32 %v3463, %v3466
      %v3468 = vrot.slane %v3467, 4
      %v3470 = vshll.u32 %v3371, 16
      %v3472 = vrot.slane %v3470, 5
      %v3473 = vsel %vm1225, %v3468, %v3472
      %v3474 = vshrl.u32 %v3371, 16
      %v3476 = vrot.slane %v3474, 4
      %v3477 = vor.u32 %v3476, %v3472
      %v3478 = vrot.slane %v3477, 4
      %v3480 = vshll.u32 %v3372, 16
      %v3482 = vrot.slane %v3480, 5
      %v3483 = vsel %vm1225, %v3478, %v3482
      %v3485 = vshrl.u32 %v3373, 16
      %v3487 = vrot.slane %v3485, 4
      %v3488 = vshll.u32 %v3373, 16
      %v3490 = vrot.slane %v3488, 5
      %v3491 = vor.u32 %v3487, %v3490
      %v3492 = vrot.slane %v3491, 4
      %v3494 = vshll.u32 %v3374, 16
      %v3496 = vrot.slane %v3494, 5
      %v3497 = vsel %vm1225, %v3492, %v3496
      %v3498 = vshrl.u32 %v3374, 16
      %v3500 = vrot.slane %v3498, 4
      %v3501 = vor.u32 %v3500, %v3496
      %v3502 = vrot.slane %v3501, 4
      %v3504 = vshll.u32 %v3375, 16
      %v3506 = vrot.slane %v3504, 5
      %v3507 = vsel %vm1225, %v3502, %v3506
      %v3509 = vshrl.u32 %v3376, 16
      %v3511 = vrot.slane %v3509, 4
      %v3512 = vshll.u32 %v3376, 16
      %v3514 = vrot.slane %v3512, 5
      %v3515 = vor.u32 %v3511, %v3514
      %v3516 = vrot.slane %v3515, 4
      %v3518 = vshll.u32 %v3377, 16
      %v3520 = vrot.slane %v3518, 5
      %v3521 = vsel %vm1225, %v3516, %v3520
      %v3522 = vshrl.u32 %v3377, 16
      %v3524 = vrot.slane %v3522, 4
      %v3525 = vor.u32 %v3524, %v3520
      %v3526 = vrot.slane %v3525, 4
      %v3528 = vshll.u32 %v3378, 16
      %v3530 = vrot.slane %v3528, 5
      %v3531 = vsel %vm1225, %v3526, %v3530
      %v3533 = vshrl.u32 %v3379, 16
      %v3535 = vrot.slane %v3533, 4
      %v3536 = vshll.u32 %v3379, 16
      %v3538 = vrot.slane %v3536, 5
      %v3539 = vor.u32 %v3535, %v3538
      %v3540 = vrot.slane %v3539, 4
      %v3542 = vshll.u32 %v3380, 16
      %v3544 = vrot.slane %v3542, 5
      %v3545 = vsel %vm1225, %v3540, %v3544
      %v3546 = vshrl.u32 %v3380, 16
      %v3548 = vrot.slane %v3546, 4
      %v3549 = vor.u32 %v3548, %v3544
      %v3550 = vrot.slane %v3549, 4
      %v3552 = vshll.u32 %v3381, 16
      %v3554 = vrot.slane %v3552, 5
      %v3555 = vsel %vm1225, %v3550, %v3554
      %v3557 = vshrl.u32 %v3382, 16
      %v3559 = vrot.slane %v3557, 4
      %v3560 = vshll.u32 %v3382, 16
      %v3562 = vrot.slane %v3560, 5
      %v3563 = vor.u32 %v3559, %v3562
      %v3564 = vrot.slane %v3563, 4
      %v3566 = vshll.u32 %v3383, 16
      %v3568 = vrot.slane %v3566, 5
      %v3569 = vsel %vm1225, %v3564, %v3568
      %v3570 = vshrl.u32 %v3383, 16
      %v3572 = vrot.slane %v3570, 4
      %v3573 = vor.u32 %v3572, %v3568
      %v3574 = vrot.slane %v3573, 4
      %v3576 = vshll.u32 %v3384, 16
      %v3578 = vrot.slane %v3576, 5
      %v3579 = vsel %vm1225, %v3574, %v3578
      %v3581 = vshrl.u32 %v3385, 16
      %v3583 = vrot.slane %v3581, 4
      %v3584 = vshll.u32 %v3385, 16
      %v3586 = vrot.slane %v3584, 5
      %v3587 = vor.u32 %v3583, %v3586
      %v3588 = vrot.slane %v3587, 4
      %v3590 = vshll.u32 %v3386, 16
      %v3592 = vrot.slane %v3590, 5
      %v3593 = vsel %vm1225, %v3588, %v3592
      %v3594 = vshrl.u32 %v3386, 16
      %v3596 = vrot.slane %v3594, 4
      %v3597 = vor.u32 %v3596, %v3592
      %v3598 = vrot.slane %v3597, 4
      %v3600 = vshll.u32 %v3387, 16
      %v3602 = vrot.slane %v3600, 5
      %v3603 = vsel %vm1225, %v3598, %v3602
      %v3605 = vshrl.u32 %v3388, 16
      %v3607 = vrot.slane %v3605, 4
      %v3608 = vshll.u32 %v3388, 16
      %v3610 = vrot.slane %v3608, 5
      %v3611 = vor.u32 %v3607, %v3610
      %v3612 = vrot.slane %v3611, 4
      %v3614 = vshll.u32 %v3389, 16
      %v3616 = vrot.slane %v3614, 5
      %v3617 = vsel %vm1225, %v3612, %v3616
      %v3618 = vshrl.u32 %v3389, 16
      %v3620 = vrot.slane %v3618, 4
      %v3621 = vor.u32 %v3620, %v3616
      %v3622 = vrot.slane %v3621, 4
      %v3624 = vshll.u32 %v3390, 16
      %v3626 = vrot.slane %v3624, 5
      %v3627 = vsel %vm1225, %v3622, %v3626
      %v3629 = vshrl.u32 %v3391, 16
      %v3631 = vrot.slane %v3629, 4
      %v3632 = vshll.u32 %v3391, 16
      %v3634 = vrot.slane %v3632, 5
      %v3635 = vor.u32 %v3631, %v3634
      %v3636 = vrot.slane %v3635, 4
      %v3638 = vshll.u32 %v3392, 16
      %v3640 = vrot.slane %v3638, 5
      %v3641 = vsel %vm1225, %v3636, %v3640
      %v3642 = vshrl.u32 %v3392, 16
      %v3644 = vrot.slane %v3642, 4
      %v3645 = vor.u32 %v3644, %v3640
      %v3646 = vrot.slane %v3645, 4
      %v3648 = vshll.u32 %v3393, 16
      %v3650 = vrot.slane %v3648, 5
      %v3651 = vsel %vm1225, %v3646, %v3650
      %v3653 = vshrl.u32 %v3394, 16
      %v3655 = vrot.slane %v3653, 4
      %v3656 = vshll.u32 %v3394, 16
      %v3658 = vrot.slane %v3656, 5
      %v3659 = vor.u32 %v3655, %v3658
      %v3660 = vrot.slane %v3659, 4
      %v3662 = vshll.u32 %v3395, 16
      %v3664 = vrot.slane %v3662, 5
      %v3665 = vsel %vm1225, %v3660, %v3664
      %v3666 = vshrl.u32 %v3395, 16
      %v3668 = vrot.slane %v3666, 4
      %v3669 = vor.u32 %v3668, %v3664
      %v3670 = vrot.slane %v3669, 4
      %v3672 = vshll.u32 %v3396, 16
      %v3674 = vrot.slane %v3672, 5
      %v3675 = vsel %vm1225, %v3670, %v3674
      %v3677 = vshrl.u32 %v3397, 16
      %v3679 = vrot.slane %v3677, 4
      %v3680 = vshll.u32 %v3397, 16
      %v3682 = vrot.slane %v3680, 5
      %v3683 = vor.u32 %v3679, %v3682
      %v3684 = vrot.slane %v3683, 4
      %v3686 = vshll.u32 %v3398, 16
      %v3688 = vrot.slane %v3686, 5
      %v3689 = vsel %vm1225, %v3684, %v3688
      %v3690 = vshrl.u32 %v3398, 16
      %v3692 = vrot.slane %v3690, 4
      %v3693 = vor.u32 %v3692, %v3688
      %v3694 = vrot.slane %v3693, 4
      %v3696 = vshll.u32 %v3399, 16
      %v3698 = vrot.slane %v3696, 5
      %v3699 = vsel %vm1225, %v3694, %v3698
      %v3701 = vshrl.u32 %v3400, 16
      %v3703 = vrot.slane %v3701, 4
      %v3704 = vshll.u32 %v3400, 16
      %v3706 = vrot.slane %v3704, 5
      %v3707 = vor.u32 %v3703, %v3706
      %v3708 = vrot.slane %v3707, 4
      %v3710 = vshll.u32 %v3401, 16
      %v3712 = vrot.slane %v3710, 5
      %v3713 = vsel %vm1225, %v3708, %v3712
      %v3714 = vshrl.u32 %v3401, 16
      %v3716 = vrot.slane %v3714, 4
      %v3717 = vor.u32 %v3716, %v3712
      %v3718 = vrot.slane %v3717, 4
      %v3720 = vshll.u32 %v3402, 16
      %v3722 = vrot.slane %v3720, 5
      %v3723 = vsel %vm1225, %v3718, %v3722
      %v3725 = vshrl.u32 %v3403, 16
      %v3727 = vrot.slane %v3725, 4
      %v3728 = vshll.u32 %v3403, 16
      %v3730 = vrot.slane %v3728, 5
      %v3731 = vor.u32 %v3727, %v3730
      %v3732 = vrot.slane %v3731, 4
      %v3734 = vshll.u32 %v3404, 16
      %v3736 = vrot.slane %v3734, 5
      %v3737 = vsel %vm1225, %v3732, %v3736
      %v3738 = vshrl.u32 %v3404, 16
      %v3740 = vrot.slane %v3738, 4
      %v3741 = vor.u32 %v3740, %v3736
      %v3742 = vrot.slane %v3741, 4
      %v3744 = vshll.u32 %v3405, 16
      %v3746 = vrot.slane %v3744, 5
      %v3747 = vsel %vm1225, %v3742, %v3746
      %v3749 = vshrl.u32 %v3406, 16
      %v3751 = vrot.slane %v3749, 4
      %v3752 = vshll.u32 %v3406, 16
      %v3754 = vrot.slane %v3752, 5
      %v3755 = vor.u32 %v3751, %v3754
      %v3756 = vrot.slane %v3755, 4
      %v3758 = vshll.u32 %v3407, 16
      %v3760 = vrot.slane %v3758, 5
      %v3761 = vsel %vm1225, %v3756, %v3760
      %v3762 = vshrl.u32 %v3407, 16
      %v3764 = vrot.slane %v3762, 4
      %v3765 = vor.u32 %v3764, %v3760
      %v3766 = vrot.slane %v3765, 4
      %v3768 = vshll.u32 %v3408, 16
      %v3770 = vrot.slane %v3768, 5
      %v3771 = vsel %vm1225, %v3766, %v3770
      %v3773 = vshrl.u32 %v3409, 16
      %v3775 = vrot.slane %v3773, 4
      %v3776 = vshll.u32 %v3409, 16
      %v3778 = vrot.slane %v3776, 5
      %v3779 = vor.u32 %v3775, %v3778
      %v3780 = vrot.slane %v3779, 4
      %v3782 = vshll.u32 %v3410, 16
      %v3784 = vrot.slane %v3782, 5
      %v3785 = vsel %vm1225, %v3780, %v3784
      %v3786 = vshrl.u32 %v3410, 16
      %v3788 = vrot.slane %v3786, 4
      %v3789 = vor.u32 %v3788, %v3784
      %v3790 = vrot.slane %v3789, 4
      %v3792 = vshll.u32 %v3411, 16
      %v3794 = vrot.slane %v3792, 5
      %v3795 = vsel %vm1225, %v3790, %v3794
      %3796 = vrot.lane.b32.xlu0 %v3425, 28
      %v3797 = vpop.permute.xlu0 %3796
      %3798 = vrot.lane.b32.xlu0 %v3435, 28
      %v3799 = vpop.permute.xlu0 %3798
      %3800 = vrot.lane.b32.xlu0 %v3449, 28
      %v3801 = vpop.permute.xlu0 %3800
      %3802 = vrot.lane.b32.xlu0 %v3459, 28
      %v3803 = vpop.permute.xlu0 %3802
      %3804 = vrot.lane.b32.xlu0 %v3473, 28
      %v3805 = vpop.permute.xlu0 %3804
      %3806 = vrot.lane.b32.xlu0 %v3483, 28
      %v3807 = vpop.permute.xlu0 %3806
      %3808 = vrot.lane.b32.xlu0 %v3497, 28
      %v3809 = vpop.permute.xlu0 %3808
      %3810 = vrot.lane.b32.xlu0 %v3507, 28
      %v3811 = vpop.permute.xlu0 %3810
      %3812 = vrot.lane.b32.xlu0 %v3521, 28
      %v3813 = vpop.permute.xlu0 %3812
      %3814 = vrot.lane.b32.xlu0 %v3531, 28
      %v3815 = vpop.permute.xlu0 %3814
      %3816 = vrot.lane.b32.xlu0 %v3545, 28
      %v3817 = vpop.permute.xlu0 %3816
      %3818 = vrot.lane.b32.xlu0 %v3555, 28
      %v3819 = vpop.permute.xlu0 %3818
      %3820 = vrot.lane.b32.xlu0 %v3569, 28
      %v3821 = vpop.permute.xlu0 %3820
      %3822 = vrot.lane.b32.xlu0 %v3579, 28
      %v3823 = vpop.permute.xlu0 %3822
      %3824 = vrot.lane.b32.xlu0 %v3593, 28
      %v3825 = vpop.permute.xlu0 %3824
      %3826 = vrot.lane.b32.xlu0 %v3603, 28
      %v3827 = vpop.permute.xlu0 %3826
      %3828 = vrot.lane.b32.xlu0 %v3617, 28
      %v3829 = vpop.permute.xlu0 %3828
      %3830 = vrot.lane.b32.xlu0 %v3627, 28
      %v3831 = vpop.permute.xlu0 %3830
      %3832 = vrot.lane.b32.xlu0 %v3641, 28
      %v3833 = vpop.permute.xlu0 %3832
      %3834 = vrot.lane.b32.xlu0 %v3651, 28
      %v3835 = vpop.permute.xlu0 %3834
      %3836 = vrot.lane.b32.xlu0 %v3665, 28
      %v3837 = vpop.permute.xlu0 %3836
      %3838 = vrot.lane.b32.xlu0 %v3675, 28
      %v3839 = vpop.permute.xlu0 %3838
      %3840 = vrot.lane.b32.xlu0 %v3689, 28
      %v3841 = vpop.permute.xlu0 %3840
      %3842 = vrot.lane.b32.xlu0 %v3699, 28
      %v3843 = vpop.permute.xlu0 %3842
      %3844 = vrot.lane.b32.xlu0 %v3713, 28
      %v3845 = vpop.permute.xlu0 %3844
      %3846 = vrot.lane.b32.xlu0 %v3723, 28
      %v3847 = vpop.permute.xlu0 %3846
      %3848 = vrot.lane.b32.xlu0 %v3737, 28
      %v3849 = vpop.permute.xlu0 %3848
      %3850 = vrot.lane.b32.xlu0 %v3747, 28
      %v3851 = vpop.permute.xlu0 %3850
      %3852 = vrot.lane.b32.xlu0 %v3761, 28
      %v3853 = vpop.permute.xlu0 %3852
      %3854 = vrot.lane.b32.xlu0 %v3771, 28
      %v3855 = vpop.permute.xlu0 %3854
      %3856 = vrot.lane.b32.xlu0 %v3785, 28
      %v3857 = vpop.permute.xlu0 %3856
      %3858 = vrot.lane.b32.xlu0 %v3795, 28
      %v3859 = vpop.permute.xlu0 %3858
      %vm3892 = vcmask 257248
      %3893 = vst.msk [vmem:[#allocation3] sm:$0xf] %vm3892, %v3797
      %3894 = vst.msk [vmem:[#allocation3 + $0x4] sm:$0xf] %vm3892, %v3799
      %3895 = vst.msk [vmem:[#allocation3 + $0x8] sm:$0xf] %vm3892, %v3801
      %3896 = vst.msk [vmem:[#allocation3 + $0xc] sm:$0xf] %vm3892, %v3803
      %3897 = vst.msk [vmem:[#allocation3 + $0x10] sm:$0xf] %vm3892, %v3805
      %3898 = vst.msk [vmem:[#allocation3 + $0x14] sm:$0xf] %vm3892, %v3807
      %3899 = vst.msk [vmem:[#allocation3 + $0x18] sm:$0xf] %vm3892, %v3809
      %3900 = vst.msk [vmem:[#allocation3 + $0x1c] sm:$0xf] %vm3892, %v3811
      %3901 = vst.msk [vmem:[#allocation3 + $0x20] sm:$0xf] %vm3892, %v3813
      %3902 = vst.msk [vmem:[#allocation3 + $0x24] sm:$0xf] %vm3892, %v3815
      %3903 = vst.msk [vmem:[#allocation3 + $0x28] sm:$0xf] %vm3892, %v3817
      %3904 = vst.msk [vmem:[#allocation3 + $0x2c] sm:$0xf] %vm3892, %v3819
      %3905 = vst.msk [vmem:[#allocation3 + $0x30] sm:$0xf] %vm3892, %v3821
      %3906 = vst.msk [vmem:[#allocation3 + $0x34] sm:$0xf] %vm3892, %v3823
      %3907 = vst.msk [vmem:[#allocation3 + $0x38] sm:$0xf] %vm3892, %v3825
      %3908 = vst.msk [vmem:[#allocation3 + $0x3c] sm:$0xf] %vm3892, %v3827
      %3909 = vst.msk [vmem:[#allocation3 + $0x40] sm:$0xf] %vm3892, %v3829
      %3910 = vst.msk [vmem:[#allocation3 + $0x44] sm:$0xf] %vm3892, %v3831
      %3911 = vst.msk [vmem:[#allocation3 + $0x48] sm:$0xf] %vm3892, %v3833
      %3912 = vst.msk [vmem:[#allocation3 + $0x4c] sm:$0xf] %vm3892, %v3835
      %3913 = vst.msk [vmem:[#allocation3 + $0x50] sm:$0xf] %vm3892, %v3837
      %3914 = vst.msk [vmem:[#allocation3 + $0x54] sm:$0xf] %vm3892, %v3839
      %3915 = vst.msk [vmem:[#allocation3 + $0x58] sm:$0xf] %vm3892, %v3841
      %3916 = vst.msk [vmem:[#allocation3 + $0x5c] sm:$0xf] %vm3892, %v3843
      %3917 = vst.msk [vmem:[#allocation3 + $0x60] sm:$0xf] %vm3892, %v3845
      %3918 = vst.msk [vmem:[#allocation3 + $0x64] sm:$0xf] %vm3892, %v3847
      %3919 = vst.msk [vmem:[#allocation3 + $0x68] sm:$0xf] %vm3892, %v3849
      %3920 = vst.msk [vmem:[#allocation3 + $0x6c] sm:$0xf] %vm3892, %v3851
      %3921 = vst.msk [vmem:[#allocation3 + $0x70] sm:$0xf] %vm3892, %v3853
      %3922 = vst.msk [vmem:[#allocation3 + $0x74] sm:$0xf] %vm3892, %v3855
      %3923 = vst.msk [vmem:[#allocation3 + $0x78] sm:$0xf] %vm3892, %v3857
      %3924 = vst.msk [vmem:[#allocation3 + $0x7c] sm:$0xf] %vm3892, %v3859
      %v3925 = vld [vmem:[%s3170] sm:$0xe]
      %v3926 = vld [vmem:[%s3170 + $0x4] sm:$0xf]
      %v3927 = vld [vmem:[%s3170 + $0x8] sm:$0x1]
      %v3928 = vld [vmem:[%s3170 + $0xc] sm:$0xe]
      %v3929 = vld [vmem:[%s3170 + $0x10] sm:$0xf]
      %v3930 = vld [vmem:[%s3170 + $0x14] sm:$0x1]
      %v3931 = vld [vmem:[%s3170 + $0x18] sm:$0xe]
      %v3932 = vld [vmem:[%s3170 + $0x1c] sm:$0xf]
      %v3933 = vld [vmem:[%s3170 + $0x20] sm:$0x1]
      %v3934 = vld [vmem:[%s3170 + $0x24] sm:$0xe]
      %v3935 = vld [vmem:[%s3170 + $0x28] sm:$0xf]
      %v3936 = vld [vmem:[%s3170 + $0x2c] sm:$0x1]
      %v3937 = vld [vmem:[%s3170 + $0x30] sm:$0xe]
      %v3938 = vld [vmem:[%s3170 + $0x34] sm:$0xf]
      %v3939 = vld [vmem:[%s3170 + $0x38] sm:$0x1]
      %v3940 = vld [vmem:[%s3170 + $0x3c] sm:$0xe]
      %v3941 = vld [vmem:[%s3170 + $0x40] sm:$0xf]
      %v3942 = vld [vmem:[%s3170 + $0x44] sm:$0x1]
      %v3943 = vld [vmem:[%s3170 + $0x48] sm:$0xe]
      %v3944 = vld [vmem:[%s3170 + $0x4c] sm:$0xf]
      %v3945 = vld [vmem:[%s3170 + $0x50] sm:$0x1]
      %v3946 = vld [vmem:[%s3170 + $0x54] sm:$0xe]
      %v3947 = vld [vmem:[%s3170 + $0x58] sm:$0xf]
      %v3948 = vld [vmem:[%s3170 + $0x5c] sm:$0x1]
      %v3949 = vld [vmem:[%s3170 + $0x60] sm:$0xe]
      %v3950 = vld [vmem:[%s3170 + $0x64] sm:$0xf]
      %v3951 = vld [vmem:[%s3170 + $0x68] sm:$0x1]
      %v3952 = vld [vmem:[%s3170 + $0x6c] sm:$0xe]
      %v3953 = vld [vmem:[%s3170 + $0x70] sm:$0xf]
      %v3954 = vld [vmem:[%s3170 + $0x74] sm:$0x1]
      %v3955 = vld [vmem:[%s3170 + $0x78] sm:$0xe]
      %v3956 = vld [vmem:[%s3170 + $0x7c] sm:$0xf]
      %v3957 = vld [vmem:[%s3170 + $0x80] sm:$0x1]
      %v3958 = vld [vmem:[%s3170 + $0x84] sm:$0xe]
      %v3959 = vld [vmem:[%s3170 + $0x88] sm:$0xf]
      %v3960 = vld [vmem:[%s3170 + $0x8c] sm:$0x1]
      %v3961 = vld [vmem:[%s3170 + $0x90] sm:$0xe]
      %v3962 = vld [vmem:[%s3170 + $0x94] sm:$0xf]
      %v3963 = vld [vmem:[%s3170 + $0x98] sm:$0x1]
      %v3964 = vld [vmem:[%s3170 + $0x9c] sm:$0xe]
      %v3965 = vld [vmem:[%s3170 + $0xa0] sm:$0xf]
      %v3966 = vld [vmem:[%s3170 + $0xa4] sm:$0x1]
      %v3967 = vld [vmem:[%s3170 + $0xa8] sm:$0xe]
      %v3968 = vld [vmem:[%s3170 + $0xac] sm:$0xf]
      %v3969 = vld [vmem:[%s3170 + $0xb0] sm:$0x1]
      %v3970 = vld [vmem:[%s3170 + $0xb4] sm:$0xe]
      %v3971 = vld [vmem:[%s3170 + $0xb8] sm:$0xf]
      %v3972 = vld [vmem:[%s3170 + $0xbc] sm:$0x1]
      %v4021 = vrot.slane %v3925, 5
      %v4022 = vrot.slane %v4021, 4
      %v4023 = vrot.slane %v3926, 5
      %v4024 = vsel %vm1837, %v4022, %v4023
      %v4025 = vrot.slane %v4023, 4
      %v4026 = vrot.slane %v3927, 5
      %v4027 = vsel %vm1837, %v4025, %v4026
      %v4028 = vrot.slane %v3928, 5
      %v4029 = vrot.slane %v4028, 4
      %v4030 = vrot.slane %v3929, 5
      %v4031 = vsel %vm1837, %v4029, %v4030
      %v4032 = vrot.slane %v4030, 4
      %v4033 = vrot.slane %v3930, 5
      %v4034 = vsel %vm1837, %v4032, %v4033
      %v4035 = vrot.slane %v3931, 5
      %v4036 = vrot.slane %v4035, 4
      %v4037 = vrot.slane %v3932, 5
      %v4038 = vsel %vm1837, %v4036, %v4037
      %v4039 = vrot.slane %v4037, 4
      %v4040 = vrot.slane %v3933, 5
      %v4041 = vsel %vm1837, %v4039, %v4040
      %v4042 = vrot.slane %v3934, 5
      %v4043 = vrot.slane %v4042, 4
      %v4044 = vrot.slane %v3935, 5
      %v4045 = vsel %vm1837, %v4043, %v4044
      %v4046 = vrot.slane %v4044, 4
      %v4047 = vrot.slane %v3936, 5
      %v4048 = vsel %vm1837, %v4046, %v4047
      %v4049 = vrot.slane %v3937, 5
      %v4050 = vrot.slane %v4049, 4
      %v4051 = vrot.slane %v3938, 5
      %v4052 = vsel %vm1837, %v4050, %v4051
      %v4053 = vrot.slane %v4051, 4
      %v4054 = vrot.slane %v3939, 5
      %v4055 = vsel %vm1837, %v4053, %v4054
      %v4056 = vrot.slane %v3940, 5
      %v4057 = vrot.slane %v4056, 4
      %v4058 = vrot.slane %v3941, 5
      %v4059 = vsel %vm1837, %v4057, %v4058
      %v4060 = vrot.slane %v4058, 4
      %v4061 = vrot.slane %v3942, 5
      %v4062 = vsel %vm1837, %v4060, %v4061
      %v4063 = vrot.slane %v3943, 5
      %v4064 = vrot.slane %v4063, 4
      %v4065 = vrot.slane %v3944, 5
      %v4066 = vsel %vm1837, %v4064, %v4065
      %v4067 = vrot.slane %v4065, 4
      %v4068 = vrot.slane %v3945, 5
      %v4069 = vsel %vm1837, %v4067, %v4068
      %v4070 = vrot.slane %v3946, 5
      %v4071 = vrot.slane %v4070, 4
      %v4072 = vrot.slane %v3947, 5
      %v4073 = vsel %vm1837, %v4071, %v4072
      %v4074 = vrot.slane %v4072, 4
      %v4075 = vrot.slane %v3948, 5
      %v4076 = vsel %vm1837, %v4074, %v4075
      %v4077 = vrot.slane %v3949, 5
      %v4078 = vrot.slane %v4077, 4
      %v4079 = vrot.slane %v3950, 5
      %v4080 = vsel %vm1837, %v4078, %v4079
      %v4081 = vrot.slane %v4079, 4
      %v4082 = vrot.slane %v3951, 5
      %v4083 = vsel %vm1837, %v4081, %v4082
      %v4084 = vrot.slane %v3952, 5
      %v4085 = vrot.slane %v4084, 4
      %v4086 = vrot.slane %v3953, 5
      %v4087 = vsel %vm1837, %v4085, %v4086
      %v4088 = vrot.slane %v4086, 4
      %v4089 = vrot.slane %v3954, 5
      %v4090 = vsel %vm1837, %v4088, %v4089
      %v4091 = vrot.slane %v3955, 5
      %v4092 = vrot.slane %v4091, 4
      %v4093 = vrot.slane %v3956, 5
      %v4094 = vsel %vm1837, %v4092, %v4093
      %v4095 = vrot.slane %v4093, 4
      %v4096 = vrot.slane %v3957, 5
      %v4097 = vsel %vm1837, %v4095, %v4096
      %v4098 = vrot.slane %v3958, 5
      %v4099 = vrot.slane %v4098, 4
      %v4100 = vrot.slane %v3959, 5
      %v4101 = vsel %vm1837, %v4099, %v4100
      %v4102 = vrot.slane %v4100, 4
      %v4103 = vrot.slane %v3960, 5
      %v4104 = vsel %vm1837, %v4102, %v4103
      %v4105 = vrot.slane %v3961, 5
      %v4106 = vrot.slane %v4105, 4
      %v4107 = vrot.slane %v3962, 5
      %v4108 = vsel %vm1837, %v4106, %v4107
      %v4109 = vrot.slane %v4107, 4
      %v4110 = vrot.slane %v3963, 5
      %v4111 = vsel %vm1837, %v4109, %v4110
      %v4112 = vrot.slane %v3964, 5
      %v4113 = vrot.slane %v4112, 4
      %v4114 = vrot.slane %v3965, 5
      %v4115 = vsel %vm1837, %v4113, %v4114
      %v4116 = vrot.slane %v4114, 4
      %v4117 = vrot.slane %v3966, 5
      %v4118 = vsel %vm1837, %v4116, %v4117
      %v4119 = vrot.slane %v3967, 5
      %v4120 = vrot.slane %v4119, 4
      %v4121 = vrot.slane %v3968, 5
      %v4122 = vsel %vm1837, %v4120, %v4121
      %v4123 = vrot.slane %v4121, 4
      %v4124 = vrot.slane %v3969, 5
      %v4125 = vsel %vm1837, %v4123, %v4124
      %v4126 = vrot.slane %v3970, 5
      %v4127 = vrot.slane %v4126, 4
      %v4128 = vrot.slane %v3971, 5
      %v4129 = vsel %vm1837, %v4127, %v4128
      %v4130 = vrot.slane %v4128, 4
      %v4131 = vrot.slane %v3972, 5
      %v4132 = vsel %vm1837, %v4130, %v4131
      %4133 = vrot.lane.b32.xlu0 %v4024, 32
      %v4134 = vpop.permute.xlu0 %4133
      %4135 = vrot.lane.b32.xlu0 %v4027, 32
      %v4136 = vpop.permute.xlu0 %4135
      %4137 = vrot.lane.b32.xlu0 %v4031, 32
      %v4138 = vpop.permute.xlu0 %4137
      %4139 = vrot.lane.b32.xlu0 %v4034, 32
      %v4140 = vpop.permute.xlu0 %4139
      %4141 = vrot.lane.b32.xlu0 %v4038, 32
      %v4142 = vpop.permute.xlu0 %4141
      %4143 = vrot.lane.b32.xlu0 %v4041, 32
      %v4144 = vpop.permute.xlu0 %4143
      %4145 = vrot.lane.b32.xlu0 %v4045, 32
      %v4146 = vpop.permute.xlu0 %4145
      %4147 = vrot.lane.b32.xlu0 %v4048, 32
      %v4148 = vpop.permute.xlu0 %4147
      %4149 = vrot.lane.b32.xlu0 %v4052, 32
      %v4150 = vpop.permute.xlu0 %4149
      %4151 = vrot.lane.b32.xlu0 %v4055, 32
      %v4152 = vpop.permute.xlu0 %4151
      %4153 = vrot.lane.b32.xlu0 %v4059, 32
      %v4154 = vpop.permute.xlu0 %4153
      %4155 = vrot.lane.b32.xlu0 %v4062, 32
      %v4156 = vpop.permute.xlu0 %4155
      %4157 = vrot.lane.b32.xlu0 %v4066, 32
      %v4158 = vpop.permute.xlu0 %4157
      %4159 = vrot.lane.b32.xlu0 %v4069, 32
      %v4160 = vpop.permute.xlu0 %4159
      %4161 = vrot.lane.b32.xlu0 %v4073, 32
      %v4162 = vpop.permute.xlu0 %4161
      %4163 = vrot.lane.b32.xlu0 %v4076, 32
      %v4164 = vpop.permute.xlu0 %4163
      %4165 = vrot.lane.b32.xlu0 %v4080, 32
      %v4166 = vpop.permute.xlu0 %4165
      %4167 = vrot.lane.b32.xlu0 %v4083, 32
      %v4168 = vpop.permute.xlu0 %4167
      %4169 = vrot.lane.b32.xlu0 %v4087, 32
      %v4170 = vpop.permute.xlu0 %4169
      %4171 = vrot.lane.b32.xlu0 %v4090, 32
      %v4172 = vpop.permute.xlu0 %4171
      %4173 = vrot.lane.b32.xlu0 %v4094, 32
      %v4174 = vpop.permute.xlu0 %4173
      %4175 = vrot.lane.b32.xlu0 %v4097, 32
      %v4176 = vpop.permute.xlu0 %4175
      %4177 = vrot.lane.b32.xlu0 %v4101, 32
      %v4178 = vpop.permute.xlu0 %4177
      %4179 = vrot.lane.b32.xlu0 %v4104, 32
      %v4180 = vpop.permute.xlu0 %4179
      %4181 = vrot.lane.b32.xlu0 %v4108, 32
      %v4182 = vpop.permute.xlu0 %4181
      %4183 = vrot.lane.b32.xlu0 %v4111, 32
      %v4184 = vpop.permute.xlu0 %4183
      %4185 = vrot.lane.b32.xlu0 %v4115, 32
      %v4186 = vpop.permute.xlu0 %4185
      %4187 = vrot.lane.b32.xlu0 %v4118, 32
      %v4188 = vpop.permute.xlu0 %4187
      %4189 = vrot.lane.b32.xlu0 %v4122, 32
      %v4190 = vpop.permute.xlu0 %4189
      %4191 = vrot.lane.b32.xlu0 %v4125, 32
      %v4192 = vpop.permute.xlu0 %4191
      %4193 = vrot.lane.b32.xlu0 %v4129, 32
      %v4194 = vpop.permute.xlu0 %4193
      %4195 = vrot.lane.b32.xlu0 %v4132, 32
      %v4196 = vpop.permute.xlu0 %4195
      %vm4229 = vcmask 290048
      %4230 = vst.msk [vmem:[#allocation3] sm:$0xf] %vm4229, %v4134
      %4231 = vst.msk [vmem:[#allocation3 + $0x4] sm:$0xf] %vm4229, %v4136
      %4232 = vst.msk [vmem:[#allocation3 + $0x8] sm:$0xf] %vm4229, %v4138
      %4233 = vst.msk [vmem:[#allocation3 + $0xc] sm:$0xf] %vm4229, %v4140
      %4234 = vst.msk [vmem:[#allocation3 + $0x10] sm:$0xf] %vm4229, %v4142
      %4235 = vst.msk [vmem:[#allocation3 + $0x14] sm:$0xf] %vm4229, %v4144
      %4236 = vst.msk [vmem:[#allocation3 + $0x18] sm:$0xf] %vm4229, %v4146
      %4237 = vst.msk [vmem:[#allocation3 + $0x1c] sm:$0xf] %vm4229, %v4148
      %4238 = vst.msk [vmem:[#allocation3 + $0x20] sm:$0xf] %vm4229, %v4150
      %4239 = vst.msk [vmem:[#allocation3 + $0x24] sm:$0xf] %vm4229, %v4152
      %4240 = vst.msk [vmem:[#allocation3 + $0x28] sm:$0xf] %vm4229, %v4154
      %4241 = vst.msk [vmem:[#allocation3 + $0x2c] sm:$0xf] %vm4229, %v4156
      %4242 = vst.msk [vmem:[#allocation3 + $0x30] sm:$0xf] %vm4229, %v4158
      %4243 = vst.msk [vmem:[#allocation3 + $0x34] sm:$0xf] %vm4229, %v4160
      %4244 = vst.msk [vmem:[#allocation3 + $0x38] sm:$0xf] %vm4229, %v4162
      %4245 = vst.msk [vmem:[#allocation3 + $0x3c] sm:$0xf] %vm4229, %v4164
      %4246 = vst.msk [vmem:[#allocation3 + $0x40] sm:$0xf] %vm4229, %v4166
      %4247 = vst.msk [vmem:[#allocation3 + $0x44] sm:$0xf] %vm4229, %v4168
      %4248 = vst.msk [vmem:[#allocation3 + $0x48] sm:$0xf] %vm4229, %v4170
      %4249 = vst.msk [vmem:[#allocation3 + $0x4c] sm:$0xf] %vm4229, %v4172
      %4250 = vst.msk [vmem:[#allocation3 + $0x50] sm:$0xf] %vm4229, %v4174
      %4251 = vst.msk [vmem:[#allocation3 + $0x54] sm:$0xf] %vm4229, %v4176
      %4252 = vst.msk [vmem:[#allocation3 + $0x58] sm:$0xf] %vm4229, %v4178
      %4253 = vst.msk [vmem:[#allocation3 + $0x5c] sm:$0xf] %vm4229, %v4180
      %4254 = vst.msk [vmem:[#allocation3 + $0x60] sm:$0xf] %vm4229, %v4182
      %4255 = vst.msk [vmem:[#allocation3 + $0x64] sm:$0xf] %vm4229, %v4184
      %4256 = vst.msk [vmem:[#allocation3 + $0x68] sm:$0xf] %vm4229, %v4186
      %4257 = vst.msk [vmem:[#allocation3 + $0x6c] sm:$0xf] %vm4229, %v4188
      %4258 = vst.msk [vmem:[#allocation3 + $0x70] sm:$0xf] %vm4229, %v4190
      %4259 = vst.msk [vmem:[#allocation3 + $0x74] sm:$0xf] %vm4229, %v4192
      %4260 = vst.msk [vmem:[#allocation3 + $0x78] sm:$0xf] %vm4229, %v4194
      %4261 = vst.msk [vmem:[#allocation3 + $0x7c] sm:$0xf] %vm4229, %v4196
      %v4262 = vld [vmem:[#allocation3] sm:$0xf]
      %v4263 = vld [vmem:[#allocation3 + $0x4] sm:$0xf]
      %v4264 = vld [vmem:[#allocation3 + $0x8] sm:$0xf]
      %v4265 = vld [vmem:[#allocation3 + $0xc] sm:$0xf]
      %v4266 = vld [vmem:[#allocation3 + $0x10] sm:$0xf]
      %v4267 = vld [vmem:[#allocation3 + $0x14] sm:$0xf]
      %v4268 = vld [vmem:[#allocation3 + $0x18] sm:$0xf]
      %v4269 = vld [vmem:[#allocation3 + $0x1c] sm:$0xf]
      %v4270 = vld [vmem:[#allocation3 + $0x20] sm:$0xf]
      %v4271 = vld [vmem:[#allocation3 + $0x24] sm:$0xf]
      %v4272 = vld [vmem:[#allocation3 + $0x28] sm:$0xf]
      %v4273 = vld [vmem:[#allocation3 + $0x2c] sm:$0xf]
      %v4274 = vld [vmem:[#allocation3 + $0x30] sm:$0xf]
      %v4275 = vld [vmem:[#allocation3 + $0x34] sm:$0xf]
      %v4276 = vld [vmem:[#allocation3 + $0x38] sm:$0xf]
      %v4277 = vld [vmem:[#allocation3 + $0x3c] sm:$0xf]
      %v4278 = vld [vmem:[#allocation3 + $0x40] sm:$0xf]
      %v4279 = vld [vmem:[#allocation3 + $0x44] sm:$0xf]
      %v4280 = vld [vmem:[#allocation3 + $0x48] sm:$0xf]
      %v4281 = vld [vmem:[#allocation3 + $0x4c] sm:$0xf]
      %v4282 = vld [vmem:[#allocation3 + $0x50] sm:$0xf]
      %v4283 = vld [vmem:[#allocation3 + $0x54] sm:$0xf]
      %v4284 = vld [vmem:[#allocation3 + $0x58] sm:$0xf]
      %v4285 = vld [vmem:[#allocation3 + $0x5c] sm:$0xf]
      %v4286 = vld [vmem:[#allocation3 + $0x60] sm:$0xf]
      %v4287 = vld [vmem:[#allocation3 + $0x64] sm:$0xf]
      %v4288 = vld [vmem:[#allocation3 + $0x68] sm:$0xf]
      %v4289 = vld [vmem:[#allocation3 + $0x6c] sm:$0xf]
      %v4290 = vld [vmem:[#allocation3 + $0x70] sm:$0xf]
      %v4291 = vld [vmem:[#allocation3 + $0x74] sm:$0xf]
      %v4292 = vld [vmem:[#allocation3 + $0x78] sm:$0xf]
      %v4293 = vld [vmem:[#allocation3 + $0x7c] sm:$0xf]
      %v4294 = vld [vmem:[%s265] sm:$0xf]
      %v4295 = vld [vmem:[%s265 + $0x4] sm:$0xf]
      %v4296 = vld [vmem:[%s265 + $0x8] sm:$0xf]
      %v4297 = vld [vmem:[%s265 + $0xc] sm:$0xf]
      %v4298 = vld [vmem:[%s265 + $0x10] sm:$0x3]
      %v4331 = vunpack.c.l.b16 %v4262
      %v4332 = vunpack.c.l.b16 %v4263
      %v4333 = vunpack.c.l.b16 %v4264
      %v4334 = vunpack.c.l.b16 %v4265
      %v4335 = vunpack.c.l.b16 %v4266
      %v4336 = vunpack.c.l.b16 %v4267
      %v4337 = vunpack.c.l.b16 %v4268
      %v4338 = vunpack.c.l.b16 %v4269
      %v4339 = vunpack.c.l.b16 %v4270
      %v4340 = vunpack.c.l.b16 %v4271
      %v4341 = vunpack.c.l.b16 %v4272
      %v4342 = vunpack.c.l.b16 %v4273
      %v4343 = vunpack.c.l.b16 %v4274
      %v4344 = vunpack.c.l.b16 %v4275
      %v4345 = vunpack.c.l.b16 %v4276
      %v4346 = vunpack.c.l.b16 %v4277
      %v4347 = vunpack.c.l.b16 %v4278
      %v4348 = vunpack.c.l.b16 %v4279
      %v4349 = vunpack.c.l.b16 %v4280
      %v4350 = vunpack.c.l.b16 %v4281
      %v4351 = vunpack.c.l.b16 %v4282
      %v4352 = vunpack.c.l.b16 %v4283
      %v4353 = vunpack.c.l.b16 %v4284
      %v4354 = vunpack.c.l.b16 %v4285
      %v4355 = vunpack.c.l.b16 %v4286
      %v4356 = vunpack.c.l.b16 %v4287
      %v4357 = vunpack.c.l.b16 %v4288
      %v4358 = vunpack.c.l.b16 %v4289
      %v4359 = vunpack.c.l.b16 %v4290
      %v4360 = vunpack.c.l.b16 %v4291
      %v4361 = vunpack.c.l.b16 %v4292
      %v4362 = vunpack.c.l.b16 %v4293
      %v4363 = vpack.c.b16 %v4332, %v4331
      %v4364 = vpack.c.b16 %v4334, %v4333
      %v4365 = vpack.c.b16 %v4336, %v4335
      %v4366 = vpack.c.b16 %v4338, %v4337
      %v4367 = vpack.c.b16 %v4340, %v4339
      %v4368 = vpack.c.b16 %v4342, %v4341
      %v4369 = vpack.c.b16 %v4344, %v4343
      %v4370 = vpack.c.b16 %v4346, %v4345
      %v4371 = vpack.c.b16 %v4348, %v4347
      %v4372 = vpack.c.b16 %v4350, %v4349
      %v4373 = vpack.c.b16 %v4352, %v4351
      %v4374 = vpack.c.b16 %v4354, %v4353
      %v4375 = vpack.c.b16 %v4356, %v4355
      %v4376 = vpack.c.b16 %v4358, %v4357
      %v4377 = vpack.c.b16 %v4360, %v4359
      %v4378 = vpack.c.b16 %v4362, %v4361
      %v4384 = vunpack.c.l.b16 %v4294
      %v4385 = vunpack.c.l.b16 %v4295
      %v4386 = vunpack.c.l.b16 %v4296
      %v4387 = vunpack.c.l.b16 %v4297
      %v4388 = vunpack.c.l.b16 %v4298
      %v4389 = vpack.c.b16 %v4385, %v4384
      %v4390 = vpack.c.b16 %v4387, %v4386
      %v4391 = vpack.c.b16 %v4388, %v4388
      %vm4394 = vcmask 293888
      %v4396 = vsel %vm4394, %v4363, 0
      %v4399 = vsel %vm4394, %v4364, 0
      %v4402 = vsel %vm4394, %v4365, 0
      %v4405 = vsel %vm4394, %v4366, 0
      %v4408 = vsel %vm4394, %v4367, 0
      %v4411 = vsel %vm4394, %v4368, 0
      %v4414 = vsel %vm4394, %v4369, 0
      %v4417 = vsel %vm4394, %v4370, 0
      %v4420 = vsel %vm4394, %v4371, 0
      %v4423 = vsel %vm4394, %v4372, 0
      %v4426 = vsel %vm4394, %v4373, 0
      %v4429 = vsel %vm4394, %v4374, 0
      %v4432 = vsel %vm4394, %v4375, 0
      %v4435 = vsel %vm4394, %v4376, 0
      %v4438 = vsel %vm4394, %v4377, 0
      %v4441 = vsel %vm4394, %v4378, 0
      %vm4443 = vcmask 1041408
      %v4445 = vsel %vm4443, %v4391, 0
      %4447 = vmatprep.subr.bf16.mxu0 0
      %4448 = vmatpush1.bf16.msra.mxu0 0
      %4449 = vmatprep.subr.bf16.mxu0 0
      %4450 = vmatpush1.bf16.msra.mxu0 0
      %4451 = vmatprep.subr.bf16.mxu0 0
      %4452 = vmatpush1.bf16.msra.mxu0 0
      %4453 = vmatprep.subr.bf16.mxu0 0
      %4454 = vmatpush1.bf16.msra.mxu0 0
      %4455 = vmatprep.subr.bf16.mxu0 0
      %4456 = vmatpush1.bf16.msra.mxu0 0
      %4457 = vmatprep.subr.bf16.mxu0 0
      %4458 = vmatpush1.bf16.msra.mxu0 %v4445
      %4459 = vmatprep.subr.bf16.mxu0 0
      %4460 = vmatpush1.bf16.msra.mxu0 %v4390
      %4461 = vmatprep.subr.bf16.mxu0 0
      %4462 = vmatpush1.bf16.msra.mxu0 %v4389
      %4463 = vmatprep.subr.bf16.mxu0 0
      %4464 = vmatpush2.bf16.msra.mxu0 0
      %4465 = vmatprep.subr.bf16.mxu0 0
      %4466 = vmatpush2.bf16.msra.mxu0 0
      %4467 = vmatprep.subr.bf16.mxu0 0
      %4468 = vmatpush2.bf16.msra.mxu0 0
      %4469 = vmatprep.subr.bf16.mxu0 0
      %4470 = vmatpush2.bf16.msra.mxu0 0
      %4471 = vmatprep.subr.bf16.mxu0 0
      %4472 = vmatpush2.bf16.msra.mxu0 0
      %4473 = vmatprep.subr.bf16.mxu0 0
      %4474 = vmatpush2.bf16.msra.mxu0 0
      %4475 = vmatprep.subr.bf16.mxu0 0
      %4476 = vmatpush2.bf16.msra.mxu0 0
      %4477 = vmatprep.subr.bf16.mxu0 0
      %4478 = vmatpush2.bf16.msra.mxu0 0
      %4479 = vmatprep.mubr.bf16.mxu0 0
      %4480 = vmatmul.mubr.bf16.gmra.mxu0 %v4396
      %v4481 = vpop.f32.mrf.mxu0
      %v4482 = vadd.f32 0.0, %v4481
      %v4483 = vpop.f32.mrf.mxu0
      %v4484 = vpop.f32.mrf.mxu0
      %v4485 = vadd.f32 0.0, %v4484
      %v4486 = vpop.f32.mrf.mxu0
      %4487 = vmatprep.mubr.bf16.mxu0 0
      %4488 = vmatmul.mubr.bf16.gmra.mxu0 %v4399
      %v4489 = vpop.f32.mrf.mxu0
      %v4490 = vadd.f32 0.0, %v4489
      %v4491 = vpop.f32.mrf.mxu0
      %v4492 = vpop.f32.mrf.mxu0
      %v4493 = vadd.f32 0.0, %v4492
      %v4494 = vpop.f32.mrf.mxu0
      %4495 = vmatprep.mubr.bf16.mxu0 0
      %4496 = vmatmul.mubr.bf16.gmra.mxu0 %v4402
      %v4497 = vpop.f32.mrf.mxu0
      %v4498 = vadd.f32 0.0, %v4497
      %v4499 = vpop.f32.mrf.mxu0
      %v4500 = vpop.f32.mrf.mxu0
      %v4501 = vadd.f32 0.0, %v4500
      %v4502 = vpop.f32.mrf.mxu0
      %4503 = vmatprep.mubr.bf16.mxu0 0
      %4504 = vmatmul.mubr.bf16.gmra.mxu0 %v4405
      %v4505 = vpop.f32.mrf.mxu0
      %v4506 = vadd.f32 0.0, %v4505
      %v4507 = vpop.f32.mrf.mxu0
      %v4508 = vpop.f32.mrf.mxu0
      %v4509 = vadd.f32 0.0, %v4508
      %v4510 = vpop.f32.mrf.mxu0
      %4511 = vmatprep.mubr.bf16.mxu0 0
      %4512 = vmatmul.mubr.bf16.gmra.mxu0 %v4408
      %v4513 = vpop.f32.mrf.mxu0
      %v4514 = vadd.f32 0.0, %v4513
      %v4515 = vpop.f32.mrf.mxu0
      %v4516 = vpop.f32.mrf.mxu0
      %v4517 = vadd.f32 0.0, %v4516
      %v4518 = vpop.f32.mrf.mxu0
      %4519 = vmatprep.mubr.bf16.mxu0 0
      %4520 = vmatmul.mubr.bf16.gmra.mxu0 %v4411
      %v4521 = vpop.f32.mrf.mxu0
      %v4522 = vadd.f32 0.0, %v4521
      %v4523 = vpop.f32.mrf.mxu0
      %v4524 = vpop.f32.mrf.mxu0
      %v4525 = vadd.f32 0.0, %v4524
      %v4526 = vpop.f32.mrf.mxu0
      %4527 = vmatprep.mubr.bf16.mxu0 0
      %4528 = vmatmul.mubr.bf16.gmra.mxu0 %v4414
      %v4529 = vpop.f32.mrf.mxu0
      %v4530 = vadd.f32 0.0, %v4529
      %v4531 = vpop.f32.mrf.mxu0
      %v4532 = vpop.f32.mrf.mxu0
      %v4533 = vadd.f32 0.0, %v4532
      %v4534 = vpop.f32.mrf.mxu0
      %4535 = vmatprep.mubr.bf16.mxu0 0
      %4536 = vmatmul.mubr.bf16.gmra.mxu0 %v4417
      %v4537 = vpop.f32.mrf.mxu0
      %v4538 = vadd.f32 0.0, %v4537
      %v4539 = vpop.f32.mrf.mxu0
      %v4540 = vpop.f32.mrf.mxu0
      %v4541 = vadd.f32 0.0, %v4540
      %v4542 = vpop.f32.mrf.mxu0
      %4543 = vmatprep.mubr.bf16.mxu0 0
      %4544 = vmatmul.mubr.bf16.gmra.mxu0 %v4420
      %v4545 = vpop.f32.mrf.mxu0
      %v4546 = vadd.f32 0.0, %v4545
      %v4547 = vpop.f32.mrf.mxu0
      %v4548 = vpop.f32.mrf.mxu0
      %v4549 = vadd.f32 0.0, %v4548
      %v4550 = vpop.f32.mrf.mxu0
      %4551 = vmatprep.mubr.bf16.mxu0 0
      %4552 = vmatmul.mubr.bf16.gmra.mxu0 %v4423
      %v4553 = vpop.f32.mrf.mxu0
      %v4554 = vadd.f32 0.0, %v4553
      %v4555 = vpop.f32.mrf.mxu0
      %v4556 = vpop.f32.mrf.mxu0
      %v4557 = vadd.f32 0.0, %v4556
      %v4558 = vpop.f32.mrf.mxu0
      %4559 = vmatprep.mubr.bf16.mxu0 0
      %4560 = vmatmul.mubr.bf16.gmra.mxu0 %v4426
      %v4561 = vpop.f32.mrf.mxu0
      %v4562 = vadd.f32 0.0, %v4561
      %v4563 = vpop.f32.mrf.mxu0
      %v4564 = vpop.f32.mrf.mxu0
      %v4565 = vadd.f32 0.0, %v4564
      %v4566 = vpop.f32.mrf.mxu0
      %4567 = vmatprep.mubr.bf16.mxu0 0
      %4568 = vmatmul.mubr.bf16.gmra.mxu0 %v4429
      %v4569 = vpop.f32.mrf.mxu0
      %v4570 = vadd.f32 0.0, %v4569
      %v4571 = vpop.f32.mrf.mxu0
      %v4572 = vpop.f32.mrf.mxu0
      %v4573 = vadd.f32 0.0, %v4572
      %v4574 = vpop.f32.mrf.mxu0
      %4575 = vmatprep.mubr.bf16.mxu0 0
      %4576 = vmatmul.mubr.bf16.gmra.mxu0 %v4432
      %v4577 = vpop.f32.mrf.mxu0
      %v4578 = vadd.f32 0.0, %v4577
      %v4579 = vpop.f32.mrf.mxu0
      %v4580 = vpop.f32.mrf.mxu0
      %v4581 = vadd.f32 0.0, %v4580
      %v4582 = vpop.f32.mrf.mxu0
      %4583 = vmatprep.mubr.bf16.mxu0 0
      %4584 = vmatmul.mubr.bf16.gmra.mxu0 %v4435
      %v4585 = vpop.f32.mrf.mxu0
      %v4586 = vadd.f32 0.0, %v4585
      %v4587 = vpop.f32.mrf.mxu0
      %v4588 = vpop.f32.mrf.mxu0
      %v4589 = vadd.f32 0.0, %v4588
      %v4590 = vpop.f32.mrf.mxu0
      %4591 = vmatprep.mubr.bf16.mxu0 0
      %4592 = vmatmul.mubr.bf16.gmra.mxu0 %v4438
      %v4593 = vpop.f32.mrf.mxu0
      %v4594 = vadd.f32 0.0, %v4593
      %v4595 = vpop.f32.mrf.mxu0
      %v4596 = vpop.f32.mrf.mxu0
      %v4597 = vadd.f32 0.0, %v4596
      %v4598 = vpop.f32.mrf.mxu0
      %4599 = vmatprep.mubr.bf16.mxu0 0
      %4600 = vmatmul.mubr.bf16.gmra.mxu0 %v4441
      %v4601 = vpop.f32.mrf.mxu0
      %v4602 = vadd.f32 0.0, %v4601
      %v4603 = vpop.f32.mrf.mxu0
      %v4604 = vpop.f32.mrf.mxu0
      %v4605 = vadd.f32 0.0, %v4604
      %v4606 = vpop.f32.mrf.mxu0
      %4607 = vdwg.mxu0
      %v4608 = vpack.c.bf16 %v4485, %v4482
      %v4609 = vpack.c.bf16 %v4493, %v4490
      %v4610 = vpack.c.bf16 %v4501, %v4498
      %v4611 = vpack.c.bf16 %v4509, %v4506
      %v4612 = vpack.c.bf16 %v4517, %v4514
      %v4613 = vpack.c.bf16 %v4525, %v4522
      %v4614 = vpack.c.bf16 %v4533, %v4530
      %v4615 = vpack.c.bf16 %v4541, %v4538
      %v4616 = vpack.c.bf16 %v4549, %v4546
      %v4617 = vpack.c.bf16 %v4557, %v4554
      %v4618 = vpack.c.bf16 %v4565, %v4562
      %v4619 = vpack.c.bf16 %v4573, %v4570
      %v4620 = vpack.c.bf16 %v4581, %v4578
      %v4621 = vpack.c.bf16 %v4589, %v4586
      %v4622 = vpack.c.bf16 %v4597, %v4594
      %v4623 = vpack.c.bf16 %v4605, %v4602
      %v4640 = vunpack.c.l.b16 %v4608
      %v4641 = vunpack.c.h.b16 %v4608
      %v4642 = vunpack.c.l.b16 %v4609
      %v4643 = vunpack.c.h.b16 %v4609
      %v4644 = vunpack.c.l.b16 %v4610
      %v4645 = vunpack.c.h.b16 %v4610
      %v4646 = vunpack.c.l.b16 %v4611
      %v4647 = vunpack.c.h.b16 %v4611
      %v4648 = vunpack.c.l.b16 %v4612
      %v4649 = vunpack.c.h.b16 %v4612
      %v4650 = vunpack.c.l.b16 %v4613
      %v4651 = vunpack.c.h.b16 %v4613
      %v4652 = vunpack.c.l.b16 %v4614
      %v4653 = vunpack.c.h.b16 %v4614
      %v4654 = vunpack.c.l.b16 %v4615
      %v4655 = vunpack.c.h.b16 %v4615
      %v4656 = vunpack.c.l.b16 %v4616
      %v4657 = vunpack.c.h.b16 %v4616
      %v4658 = vunpack.c.l.b16 %v4617
      %v4659 = vunpack.c.h.b16 %v4617
      %v4660 = vunpack.c.l.b16 %v4618
      %v4661 = vunpack.c.h.b16 %v4618
      %v4662 = vunpack.c.l.b16 %v4619
      %v4663 = vunpack.c.h.b16 %v4619
      %v4664 = vunpack.c.l.b16 %v4620
      %v4665 = vunpack.c.h.b16 %v4620
      %v4666 = vunpack.c.l.b16 %v4621
      %v4667 = vunpack.c.h.b16 %v4621
      %v4668 = vunpack.c.l.b16 %v4622
      %v4669 = vunpack.c.h.b16 %v4622
      %v4670 = vunpack.c.l.b16 %v4623
      %v4671 = vunpack.c.h.b16 %v4623
      %v4672 = vpack.c.b16 %v4640, %v4640
      %v4673 = vpack.c.b16 %v4641, %v4641
      %v4674 = vpack.c.b16 %v4642, %v4642
      %v4675 = vpack.c.b16 %v4643, %v4643
      %v4676 = vpack.c.b16 %v4644, %v4644
      %v4677 = vpack.c.b16 %v4645, %v4645
      %v4678 = vpack.c.b16 %v4646, %v4646
      %v4679 = vpack.c.b16 %v4647, %v4647
      %v4680 = vpack.c.b16 %v4648, %v4648
      %v4681 = vpack.c.b16 %v4649, %v4649
      %v4682 = vpack.c.b16 %v4650, %v4650
      %v4683 = vpack.c.b16 %v4651, %v4651
      %v4684 = vpack.c.b16 %v4652, %v4652
      %v4685 = vpack.c.b16 %v4653, %v4653
      %v4686 = vpack.c.b16 %v4654, %v4654
      %v4687 = vpack.c.b16 %v4655, %v4655
      %v4688 = vpack.c.b16 %v4656, %v4656
      %v4689 = vpack.c.b16 %v4657, %v4657
      %v4690 = vpack.c.b16 %v4658, %v4658
      %v4691 = vpack.c.b16 %v4659, %v4659
      %v4692 = vpack.c.b16 %v4660, %v4660
      %v4693 = vpack.c.b16 %v4661, %v4661
      %v4694 = vpack.c.b16 %v4662, %v4662
      %v4695 = vpack.c.b16 %v4663, %v4663
      %v4696 = vpack.c.b16 %v4664, %v4664
      %v4697 = vpack.c.b16 %v4665, %v4665
      %v4698 = vpack.c.b16 %v4666, %v4666
      %v4699 = vpack.c.b16 %v4667, %v4667
      %v4700 = vpack.c.b16 %v4668, %v4668
      %v4701 = vpack.c.b16 %v4669, %v4669
      %v4702 = vpack.c.b16 %v4670, %v4670
      %v4703 = vpack.c.b16 %v4671, %v4671
      %4736 = vst.msk [vmem:[%s273] sm:$0xf] %vm456, %v4672
      %4737 = vst.msk [vmem:[%s273 + $0x4] sm:$0xf] %vm456, %v4673
      %4738 = vst.msk [vmem:[%s273 + $0x8] sm:$0xf] %vm456, %v4674
      %4739 = vst.msk [vmem:[%s273 + $0xc] sm:$0xf] %vm456, %v4675
      %4740 = vst.msk [vmem:[%s273 + $0x10] sm:$0xf] %vm456, %v4676
      %4741 = vst.msk [vmem:[%s273 + $0x14] sm:$0xf] %vm456, %v4677
      %4742 = vst.msk [vmem:[%s273 + $0x18] sm:$0xf] %vm456, %v4678
      %4743 = vst.msk [vmem:[%s273 + $0x1c] sm:$0xf] %vm456, %v4679
      %4744 = vst.msk [vmem:[%s273 + $0x20] sm:$0xf] %vm456, %v4680
      %4745 = vst.msk [vmem:[%s273 + $0x24] sm:$0xf] %vm456, %v4681
      %4746 = vst.msk [vmem:[%s273 + $0x28] sm:$0xf] %vm456, %v4682
      %4747 = vst.msk [vmem:[%s273 + $0x2c] sm:$0xf] %vm456, %v4683
      %4748 = vst.msk [vmem:[%s273 + $0x30] sm:$0xf] %vm456, %v4684
      %4749 = vst.msk [vmem:[%s273 + $0x34] sm:$0xf] %vm456, %v4685
      %4750 = vst.msk [vmem:[%s273 + $0x38] sm:$0xf] %vm456, %v4686
      %4751 = vst.msk [vmem:[%s273 + $0x3c] sm:$0xf] %vm456, %v4687
      %4752 = vst.msk [vmem:[%s273 + $0x40] sm:$0xf] %vm456, %v4688
      %4753 = vst.msk [vmem:[%s273 + $0x44] sm:$0xf] %vm456, %v4689
      %4754 = vst.msk [vmem:[%s273 + $0x48] sm:$0xf] %vm456, %v4690
      %4755 = vst.msk [vmem:[%s273 + $0x4c] sm:$0xf] %vm456, %v4691
      %4756 = vst.msk [vmem:[%s273 + $0x50] sm:$0xf] %vm456, %v4692
      %4757 = vst.msk [vmem:[%s273 + $0x54] sm:$0xf] %vm456, %v4693
      %4758 = vst.msk [vmem:[%s273 + $0x58] sm:$0xf] %vm456, %v4694
      %4759 = vst.msk [vmem:[%s273 + $0x5c] sm:$0xf] %vm456, %v4695
      %4760 = vst.msk [vmem:[%s273 + $0x60] sm:$0xf] %vm456, %v4696
      %4761 = vst.msk [vmem:[%s273 + $0x64] sm:$0xf] %vm456, %v4697
      %4762 = vst.msk [vmem:[%s273 + $0x68] sm:$0xf] %vm456, %v4698
      %4763 = vst.msk [vmem:[%s273 + $0x6c] sm:$0xf] %vm456, %v4699
      %4764 = vst.msk [vmem:[%s273 + $0x70] sm:$0xf] %vm456, %v4700
      %4765 = vst.msk [vmem:[%s273 + $0x74] sm:$0xf] %vm456, %v4701
      %4766 = vst.msk [vmem:[%s273 + $0x78] sm:$0xf] %vm456, %v4702
      %4767 = vst.msk [vmem:[%s273 + $0x7c] sm:$0xf] %vm456, %v4703
      %vm4768 = vcmask 31744
      %v4769 = vsel %vm4768, %v4482, 0.0
      %v4770 = vsel %vm4768, %v4485, 0.0
      %v4771 = vadd.f32 %v4769, %v4770
      %v4772 = vsel %vm4768, %v4490, 0.0
      %v4773 = vadd.f32 %v4771, %v4772
      %v4774 = vsel %vm4768, %v4493, 0.0
      %v4775 = vadd.f32 %v4773, %v4774
      %v4776 = vsel %vm4768, %v4498, 0.0
      %v4777 = vadd.f32 %v4775, %v4776
      %v4778 = vsel %vm4768, %v4501, 0.0
      %v4779 = vadd.f32 %v4777, %v4778
      %v4780 = vsel %vm4768, %v4506, 0.0
      %v4781 = vadd.f32 %v4779, %v4780
      %v4782 = vsel %vm4768, %v4509, 0.0
      %v4783 = vadd.f32 %v4781, %v4782
      %v4784 = vsel %vm4768, %v4514, 0.0
      %v4785 = vadd.f32 %v4783, %v4784
      %v4786 = vsel %vm4768, %v4517, 0.0
      %v4787 = vadd.f32 %v4785, %v4786
      %v4788 = vsel %vm4768, %v4522, 0.0
      %v4789 = vadd.f32 %v4787, %v4788
      %v4790 = vsel %vm4768, %v4525, 0.0
      %v4791 = vadd.f32 %v4789, %v4790
      %v4792 = vsel %vm4768, %v4530, 0.0
      %v4793 = vadd.f32 %v4791, %v4792
      %v4794 = vsel %vm4768, %v4533, 0.0
      %v4795 = vadd.f32 %v4793, %v4794
      %v4796 = vsel %vm4768, %v4538, 0.0
      %v4797 = vadd.f32 %v4795, %v4796
      %v4798 = vsel %vm4768, %v4541, 0.0
      %v4799 = vadd.f32 %v4797, %v4798
      %v4800 = vsel %vm4768, %v4546, 0.0
      %v4801 = vadd.f32 %v4799, %v4800
      %v4802 = vsel %vm4768, %v4549, 0.0
      %v4803 = vadd.f32 %v4801, %v4802
      %v4804 = vsel %vm4768, %v4554, 0.0
      %v4805 = vadd.f32 %v4803, %v4804
      %v4806 = vsel %vm4768, %v4557, 0.0
      %v4807 = vadd.f32 %v4805, %v4806
      %v4808 = vsel %vm4768, %v4562, 0.0
      %v4809 = vadd.f32 %v4807, %v4808
      %v4810 = vsel %vm4768, %v4565, 0.0
      %v4811 = vadd.f32 %v4809, %v4810
      %v4812 = vsel %vm4768, %v4570, 0.0
      %v4813 = vadd.f32 %v4811, %v4812
      %v4814 = vsel %vm4768, %v4573, 0.0
      %v4815 = vadd.f32 %v4813, %v4814
      %v4816 = vsel %vm4768, %v4578, 0.0
      %v4817 = vadd.f32 %v4815, %v4816
      %v4818 = vsel %vm4768, %v4581, 0.0
      %v4819 = vadd.f32 %v4817, %v4818
      %v4820 = vsel %vm4768, %v4586, 0.0
      %v4821 = vadd.f32 %v4819, %v4820
      %v4822 = vsel %vm4768, %v4589, 0.0
      %v4823 = vadd.f32 %v4821, %v4822
      %v4824 = vsel %vm4768, %v4594, 0.0
      %v4825 = vadd.f32 %v4823, %v4824
      %v4826 = vsel %vm4768, %v4597, 0.0
      %v4827 = vadd.f32 %v4825, %v4826
      %v4828 = vsel %vm4768, %v4602, 0.0
      %v4829 = vadd.f32 %v4827, %v4828
      %v4830 = vsel %vm4768, %v4605, 0.0
      %v4831 = vadd.f32 %v4829, %v4830
      %v4832 = vrot.slane %v4831, 4
      %v4833 = vadd.f32 %v4831, %v4832
      %v4834 = vrot.slane %v4833, 2
      %v4835 = vadd.f32 %v4833, %v4834
      %v4836 = vrot.slane %v4835, 1
      %v4837 = vadd.f32 %v4835, %v4836
      %v4838 = vmul.f32 %v4482, %v4482
      %v4839 = vmul.f32 %v4485, %v4485
      %v4840 = vmul.f32 %v4490, %v4490
      %v4841 = vmul.f32 %v4493, %v4493
      %v4842 = vmul.f32 %v4498, %v4498
      %v4843 = vmul.f32 %v4501, %v4501
      %v4844 = vmul.f32 %v4506, %v4506
      %v4845 = vmul.f32 %v4509, %v4509
      %v4846 = vmul.f32 %v4514, %v4514
      %v4847 = vmul.f32 %v4517, %v4517
      %v4848 = vmul.f32 %v4522, %v4522
      %v4849 = vmul.f32 %v4525, %v4525
      %v4850 = vmul.f32 %v4530, %v4530
      %v4851 = vmul.f32 %v4533, %v4533
      %v4852 = vmul.f32 %v4538, %v4538
      %v4853 = vmul.f32 %v4541, %v4541
      %v4854 = vmul.f32 %v4546, %v4546
      %v4855 = vmul.f32 %v4549, %v4549
      %v4856 = vmul.f32 %v4554, %v4554
      %v4857 = vmul.f32 %v4557, %v4557
      %v4858 = vmul.f32 %v4562, %v4562
      %v4859 = vmul.f32 %v4565, %v4565
      %v4860 = vmul.f32 %v4570, %v4570
      %v4861 = vmul.f32 %v4573, %v4573
      %v4862 = vmul.f32 %v4578, %v4578
      %v4863 = vmul.f32 %v4581, %v4581
      %v4864 = vmul.f32 %v4586, %v4586
      %v4865 = vmul.f32 %v4589, %v4589
      %v4866 = vmul.f32 %v4594, %v4594
      %v4867 = vmul.f32 %v4597, %v4597
      %v4868 = vmul.f32 %v4602, %v4602
      %v4869 = vmul.f32 %v4605, %v4605
      %v4870 = vsel %vm4768, %v4838, 0.0
      %v4871 = vsel %vm4768, %v4839, 0.0
      %v4872 = vadd.f32 %v4870, %v4871
      %v4873 = vsel %vm4768, %v4840, 0.0
      %v4874 = vadd.f32 %v4872, %v4873
      %v4875 = vsel %vm4768, %v4841, 0.0
      %v4876 = vadd.f32 %v4874, %v4875
      %v4877 = vsel %vm4768, %v4842, 0.0
      %v4878 = vadd.f32 %v4876, %v4877
      %v4879 = vsel %vm4768, %v4843, 0.0
      %v4880 = vadd.f32 %v4878, %v4879
      %v4881 = vsel %vm4768, %v4844, 0.0
      %v4882 = vadd.f32 %v4880, %v4881
      %v4883 = vsel %vm4768, %v4845, 0.0
      %v4884 = vadd.f32 %v4882, %v4883
      %v4885 = vsel %vm4768, %v4846, 0.0
      %v4886 = vadd.f32 %v4884, %v4885
      %v4887 = vsel %vm4768, %v4847, 0.0
      %v4888 = vadd.f32 %v4886, %v4887
      %v4889 = vsel %vm4768, %v4848, 0.0
      %v4890 = vadd.f32 %v4888, %v4889
      %v4891 = vsel %vm4768, %v4849, 0.0
      %v4892 = vadd.f32 %v4890, %v4891
      %v4893 = vsel %vm4768, %v4850, 0.0
      %v4894 = vadd.f32 %v4892, %v4893
      %v4895 = vsel %vm4768, %v4851, 0.0
      %v4896 = vadd.f32 %v4894, %v4895
      %v4897 = vsel %vm4768, %v4852, 0.0
      %v4898 = vadd.f32 %v4896, %v4897
      %v4899 = vsel %vm4768, %v4853, 0.0
      %v4900 = vadd.f32 %v4898, %v4899
      %v4901 = vsel %vm4768, %v4854, 0.0
      %v4902 = vadd.f32 %v4900, %v4901
      %v4903 = vsel %vm4768, %v4855, 0.0
      %v4904 = vadd.f32 %v4902, %v4903
      %v4905 = vsel %vm4768, %v4856, 0.0
      %v4906 = vadd.f32 %v4904, %v4905
      %v4907 = vsel %vm4768, %v4857, 0.0
      %v4908 = vadd.f32 %v4906, %v4907
      %v4909 = vsel %vm4768, %v4858, 0.0
      %v4910 = vadd.f32 %v4908, %v4909
      %v4911 = vsel %vm4768, %v4859, 0.0
      %v4912 = vadd.f32 %v4910, %v4911
      %v4913 = vsel %vm4768, %v4860, 0.0
      %v4914 = vadd.f32 %v4912, %v4913
      %v4915 = vsel %vm4768, %v4861, 0.0
      %v4916 = vadd.f32 %v4914, %v4915
      %v4917 = vsel %vm4768, %v4862, 0.0
      %v4918 = vadd.f32 %v4916, %v4917
      %v4919 = vsel %vm4768, %v4863, 0.0
      %v4920 = vadd.f32 %v4918, %v4919
      %v4921 = vsel %vm4768, %v4864, 0.0
      %v4922 = vadd.f32 %v4920, %v4921
      %v4923 = vsel %vm4768, %v4865, 0.0
      %v4924 = vadd.f32 %v4922, %v4923
      %v4925 = vsel %vm4768, %v4866, 0.0
      %v4926 = vadd.f32 %v4924, %v4925
      %v4927 = vsel %vm4768, %v4867, 0.0
      %v4928 = vadd.f32 %v4926, %v4927
      %v4929 = vsel %vm4768, %v4868, 0.0
      %v4930 = vadd.f32 %v4928, %v4929
      %v4931 = vsel %vm4768, %v4869, 0.0
      %v4932 = vadd.f32 %v4930, %v4931
      %v4933 = vrot.slane %v4932, 4
      %v4934 = vadd.f32 %v4932, %v4933
      %v4935 = vrot.slane %v4934, 2
      %v4936 = vadd.f32 %v4934, %v4935
      %v4937 = vrot.slane %v4936, 1
      %v4938 = vadd.f32 %v4936, %v4937
      %vm4939 = vcmask 1040384
      %v4940 = vsel %vm4939, %v4837, %v4938
      %vm4941 = vcmask 25600
      %4942 = vst.msk [vmem:[%s280] sm:$0x3] %vm4941, %v4940
      %p4943 = scmp.lt.s32.totalorder %s21, 1
      %s4944 = scalar_select %p4943, %s21, 1
      %p4945 = scmp.lt.s32.totalorder %s22, 0
      %s4946 = scalar_select %p4945, %s22, 0
      %s4947 = smul.addr %s4944, 32
      %s4948 = sadd.s32 %s4946, %s4947
      %s4949 = smul.addr %s4948, 4
      %s4950 = scalar_lea.vmem %s4, %s4949
      %p4951 = scmp.lt.s32.totalorder %s21, 1
      %s4952 = scalar_select %p4951, %s21, 1
      %p4953 = scmp.lt.s32.totalorder %s22, 0
      %s4954 = scalar_select %p4953, %s22, 0
      %s4955 = sadd.s32 %s4954, %s4952
      %s4956 = smul.addr %s4955, 2
      %s4957 = scalar_lea.vmem %s5, %s4956
      // Predicated region
      $region37: #{basic_block_forward.4} parent=35 // pred_check
        %p4958 = pneg %p143
      $region38: #{basic_block_forward.4} parent=35 // pred_check_branch
        %4960 = sbr.rel (%p4958) target = $region40
      $region39: #{basic_block_forward.4} parent=35 // pred_region
        _
      $region40: #{basic_block_forward.4} parent=35 // pred_fallthru
        _
      // Predicated region
      $region41: #{basic_block_forward.4} parent=35 // pred_check
        %p4961 = pneg %p171
      $region42: #{basic_block_forward.4} parent=35 // pred_check_branch
        %4963 = sbr.rel (%p4961) target = $region44
      $region43: #{basic_block_forward.4} parent=35 // pred_region
        _
      $region44: #{basic_block_forward.4} parent=35 // pred_fallthru
        _
    $region36: #{basic_block_forward.4} parent=5 // pred_fallthru
      _
    %p4964 = scmp.le.s32.totalorder 2, %s12
    // Predicated region
    $region45: #{basic_block_forward.4} parent=5 // pred_check
      %p4965 = pneg %p4964
    $region46: #{basic_block_forward.4} parent=5 // pred_check_branch
      %4967 = sbr.rel (%p4965) target = $region48
    $region47: #{basic_block_forward.4} parent=5 // pred_region
      %s4968 = ssub.s32 %s12, 2
      // Predicated region
      $region49: #{basic_block_forward.4} parent=47 // pred_check
        %p4969 = pneg %p149
      $region50: #{basic_block_forward.4} parent=47 // pred_check_branch
        %4971 = sbr.rel (%p4969) target = $region52
      $region51: #{basic_block_forward.4} parent=47 // pred_region
        %p4972 = scmp.lt.s32.totalorder %s23, 1
        %s4973 = scalar_select %p4972, %s23, 1
        %p4974 = scmp.lt.s32.totalorder %s24, 0
        %s4975 = scalar_select %p4974, %s24, 0
        %s4976 = smul.addr %s4973, 32
        %s4977 = sadd.s32 %s4975, %s4976
        %s4978 = smul.addr %s4977, 4
        %s4979 = scalar_lea.vmem %s4, %s4978
      $region52: #{basic_block_forward.4} parent=47 // pred_fallthru
        _
      // Predicated region
      $region53: #{basic_block_forward.4} parent=47 // pred_check
        %p4980 = pneg %p177
      $region54: #{basic_block_forward.4} parent=47 // pred_check_branch
        %4982 = sbr.rel (%p4980) target = $region56
      $region55: #{basic_block_forward.4} parent=47 // pred_region
        %p4983 = scmp.lt.s32.totalorder %s23, 1
        %s4984 = scalar_select %p4983, %s23, 1
        %p4985 = scmp.lt.s32.totalorder %s24, 0
        %s4986 = scalar_select %p4985, %s24, 0
        %s4987 = sadd.s32 %s4986, %s4984
        %s4988 = smul.addr %s4987, 2
        %s4989 = scalar_lea.vmem %s5, %s4988
      $region56: #{basic_block_forward.4} parent=47 // pred_fallthru
        _
    $region48: #{basic_block_forward.4} parent=5 // pred_fallthru
      _
  $region6: #{basic_block_forward.4} parent=0 // loop_footer
    %s16 = sadd.s32 1, %s12
  $region7: #{basic_block_forward.4} parent=0 // loop_footer_branch
    %11 = sbr.rel target = $region3
  $region8: #{basic_block_forward.4} parent=0 // loop_exit
    _

</llo_original>
